<compile_context>
chip_gen: v7x
topology: tpu7x:2x2x1
jax: 0.10.0
libtpu: 0.0.40
codegen_flags: <defaults>
</compile_context>

<pallas_src>
import math

import jax
import jax.numpy as jnp
import numpy as np
from jax import lax
from jax.experimental import pallas as pl
from jax.experimental.pallas import tpu as pltpu


# ----------------------------------------------------------------------------
# Network topology.
# ----------------------------------------------------------------------------
CONV_SPECS = [(1, 32), (32, 32),       # layer1
              (32, 64), (64, 64),      # layer2
              (64, 128), (128, 128),   # layer3
              (128, 128), (128, 128)]  # layer4
POOL_AFTER = (1, 3, 5)                 # 2x2 maxpool after conv1_2, conv2_2, conv3_2
SPATIAL = [16, 16, 8, 8, 4, 4, 2, 2]   # input H (== W) of each conv layer
N_LAYERS = len(CONV_SPECS)
OUT_HW = 2
OUT_C = 128
BN_EPS = 1e-5


# ----------------------------------------------------------------------------
# Fused kernel: entire network for one image, everything resident in VMEM.
# ----------------------------------------------------------------------------
def _epilogue_and_pool(y, bst_ref, h, cout, do_pool):
    """bias + ReLU + BatchNorm(eval) epilogue, optionally fused 2x2 maxpool.

    y: (h*h, cout) f32 conv result (row index = img_row * h + img_col).
    Returns an (h', h', cout) activation, h' = h//2 if pooled else h.
    """
    bias = bst_ref[0:1, :]       # (1, cout) — read once per layer
    scale = bst_ref[1:2, :]
    shift = bst_ref[2:3, :]
    y = jnp.maximum(y + bias, 0.0) * scale + shift
    if not do_pool:
        return y.reshape(h, h, cout)
    # Pool adjacent image columns (adjacent rows of the (h*h, cout) matrix).
    yw = jnp.max(y.reshape(h * h // 2, 2, cout), axis=1)            # (h*h//2, cout)
    # Pool adjacent image rows: within each group of h rows, the first h//2 rows
    # belong to the even image row and the last h//2 to the odd image row.
    ywr = yw.reshape(h // 2, h, cout)
    return jnp.maximum(ywr[:, :h // 2, :], ywr[:, h // 2:, :])       # (h//2, h//2, cout)


def fused_cnn_kernel(x_ref, *rest):
    """rest = [w0, bst0, ..., w7, bst7, o_ref, pad_1..pad_7, col_1..col_7]."""
    w_refs = rest[0:2 * N_LAYERS:2]
    bst_refs = rest[1:2 * N_LAYERS:2]
    o_ref = rest[2 * N_LAYERS]
    scratch = rest[2 * N_LAYERS + 1:]
    pad_refs = scratch[:N_LAYERS - 1]          # zero-padded activations, layers 1..7
    col_refs = scratch[N_LAYERS - 1:]          # im2col patch matrices, layers 1..7

    # ---- Layer 0 (Cin=1): patches pre-im2col'd by the wrapper -> (H*W, 9). ----
    h, (_, cout) = SPATIAL[0], CONV_SPECS[0]
    y = jnp.dot(x_ref[0], w_refs[0][...], preferred_element_type=jnp.float32)
    act = _epilogue_and_pool(y, bst_refs[0], h, cout, 0 in POOL_AFTER)

    # ---- Layers 1..7: in-VMEM zero-pad + im2col + one MXU matmul each. ----
    for i in range(1, N_LAYERS):
        h, (cin, cout) = SPATIAL[i], CONV_SPECS[i]
        pad = pad_refs[i - 1]                  # (h+2, h+2, cin)
        col = col_refs[i - 1]                  # (h*h, 9*cin)

        pad[...] = jnp.zeros_like(pad)         # zero halo
        pad[1:h + 1, 1:h + 1, :] = act

        for k in range(9):                     # build (h*h, 9*cin) patch matrix
            dy, dx = k // 3, k % 3
            col[:, k * cin:(k + 1) * cin] = (
                pad[dy:dy + h, dx:dx + h, :].reshape(h * h, cin))

        y = jnp.dot(col[...], w_refs[i][...],
                    preferred_element_type=jnp.float32)       # (h*h, cout)
        act = _epilogue_and_pool(y, bst_refs[i], h, cout, i in POOL_AFTER)

    # Lane-dense (4, 128) output store.
    o_ref[0] = act.reshape(OUT_HW * OUT_HW, OUT_C)


# ----------------------------------------------------------------------------
# Wrapper.
# ----------------------------------------------------------------------------
def _first_layer_patches(x_nhwc):
    """(N, 16, 16, 1) -> (N, 256, 9) im2col patches for the Cin=1 first conv."""
    N, H, W, _ = x_nhwc.shape
    xp = jnp.pad(x_nhwc[..., 0], ((0, 0), (1, 1), (1, 1)))
    taps = [xp[:, dy:dy + H, dx:dx + W] for dy in range(3) for dx in range(3)]
    return jnp.stack(taps, axis=-1).reshape(N, H * W, 9)


def simple_cnn_forward(x_nchw, params):
    N = x_nchw.shape[0]
    H = x_nchw.shape[2]
    x = jnp.transpose(x_nchw, (0, 2, 3, 1)).astype(jnp.float32)   # NCHW -> NHWC
    patches0 = _first_layer_patches(x)                            # (N, H*W, 9)

    flat_params = []
    in_specs = [pl.BlockSpec((1, H * H, 9), lambda n: (n, 0, 0))]
    for (w, b, scale, shift) in params:
        cin, cout = w.shape[2], w.shape[3]
        wmat = w.reshape(9 * cin, cout)                 # HWIO -> (9*Cin, Cout)
        bst = jnp.stack([b, scale, shift], axis=0)      # (3, Cout)
        flat_params += [wmat, bst]
        in_specs.append(pl.BlockSpec((9 * cin, cout), lambda n: (0, 0)))
        in_specs.append(pl.BlockSpec((3, cout), lambda n: (0, 0)))

    pad_scratch = [pltpu.VMEM((SPATIAL[i] + 2, SPATIAL[i] + 2, CONV_SPECS[i][0]),
                              jnp.float32) for i in range(1, N_LAYERS)]
    col_scratch = [pltpu.VMEM((SPATIAL[i] * SPATIAL[i], 9 * CONV_SPECS[i][0]),
                              jnp.float32) for i in range(1, N_LAYERS)]

    out = pl.pallas_call(
        fused_cnn_kernel,
        out_shape=jax.ShapeDtypeStruct((N, OUT_HW * OUT_HW, OUT_C), jnp.float32),
        grid_spec=pltpu.PrefetchScalarGridSpec(
            num_scalar_prefetch=0,
            grid=(N,),
            in_specs=in_specs,
            out_specs=pl.BlockSpec((1, OUT_HW * OUT_HW, OUT_C),
                                   lambda n: (n, 0, 0)),
            scratch_shapes=pad_scratch + col_scratch,
        ),
        compiler_params=pltpu.CompilerParams(
            dimension_semantics=("parallel",)),   # batch is independent (v7x 2 TCs)
    )(patches0, *flat_params)

    out = out.reshape(N, OUT_HW, OUT_HW, OUT_C)
    return jnp.transpose(out, (0, 3, 1, 2))            # NHWC -> NCHW


# ----------------------------------------------------------------------------
# Deterministic parameter construction (conv weights/biases + BN affine terms).
# ----------------------------------------------------------------------------
def init_params(key):
    params = []
    for cin, cout in CONV_SPECS:
        key, kw, kb, kg, kbt, km, kv = jax.random.split(key, 7)
        w = jax.random.normal(kw, (3, 3, cin, cout), jnp.float32) / math.sqrt(9 * cin)
        b = jax.random.normal(kb, (cout,), jnp.float32) * 0.01
        gamma = jax.random.uniform(kg, (cout,), jnp.float32, 0.5, 1.5)
        beta = jax.random.normal(kbt, (cout,), jnp.float32) * 0.1
        rmean = jax.random.normal(km, (cout,), jnp.float32) * 0.1
        rvar = jax.random.uniform(kv, (cout,), jnp.float32, 0.5, 1.5)
        scale = gamma / jnp.sqrt(rvar + BN_EPS)
        shift = beta - rmean * scale
        params.append((w, b, scale, shift))
    return params


# ----------------------------------------------------------------------------
# Pure-JAX reference (conv -> ReLU -> BN affine -> optional 2x2 maxpool).
# ----------------------------------------------------------------------------
def simple_cnn_reference(x_nchw, params):
    x = jnp.transpose(x_nchw, (0, 2, 3, 1)).astype(jnp.float32)
    for i, (w, b, scale, shift) in enumerate(params):
        y = lax.conv_general_dilated(
            x, w, window_strides=(1, 1), padding="SAME",
            dimension_numbers=("NHWC", "HWIO", "NHWC"))
        y = jnp.maximum(y + b, 0.0)
        x = y * scale + shift
        if i in POOL_AFTER:
            x = lax.reduce_window(x, -jnp.inf, lax.max,
                                  (1, 2, 2, 1), (1, 2, 2, 1), "VALID")
    return jnp.transpose(x, (0, 3, 1, 2))


if __name__ == "__main__":
    key = jax.random.PRNGKey(0)
    key, kx = jax.random.split(key)
    x = jax.random.normal(kx, (2, 1, 16, 16), jnp.float32)   # NCHW, Conv2d(1, ...)

    params = init_params(key)

    fwd = jax.jit(simple_cnn_forward)
    out = fwd(x, params)
    out = jax.block_until_ready(out)

    ref = jax.block_until_ready(simple_cnn_reference(x, params))

    assert out.shape == (2, 128, 2, 2), out.shape
    np.testing.assert_allclose(np.asarray(out), np.asarray(ref), rtol=1e-4, atol=1e-4)

    print("KERNEL_OK")
</pallas_src>

<mosaic_0001>
module attributes {stable_mosaic.version = 11 : i64} {
  func.func @fused_cnn_kernel(%arg0: i32, %arg1: memref<1x256x9xf32, #tpu.memory_space<vmem>>, %arg2: memref<9x32xf32, #tpu.memory_space<vmem>>, %arg3: memref<3x32xf32, #tpu.memory_space<vmem>>, %arg4: memref<288x32xf32, #tpu.memory_space<vmem>>, %arg5: memref<3x32xf32, #tpu.memory_space<vmem>>, %arg6: memref<288x64xf32, #tpu.memory_space<vmem>>, %arg7: memref<3x64xf32, #tpu.memory_space<vmem>>, %arg8: memref<576x64xf32, #tpu.memory_space<vmem>>, %arg9: memref<3x64xf32, #tpu.memory_space<vmem>>, %arg10: memref<576x128xf32, #tpu.memory_space<vmem>>, %arg11: memref<3x128xf32, #tpu.memory_space<vmem>>, %arg12: memref<1152x128xf32, #tpu.memory_space<vmem>>, %arg13: memref<3x128xf32, #tpu.memory_space<vmem>>, %arg14: memref<1152x128xf32, #tpu.memory_space<vmem>>, %arg15: memref<3x128xf32, #tpu.memory_space<vmem>>, %arg16: memref<1152x128xf32, #tpu.memory_space<vmem>>, %arg17: memref<3x128xf32, #tpu.memory_space<vmem>>, %arg18: memref<1x4x128xf32, #tpu.memory_space<vmem>>, %arg19: memref<18x18x32xf32, #tpu.memory_space<vmem>>, %arg20: memref<10x10x32xf32, #tpu.memory_space<vmem>>, %arg21: memref<10x10x64xf32, #tpu.memory_space<vmem>>, %arg22: memref<6x6x64xf32, #tpu.memory_space<vmem>>, %arg23: memref<6x6x128xf32, #tpu.memory_space<vmem>>, %arg24: memref<4x4x128xf32, #tpu.memory_space<vmem>>, %arg25: memref<4x4x128xf32, #tpu.memory_space<vmem>>, %arg26: memref<256x288xf32, #tpu.memory_space<vmem>>, %arg27: memref<64x288xf32, #tpu.memory_space<vmem>>, %arg28: memref<64x576xf32, #tpu.memory_space<vmem>>, %arg29: memref<16x576xf32, #tpu.memory_space<vmem>>, %arg30: memref<16x1152xf32, #tpu.memory_space<vmem>>, %arg31: memref<4x1152xf32, #tpu.memory_space<vmem>>, %arg32: memref<4x1152xf32, #tpu.memory_space<vmem>>) attributes {dimension_semantics = [#tpu.dimension_semantics<parallel>], iteration_bounds = array<i64: 2>, scalar_prefetch = 0 : i64, scratch_operands = 14 : i64, tpu.core_type = #tpu.core_type<tc>, window_params = [{transform_indices = @transform_0, window_bounds = array<i64: 1, 256, 9>}, {pipeline_mode = #tpu.pipeline_mode<synchronous>, transform_indices = @transform_1, window_bounds = array<i64: 9, 32>}, {pipeline_mode = #tpu.pipeline_mode<synchronous>, transform_indices = @transform_2, window_bounds = array<i64: 3, 32>}, {pipeline_mode = #tpu.pipeline_mode<synchronous>, transform_indices = @transform_3, window_bounds = array<i64: 288, 32>}, {pipeline_mode = #tpu.pipeline_mode<synchronous>, transform_indices = @transform_4, window_bounds = array<i64: 3, 32>}, {pipeline_mode = #tpu.pipeline_mode<synchronous>, transform_indices = @transform_5, window_bounds = array<i64: 288, 64>}, {pipeline_mode = #tpu.pipeline_mode<synchronous>, transform_indices = @transform_6, window_bounds = array<i64: 3, 64>}, {pipeline_mode = #tpu.pipeline_mode<synchronous>, transform_indices = @transform_7, window_bounds = array<i64: 576, 64>}, {pipeline_mode = #tpu.pipeline_mode<synchronous>, transform_indices = @transform_8, window_bounds = array<i64: 3, 64>}, {pipeline_mode = #tpu.pipeline_mode<synchronous>, transform_indices = @transform_9, window_bounds = array<i64: 576, 128>}, {pipeline_mode = #tpu.pipeline_mode<synchronous>, transform_indices = @transform_10, window_bounds = array<i64: 3, 128>}, {pipeline_mode = #tpu.pipeline_mode<synchronous>, transform_indices = @transform_11, window_bounds = array<i64: 1152, 128>}, {pipeline_mode = #tpu.pipeline_mode<synchronous>, transform_indices = @transform_12, window_bounds = array<i64: 3, 128>}, {pipeline_mode = #tpu.pipeline_mode<synchronous>, transform_indices = @transform_13, window_bounds = array<i64: 1152, 128>}, {pipeline_mode = #tpu.pipeline_mode<synchronous>, transform_indices = @transform_14, window_bounds = array<i64: 3, 128>}, {pipeline_mode = #tpu.pipeline_mode<synchronous>, transform_indices = @transform_15, window_bounds = array<i64: 1152, 128>}, {pipeline_mode = #tpu.pipeline_mode<synchronous>, transform_indices = @transform_16, window_bounds = array<i64: 3, 128>}, {transform_indices = @transform_17, window_bounds = array<i64: 1, 4, 128>}]} {
    %c0 = arith.constant 0 : index
    %c0_0 = arith.constant 0 : index
    %c0_1 = arith.constant 0 : index
    %0 = vector.load %arg1[%c0, %c0_0, %c0_1] : memref<1x256x9xf32, #tpu.memory_space<vmem>>, vector<1x256x9xf32>
    %1 = vector.shape_cast %0 : vector<1x256x9xf32> to vector<256x9xf32>
    %c0_2 = arith.constant 0 : index
    %c0_3 = arith.constant 0 : index
    %2 = vector.load %arg2[%c0_2, %c0_3] : memref<9x32xf32, #tpu.memory_space<vmem>>, vector<9x32xf32>
    %cst = arith.constant dense<0.000000e+00> : vector<256x32xf32>
    %3 = tpu.matmul %1, %2, %cst {dimension_numbers = #tpu.dot_dimension_numbers<[1], [0], [0], [1], [0, 0, 1, 1], [], []>} : vector<256x9xf32>, vector<9x32xf32>, vector<256x32xf32> -> vector<256x32xf32>
    %c0_4 = arith.constant 0 : index
    %c0_5 = arith.constant 0 : index
    %4 = vector.load %arg3[%c0_4, %c0_5] : memref<3x32xf32, #tpu.memory_space<vmem>>, vector<1x32xf32>
    %c1 = arith.constant 1 : index
    %c0_6 = arith.constant 0 : index
    %5 = vector.load %arg3[%c1, %c0_6] : memref<3x32xf32, #tpu.memory_space<vmem>>, vector<1x32xf32>
    %c2 = arith.constant 2 : index
    %c0_7 = arith.constant 0 : index
    %6 = vector.load %arg3[%c2, %c0_7] : memref<3x32xf32, #tpu.memory_space<vmem>>, vector<1x32xf32>
    %7 = vector.broadcast %4 : vector<1x32xf32> to vector<256x32xf32>
    %8 = arith.addf %3, %7 : vector<256x32xf32>
    %cst_8 = arith.constant 0.000000e+00 : f32
    %9 = vector.broadcast %cst_8 : f32 to vector<256x32xf32>
    %10 = arith.maximumf %8, %9 : vector<256x32xf32>
    %11 = vector.broadcast %5 : vector<1x32xf32> to vector<256x32xf32>
    %12 = arith.mulf %10, %11 : vector<256x32xf32>
    %13 = vector.broadcast %6 : vector<1x32xf32> to vector<256x32xf32>
    %14 = arith.addf %12, %13 : vector<256x32xf32>
    %15 = vector.shape_cast %14 : vector<256x32xf32> to vector<16x16x32xf32>
    %cst_9 = arith.constant 0.000000e+00 : f32
    %16 = vector.broadcast %cst_9 : f32 to vector<18x18x32xf32>
    %c0_10 = arith.constant 0 : index
    %c0_11 = arith.constant 0 : index
    %c0_12 = arith.constant 0 : index
    %17 = vector.load %arg19[%c0_10, %c0_11, %c0_12] : memref<18x18x32xf32, #tpu.memory_space<vmem>>, vector<18x18x32xf32>
    tpu.vector_store %arg19[%c0_10, %c0_11, %c0_12], %16 {strides = array<i32>} : memref<18x18x32xf32, #tpu.memory_space<vmem>>, vector<18x18x32xf32>,
    %c1_13 = arith.constant 1 : index
    %c1_14 = arith.constant 1 : index
    %c0_15 = arith.constant 0 : index
    %18 = vector.load %arg19[%c1_13, %c1_14, %c0_15] : memref<18x18x32xf32, #tpu.memory_space<vmem>>, vector<16x16x32xf32>
    tpu.vector_store %arg19[%c1_13, %c1_14, %c0_15], %15 {strides = array<i32>} : memref<18x18x32xf32, #tpu.memory_space<vmem>>, vector<16x16x32xf32>,
    %c0_16 = arith.constant 0 : index
    %c0_17 = arith.constant 0 : index
    %c0_18 = arith.constant 0 : index
    %19 = vector.load %arg19[%c0_16, %c0_17, %c0_18] : memref<18x18x32xf32, #tpu.memory_space<vmem>>, vector<16x16x32xf32>
    %20 = vector.shape_cast %19 : vector<16x16x32xf32> to vector<256x32xf32>
    %c0_19 = arith.constant 0 : index
    %c0_20 = arith.constant 0 : index
    %21 = vector.load %arg26[%c0_19, %c0_20] : memref<256x288xf32, #tpu.memory_space<vmem>>, vector<256x32xf32>
    tpu.vector_store %arg26[%c0_19, %c0_20], %20 {strides = array<i32>} : memref<256x288xf32, #tpu.memory_space<vmem>>, vector<256x32xf32>,
    %c0_21 = arith.constant 0 : index
    %c1_22 = arith.constant 1 : index
    %c0_23 = arith.constant 0 : index
    %22 = vector.load %arg19[%c0_21, %c1_22, %c0_23] : memref<18x18x32xf32, #tpu.memory_space<vmem>>, vector<16x16x32xf32>
    %23 = vector.shape_cast %22 : vector<16x16x32xf32> to vector<256x32xf32>
    %c0_24 = arith.constant 0 : index
    %c32 = arith.constant 32 : index
    %24 = vector.load %arg26[%c0_24, %c32] : memref<256x288xf32, #tpu.memory_space<vmem>>, vector<256x32xf32>
    tpu.vector_store %arg26[%c0_24, %c32], %23 {strides = array<i32>} : memref<256x288xf32, #tpu.memory_space<vmem>>, vector<256x32xf32>,
    %c0_25 = arith.constant 0 : index
    %c2_26 = arith.constant 2 : index
    %c0_27 = arith.constant 0 : index
    %25 = vector.load %arg19[%c0_25, %c2_26, %c0_27] : memref<18x18x32xf32, #tpu.memory_space<vmem>>, vector<16x16x32xf32>
    %26 = vector.shape_cast %25 : vector<16x16x32xf32> to vector<256x32xf32>
    %c0_28 = arith.constant 0 : index
    %c64 = arith.constant 64 : index
    %27 = vector.load %arg26[%c0_28, %c64] : memref<256x288xf32, #tpu.memory_space<vmem>>, vector<256x32xf32>
    tpu.vector_store %arg26[%c0_28, %c64], %26 {strides = array<i32>} : memref<256x288xf32, #tpu.memory_space<vmem>>, vector<256x32xf32>,
    %c1_29 = arith.constant 1 : index
    %c0_30 = arith.constant 0 : index
    %c0_31 = arith.constant 0 : index
    %28 = vector.load %arg19[%c1_29, %c0_30, %c0_31] : memref<18x18x32xf32, #tpu.memory_space<vmem>>, vector<16x16x32xf32>
    %29 = vector.shape_cast %28 : vector<16x16x32xf32> to vector<256x32xf32>
    %c0_32 = arith.constant 0 : index
    %c96 = arith.constant 96 : index
    %30 = vector.load %arg26[%c0_32, %c96] : memref<256x288xf32, #tpu.memory_space<vmem>>, vector<256x32xf32>
    tpu.vector_store %arg26[%c0_32, %c96], %29 {strides = array<i32>} : memref<256x288xf32, #tpu.memory_space<vmem>>, vector<256x32xf32>,
    %c1_33 = arith.constant 1 : index
    %c1_34 = arith.constant 1 : index
    %c0_35 = arith.constant 0 : index
    %31 = vector.load %arg19[%c1_33, %c1_34, %c0_35] : memref<18x18x32xf32, #tpu.memory_space<vmem>>, vector<16x16x32xf32>
    %32 = vector.shape_cast %31 : vector<16x16x32xf32> to vector<256x32xf32>
    %c0_36 = arith.constant 0 : index
    %c128 = arith.constant 128 : index
    %33 = vector.load %arg26[%c0_36, %c128] : memref<256x288xf32, #tpu.memory_space<vmem>>, vector<256x32xf32>
    tpu.vector_store %arg26[%c0_36, %c128], %32 {strides = array<i32>} : memref<256x288xf32, #tpu.memory_space<vmem>>, vector<256x32xf32>,
    %c1_37 = arith.constant 1 : index
    %c2_38 = arith.constant 2 : index
    %c0_39 = arith.constant 0 : index
    %34 = vector.load %arg19[%c1_37, %c2_38, %c0_39] : memref<18x18x32xf32, #tpu.memory_space<vmem>>, vector<16x16x32xf32>
    %35 = vector.shape_cast %34 : vector<16x16x32xf32> to vector<256x32xf32>
    %c0_40 = arith.constant 0 : index
    %c160 = arith.constant 160 : index
    %36 = vector.load %arg26[%c0_40, %c160] : memref<256x288xf32, #tpu.memory_space<vmem>>, vector<256x32xf32>
    tpu.vector_store %arg26[%c0_40, %c160], %35 {strides = array<i32>} : memref<256x288xf32, #tpu.memory_space<vmem>>, vector<256x32xf32>,
    %c2_41 = arith.constant 2 : index
    %c0_42 = arith.constant 0 : index
    %c0_43 = arith.constant 0 : index
    %37 = vector.load %arg19[%c2_41, %c0_42, %c0_43] : memref<18x18x32xf32, #tpu.memory_space<vmem>>, vector<16x16x32xf32>
    %38 = vector.shape_cast %37 : vector<16x16x32xf32> to vector<256x32xf32>
    %c0_44 = arith.constant 0 : index
    %c192 = arith.constant 192 : index
    %39 = vector.load %arg26[%c0_44, %c192] : memref<256x288xf32, #tpu.memory_space<vmem>>, vector<256x32xf32>
    tpu.vector_store %arg26[%c0_44, %c192], %38 {strides = array<i32>} : memref<256x288xf32, #tpu.memory_space<vmem>>, vector<256x32xf32>,
    %c2_45 = arith.constant 2 : index
    %c1_46 = arith.constant 1 : index
    %c0_47 = arith.constant 0 : index
    %40 = vector.load %arg19[%c2_45, %c1_46, %c0_47] : memref<18x18x32xf32, #tpu.memory_space<vmem>>, vector<16x16x32xf32>
    %41 = vector.shape_cast %40 : vector<16x16x32xf32> to vector<256x32xf32>
    %c0_48 = arith.constant 0 : index
    %c224 = arith.constant 224 : index
    %42 = vector.load %arg26[%c0_48, %c224] : memref<256x288xf32, #tpu.memory_space<vmem>>, vector<256x32xf32>
    tpu.vector_store %arg26[%c0_48, %c224], %41 {strides = array<i32>} : memref<256x288xf32, #tpu.memory_space<vmem>>, vector<256x32xf32>,
    %c2_49 = arith.constant 2 : index
    %c2_50 = arith.constant 2 : index
    %c0_51 = arith.constant 0 : index
    %43 = vector.load %arg19[%c2_49, %c2_50, %c0_51] : memref<18x18x32xf32, #tpu.memory_space<vmem>>, vector<16x16x32xf32>
    %44 = vector.shape_cast %43 : vector<16x16x32xf32> to vector<256x32xf32>
    %c0_52 = arith.constant 0 : index
    %c256 = arith.constant 256 : index
    %45 = vector.load %arg26[%c0_52, %c256] : memref<256x288xf32, #tpu.memory_space<vmem>>, vector<256x32xf32>
    tpu.vector_store %arg26[%c0_52, %c256], %44 {strides = array<i32>} : memref<256x288xf32, #tpu.memory_space<vmem>>, vector<256x32xf32>,
    %c0_53 = arith.constant 0 : index
    %c0_54 = arith.constant 0 : index
    %46 = vector.load %arg26[%c0_53, %c0_54] : memref<256x288xf32, #tpu.memory_space<vmem>>, vector<256x288xf32>
    %c0_55 = arith.constant 0 : index
    %c0_56 = arith.constant 0 : index
    %47 = vector.load %arg4[%c0_55, %c0_56] : memref<288x32xf32, #tpu.memory_space<vmem>>, vector<288x32xf32>
    %cst_57 = arith.constant dense<0.000000e+00> : vector<256x32xf32>
    %48 = tpu.matmul %46, %47, %cst_57 {dimension_numbers = #tpu.dot_dimension_numbers<[1], [0], [0], [1], [0, 0, 1, 1], [], []>} : vector<256x288xf32>, vector<288x32xf32>, vector<256x32xf32> -> vector<256x32xf32>
    %c0_58 = arith.constant 0 : index
    %c0_59 = arith.constant 0 : index
    %49 = vector.load %arg5[%c0_58, %c0_59] : memref<3x32xf32, #tpu.memory_space<vmem>>, vector<1x32xf32>
    %c1_60 = arith.constant 1 : index
    %c0_61 = arith.constant 0 : index
    %50 = vector.load %arg5[%c1_60, %c0_61] : memref<3x32xf32, #tpu.memory_space<vmem>>, vector<1x32xf32>
    %c2_62 = arith.constant 2 : index
    %c0_63 = arith.constant 0 : index
    %51 = vector.load %arg5[%c2_62, %c0_63] : memref<3x32xf32, #tpu.memory_space<vmem>>, vector<1x32xf32>
    %52 = vector.broadcast %49 : vector<1x32xf32> to vector<256x32xf32>
    %53 = arith.addf %48, %52 : vector<256x32xf32>
    %cst_64 = arith.constant 0.000000e+00 : f32
    %54 = vector.broadcast %cst_64 : f32 to vector<256x32xf32>
    %55 = arith.maximumf %53, %54 : vector<256x32xf32>
    %56 = vector.broadcast %50 : vector<1x32xf32> to vector<256x32xf32>
    %57 = arith.mulf %55, %56 : vector<256x32xf32>
    %58 = vector.broadcast %51 : vector<1x32xf32> to vector<256x32xf32>
    %59 = arith.addf %57, %58 : vector<256x32xf32>
    %60 = vector.shape_cast %59 : vector<256x32xf32> to vector<128x2x32xf32>
    %cst_65 = arith.constant dense<0xFF800000> : vector<128x32xf32>
    %61 = vector.multi_reduction <maximumf>, %60, %cst_65 [1] : vector<128x2x32xf32> to vector<128x32xf32>
    %62 = vector.shape_cast %61 : vector<128x32xf32> to vector<8x16x32xf32>
    %63 = vector.extract_strided_slice %62 {offsets = [0, 0, 0], sizes = [8, 8, 32], strides = [1, 1, 1]} : vector<8x16x32xf32> to vector<8x8x32xf32>
    %64 = vector.extract_strided_slice %62 {offsets = [0, 8, 0], sizes = [8, 8, 32], strides = [1, 1, 1]} : vector<8x16x32xf32> to vector<8x8x32xf32>
    %65 = arith.maximumf %63, %64 : vector<8x8x32xf32>
    %cst_66 = arith.constant 0.000000e+00 : f32
    %66 = vector.broadcast %cst_66 : f32 to vector<10x10x32xf32>
    %c0_67 = arith.constant 0 : index
    %c0_68 = arith.constant 0 : index
    %c0_69 = arith.constant 0 : index
    %67 = vector.load %arg20[%c0_67, %c0_68, %c0_69] : memref<10x10x32xf32, #tpu.memory_space<vmem>>, vector<10x10x32xf32>
    tpu.vector_store %arg20[%c0_67, %c0_68, %c0_69], %66 {strides = array<i32>} : memref<10x10x32xf32, #tpu.memory_space<vmem>>, vector<10x10x32xf32>,
    %c1_70 = arith.constant 1 : index
    %c1_71 = arith.constant 1 : index
    %c0_72 = arith.constant 0 : index
    %68 = vector.load %arg20[%c1_70, %c1_71, %c0_72] : memref<10x10x32xf32, #tpu.memory_space<vmem>>, vector<8x8x32xf32>
    tpu.vector_store %arg20[%c1_70, %c1_71, %c0_72], %65 {strides = array<i32>} : memref<10x10x32xf32, #tpu.memory_space<vmem>>, vector<8x8x32xf32>,
    %c0_73 = arith.constant 0 : index
    %c0_74 = arith.constant 0 : index
    %c0_75 = arith.constant 0 : index
    %69 = vector.load %arg20[%c0_73, %c0_74, %c0_75] : memref<10x10x32xf32, #tpu.memory_space<vmem>>, vector<8x8x32xf32>
    %70 = vector.shape_cast %69 : vector<8x8x32xf32> to vector<64x32xf32>
    %c0_76 = arith.constant 0 : index
    %c0_77 = arith.constant 0 : index
    %71 = vector.load %arg27[%c0_76, %c0_77] : memref<64x288xf32, #tpu.memory_space<vmem>>, vector<64x32xf32>
    tpu.vector_store %arg27[%c0_76, %c0_77], %70 {strides = array<i32>} : memref<64x288xf32, #tpu.memory_space<vmem>>, vector<64x32xf32>,
    %c0_78 = arith.constant 0 : index
    %c1_79 = arith.constant 1 : index
    %c0_80 = arith.constant 0 : index
    %72 = vector.load %arg20[%c0_78, %c1_79, %c0_80] : memref<10x10x32xf32, #tpu.memory_space<vmem>>, vector<8x8x32xf32>
    %73 = vector.shape_cast %72 : vector<8x8x32xf32> to vector<64x32xf32>
    %c0_81 = arith.constant 0 : index
    %c32_82 = arith.constant 32 : index
    %74 = vector.load %arg27[%c0_81, %c32_82] : memref<64x288xf32, #tpu.memory_space<vmem>>, vector<64x32xf32>
    tpu.vector_store %arg27[%c0_81, %c32_82], %73 {strides = array<i32>} : memref<64x288xf32, #tpu.memory_space<vmem>>, vector<64x32xf32>,
    %c0_83 = arith.constant 0 : index
    %c2_84 = arith.constant 2 : index
    %c0_85 = arith.constant 0 : index
    %75 = vector.load %arg20[%c0_83, %c2_84, %c0_85] : memref<10x10x32xf32, #tpu.memory_space<vmem>>, vector<8x8x32xf32>
    %76 = vector.shape_cast %75 : vector<8x8x32xf32> to vector<64x32xf32>
    %c0_86 = arith.constant 0 : index
    %c64_87 = arith.constant 64 : index
    %77 = vector.load %arg27[%c0_86, %c64_87] : memref<64x288xf32, #tpu.memory_space<vmem>>, vector<64x32xf32>
    tpu.vector_store %arg27[%c0_86, %c64_87], %76 {strides = array<i32>} : memref<64x288xf32, #tpu.memory_space<vmem>>, vector<64x32xf32>,
    %c1_88 = arith.constant 1 : index
    %c0_89 = arith.constant 0 : index
    %c0_90 = arith.constant 0 : index
    %78 = vector.load %arg20[%c1_88, %c0_89, %c0_90] : memref<10x10x32xf32, #tpu.memory_space<vmem>>, vector<8x8x32xf32>
    %79 = vector.shape_cast %78 : vector<8x8x32xf32> to vector<64x32xf32>
    %c0_91 = arith.constant 0 : index
    %c96_92 = arith.constant 96 : index
    %80 = vector.load %arg27[%c0_91, %c96_92] : memref<64x288xf32, #tpu.memory_space<vmem>>, vector<64x32xf32>
    tpu.vector_store %arg27[%c0_91, %c96_92], %79 {strides = array<i32>} : memref<64x288xf32, #tpu.memory_space<vmem>>, vector<64x32xf32>,
    %c1_93 = arith.constant 1 : index
    %c1_94 = arith.constant 1 : index
    %c0_95 = arith.constant 0 : index
    %81 = vector.load %arg20[%c1_93, %c1_94, %c0_95] : memref<10x10x32xf32, #tpu.memory_space<vmem>>, vector<8x8x32xf32>
    %82 = vector.shape_cast %81 : vector<8x8x32xf32> to vector<64x32xf32>
    %c0_96 = arith.constant 0 : index
    %c128_97 = arith.constant 128 : index
    %83 = vector.load %arg27[%c0_96, %c128_97] : memref<64x288xf32, #tpu.memory_space<vmem>>, vector<64x32xf32>
    tpu.vector_store %arg27[%c0_96, %c128_97], %82 {strides = array<i32>} : memref<64x288xf32, #tpu.memory_space<vmem>>, vector<64x32xf32>,
    %c1_98 = arith.constant 1 : index
    %c2_99 = arith.constant 2 : index
    %c0_100 = arith.constant 0 : index
    %84 = vector.load %arg20[%c1_98, %c2_99, %c0_100] : memref<10x10x32xf32, #tpu.memory_space<vmem>>, vector<8x8x32xf32>
    %85 = vector.shape_cast %84 : vector<8x8x32xf32> to vector<64x32xf32>
    %c0_101 = arith.constant 0 : index
    %c160_102 = arith.constant 160 : index
    %86 = vector.load %arg27[%c0_101, %c160_102] : memref<64x288xf32, #tpu.memory_space<vmem>>, vector<64x32xf32>
    tpu.vector_store %arg27[%c0_101, %c160_102], %85 {strides = array<i32>} : memref<64x288xf32, #tpu.memory_space<vmem>>, vector<64x32xf32>,
    %c2_103 = arith.constant 2 : index
    %c0_104 = arith.constant 0 : index
    %c0_105 = arith.constant 0 : index
    %87 = vector.load %arg20[%c2_103, %c0_104, %c0_105] : memref<10x10x32xf32, #tpu.memory_space<vmem>>, vector<8x8x32xf32>
    %88 = vector.shape_cast %87 : vector<8x8x32xf32> to vector<64x32xf32>
    %c0_106 = arith.constant 0 : index
    %c192_107 = arith.constant 192 : index
    %89 = vector.load %arg27[%c0_106, %c192_107] : memref<64x288xf32, #tpu.memory_space<vmem>>, vector<64x32xf32>
    tpu.vector_store %arg27[%c0_106, %c192_107], %88 {strides = array<i32>} : memref<64x288xf32, #tpu.memory_space<vmem>>, vector<64x32xf32>,
    %c2_108 = arith.constant 2 : index
    %c1_109 = arith.constant 1 : index
    %c0_110 = arith.constant 0 : index
    %90 = vector.load %arg20[%c2_108, %c1_109, %c0_110] : memref<10x10x32xf32, #tpu.memory_space<vmem>>, vector<8x8x32xf32>
    %91 = vector.shape_cast %90 : vector<8x8x32xf32> to vector<64x32xf32>
    %c0_111 = arith.constant 0 : index
    %c224_112 = arith.constant 224 : index
    %92 = vector.load %arg27[%c0_111, %c224_112] : memref<64x288xf32, #tpu.memory_space<vmem>>, vector<64x32xf32>
    tpu.vector_store %arg27[%c0_111, %c224_112], %91 {strides = array<i32>} : memref<64x288xf32, #tpu.memory_space<vmem>>, vector<64x32xf32>,
    %c2_113 = arith.constant 2 : index
    %c2_114 = arith.constant 2 : index
    %c0_115 = arith.constant 0 : index
    %93 = vector.load %arg20[%c2_113, %c2_114, %c0_115] : memref<10x10x32xf32, #tpu.memory_space<vmem>>, vector<8x8x32xf32>
    %94 = vector.shape_cast %93 : vector<8x8x32xf32> to vector<64x32xf32>
    %c0_116 = arith.constant 0 : index
    %c256_117 = arith.constant 256 : index
    %95 = vector.load %arg27[%c0_116, %c256_117] : memref<64x288xf32, #tpu.memory_space<vmem>>, vector<64x32xf32>
    tpu.vector_store %arg27[%c0_116, %c256_117], %94 {strides = array<i32>} : memref<64x288xf32, #tpu.memory_space<vmem>>, vector<64x32xf32>,
    %c0_118 = arith.constant 0 : index
    %c0_119 = arith.constant 0 : index
    %96 = vector.load %arg27[%c0_118, %c0_119] : memref<64x288xf32, #tpu.memory_space<vmem>>, vector<64x288xf32>
    %c0_120 = arith.constant 0 : index
    %c0_121 = arith.constant 0 : index
    %97 = vector.load %arg6[%c0_120, %c0_121] : memref<288x64xf32, #tpu.memory_space<vmem>>, vector<288x64xf32>
    %cst_122 = arith.constant dense<0.000000e+00> : vector<64x64xf32>
    %98 = tpu.matmul %96, %97, %cst_122 {dimension_numbers = #tpu.dot_dimension_numbers<[1], [0], [0], [1], [0, 0, 1, 1], [], []>} : vector<64x288xf32>, vector<288x64xf32>, vector<64x64xf32> -> vector<64x64xf32>
    %c0_123 = arith.constant 0 : index
    %c0_124 = arith.constant 0 : index
    %99 = vector.load %arg7[%c0_123, %c0_124] : memref<3x64xf32, #tpu.memory_space<vmem>>, vector<1x64xf32>
    %c1_125 = arith.constant 1 : index
    %c0_126 = arith.constant 0 : index
    %100 = vector.load %arg7[%c1_125, %c0_126] : memref<3x64xf32, #tpu.memory_space<vmem>>, vector<1x64xf32>
    %c2_127 = arith.constant 2 : index
    %c0_128 = arith.constant 0 : index
    %101 = vector.load %arg7[%c2_127, %c0_128] : memref<3x64xf32, #tpu.memory_space<vmem>>, vector<1x64xf32>
    %102 = vector.broadcast %99 : vector<1x64xf32> to vector<64x64xf32>
    %103 = arith.addf %98, %102 : vector<64x64xf32>
    %cst_129 = arith.constant 0.000000e+00 : f32
    %104 = vector.broadcast %cst_129 : f32 to vector<64x64xf32>
    %105 = arith.maximumf %103, %104 : vector<64x64xf32>
    %106 = vector.broadcast %100 : vector<1x64xf32> to vector<64x64xf32>
    %107 = arith.mulf %105, %106 : vector<64x64xf32>
    %108 = vector.broadcast %101 : vector<1x64xf32> to vector<64x64xf32>
    %109 = arith.addf %107, %108 : vector<64x64xf32>
    %110 = vector.shape_cast %109 : vector<64x64xf32> to vector<8x8x64xf32>
    %cst_130 = arith.constant 0.000000e+00 : f32
    %111 = vector.broadcast %cst_130 : f32 to vector<10x10x64xf32>
    %c0_131 = arith.constant 0 : index
    %c0_132 = arith.constant 0 : index
    %c0_133 = arith.constant 0 : index
    %112 = vector.load %arg21[%c0_131, %c0_132, %c0_133] : memref<10x10x64xf32, #tpu.memory_space<vmem>>, vector<10x10x64xf32>
    tpu.vector_store %arg21[%c0_131, %c0_132, %c0_133], %111 {strides = array<i32>} : memref<10x10x64xf32, #tpu.memory_space<vmem>>, vector<10x10x64xf32>,
    %c1_134 = arith.constant 1 : index
    %c1_135 = arith.constant 1 : index
    %c0_136 = arith.constant 0 : index
    %113 = vector.load %arg21[%c1_134, %c1_135, %c0_136] : memref<10x10x64xf32, #tpu.memory_space<vmem>>, vector<8x8x64xf32>
    tpu.vector_store %arg21[%c1_134, %c1_135, %c0_136], %110 {strides = array<i32>} : memref<10x10x64xf32, #tpu.memory_space<vmem>>, vector<8x8x64xf32>,
    %c0_137 = arith.constant 0 : index
    %c0_138 = arith.constant 0 : index
    %c0_139 = arith.constant 0 : index
    %114 = vector.load %arg21[%c0_137, %c0_138, %c0_139] : memref<10x10x64xf32, #tpu.memory_space<vmem>>, vector<8x8x64xf32>
    %115 = vector.shape_cast %114 : vector<8x8x64xf32> to vector<64x64xf32>
    %c0_140 = arith.constant 0 : index
    %c0_141 = arith.constant 0 : index
    %116 = vector.load %arg28[%c0_140, %c0_141] : memref<64x576xf32, #tpu.memory_space<vmem>>, vector<64x64xf32>
    tpu.vector_store %arg28[%c0_140, %c0_141], %115 {strides = array<i32>} : memref<64x576xf32, #tpu.memory_space<vmem>>, vector<64x64xf32>,
    %c0_142 = arith.constant 0 : index
    %c1_143 = arith.constant 1 : index
    %c0_144 = arith.constant 0 : index
    %117 = vector.load %arg21[%c0_142, %c1_143, %c0_144] : memref<10x10x64xf32, #tpu.memory_space<vmem>>, vector<8x8x64xf32>
    %118 = vector.shape_cast %117 : vector<8x8x64xf32> to vector<64x64xf32>
    %c0_145 = arith.constant 0 : index
    %c64_146 = arith.constant 64 : index
    %119 = vector.load %arg28[%c0_145, %c64_146] : memref<64x576xf32, #tpu.memory_space<vmem>>, vector<64x64xf32>
    tpu.vector_store %arg28[%c0_145, %c64_146], %118 {strides = array<i32>} : memref<64x576xf32, #tpu.memory_space<vmem>>, vector<64x64xf32>,
    %c0_147 = arith.constant 0 : index
    %c2_148 = arith.constant 2 : index
    %c0_149 = arith.constant 0 : index
    %120 = vector.load %arg21[%c0_147, %c2_148, %c0_149] : memref<10x10x64xf32, #tpu.memory_space<vmem>>, vector<8x8x64xf32>
    %121 = vector.shape_cast %120 : vector<8x8x64xf32> to vector<64x64xf32>
    %c0_150 = arith.constant 0 : index
    %c128_151 = arith.constant 128 : index
    %122 = vector.load %arg28[%c0_150, %c128_151] : memref<64x576xf32, #tpu.memory_space<vmem>>, vector<64x64xf32>
    tpu.vector_store %arg28[%c0_150, %c128_151], %121 {strides = array<i32>} : memref<64x576xf32, #tpu.memory_space<vmem>>, vector<64x64xf32>,
    %c1_152 = arith.constant 1 : index
    %c0_153 = arith.constant 0 : index
    %c0_154 = arith.constant 0 : index
    %123 = vector.load %arg21[%c1_152, %c0_153, %c0_154] : memref<10x10x64xf32, #tpu.memory_space<vmem>>, vector<8x8x64xf32>
    %124 = vector.shape_cast %123 : vector<8x8x64xf32> to vector<64x64xf32>
    %c0_155 = arith.constant 0 : index
    %c192_156 = arith.constant 192 : index
    %125 = vector.load %arg28[%c0_155, %c192_156] : memref<64x576xf32, #tpu.memory_space<vmem>>, vector<64x64xf32>
    tpu.vector_store %arg28[%c0_155, %c192_156], %124 {strides = array<i32>} : memref<64x576xf32, #tpu.memory_space<vmem>>, vector<64x64xf32>,
    %c1_157 = arith.constant 1 : index
    %c1_158 = arith.constant 1 : index
    %c0_159 = arith.constant 0 : index
    %126 = vector.load %arg21[%c1_157, %c1_158, %c0_159] : memref<10x10x64xf32, #tpu.memory_space<vmem>>, vector<8x8x64xf32>
    %127 = vector.shape_cast %126 : vector<8x8x64xf32> to vector<64x64xf32>
    %c0_160 = arith.constant 0 : index
    %c256_161 = arith.constant 256 : index
    %128 = vector.load %arg28[%c0_160, %c256_161] : memref<64x576xf32, #tpu.memory_space<vmem>>, vector<64x64xf32>
    tpu.vector_store %arg28[%c0_160, %c256_161], %127 {strides = array<i32>} : memref<64x576xf32, #tpu.memory_space<vmem>>, vector<64x64xf32>,
    %c1_162 = arith.constant 1 : index
    %c2_163 = arith.constant 2 : index
    %c0_164 = arith.constant 0 : index
    %129 = vector.load %arg21[%c1_162, %c2_163, %c0_164] : memref<10x10x64xf32, #tpu.memory_space<vmem>>, vector<8x8x64xf32>
    %130 = vector.shape_cast %129 : vector<8x8x64xf32> to vector<64x64xf32>
    %c0_165 = arith.constant 0 : index
    %c320 = arith.constant 320 : index
    %131 = vector.load %arg28[%c0_165, %c320] : memref<64x576xf32, #tpu.memory_space<vmem>>, vector<64x64xf32>
    tpu.vector_store %arg28[%c0_165, %c320], %130 {strides = array<i32>} : memref<64x576xf32, #tpu.memory_space<vmem>>, vector<64x64xf32>,
    %c2_166 = arith.constant 2 : index
    %c0_167 = arith.constant 0 : index
    %c0_168 = arith.constant 0 : index
    %132 = vector.load %arg21[%c2_166, %c0_167, %c0_168] : memref<10x10x64xf32, #tpu.memory_space<vmem>>, vector<8x8x64xf32>
    %133 = vector.shape_cast %132 : vector<8x8x64xf32> to vector<64x64xf32>
    %c0_169 = arith.constant 0 : index
    %c384 = arith.constant 384 : index
    %134 = vector.load %arg28[%c0_169, %c384] : memref<64x576xf32, #tpu.memory_space<vmem>>, vector<64x64xf32>
    tpu.vector_store %arg28[%c0_169, %c384], %133 {strides = array<i32>} : memref<64x576xf32, #tpu.memory_space<vmem>>, vector<64x64xf32>,
    %c2_170 = arith.constant 2 : index
    %c1_171 = arith.constant 1 : index
    %c0_172 = arith.constant 0 : index
    %135 = vector.load %arg21[%c2_170, %c1_171, %c0_172] : memref<10x10x64xf32, #tpu.memory_space<vmem>>, vector<8x8x64xf32>
    %136 = vector.shape_cast %135 : vector<8x8x64xf32> to vector<64x64xf32>
    %c0_173 = arith.constant 0 : index
    %c448 = arith.constant 448 : index
    %137 = vector.load %arg28[%c0_173, %c448] : memref<64x576xf32, #tpu.memory_space<vmem>>, vector<64x64xf32>
    tpu.vector_store %arg28[%c0_173, %c448], %136 {strides = array<i32>} : memref<64x576xf32, #tpu.memory_space<vmem>>, vector<64x64xf32>,
    %c2_174 = arith.constant 2 : index
    %c2_175 = arith.constant 2 : index
    %c0_176 = arith.constant 0 : index
    %138 = vector.load %arg21[%c2_174, %c2_175, %c0_176] : memref<10x10x64xf32, #tpu.memory_space<vmem>>, vector<8x8x64xf32>
    %139 = vector.shape_cast %138 : vector<8x8x64xf32> to vector<64x64xf32>
    %c0_177 = arith.constant 0 : index
    %c512 = arith.constant 512 : index
    %140 = vector.load %arg28[%c0_177, %c512] : memref<64x576xf32, #tpu.memory_space<vmem>>, vector<64x64xf32>
    tpu.vector_store %arg28[%c0_177, %c512], %139 {strides = array<i32>} : memref<64x576xf32, #tpu.memory_space<vmem>>, vector<64x64xf32>,
    %c0_178 = arith.constant 0 : index
    %c0_179 = arith.constant 0 : index
    %141 = vector.load %arg28[%c0_178, %c0_179] : memref<64x576xf32, #tpu.memory_space<vmem>>, vector<64x576xf32>
    %c0_180 = arith.constant 0 : index
    %c0_181 = arith.constant 0 : index
    %142 = vector.load %arg8[%c0_180, %c0_181] : memref<576x64xf32, #tpu.memory_space<vmem>>, vector<576x64xf32>
    %cst_182 = arith.constant dense<0.000000e+00> : vector<64x64xf32>
    %143 = tpu.matmul %141, %142, %cst_182 {dimension_numbers = #tpu.dot_dimension_numbers<[1], [0], [0], [1], [0, 0, 1, 1], [], []>} : vector<64x576xf32>, vector<576x64xf32>, vector<64x64xf32> -> vector<64x64xf32>
    %c0_183 = arith.constant 0 : index
    %c0_184 = arith.constant 0 : index
    %144 = vector.load %arg9[%c0_183, %c0_184] : memref<3x64xf32, #tpu.memory_space<vmem>>, vector<1x64xf32>
    %c1_185 = arith.constant 1 : index
    %c0_186 = arith.constant 0 : index
    %145 = vector.load %arg9[%c1_185, %c0_186] : memref<3x64xf32, #tpu.memory_space<vmem>>, vector<1x64xf32>
    %c2_187 = arith.constant 2 : index
    %c0_188 = arith.constant 0 : index
    %146 = vector.load %arg9[%c2_187, %c0_188] : memref<3x64xf32, #tpu.memory_space<vmem>>, vector<1x64xf32>
    %147 = vector.broadcast %144 : vector<1x64xf32> to vector<64x64xf32>
    %148 = arith.addf %143, %147 : vector<64x64xf32>
    %cst_189 = arith.constant 0.000000e+00 : f32
    %149 = vector.broadcast %cst_189 : f32 to vector<64x64xf32>
    %150 = arith.maximumf %148, %149 : vector<64x64xf32>
    %151 = vector.broadcast %145 : vector<1x64xf32> to vector<64x64xf32>
    %152 = arith.mulf %150, %151 : vector<64x64xf32>
    %153 = vector.broadcast %146 : vector<1x64xf32> to vector<64x64xf32>
    %154 = arith.addf %152, %153 : vector<64x64xf32>
    %155 = vector.shape_cast %154 : vector<64x64xf32> to vector<32x2x64xf32>
    %cst_190 = arith.constant dense<0xFF800000> : vector<32x64xf32>
    %156 = vector.multi_reduction <maximumf>, %155, %cst_190 [1] : vector<32x2x64xf32> to vector<32x64xf32>
    %157 = vector.shape_cast %156 : vector<32x64xf32> to vector<4x8x64xf32>
    %158 = vector.extract_strided_slice %157 {offsets = [0, 0, 0], sizes = [4, 4, 64], strides = [1, 1, 1]} : vector<4x8x64xf32> to vector<4x4x64xf32>
    %159 = vector.extract_strided_slice %157 {offsets = [0, 4, 0], sizes = [4, 4, 64], strides = [1, 1, 1]} : vector<4x8x64xf32> to vector<4x4x64xf32>
    %160 = arith.maximumf %158, %159 : vector<4x4x64xf32>
    %cst_191 = arith.constant 0.000000e+00 : f32
    %161 = vector.broadcast %cst_191 : f32 to vector<6x6x64xf32>
    %c0_192 = arith.constant 0 : index
    %c0_193 = arith.constant 0 : index
    %c0_194 = arith.constant 0 : index
    %162 = vector.load %arg22[%c0_192, %c0_193, %c0_194] : memref<6x6x64xf32, #tpu.memory_space<vmem>>, vector<6x6x64xf32>
    tpu.vector_store %arg22[%c0_192, %c0_193, %c0_194], %161 {strides = array<i32>} : memref<6x6x64xf32, #tpu.memory_space<vmem>>, vector<6x6x64xf32>,
    %c1_195 = arith.constant 1 : index
    %c1_196 = arith.constant 1 : index
    %c0_197 = arith.constant 0 : index
    %163 = vector.load %arg22[%c1_195, %c1_196, %c0_197] : memref<6x6x64xf32, #tpu.memory_space<vmem>>, vector<4x4x64xf32>
    tpu.vector_store %arg22[%c1_195, %c1_196, %c0_197], %160 {strides = array<i32>} : memref<6x6x64xf32, #tpu.memory_space<vmem>>, vector<4x4x64xf32>,
    %c0_198 = arith.constant 0 : index
    %c0_199 = arith.constant 0 : index
    %c0_200 = arith.constant 0 : index
    %164 = vector.load %arg22[%c0_198, %c0_199, %c0_200] : memref<6x6x64xf32, #tpu.memory_space<vmem>>, vector<4x4x64xf32>
    %165 = vector.shape_cast %164 : vector<4x4x64xf32> to vector<16x64xf32>
    %c0_201 = arith.constant 0 : index
    %c0_202 = arith.constant 0 : index
    %166 = vector.load %arg29[%c0_201, %c0_202] : memref<16x576xf32, #tpu.memory_space<vmem>>, vector<16x64xf32>
    tpu.vector_store %arg29[%c0_201, %c0_202], %165 {strides = array<i32>} : memref<16x576xf32, #tpu.memory_space<vmem>>, vector<16x64xf32>,
    %c0_203 = arith.constant 0 : index
    %c1_204 = arith.constant 1 : index
    %c0_205 = arith.constant 0 : index
    %167 = vector.load %arg22[%c0_203, %c1_204, %c0_205] : memref<6x6x64xf32, #tpu.memory_space<vmem>>, vector<4x4x64xf32>
    %168 = vector.shape_cast %167 : vector<4x4x64xf32> to vector<16x64xf32>
    %c0_206 = arith.constant 0 : index
    %c64_207 = arith.constant 64 : index
    %169 = vector.load %arg29[%c0_206, %c64_207] : memref<16x576xf32, #tpu.memory_space<vmem>>, vector<16x64xf32>
    tpu.vector_store %arg29[%c0_206, %c64_207], %168 {strides = array<i32>} : memref<16x576xf32, #tpu.memory_space<vmem>>, vector<16x64xf32>,
    %c0_208 = arith.constant 0 : index
    %c2_209 = arith.constant 2 : index
    %c0_210 = arith.constant 0 : index
    %170 = vector.load %arg22[%c0_208, %c2_209, %c0_210] : memref<6x6x64xf32, #tpu.memory_space<vmem>>, vector<4x4x64xf32>
    %171 = vector.shape_cast %170 : vector<4x4x64xf32> to vector<16x64xf32>
    %c0_211 = arith.constant 0 : index
    %c128_212 = arith.constant 128 : index
    %172 = vector.load %arg29[%c0_211, %c128_212] : memref<16x576xf32, #tpu.memory_space<vmem>>, vector<16x64xf32>
    tpu.vector_store %arg29[%c0_211, %c128_212], %171 {strides = array<i32>} : memref<16x576xf32, #tpu.memory_space<vmem>>, vector<16x64xf32>,
    %c1_213 = arith.constant 1 : index
    %c0_214 = arith.constant 0 : index
    %c0_215 = arith.constant 0 : index
    %173 = vector.load %arg22[%c1_213, %c0_214, %c0_215] : memref<6x6x64xf32, #tpu.memory_space<vmem>>, vector<4x4x64xf32>
    %174 = vector.shape_cast %173 : vector<4x4x64xf32> to vector<16x64xf32>
    %c0_216 = arith.constant 0 : index
    %c192_217 = arith.constant 192 : index
    %175 = vector.load %arg29[%c0_216, %c192_217] : memref<16x576xf32, #tpu.memory_space<vmem>>, vector<16x64xf32>
    tpu.vector_store %arg29[%c0_216, %c192_217], %174 {strides = array<i32>} : memref<16x576xf32, #tpu.memory_space<vmem>>, vector<16x64xf32>,
    %c1_218 = arith.constant 1 : index
    %c1_219 = arith.constant 1 : index
    %c0_220 = arith.constant 0 : index
    %176 = vector.load %arg22[%c1_218, %c1_219, %c0_220] : memref<6x6x64xf32, #tpu.memory_space<vmem>>, vector<4x4x64xf32>
    %177 = vector.shape_cast %176 : vector<4x4x64xf32> to vector<16x64xf32>
    %c0_221 = arith.constant 0 : index
    %c256_222 = arith.constant 256 : index
    %178 = vector.load %arg29[%c0_221, %c256_222] : memref<16x576xf32, #tpu.memory_space<vmem>>, vector<16x64xf32>
    tpu.vector_store %arg29[%c0_221, %c256_222], %177 {strides = array<i32>} : memref<16x576xf32, #tpu.memory_space<vmem>>, vector<16x64xf32>,
    %c1_223 = arith.constant 1 : index
    %c2_224 = arith.constant 2 : index
    %c0_225 = arith.constant 0 : index
    %179 = vector.load %arg22[%c1_223, %c2_224, %c0_225] : memref<6x6x64xf32, #tpu.memory_space<vmem>>, vector<4x4x64xf32>
    %180 = vector.shape_cast %179 : vector<4x4x64xf32> to vector<16x64xf32>
    %c0_226 = arith.constant 0 : index
    %c320_227 = arith.constant 320 : index
    %181 = vector.load %arg29[%c0_226, %c320_227] : memref<16x576xf32, #tpu.memory_space<vmem>>, vector<16x64xf32>
    tpu.vector_store %arg29[%c0_226, %c320_227], %180 {strides = array<i32>} : memref<16x576xf32, #tpu.memory_space<vmem>>, vector<16x64xf32>,
    %c2_228 = arith.constant 2 : index
    %c0_229 = arith.constant 0 : index
    %c0_230 = arith.constant 0 : index
    %182 = vector.load %arg22[%c2_228, %c0_229, %c0_230] : memref<6x6x64xf32, #tpu.memory_space<vmem>>, vector<4x4x64xf32>
    %183 = vector.shape_cast %182 : vector<4x4x64xf32> to vector<16x64xf32>
    %c0_231 = arith.constant 0 : index
    %c384_232 = arith.constant 384 : index
    %184 = vector.load %arg29[%c0_231, %c384_232] : memref<16x576xf32, #tpu.memory_space<vmem>>, vector<16x64xf32>
    tpu.vector_store %arg29[%c0_231, %c384_232], %183 {strides = array<i32>} : memref<16x576xf32, #tpu.memory_space<vmem>>, vector<16x64xf32>,
    %c2_233 = arith.constant 2 : index
    %c1_234 = arith.constant 1 : index
    %c0_235 = arith.constant 0 : index
    %185 = vector.load %arg22[%c2_233, %c1_234, %c0_235] : memref<6x6x64xf32, #tpu.memory_space<vmem>>, vector<4x4x64xf32>
    %186 = vector.shape_cast %185 : vector<4x4x64xf32> to vector<16x64xf32>
    %c0_236 = arith.constant 0 : index
    %c448_237 = arith.constant 448 : index
    %187 = vector.load %arg29[%c0_236, %c448_237] : memref<16x576xf32, #tpu.memory_space<vmem>>, vector<16x64xf32>
    tpu.vector_store %arg29[%c0_236, %c448_237], %186 {strides = array<i32>} : memref<16x576xf32, #tpu.memory_space<vmem>>, vector<16x64xf32>,
    %c2_238 = arith.constant 2 : index
    %c2_239 = arith.constant 2 : index
    %c0_240 = arith.constant 0 : index
    %188 = vector.load %arg22[%c2_238, %c2_239, %c0_240] : memref<6x6x64xf32, #tpu.memory_space<vmem>>, vector<4x4x64xf32>
    %189 = vector.shape_cast %188 : vector<4x4x64xf32> to vector<16x64xf32>
    %c0_241 = arith.constant 0 : index
    %c512_242 = arith.constant 512 : index
    %190 = vector.load %arg29[%c0_241, %c512_242] : memref<16x576xf32, #tpu.memory_space<vmem>>, vector<16x64xf32>
    tpu.vector_store %arg29[%c0_241, %c512_242], %189 {strides = array<i32>} : memref<16x576xf32, #tpu.memory_space<vmem>>, vector<16x64xf32>,
    %c0_243 = arith.constant 0 : index
    %c0_244 = arith.constant 0 : index
    %191 = vector.load %arg29[%c0_243, %c0_244] : memref<16x576xf32, #tpu.memory_space<vmem>>, vector<16x576xf32>
    %c0_245 = arith.constant 0 : index
    %c0_246 = arith.constant 0 : index
    %192 = vector.load %arg10[%c0_245, %c0_246] : memref<576x128xf32, #tpu.memory_space<vmem>>, vector<576x128xf32>
    %cst_247 = arith.constant dense<0.000000e+00> : vector<16x128xf32>
    %193 = tpu.matmul %191, %192, %cst_247 {dimension_numbers = #tpu.dot_dimension_numbers<[1], [0], [0], [1], [0, 0, 1, 1], [], []>} : vector<16x576xf32>, vector<576x128xf32>, vector<16x128xf32> -> vector<16x128xf32>
    %c0_248 = arith.constant 0 : index
    %c0_249 = arith.constant 0 : index
    %194 = vector.load %arg11[%c0_248, %c0_249] : memref<3x128xf32, #tpu.memory_space<vmem>>, vector<1x128xf32>
    %c1_250 = arith.constant 1 : index
    %c0_251 = arith.constant 0 : index
    %195 = vector.load %arg11[%c1_250, %c0_251] : memref<3x128xf32, #tpu.memory_space<vmem>>, vector<1x128xf32>
    %c2_252 = arith.constant 2 : index
    %c0_253 = arith.constant 0 : index
    %196 = vector.load %arg11[%c2_252, %c0_253] : memref<3x128xf32, #tpu.memory_space<vmem>>, vector<1x128xf32>
    %197 = vector.broadcast %194 : vector<1x128xf32> to vector<16x128xf32>
    %198 = arith.addf %193, %197 : vector<16x128xf32>
    %cst_254 = arith.constant 0.000000e+00 : f32
    %199 = vector.broadcast %cst_254 : f32 to vector<16x128xf32>
    %200 = arith.maximumf %198, %199 : vector<16x128xf32>
    %201 = vector.broadcast %195 : vector<1x128xf32> to vector<16x128xf32>
    %202 = arith.mulf %200, %201 : vector<16x128xf32>
    %203 = vector.broadcast %196 : vector<1x128xf32> to vector<16x128xf32>
    %204 = arith.addf %202, %203 : vector<16x128xf32>
    %205 = vector.shape_cast %204 : vector<16x128xf32> to vector<4x4x128xf32>
    %cst_255 = arith.constant 0.000000e+00 : f32
    %206 = vector.broadcast %cst_255 : f32 to vector<6x6x128xf32>
    %c0_256 = arith.constant 0 : index
    %c0_257 = arith.constant 0 : index
    %c0_258 = arith.constant 0 : index
    %207 = vector.load %arg23[%c0_256, %c0_257, %c0_258] : memref<6x6x128xf32, #tpu.memory_space<vmem>>, vector<6x6x128xf32>
    tpu.vector_store %arg23[%c0_256, %c0_257, %c0_258], %206 {strides = array<i32>} : memref<6x6x128xf32, #tpu.memory_space<vmem>>, vector<6x6x128xf32>,
    %c1_259 = arith.constant 1 : index
    %c1_260 = arith.constant 1 : index
    %c0_261 = arith.constant 0 : index
    %208 = vector.load %arg23[%c1_259, %c1_260, %c0_261] : memref<6x6x128xf32, #tpu.memory_space<vmem>>, vector<4x4x128xf32>
    tpu.vector_store %arg23[%c1_259, %c1_260, %c0_261], %205 {strides = array<i32>} : memref<6x6x128xf32, #tpu.memory_space<vmem>>, vector<4x4x128xf32>,
    %c0_262 = arith.constant 0 : index
    %c0_263 = arith.constant 0 : index
    %c0_264 = arith.constant 0 : index
    %209 = vector.load %arg23[%c0_262, %c0_263, %c0_264] : memref<6x6x128xf32, #tpu.memory_space<vmem>>, vector<4x4x128xf32>
    %210 = vector.shape_cast %209 : vector<4x4x128xf32> to vector<16x128xf32>
    %c0_265 = arith.constant 0 : index
    %c0_266 = arith.constant 0 : index
    %211 = vector.load %arg30[%c0_265, %c0_266] : memref<16x1152xf32, #tpu.memory_space<vmem>>, vector<16x128xf32>
    tpu.vector_store %arg30[%c0_265, %c0_266], %210 {strides = array<i32>} : memref<16x1152xf32, #tpu.memory_space<vmem>>, vector<16x128xf32>,
    %c0_267 = arith.constant 0 : index
    %c1_268 = arith.constant 1 : index
    %c0_269 = arith.constant 0 : index
    %212 = vector.load %arg23[%c0_267, %c1_268, %c0_269] : memref<6x6x128xf32, #tpu.memory_space<vmem>>, vector<4x4x128xf32>
    %213 = vector.shape_cast %212 : vector<4x4x128xf32> to vector<16x128xf32>
    %c0_270 = arith.constant 0 : index
    %c128_271 = arith.constant 128 : index
    %214 = vector.load %arg30[%c0_270, %c128_271] : memref<16x1152xf32, #tpu.memory_space<vmem>>, vector<16x128xf32>
    tpu.vector_store %arg30[%c0_270, %c128_271], %213 {strides = array<i32>} : memref<16x1152xf32, #tpu.memory_space<vmem>>, vector<16x128xf32>,
    %c0_272 = arith.constant 0 : index
    %c2_273 = arith.constant 2 : index
    %c0_274 = arith.constant 0 : index
    %215 = vector.load %arg23[%c0_272, %c2_273, %c0_274] : memref<6x6x128xf32, #tpu.memory_space<vmem>>, vector<4x4x128xf32>
    %216 = vector.shape_cast %215 : vector<4x4x128xf32> to vector<16x128xf32>
    %c0_275 = arith.constant 0 : index
    %c256_276 = arith.constant 256 : index
    %217 = vector.load %arg30[%c0_275, %c256_276] : memref<16x1152xf32, #tpu.memory_space<vmem>>, vector<16x128xf32>
    tpu.vector_store %arg30[%c0_275, %c256_276], %216 {strides = array<i32>} : memref<16x1152xf32, #tpu.memory_space<vmem>>, vector<16x128xf32>,
    %c1_277 = arith.constant 1 : index
    %c0_278 = arith.constant 0 : index
    %c0_279 = arith.constant 0 : index
    %218 = vector.load %arg23[%c1_277, %c0_278, %c0_279] : memref<6x6x128xf32, #tpu.memory_space<vmem>>, vector<4x4x128xf32>
    %219 = vector.shape_cast %218 : vector<4x4x128xf32> to vector<16x128xf32>
    %c0_280 = arith.constant 0 : index
    %c384_281 = arith.constant 384 : index
    %220 = vector.load %arg30[%c0_280, %c384_281] : memref<16x1152xf32, #tpu.memory_space<vmem>>, vector<16x128xf32>
    tpu.vector_store %arg30[%c0_280, %c384_281], %219 {strides = array<i32>} : memref<16x1152xf32, #tpu.memory_space<vmem>>, vector<16x128xf32>,
    %c1_282 = arith.constant 1 : index
    %c1_283 = arith.constant 1 : index
    %c0_284 = arith.constant 0 : index
    %221 = vector.load %arg23[%c1_282, %c1_283, %c0_284] : memref<6x6x128xf32, #tpu.memory_space<vmem>>, vector<4x4x128xf32>
    %222 = vector.shape_cast %221 : vector<4x4x128xf32> to vector<16x128xf32>
    %c0_285 = arith.constant 0 : index
    %c512_286 = arith.constant 512 : index
    %223 = vector.load %arg30[%c0_285, %c512_286] : memref<16x1152xf32, #tpu.memory_space<vmem>>, vector<16x128xf32>
    tpu.vector_store %arg30[%c0_285, %c512_286], %222 {strides = array<i32>} : memref<16x1152xf32, #tpu.memory_space<vmem>>, vector<16x128xf32>,
    %c1_287 = arith.constant 1 : index
    %c2_288 = arith.constant 2 : index
    %c0_289 = arith.constant 0 : index
    %224 = vector.load %arg23[%c1_287, %c2_288, %c0_289] : memref<6x6x128xf32, #tpu.memory_space<vmem>>, vector<4x4x128xf32>
    %225 = vector.shape_cast %224 : vector<4x4x128xf32> to vector<16x128xf32>
    %c0_290 = arith.constant 0 : index
    %c640 = arith.constant 640 : index
    %226 = vector.load %arg30[%c0_290, %c640] : memref<16x1152xf32, #tpu.memory_space<vmem>>, vector<16x128xf32>
    tpu.vector_store %arg30[%c0_290, %c640], %225 {strides = array<i32>} : memref<16x1152xf32, #tpu.memory_space<vmem>>, vector<16x128xf32>,
    %c2_291 = arith.constant 2 : index
    %c0_292 = arith.constant 0 : index
    %c0_293 = arith.constant 0 : index
    %227 = vector.load %arg23[%c2_291, %c0_292, %c0_293] : memref<6x6x128xf32, #tpu.memory_space<vmem>>, vector<4x4x128xf32>
    %228 = vector.shape_cast %227 : vector<4x4x128xf32> to vector<16x128xf32>
    %c0_294 = arith.constant 0 : index
    %c768 = arith.constant 768 : index
    %229 = vector.load %arg30[%c0_294, %c768] : memref<16x1152xf32, #tpu.memory_space<vmem>>, vector<16x128xf32>
    tpu.vector_store %arg30[%c0_294, %c768], %228 {strides = array<i32>} : memref<16x1152xf32, #tpu.memory_space<vmem>>, vector<16x128xf32>,
    %c2_295 = arith.constant 2 : index
    %c1_296 = arith.constant 1 : index
    %c0_297 = arith.constant 0 : index
    %230 = vector.load %arg23[%c2_295, %c1_296, %c0_297] : memref<6x6x128xf32, #tpu.memory_space<vmem>>, vector<4x4x128xf32>
    %231 = vector.shape_cast %230 : vector<4x4x128xf32> to vector<16x128xf32>
    %c0_298 = arith.constant 0 : index
    %c896 = arith.constant 896 : index
    %232 = vector.load %arg30[%c0_298, %c896] : memref<16x1152xf32, #tpu.memory_space<vmem>>, vector<16x128xf32>
    tpu.vector_store %arg30[%c0_298, %c896], %231 {strides = array<i32>} : memref<16x1152xf32, #tpu.memory_space<vmem>>, vector<16x128xf32>,
    %c2_299 = arith.constant 2 : index
    %c2_300 = arith.constant 2 : index
    %c0_301 = arith.constant 0 : index
    %233 = vector.load %arg23[%c2_299, %c2_300, %c0_301] : memref<6x6x128xf32, #tpu.memory_space<vmem>>, vector<4x4x128xf32>
    %234 = vector.shape_cast %233 : vector<4x4x128xf32> to vector<16x128xf32>
    %c0_302 = arith.constant 0 : index
    %c1024 = arith.constant 1024 : index
    %235 = vector.load %arg30[%c0_302, %c1024] : memref<16x1152xf32, #tpu.memory_space<vmem>>, vector<16x128xf32>
    tpu.vector_store %arg30[%c0_302, %c1024], %234 {strides = array<i32>} : memref<16x1152xf32, #tpu.memory_space<vmem>>, vector<16x128xf32>,
    %c0_303 = arith.constant 0 : index
    %c0_304 = arith.constant 0 : index
    %236 = vector.load %arg30[%c0_303, %c0_304] : memref<16x1152xf32, #tpu.memory_space<vmem>>, vector<16x1152xf32>
    %c0_305 = arith.constant 0 : index
    %c0_306 = arith.constant 0 : index
    %237 = vector.load %arg12[%c0_305, %c0_306] : memref<1152x128xf32, #tpu.memory_space<vmem>>, vector<1152x128xf32>
    %cst_307 = arith.constant dense<0.000000e+00> : vector<16x128xf32>
    %238 = tpu.matmul %236, %237, %cst_307 {dimension_numbers = #tpu.dot_dimension_numbers<[1], [0], [0], [1], [0, 0, 1, 1], [], []>} : vector<16x1152xf32>, vector<1152x128xf32>, vector<16x128xf32> -> vector<16x128xf32>
    %c0_308 = arith.constant 0 : index
    %c0_309 = arith.constant 0 : index
    %239 = vector.load %arg13[%c0_308, %c0_309] : memref<3x128xf32, #tpu.memory_space<vmem>>, vector<1x128xf32>
    %c1_310 = arith.constant 1 : index
    %c0_311 = arith.constant 0 : index
    %240 = vector.load %arg13[%c1_310, %c0_311] : memref<3x128xf32, #tpu.memory_space<vmem>>, vector<1x128xf32>
    %c2_312 = arith.constant 2 : index
    %c0_313 = arith.constant 0 : index
    %241 = vector.load %arg13[%c2_312, %c0_313] : memref<3x128xf32, #tpu.memory_space<vmem>>, vector<1x128xf32>
    %242 = vector.broadcast %239 : vector<1x128xf32> to vector<16x128xf32>
    %243 = arith.addf %238, %242 : vector<16x128xf32>
    %cst_314 = arith.constant 0.000000e+00 : f32
    %244 = vector.broadcast %cst_314 : f32 to vector<16x128xf32>
    %245 = arith.maximumf %243, %244 : vector<16x128xf32>
    %246 = vector.broadcast %240 : vector<1x128xf32> to vector<16x128xf32>
    %247 = arith.mulf %245, %246 : vector<16x128xf32>
    %248 = vector.broadcast %241 : vector<1x128xf32> to vector<16x128xf32>
    %249 = arith.addf %247, %248 : vector<16x128xf32>
    %250 = vector.shape_cast %249 : vector<16x128xf32> to vector<8x2x128xf32>
    %cst_315 = arith.constant dense<0xFF800000> : vector<8x128xf32>
    %251 = vector.multi_reduction <maximumf>, %250, %cst_315 [1] : vector<8x2x128xf32> to vector<8x128xf32>
    %252 = vector.shape_cast %251 : vector<8x128xf32> to vector<2x4x128xf32>
    %253 = vector.extract_strided_slice %252 {offsets = [0, 0, 0], sizes = [2, 2, 128], strides = [1, 1, 1]} : vector<2x4x128xf32> to vector<2x2x128xf32>
    %254 = vector.extract_strided_slice %252 {offsets = [0, 2, 0], sizes = [2, 2, 128], strides = [1, 1, 1]} : vector<2x4x128xf32> to vector<2x2x128xf32>
    %255 = arith.maximumf %253, %254 : vector<2x2x128xf32>
    %cst_316 = arith.constant 0.000000e+00 : f32
    %256 = vector.broadcast %cst_316 : f32 to vector<4x4x128xf32>
    %c0_317 = arith.constant 0 : index
    %c0_318 = arith.constant 0 : index
    %c0_319 = arith.constant 0 : index
    %257 = vector.load %arg24[%c0_317, %c0_318, %c0_319] : memref<4x4x128xf32, #tpu.memory_space<vmem>>, vector<4x4x128xf32>
    tpu.vector_store %arg24[%c0_317, %c0_318, %c0_319], %256 {strides = array<i32>} : memref<4x4x128xf32, #tpu.memory_space<vmem>>, vector<4x4x128xf32>,
    %c1_320 = arith.constant 1 : index
    %c1_321 = arith.constant 1 : index
    %c0_322 = arith.constant 0 : index
    %258 = vector.load %arg24[%c1_320, %c1_321, %c0_322] : memref<4x4x128xf32, #tpu.memory_space<vmem>>, vector<2x2x128xf32>
    tpu.vector_store %arg24[%c1_320, %c1_321, %c0_322], %255 {strides = array<i32>} : memref<4x4x128xf32, #tpu.memory_space<vmem>>, vector<2x2x128xf32>,
    %c0_323 = arith.constant 0 : index
    %c0_324 = arith.constant 0 : index
    %c0_325 = arith.constant 0 : index
    %259 = vector.load %arg24[%c0_323, %c0_324, %c0_325] : memref<4x4x128xf32, #tpu.memory_space<vmem>>, vector<2x2x128xf32>
    %260 = vector.shape_cast %259 : vector<2x2x128xf32> to vector<4x128xf32>
    %c0_326 = arith.constant 0 : index
    %c0_327 = arith.constant 0 : index
    %261 = vector.load %arg31[%c0_326, %c0_327] : memref<4x1152xf32, #tpu.memory_space<vmem>>, vector<4x128xf32>
    tpu.vector_store %arg31[%c0_326, %c0_327], %260 {strides = array<i32>} : memref<4x1152xf32, #tpu.memory_space<vmem>>, vector<4x128xf32>,
    %c0_328 = arith.constant 0 : index
    %c1_329 = arith.constant 1 : index
    %c0_330 = arith.constant 0 : index
    %262 = vector.load %arg24[%c0_328, %c1_329, %c0_330] : memref<4x4x128xf32, #tpu.memory_space<vmem>>, vector<2x2x128xf32>
    %263 = vector.shape_cast %262 : vector<2x2x128xf32> to vector<4x128xf32>
    %c0_331 = arith.constant 0 : index
    %c128_332 = arith.constant 128 : index
    %264 = vector.load %arg31[%c0_331, %c128_332] : memref<4x1152xf32, #tpu.memory_space<vmem>>, vector<4x128xf32>
    tpu.vector_store %arg31[%c0_331, %c128_332], %263 {strides = array<i32>} : memref<4x1152xf32, #tpu.memory_space<vmem>>, vector<4x128xf32>,
    %c0_333 = arith.constant 0 : index
    %c2_334 = arith.constant 2 : index
    %c0_335 = arith.constant 0 : index
    %265 = vector.load %arg24[%c0_333, %c2_334, %c0_335] : memref<4x4x128xf32, #tpu.memory_space<vmem>>, vector<2x2x128xf32>
    %266 = vector.shape_cast %265 : vector<2x2x128xf32> to vector<4x128xf32>
    %c0_336 = arith.constant 0 : index
    %c256_337 = arith.constant 256 : index
    %267 = vector.load %arg31[%c0_336, %c256_337] : memref<4x1152xf32, #tpu.memory_space<vmem>>, vector<4x128xf32>
    tpu.vector_store %arg31[%c0_336, %c256_337], %266 {strides = array<i32>} : memref<4x1152xf32, #tpu.memory_space<vmem>>, vector<4x128xf32>,
    %c1_338 = arith.constant 1 : index
    %c0_339 = arith.constant 0 : index
    %c0_340 = arith.constant 0 : index
    %268 = vector.load %arg24[%c1_338, %c0_339, %c0_340] : memref<4x4x128xf32, #tpu.memory_space<vmem>>, vector<2x2x128xf32>
    %269 = vector.shape_cast %268 : vector<2x2x128xf32> to vector<4x128xf32>
    %c0_341 = arith.constant 0 : index
    %c384_342 = arith.constant 384 : index
    %270 = vector.load %arg31[%c0_341, %c384_342] : memref<4x1152xf32, #tpu.memory_space<vmem>>, vector<4x128xf32>
    tpu.vector_store %arg31[%c0_341, %c384_342], %269 {strides = array<i32>} : memref<4x1152xf32, #tpu.memory_space<vmem>>, vector<4x128xf32>,
    %c1_343 = arith.constant 1 : index
    %c1_344 = arith.constant 1 : index
    %c0_345 = arith.constant 0 : index
    %271 = vector.load %arg24[%c1_343, %c1_344, %c0_345] : memref<4x4x128xf32, #tpu.memory_space<vmem>>, vector<2x2x128xf32>
    %272 = vector.shape_cast %271 : vector<2x2x128xf32> to vector<4x128xf32>
    %c0_346 = arith.constant 0 : index
    %c512_347 = arith.constant 512 : index
    %273 = vector.load %arg31[%c0_346, %c512_347] : memref<4x1152xf32, #tpu.memory_space<vmem>>, vector<4x128xf32>
    tpu.vector_store %arg31[%c0_346, %c512_347], %272 {strides = array<i32>} : memref<4x1152xf32, #tpu.memory_space<vmem>>, vector<4x128xf32>,
    %c1_348 = arith.constant 1 : index
    %c2_349 = arith.constant 2 : index
    %c0_350 = arith.constant 0 : index
    %274 = vector.load %arg24[%c1_348, %c2_349, %c0_350] : memref<4x4x128xf32, #tpu.memory_space<vmem>>, vector<2x2x128xf32>
    %275 = vector.shape_cast %274 : vector<2x2x128xf32> to vector<4x128xf32>
    %c0_351 = arith.constant 0 : index
    %c640_352 = arith.constant 640 : index
    %276 = vector.load %arg31[%c0_351, %c640_352] : memref<4x1152xf32, #tpu.memory_space<vmem>>, vector<4x128xf32>
    tpu.vector_store %arg31[%c0_351, %c640_352], %275 {strides = array<i32>} : memref<4x1152xf32, #tpu.memory_space<vmem>>, vector<4x128xf32>,
    %c2_353 = arith.constant 2 : index
    %c0_354 = arith.constant 0 : index
    %c0_355 = arith.constant 0 : index
    %277 = vector.load %arg24[%c2_353, %c0_354, %c0_355] : memref<4x4x128xf32, #tpu.memory_space<vmem>>, vector<2x2x128xf32>
    %278 = vector.shape_cast %277 : vector<2x2x128xf32> to vector<4x128xf32>
    %c0_356 = arith.constant 0 : index
    %c768_357 = arith.constant 768 : index
    %279 = vector.load %arg31[%c0_356, %c768_357] : memref<4x1152xf32, #tpu.memory_space<vmem>>, vector<4x128xf32>
    tpu.vector_store %arg31[%c0_356, %c768_357], %278 {strides = array<i32>} : memref<4x1152xf32, #tpu.memory_space<vmem>>, vector<4x128xf32>,
    %c2_358 = arith.constant 2 : index
    %c1_359 = arith.constant 1 : index
    %c0_360 = arith.constant 0 : index
    %280 = vector.load %arg24[%c2_358, %c1_359, %c0_360] : memref<4x4x128xf32, #tpu.memory_space<vmem>>, vector<2x2x128xf32>
    %281 = vector.shape_cast %280 : vector<2x2x128xf32> to vector<4x128xf32>
    %c0_361 = arith.constant 0 : index
    %c896_362 = arith.constant 896 : index
    %282 = vector.load %arg31[%c0_361, %c896_362] : memref<4x1152xf32, #tpu.memory_space<vmem>>, vector<4x128xf32>
    tpu.vector_store %arg31[%c0_361, %c896_362], %281 {strides = array<i32>} : memref<4x1152xf32, #tpu.memory_space<vmem>>, vector<4x128xf32>,
    %c2_363 = arith.constant 2 : index
    %c2_364 = arith.constant 2 : index
    %c0_365 = arith.constant 0 : index
    %283 = vector.load %arg24[%c2_363, %c2_364, %c0_365] : memref<4x4x128xf32, #tpu.memory_space<vmem>>, vector<2x2x128xf32>
    %284 = vector.shape_cast %283 : vector<2x2x128xf32> to vector<4x128xf32>
    %c0_366 = arith.constant 0 : index
    %c1024_367 = arith.constant 1024 : index
    %285 = vector.load %arg31[%c0_366, %c1024_367] : memref<4x1152xf32, #tpu.memory_space<vmem>>, vector<4x128xf32>
    tpu.vector_store %arg31[%c0_366, %c1024_367], %284 {strides = array<i32>} : memref<4x1152xf32, #tpu.memory_space<vmem>>, vector<4x128xf32>,
    %c0_368 = arith.constant 0 : index
    %c0_369 = arith.constant 0 : index
    %286 = vector.load %arg31[%c0_368, %c0_369] : memref<4x1152xf32, #tpu.memory_space<vmem>>, vector<4x1152xf32>
    %c0_370 = arith.constant 0 : index
    %c0_371 = arith.constant 0 : index
    %287 = vector.load %arg14[%c0_370, %c0_371] : memref<1152x128xf32, #tpu.memory_space<vmem>>, vector<1152x128xf32>
    %cst_372 = arith.constant dense<0.000000e+00> : vector<4x128xf32>
    %288 = tpu.matmul %286, %287, %cst_372 {dimension_numbers = #tpu.dot_dimension_numbers<[1], [0], [0], [1], [0, 0, 1, 1], [], []>} : vector<4x1152xf32>, vector<1152x128xf32>, vector<4x128xf32> -> vector<4x128xf32>
    %c0_373 = arith.constant 0 : index
    %c0_374 = arith.constant 0 : index
    %289 = vector.load %arg15[%c0_373, %c0_374] : memref<3x128xf32, #tpu.memory_space<vmem>>, vector<1x128xf32>
    %c1_375 = arith.constant 1 : index
    %c0_376 = arith.constant 0 : index
    %290 = vector.load %arg15[%c1_375, %c0_376] : memref<3x128xf32, #tpu.memory_space<vmem>>, vector<1x128xf32>
    %c2_377 = arith.constant 2 : index
    %c0_378 = arith.constant 0 : index
    %291 = vector.load %arg15[%c2_377, %c0_378] : memref<3x128xf32, #tpu.memory_space<vmem>>, vector<1x128xf32>
    %292 = vector.broadcast %289 : vector<1x128xf32> to vector<4x128xf32>
    %293 = arith.addf %288, %292 : vector<4x128xf32>
    %cst_379 = arith.constant 0.000000e+00 : f32
    %294 = vector.broadcast %cst_379 : f32 to vector<4x128xf32>
    %295 = arith.maximumf %293, %294 : vector<4x128xf32>
    %296 = vector.broadcast %290 : vector<1x128xf32> to vector<4x128xf32>
    %297 = arith.mulf %295, %296 : vector<4x128xf32>
    %298 = vector.broadcast %291 : vector<1x128xf32> to vector<4x128xf32>
    %299 = arith.addf %297, %298 : vector<4x128xf32>
    %300 = vector.shape_cast %299 : vector<4x128xf32> to vector<2x2x128xf32>
    %cst_380 = arith.constant 0.000000e+00 : f32
    %301 = vector.broadcast %cst_380 : f32 to vector<4x4x128xf32>
    %c0_381 = arith.constant 0 : index
    %c0_382 = arith.constant 0 : index
    %c0_383 = arith.constant 0 : index
    %302 = vector.load %arg25[%c0_381, %c0_382, %c0_383] : memref<4x4x128xf32, #tpu.memory_space<vmem>>, vector<4x4x128xf32>
    tpu.vector_store %arg25[%c0_381, %c0_382, %c0_383], %301 {strides = array<i32>} : memref<4x4x128xf32, #tpu.memory_space<vmem>>, vector<4x4x128xf32>,
    %c1_384 = arith.constant 1 : index
    %c1_385 = arith.constant 1 : index
    %c0_386 = arith.constant 0 : index
    %303 = vector.load %arg25[%c1_384, %c1_385, %c0_386] : memref<4x4x128xf32, #tpu.memory_space<vmem>>, vector<2x2x128xf32>
    tpu.vector_store %arg25[%c1_384, %c1_385, %c0_386], %300 {strides = array<i32>} : memref<4x4x128xf32, #tpu.memory_space<vmem>>, vector<2x2x128xf32>,
    %c0_387 = arith.constant 0 : index
    %c0_388 = arith.constant 0 : index
    %c0_389 = arith.constant 0 : index
    %304 = vector.load %arg25[%c0_387, %c0_388, %c0_389] : memref<4x4x128xf32, #tpu.memory_space<vmem>>, vector<2x2x128xf32>
    %305 = vector.shape_cast %304 : vector<2x2x128xf32> to vector<4x128xf32>
    %c0_390 = arith.constant 0 : index
    %c0_391 = arith.constant 0 : index
    %306 = vector.load %arg32[%c0_390, %c0_391] : memref<4x1152xf32, #tpu.memory_space<vmem>>, vector<4x128xf32>
    tpu.vector_store %arg32[%c0_390, %c0_391], %305 {strides = array<i32>} : memref<4x1152xf32, #tpu.memory_space<vmem>>, vector<4x128xf32>,
    %c0_392 = arith.constant 0 : index
    %c1_393 = arith.constant 1 : index
    %c0_394 = arith.constant 0 : index
    %307 = vector.load %arg25[%c0_392, %c1_393, %c0_394] : memref<4x4x128xf32, #tpu.memory_space<vmem>>, vector<2x2x128xf32>
    %308 = vector.shape_cast %307 : vector<2x2x128xf32> to vector<4x128xf32>
    %c0_395 = arith.constant 0 : index
    %c128_396 = arith.constant 128 : index
    %309 = vector.load %arg32[%c0_395, %c128_396] : memref<4x1152xf32, #tpu.memory_space<vmem>>, vector<4x128xf32>
    tpu.vector_store %arg32[%c0_395, %c128_396], %308 {strides = array<i32>} : memref<4x1152xf32, #tpu.memory_space<vmem>>, vector<4x128xf32>,
    %c0_397 = arith.constant 0 : index
    %c2_398 = arith.constant 2 : index
    %c0_399 = arith.constant 0 : index
    %310 = vector.load %arg25[%c0_397, %c2_398, %c0_399] : memref<4x4x128xf32, #tpu.memory_space<vmem>>, vector<2x2x128xf32>
    %311 = vector.shape_cast %310 : vector<2x2x128xf32> to vector<4x128xf32>
    %c0_400 = arith.constant 0 : index
    %c256_401 = arith.constant 256 : index
    %312 = vector.load %arg32[%c0_400, %c256_401] : memref<4x1152xf32, #tpu.memory_space<vmem>>, vector<4x128xf32>
    tpu.vector_store %arg32[%c0_400, %c256_401], %311 {strides = array<i32>} : memref<4x1152xf32, #tpu.memory_space<vmem>>, vector<4x128xf32>,
    %c1_402 = arith.constant 1 : index
    %c0_403 = arith.constant 0 : index
    %c0_404 = arith.constant 0 : index
    %313 = vector.load %arg25[%c1_402, %c0_403, %c0_404] : memref<4x4x128xf32, #tpu.memory_space<vmem>>, vector<2x2x128xf32>
    %314 = vector.shape_cast %313 : vector<2x2x128xf32> to vector<4x128xf32>
    %c0_405 = arith.constant 0 : index
    %c384_406 = arith.constant 384 : index
    %315 = vector.load %arg32[%c0_405, %c384_406] : memref<4x1152xf32, #tpu.memory_space<vmem>>, vector<4x128xf32>
    tpu.vector_store %arg32[%c0_405, %c384_406], %314 {strides = array<i32>} : memref<4x1152xf32, #tpu.memory_space<vmem>>, vector<4x128xf32>,
    %c1_407 = arith.constant 1 : index
    %c1_408 = arith.constant 1 : index
    %c0_409 = arith.constant 0 : index
    %316 = vector.load %arg25[%c1_407, %c1_408, %c0_409] : memref<4x4x128xf32, #tpu.memory_space<vmem>>, vector<2x2x128xf32>
    %317 = vector.shape_cast %316 : vector<2x2x128xf32> to vector<4x128xf32>
    %c0_410 = arith.constant 0 : index
    %c512_411 = arith.constant 512 : index
    %318 = vector.load %arg32[%c0_410, %c512_411] : memref<4x1152xf32, #tpu.memory_space<vmem>>, vector<4x128xf32>
    tpu.vector_store %arg32[%c0_410, %c512_411], %317 {strides = array<i32>} : memref<4x1152xf32, #tpu.memory_space<vmem>>, vector<4x128xf32>,
    %c1_412 = arith.constant 1 : index
    %c2_413 = arith.constant 2 : index
    %c0_414 = arith.constant 0 : index
    %319 = vector.load %arg25[%c1_412, %c2_413, %c0_414] : memref<4x4x128xf32, #tpu.memory_space<vmem>>, vector<2x2x128xf32>
    %320 = vector.shape_cast %319 : vector<2x2x128xf32> to vector<4x128xf32>
    %c0_415 = arith.constant 0 : index
    %c640_416 = arith.constant 640 : index
    %321 = vector.load %arg32[%c0_415, %c640_416] : memref<4x1152xf32, #tpu.memory_space<vmem>>, vector<4x128xf32>
    tpu.vector_store %arg32[%c0_415, %c640_416], %320 {strides = array<i32>} : memref<4x1152xf32, #tpu.memory_space<vmem>>, vector<4x128xf32>,
    %c2_417 = arith.constant 2 : index
    %c0_418 = arith.constant 0 : index
    %c0_419 = arith.constant 0 : index
    %322 = vector.load %arg25[%c2_417, %c0_418, %c0_419] : memref<4x4x128xf32, #tpu.memory_space<vmem>>, vector<2x2x128xf32>
    %323 = vector.shape_cast %322 : vector<2x2x128xf32> to vector<4x128xf32>
    %c0_420 = arith.constant 0 : index
    %c768_421 = arith.constant 768 : index
    %324 = vector.load %arg32[%c0_420, %c768_421] : memref<4x1152xf32, #tpu.memory_space<vmem>>, vector<4x128xf32>
    tpu.vector_store %arg32[%c0_420, %c768_421], %323 {strides = array<i32>} : memref<4x1152xf32, #tpu.memory_space<vmem>>, vector<4x128xf32>,
    %c2_422 = arith.constant 2 : index
    %c1_423 = arith.constant 1 : index
    %c0_424 = arith.constant 0 : index
    %325 = vector.load %arg25[%c2_422, %c1_423, %c0_424] : memref<4x4x128xf32, #tpu.memory_space<vmem>>, vector<2x2x128xf32>
    %326 = vector.shape_cast %325 : vector<2x2x128xf32> to vector<4x128xf32>
    %c0_425 = arith.constant 0 : index
    %c896_426 = arith.constant 896 : index
    %327 = vector.load %arg32[%c0_425, %c896_426] : memref<4x1152xf32, #tpu.memory_space<vmem>>, vector<4x128xf32>
    tpu.vector_store %arg32[%c0_425, %c896_426], %326 {strides = array<i32>} : memref<4x1152xf32, #tpu.memory_space<vmem>>, vector<4x128xf32>,
    %c2_427 = arith.constant 2 : index
    %c2_428 = arith.constant 2 : index
    %c0_429 = arith.constant 0 : index
    %328 = vector.load %arg25[%c2_427, %c2_428, %c0_429] : memref<4x4x128xf32, #tpu.memory_space<vmem>>, vector<2x2x128xf32>
    %329 = vector.shape_cast %328 : vector<2x2x128xf32> to vector<4x128xf32>
    %c0_430 = arith.constant 0 : index
    %c1024_431 = arith.constant 1024 : index
    %330 = vector.load %arg32[%c0_430, %c1024_431] : memref<4x1152xf32, #tpu.memory_space<vmem>>, vector<4x128xf32>
    tpu.vector_store %arg32[%c0_430, %c1024_431], %329 {strides = array<i32>} : memref<4x1152xf32, #tpu.memory_space<vmem>>, vector<4x128xf32>,
    %c0_432 = arith.constant 0 : index
    %c0_433 = arith.constant 0 : index
    %331 = vector.load %arg32[%c0_432, %c0_433] : memref<4x1152xf32, #tpu.memory_space<vmem>>, vector<4x1152xf32>
    %c0_434 = arith.constant 0 : index
    %c0_435 = arith.constant 0 : index
    %332 = vector.load %arg16[%c0_434, %c0_435] : memref<1152x128xf32, #tpu.memory_space<vmem>>, vector<1152x128xf32>
    %cst_436 = arith.constant dense<0.000000e+00> : vector<4x128xf32>
    %333 = tpu.matmul %331, %332, %cst_436 {dimension_numbers = #tpu.dot_dimension_numbers<[1], [0], [0], [1], [0, 0, 1, 1], [], []>} : vector<4x1152xf32>, vector<1152x128xf32>, vector<4x128xf32> -> vector<4x128xf32>
    %c0_437 = arith.constant 0 : index
    %c0_438 = arith.constant 0 : index
    %334 = vector.load %arg17[%c0_437, %c0_438] : memref<3x128xf32, #tpu.memory_space<vmem>>, vector<1x128xf32>
    %c1_439 = arith.constant 1 : index
    %c0_440 = arith.constant 0 : index
    %335 = vector.load %arg17[%c1_439, %c0_440] : memref<3x128xf32, #tpu.memory_space<vmem>>, vector<1x128xf32>
    %c2_441 = arith.constant 2 : index
    %c0_442 = arith.constant 0 : index
    %336 = vector.load %arg17[%c2_441, %c0_442] : memref<3x128xf32, #tpu.memory_space<vmem>>, vector<1x128xf32>
    %337 = vector.broadcast %334 : vector<1x128xf32> to vector<4x128xf32>
    %338 = arith.addf %333, %337 : vector<4x128xf32>
    %cst_443 = arith.constant 0.000000e+00 : f32
    %339 = vector.broadcast %cst_443 : f32 to vector<4x128xf32>
    %340 = arith.maximumf %338, %339 : vector<4x128xf32>
    %341 = vector.broadcast %335 : vector<1x128xf32> to vector<4x128xf32>
    %342 = arith.mulf %340, %341 : vector<4x128xf32>
    %343 = vector.broadcast %336 : vector<1x128xf32> to vector<4x128xf32>
    %344 = arith.addf %342, %343 : vector<4x128xf32>
    %345 = vector.shape_cast %344 : vector<4x128xf32> to vector<2x2x128xf32>
    %346 = vector.shape_cast %345 : vector<2x2x128xf32> to vector<4x128xf32>
    %c0_444 = arith.constant 0 : index
    %c0_445 = arith.constant 0 : index
    %c0_446 = arith.constant 0 : index
    %347 = vector.load %arg18[%c0_444, %c0_445, %c0_446] : memref<1x4x128xf32, #tpu.memory_space<vmem>>, vector<1x4x128xf32>
    %348 = vector.shape_cast %347 : vector<1x4x128xf32> to vector<4x128xf32>
    %349 = vector.shape_cast %346 : vector<4x128xf32> to vector<1x4x128xf32>
    tpu.vector_store %arg18[%c0_444, %c0_445, %c0_446], %349 {strides = array<i32>} : memref<1x4x128xf32, #tpu.memory_space<vmem>>, vector<1x4x128xf32>,
    return
  }
  func.func @transform_0(%arg0: i32) -> (i32, i32, i32) {
    %c0_i32 = arith.constant 0 : i32
    %c0_i32_0 = arith.constant 0 : i32
    %c0_i32_1 = arith.constant 0 : i32
    return %arg0, %c0_i32, %c0_i32_0 : i32, i32, i32
  }
  func.func @transform_1(%arg0: i32) -> (i32, i32) {
    %c0_i32 = arith.constant 0 : i32
    %c0_i32_0 = arith.constant 0 : i32
    %c0_i32_1 = arith.constant 0 : i32
    return %c0_i32, %c0_i32_0 : i32, i32
  }
  func.func @transform_2(%arg0: i32) -> (i32, i32) {
    %c0_i32 = arith.constant 0 : i32
    %c0_i32_0 = arith.constant 0 : i32
    %c0_i32_1 = arith.constant 0 : i32
    return %c0_i32, %c0_i32_0 : i32, i32
  }
  func.func @transform_3(%arg0: i32) -> (i32, i32) {
    %c0_i32 = arith.constant 0 : i32
    %c0_i32_0 = arith.constant 0 : i32
    %c0_i32_1 = arith.constant 0 : i32
    return %c0_i32, %c0_i32_0 : i32, i32
  }
  func.func @transform_4(%arg0: i32) -> (i32, i32) {
    %c0_i32 = arith.constant 0 : i32
    %c0_i32_0 = arith.constant 0 : i32
    %c0_i32_1 = arith.constant 0 : i32
    return %c0_i32, %c0_i32_0 : i32, i32
  }
  func.func @transform_5(%arg0: i32) -> (i32, i32) {
    %c0_i32 = arith.constant 0 : i32
    %c0_i32_0 = arith.constant 0 : i32
    %c0_i32_1 = arith.constant 0 : i32
    return %c0_i32, %c0_i32_0 : i32, i32
  }
  func.func @transform_6(%arg0: i32) -> (i32, i32) {
    %c0_i32 = arith.constant 0 : i32
    %c0_i32_0 = arith.constant 0 : i32
    %c0_i32_1 = arith.constant 0 : i32
    return %c0_i32, %c0_i32_0 : i32, i32
  }
  func.func @transform_7(%arg0: i32) -> (i32, i32) {
    %c0_i32 = arith.constant 0 : i32
    %c0_i32_0 = arith.constant 0 : i32
    %c0_i32_1 = arith.constant 0 : i32
    return %c0_i32, %c0_i32_0 : i32, i32
  }
  func.func @transform_8(%arg0: i32) -> (i32, i32) {
    %c0_i32 = arith.constant 0 : i32
    %c0_i32_0 = arith.constant 0 : i32
    %c0_i32_1 = arith.constant 0 : i32
    return %c0_i32, %c0_i32_0 : i32, i32
  }
  func.func @transform_9(%arg0: i32) -> (i32, i32) {
    %c0_i32 = arith.constant 0 : i32
    %c0_i32_0 = arith.constant 0 : i32
    %c0_i32_1 = arith.constant 0 : i32
    return %c0_i32, %c0_i32_0 : i32, i32
  }
  func.func @transform_10(%arg0: i32) -> (i32, i32) {
    %c0_i32 = arith.constant 0 : i32
    %c0_i32_0 = arith.constant 0 : i32
    %c0_i32_1 = arith.constant 0 : i32
    return %c0_i32, %c0_i32_0 : i32, i32
  }
  func.func @transform_11(%arg0: i32) -> (i32, i32) {
    %c0_i32 = arith.constant 0 : i32
    %c0_i32_0 = arith.constant 0 : i32
    %c0_i32_1 = arith.constant 0 : i32
    return %c0_i32, %c0_i32_0 : i32, i32
  }
  func.func @transform_12(%arg0: i32) -> (i32, i32) {
    %c0_i32 = arith.constant 0 : i32
    %c0_i32_0 = arith.constant 0 : i32
    %c0_i32_1 = arith.constant 0 : i32
    return %c0_i32, %c0_i32_0 : i32, i32
  }
  func.func @transform_13(%arg0: i32) -> (i32, i32) {
    %c0_i32 = arith.constant 0 : i32
    %c0_i32_0 = arith.constant 0 : i32
    %c0_i32_1 = arith.constant 0 : i32
    return %c0_i32, %c0_i32_0 : i32, i32
  }
  func.func @transform_14(%arg0: i32) -> (i32, i32) {
    %c0_i32 = arith.constant 0 : i32
    %c0_i32_0 = arith.constant 0 : i32
    %c0_i32_1 = arith.constant 0 : i32
    return %c0_i32, %c0_i32_0 : i32, i32
  }
  func.func @transform_15(%arg0: i32) -> (i32, i32) {
    %c0_i32 = arith.constant 0 : i32
    %c0_i32_0 = arith.constant 0 : i32
    %c0_i32_1 = arith.constant 0 : i32
    return %c0_i32, %c0_i32_0 : i32, i32
  }
  func.func @transform_16(%arg0: i32) -> (i32, i32) {
    %c0_i32 = arith.constant 0 : i32
    %c0_i32_0 = arith.constant 0 : i32
    %c0_i32_1 = arith.constant 0 : i32
    return %c0_i32, %c0_i32_0 : i32, i32
  }
  func.func @transform_17(%arg0: i32) -> (i32, i32, i32) {
    %c0_i32 = arith.constant 0 : i32
    %c0_i32_0 = arith.constant 0 : i32
    %c0_i32_1 = arith.constant 0 : i32
    return %arg0, %c0_i32, %c0_i32_0 : i32, i32, i32
  }
}

</mosaic_0001>

<llo_original>
// kernel: simple_cnn_forward.1
$region0: #{simple_cnn_forward.1}
  #allocation0 [shape = 'u32[]', space=smem, size = 0x4, offset = 0x4, fixed_abs, tag = 'smem constant byte address 0x4 - core index']
  #allocation1 [shape = 'u32[144,128]{1,0:T(1,128)}', space=vmem, size = 0x12000, scoped, tag = 'internal scratch']
  #allocation2 [shape = 'f32[18,18,32]{2,1,0:T(8,128)}', space=vmem, size = 0x36000, scoped, tag = 'scratch operand']
  #allocation3 [shape = 'f32[10,10,32]{2,1,0:T(8,128)}', space=vmem, size = 0x14000, scoped, tag = 'scratch operand']
  #allocation4 [shape = 'f32[10,10,64]{2,1,0:T(8,128)}', space=vmem, size = 0x14000, scoped, tag = 'scratch operand']
  #allocation5 [shape = 'f32[6,6,64]{2,1,0:T(8,128)}', space=vmem, size = 0x6000, scoped, tag = 'scratch operand']
  #allocation6 [shape = 'f32[6,6,128]{2,1,0:T(8,128)}', space=vmem, size = 0x6000, scoped, tag = 'scratch operand']
  #allocation7 [shape = 'f32[4,4,128]{2,1,0:T(4,128)}', space=vmem, size = 0x2000, scoped, tag = 'scratch operand']
  #allocation8 [shape = 'f32[4,4,128]{2,1,0:T(4,128)}', space=vmem, size = 0x2000, scoped, tag = 'scratch operand']
  #allocation9 [shape = 'f32[256,288]{1,0:T(8,128)}', space=vmem, size = 0x60000, scoped, tag = 'scratch operand']
  #allocation10 [shape = 'f32[64,288]{1,0:T(8,128)}', space=vmem, size = 0x18000, scoped, tag = 'scratch operand']
  #allocation11 [shape = 'f32[64,576]{1,0:T(8,128)}', space=vmem, size = 0x28000, scoped, tag = 'scratch operand']
  #allocation12 [shape = 'f32[16,576]{1,0:T(8,128)}', space=vmem, size = 0xa000, scoped, tag = 'scratch operand']
  #allocation13 [shape = 'f32[16,1152]{1,0:T(8,128)}', space=vmem, size = 0x12000, scoped, tag = 'scratch operand']
  #allocation14 [shape = 'f32[4,1152]{1,0:T(4,128)}', space=vmem, size = 0x4800, scoped, tag = 'scratch operand']
  #allocation15 [shape = 'f32[4,1152]{1,0:T(4,128)}', space=vmem, size = 0x4800, scoped, tag = 'scratch operand']
  %s0 = inlined_call_operand.vmem [shape: f32[2,256,9], index: 0, kind: input, shape index: {}]
  %s1 = inlined_call_operand.vmem [shape: f32[9,32], index: 1, kind: input, shape index: {}]
  %s2 = inlined_call_operand.vmem [shape: f32[3,32], index: 2, kind: input, shape index: {}]
  %s3 = inlined_call_operand.vmem [shape: f32[288,32], index: 3, kind: input, shape index: {}]
  %s4 = inlined_call_operand.vmem [shape: f32[3,32], index: 4, kind: input, shape index: {}]
  %s5 = inlined_call_operand.hbm [shape: f32[288,64], index: 5, kind: input, shape index: {}]
  %s6 = inlined_call_operand.vmem [shape: f32[3,64], index: 6, kind: input, shape index: {}]
  %s7 = inlined_call_operand.hbm [shape: f32[576,64], index: 7, kind: input, shape index: {}]
  %s8 = inlined_call_operand.vmem [shape: f32[3,64], index: 8, kind: input, shape index: {}]
  %s9 = inlined_call_operand.hbm [shape: f32[576,128], index: 9, kind: input, shape index: {}]
  %s10 = inlined_call_operand.vmem [shape: f32[3,128], index: 10, kind: input, shape index: {}]
  %s11 = inlined_call_operand.vmem [shape: f32[1152,128], index: 11, kind: input, shape index: {}]
  %s12 = inlined_call_operand.vmem [shape: f32[3,128], index: 12, kind: input, shape index: {}]
  %s13 = inlined_call_operand.hbm [shape: f32[1152,128], index: 13, kind: input, shape index: {}]
  %s14 = inlined_call_operand.vmem [shape: f32[3,128], index: 14, kind: input, shape index: {}]
  %s15 = inlined_call_operand.hbm [shape: f32[1152,128], index: 15, kind: input, shape index: {}]
  %s16 = inlined_call_operand.vmem [shape: f32[3,128], index: 16, kind: input, shape index: {}]
  %s17 = inlined_call_operand.hbm [shape: f32[2,4,128], index: 17, kind: output, shape index: {}]
  %s18 = sld [smem:[#allocation0]]
  $region121: #{simple_cnn_forward.1} parent=0
    _
  %s20 = ssub.s32 1, %s18
  %s21 = scalar_select 0, %s20, %s18
  $region1: #{simple_cnn_forward.1} parent=0
    #allocation16 [shape = 'u8[147456]{0}', space=vmem, size = 0x24000, scoped, tag = 'input window, operand 5, single buffered']
    #allocation17 [shape = 's32[2]{0}', space=sflag, size = 0x8, scoped, tag = 'scoped memory for simple_cnn_forward.1']
    #allocation18 [shape = 's32[2]{0}', space=sflag, size = 0x8, scoped, tag = 'scoped memory for simple_cnn_forward.1']
    #allocation19 [shape = 'u8[294912]{0}', space=vmem, size = 0x48000, scoped, tag = 'input window, operand 7, single buffered']
    #allocation20 [shape = 's32[1]{0}', space=sflag, size = 0x4, scoped, tag = 'scoped memory for simple_cnn_forward.1']
    #allocation21 [shape = 'u8[294912]{0}', space=vmem, size = 0x48000, scoped, tag = 'input window, operand 9, single buffered']
    #allocation22 [shape = 'u8[589824]{0}', space=vmem, size = 0x90000, scoped, tag = 'input window, operand 13, single buffered']
    #allocation23 [shape = 's32[1]{0}', space=sflag, size = 0x4, scoped, tag = 'scoped memory for simple_cnn_forward.1']
    #allocation24 [shape = 'u8[589824]{0}', space=vmem, size = 0x90000, scoped, tag = 'input window, operand 15, single buffered']
    #allocation25 [shape = 'u8[4096]{0}', space=vmem, size = 0x1000, scoped, tag = 'output window, operand 0']
    %22 = vsyncpa [#allocation17], 0
    %23 = vsyncpa [#allocation20], 0
    %24 = vsyncpa [#allocation23], 0
    %25 = vsyncpa [#allocation18], 0
    %s26 = scalar_lea.sflag [#allocation18], 1
    %27 = vsyncpa %s26, 0
    loop: start=0, step=1, limit=4
    $region2: #{simple_cnn_forward.1} parent=1 // loop_pre_header
      _
    $region3: #{simple_cnn_forward.1} parent=1 // loop_header
      %s29 = sphi 0, %s33
      %p30 = scmp.ge.s32.totalorder %s29, 4
      %s39 = sphi 0, %s41
      %s42 = sphi 0, %s39
      %s43 = sphi 0, %s42
      %s59 = sphi 0, %s43
      %s63 = sphi 0, %s63
      %s65 = sphi 0, %s63
      %s66 = sphi 0, %s65
      %s80 = sphi 0, %s66
      %s84 = sphi 0, %s84
      %s86 = sphi 0, %s84
      %s87 = sphi 0, %s86
      %s101 = sphi 0, %s87
      %s105 = sphi 0, %s105
      %s107 = sphi 0, %s105
      %s108 = sphi 0, %s107
      %s122 = sphi 0, %s108
      %s126 = sphi 0, %s126
      %s128 = sphi 0, %s126
      %s129 = sphi 0, %s128
      %s143 = sphi 0, %s129
      %s147 = sphi 0, %s147
      %s149 = sphi 0, %s147
      %s150 = sphi 0, %s149
      %s164 = sphi 0, %s150
      %s168 = sphi 0, %s168
      %s170 = sphi 0, %s168
      %s171 = sphi 0, %s170
      %s185 = sphi 0, %s171
      %s189 = sphi 0, %s189
      %s191 = sphi 0, %s189
      %s192 = sphi 0, %s191
      %s206 = sphi 0, %s192
      %s210 = sphi 0, %s210
      %s212 = sphi 0, %s210
      %s213 = sphi 0, %s212
      %s227 = sphi 0, %s213
      %s231 = sphi 0, %s231
      %s233 = sphi 0, %s231
      %s234 = sphi 0, %s233
      %s248 = sphi 0, %s234
      %s252 = sphi 0, %s252
      %s254 = sphi 0, %s252
      %s255 = sphi 0, %s254
      %s269 = sphi 0, %s255
      %s273 = sphi 0, %s273
      %s275 = sphi 0, %s273
      %s276 = sphi 0, %s275
      %s290 = sphi 0, %s276
      %s294 = sphi 0, %s294
      %s296 = sphi 0, %s294
      %s297 = sphi 0, %s296
      %s311 = sphi 0, %s297
      %s315 = sphi 0, %s315
      %s317 = sphi 0, %s315
      %s318 = sphi 0, %s317
      %s332 = sphi 0, %s318
      %s336 = sphi 0, %s336
      %s338 = sphi 0, %s336
      %s339 = sphi 0, %s338
      %s353 = sphi 0, %s339
      %s357 = sphi 0, %s357
      %s359 = sphi 0, %s357
      %s360 = sphi 0, %s359
      %s374 = sphi 0, %s360
      %s378 = sphi 0, %s378
      %s380 = sphi 0, %s378
      %s381 = sphi 0, %s380
      %s395 = sphi 0, %s381
      %s401 = sphi 0, %s403
      %s404 = sphi 0, %s401
      %s405 = sphi 0, %s404
      %s421 = sphi 0, %s405
    $region4: #{simple_cnn_forward.1} parent=1 // loop_header_branch
      %32 = sbr.rel (%p30) target = $region8
    $region5: #{simple_cnn_forward.1} parent=1 // loop_body
      %s34 = ssub.s32 %s29, 1
      %s35 = ssub.s32 %s29, 2
      %s36 = sadd.s32 %s29, 1
      %s37 = ssub.s32 %s29, %s36
      %p38 = scmp.eq.s32.totalorder %s37, 0
      %s40 = sadd.s32 %s39, 1
      %s41 = scalar_select %p38, %s39, %s40
      %p44 = pneg %p38
      %p45 = scmp.eq.s32.totalorder %s29, 1
      %p46 = por %p44, %p45
      %p47 = scmp.ne.s32.totalorder %s39, %s42
      %p48 = scmp.eq.s32.totalorder %s29, 0
      %p49 = por %p47, %p48
      %p50 = scmp.ne.s32.totalorder %s39, %s42
      %p51 = scmp.eq.s32.totalorder %s34, 1
      %p52 = por %p50, %p51
      %p53 = scmp.ne.s32.totalorder %s42, %s43
      %p54 = scmp.eq.s32.totalorder %s34, 0
      %p55 = por %p53, %p54
      %p56 = scmp.ne.s32.totalorder %s42, %s43
      %p57 = scmp.eq.s32.totalorder %s35, 1
      %p58 = por %p56, %p57
      %p60 = scmp.ne.s32.totalorder %s43, %s59
      %p61 = scmp.eq.s32.totalorder %s35, 0
      %p62 = por %p60, %p61
      %s64 = sadd.s32 %s63, 1
      %p67 = scmp.eq.s32.totalorder %s29, 1
      %p68 = scmp.ne.s32.totalorder %s63, %s65
      %p69 = scmp.eq.s32.totalorder %s29, 0
      %p70 = por %p68, %p69
      %p71 = scmp.ne.s32.totalorder %s63, %s65
      %p72 = scmp.eq.s32.totalorder %s34, 1
      %p73 = por %p71, %p72
      %p74 = scmp.ne.s32.totalorder %s65, %s66
      %p75 = scmp.eq.s32.totalorder %s34, 0
      %p76 = por %p74, %p75
      %p77 = scmp.ne.s32.totalorder %s65, %s66
      %p78 = scmp.eq.s32.totalorder %s35, 1
      %p79 = por %p77, %p78
      %p81 = scmp.ne.s32.totalorder %s66, %s80
      %p82 = scmp.eq.s32.totalorder %s35, 0
      %p83 = por %p81, %p82
      %s85 = sadd.s32 %s84, 1
      %p88 = scmp.eq.s32.totalorder %s29, 1
      %p89 = scmp.ne.s32.totalorder %s84, %s86
      %p90 = scmp.eq.s32.totalorder %s29, 0
      %p91 = por %p89, %p90
      %p92 = scmp.ne.s32.totalorder %s84, %s86
      %p93 = scmp.eq.s32.totalorder %s34, 1
      %p94 = por %p92, %p93
      %p95 = scmp.ne.s32.totalorder %s86, %s87
      %p96 = scmp.eq.s32.totalorder %s34, 0
      %p97 = por %p95, %p96
      %p98 = scmp.ne.s32.totalorder %s86, %s87
      %p99 = scmp.eq.s32.totalorder %s35, 1
      %p100 = por %p98, %p99
      %p102 = scmp.ne.s32.totalorder %s87, %s101
      %p103 = scmp.eq.s32.totalorder %s35, 0
      %p104 = por %p102, %p103
      %s106 = sadd.s32 %s105, 1
      %p109 = scmp.eq.s32.totalorder %s29, 1
      %p110 = scmp.ne.s32.totalorder %s105, %s107
      %p111 = scmp.eq.s32.totalorder %s29, 0
      %p112 = por %p110, %p111
      %p113 = scmp.ne.s32.totalorder %s105, %s107
      %p114 = scmp.eq.s32.totalorder %s34, 1
      %p115 = por %p113, %p114
      %p116 = scmp.ne.s32.totalorder %s107, %s108
      %p117 = scmp.eq.s32.totalorder %s34, 0
      %p118 = por %p116, %p117
      %p119 = scmp.ne.s32.totalorder %s107, %s108
      %p120 = scmp.eq.s32.totalorder %s35, 1
      %p121 = por %p119, %p120
      %p123 = scmp.ne.s32.totalorder %s108, %s122
      %p124 = scmp.eq.s32.totalorder %s35, 0
      %p125 = por %p123, %p124
      %s127 = sadd.s32 %s126, 1
      %p130 = scmp.eq.s32.totalorder %s29, 1
      %p131 = scmp.ne.s32.totalorder %s126, %s128
      %p132 = scmp.eq.s32.totalorder %s29, 0
      %p133 = por %p131, %p132
      %p134 = scmp.ne.s32.totalorder %s126, %s128
      %p135 = scmp.eq.s32.totalorder %s34, 1
      %p136 = por %p134, %p135
      %p137 = scmp.ne.s32.totalorder %s128, %s129
      %p138 = scmp.eq.s32.totalorder %s34, 0
      %p139 = por %p137, %p138
      %p140 = scmp.ne.s32.totalorder %s128, %s129
      %p141 = scmp.eq.s32.totalorder %s35, 1
      %p142 = por %p140, %p141
      %p144 = scmp.ne.s32.totalorder %s129, %s143
      %p145 = scmp.eq.s32.totalorder %s35, 0
      %p146 = por %p144, %p145
      %s148 = sadd.s32 %s147, 1
      %p151 = scmp.eq.s32.totalorder %s29, 1
      %p152 = scmp.ne.s32.totalorder %s147, %s149
      %p153 = scmp.eq.s32.totalorder %s29, 0
      %p154 = por %p152, %p153
      %p155 = scmp.ne.s32.totalorder %s147, %s149
      %p156 = scmp.eq.s32.totalorder %s34, 1
      %p157 = por %p155, %p156
      %p158 = scmp.ne.s32.totalorder %s149, %s150
      %p159 = scmp.eq.s32.totalorder %s34, 0
      %p160 = por %p158, %p159
      %p161 = scmp.ne.s32.totalorder %s149, %s150
      %p162 = scmp.eq.s32.totalorder %s35, 1
      %p163 = por %p161, %p162
      %p165 = scmp.ne.s32.totalorder %s150, %s164
      %p166 = scmp.eq.s32.totalorder %s35, 0
      %p167 = por %p165, %p166
      %s169 = sadd.s32 %s168, 1
      %p172 = scmp.eq.s32.totalorder %s29, 1
      %p173 = scmp.ne.s32.totalorder %s168, %s170
      %p174 = scmp.eq.s32.totalorder %s29, 0
      %p175 = por %p173, %p174
      %p176 = scmp.ne.s32.totalorder %s168, %s170
      %p177 = scmp.eq.s32.totalorder %s34, 1
      %p178 = por %p176, %p177
      %p179 = scmp.ne.s32.totalorder %s170, %s171
      %p180 = scmp.eq.s32.totalorder %s34, 0
      %p181 = por %p179, %p180
      %p182 = scmp.ne.s32.totalorder %s170, %s171
      %p183 = scmp.eq.s32.totalorder %s35, 1
      %p184 = por %p182, %p183
      %p186 = scmp.ne.s32.totalorder %s171, %s185
      %p187 = scmp.eq.s32.totalorder %s35, 0
      %p188 = por %p186, %p187
      %s190 = sadd.s32 %s189, 1
      %p193 = scmp.eq.s32.totalorder %s29, 1
      %p194 = scmp.ne.s32.totalorder %s189, %s191
      %p195 = scmp.eq.s32.totalorder %s29, 0
      %p196 = por %p194, %p195
      %p197 = scmp.ne.s32.totalorder %s189, %s191
      %p198 = scmp.eq.s32.totalorder %s34, 1
      %p199 = por %p197, %p198
      %p200 = scmp.ne.s32.totalorder %s191, %s192
      %p201 = scmp.eq.s32.totalorder %s34, 0
      %p202 = por %p200, %p201
      %p203 = scmp.ne.s32.totalorder %s191, %s192
      %p204 = scmp.eq.s32.totalorder %s35, 1
      %p205 = por %p203, %p204
      %p207 = scmp.ne.s32.totalorder %s192, %s206
      %p208 = scmp.eq.s32.totalorder %s35, 0
      %p209 = por %p207, %p208
      %s211 = sadd.s32 %s210, 1
      %p214 = scmp.eq.s32.totalorder %s29, 1
      %p215 = scmp.ne.s32.totalorder %s210, %s212
      %p216 = scmp.eq.s32.totalorder %s29, 0
      %p217 = por %p215, %p216
      %p218 = scmp.ne.s32.totalorder %s210, %s212
      %p219 = scmp.eq.s32.totalorder %s34, 1
      %p220 = por %p218, %p219
      %p221 = scmp.ne.s32.totalorder %s212, %s213
      %p222 = scmp.eq.s32.totalorder %s34, 0
      %p223 = por %p221, %p222
      %p224 = scmp.ne.s32.totalorder %s212, %s213
      %p225 = scmp.eq.s32.totalorder %s35, 1
      %p226 = por %p224, %p225
      %p228 = scmp.ne.s32.totalorder %s213, %s227
      %p229 = scmp.eq.s32.totalorder %s35, 0
      %p230 = por %p228, %p229
      %s232 = sadd.s32 %s231, 1
      %p235 = scmp.eq.s32.totalorder %s29, 1
      %p236 = scmp.ne.s32.totalorder %s231, %s233
      %p237 = scmp.eq.s32.totalorder %s29, 0
      %p238 = por %p236, %p237
      %p239 = scmp.ne.s32.totalorder %s231, %s233
      %p240 = scmp.eq.s32.totalorder %s34, 1
      %p241 = por %p239, %p240
      %p242 = scmp.ne.s32.totalorder %s233, %s234
      %p243 = scmp.eq.s32.totalorder %s34, 0
      %p244 = por %p242, %p243
      %p245 = scmp.ne.s32.totalorder %s233, %s234
      %p246 = scmp.eq.s32.totalorder %s35, 1
      %p247 = por %p245, %p246
      %p249 = scmp.ne.s32.totalorder %s234, %s248
      %p250 = scmp.eq.s32.totalorder %s35, 0
      %p251 = por %p249, %p250
      %s253 = sadd.s32 %s252, 1
      %p256 = scmp.eq.s32.totalorder %s29, 1
      %p257 = scmp.ne.s32.totalorder %s252, %s254
      %p258 = scmp.eq.s32.totalorder %s29, 0
      %p259 = por %p257, %p258
      %p260 = scmp.ne.s32.totalorder %s252, %s254
      %p261 = scmp.eq.s32.totalorder %s34, 1
      %p262 = por %p260, %p261
      %p263 = scmp.ne.s32.totalorder %s254, %s255
      %p264 = scmp.eq.s32.totalorder %s34, 0
      %p265 = por %p263, %p264
      %p266 = scmp.ne.s32.totalorder %s254, %s255
      %p267 = scmp.eq.s32.totalorder %s35, 1
      %p268 = por %p266, %p267
      %p270 = scmp.ne.s32.totalorder %s255, %s269
      %p271 = scmp.eq.s32.totalorder %s35, 0
      %p272 = por %p270, %p271
      %s274 = sadd.s32 %s273, 1
      %p277 = scmp.eq.s32.totalorder %s29, 1
      %p278 = scmp.ne.s32.totalorder %s273, %s275
      %p279 = scmp.eq.s32.totalorder %s29, 0
      %p280 = por %p278, %p279
      %p281 = scmp.ne.s32.totalorder %s273, %s275
      %p282 = scmp.eq.s32.totalorder %s34, 1
      %p283 = por %p281, %p282
      %p284 = scmp.ne.s32.totalorder %s275, %s276
      %p285 = scmp.eq.s32.totalorder %s34, 0
      %p286 = por %p284, %p285
      %p287 = scmp.ne.s32.totalorder %s275, %s276
      %p288 = scmp.eq.s32.totalorder %s35, 1
      %p289 = por %p287, %p288
      %p291 = scmp.ne.s32.totalorder %s276, %s290
      %p292 = scmp.eq.s32.totalorder %s35, 0
      %p293 = por %p291, %p292
      %s295 = sadd.s32 %s294, 1
      %p298 = scmp.eq.s32.totalorder %s29, 1
      %p299 = scmp.ne.s32.totalorder %s294, %s296
      %p300 = scmp.eq.s32.totalorder %s29, 0
      %p301 = por %p299, %p300
      %p302 = scmp.ne.s32.totalorder %s294, %s296
      %p303 = scmp.eq.s32.totalorder %s34, 1
      %p304 = por %p302, %p303
      %p305 = scmp.ne.s32.totalorder %s296, %s297
      %p306 = scmp.eq.s32.totalorder %s34, 0
      %p307 = por %p305, %p306
      %p308 = scmp.ne.s32.totalorder %s296, %s297
      %p309 = scmp.eq.s32.totalorder %s35, 1
      %p310 = por %p308, %p309
      %p312 = scmp.ne.s32.totalorder %s297, %s311
      %p313 = scmp.eq.s32.totalorder %s35, 0
      %p314 = por %p312, %p313
      %s316 = sadd.s32 %s315, 1
      %p319 = scmp.eq.s32.totalorder %s29, 1
      %p320 = scmp.ne.s32.totalorder %s315, %s317
      %p321 = scmp.eq.s32.totalorder %s29, 0
      %p322 = por %p320, %p321
      %p323 = scmp.ne.s32.totalorder %s315, %s317
      %p324 = scmp.eq.s32.totalorder %s34, 1
      %p325 = por %p323, %p324
      %p326 = scmp.ne.s32.totalorder %s317, %s318
      %p327 = scmp.eq.s32.totalorder %s34, 0
      %p328 = por %p326, %p327
      %p329 = scmp.ne.s32.totalorder %s317, %s318
      %p330 = scmp.eq.s32.totalorder %s35, 1
      %p331 = por %p329, %p330
      %p333 = scmp.ne.s32.totalorder %s318, %s332
      %p334 = scmp.eq.s32.totalorder %s35, 0
      %p335 = por %p333, %p334
      %s337 = sadd.s32 %s336, 1
      %p340 = scmp.eq.s32.totalorder %s29, 1
      %p341 = scmp.ne.s32.totalorder %s336, %s338
      %p342 = scmp.eq.s32.totalorder %s29, 0
      %p343 = por %p341, %p342
      %p344 = scmp.ne.s32.totalorder %s336, %s338
      %p345 = scmp.eq.s32.totalorder %s34, 1
      %p346 = por %p344, %p345
      %p347 = scmp.ne.s32.totalorder %s338, %s339
      %p348 = scmp.eq.s32.totalorder %s34, 0
      %p349 = por %p347, %p348
      %p350 = scmp.ne.s32.totalorder %s338, %s339
      %p351 = scmp.eq.s32.totalorder %s35, 1
      %p352 = por %p350, %p351
      %p354 = scmp.ne.s32.totalorder %s339, %s353
      %p355 = scmp.eq.s32.totalorder %s35, 0
      %p356 = por %p354, %p355
      %s358 = sadd.s32 %s357, 1
      %p361 = scmp.eq.s32.totalorder %s29, 1
      %p362 = scmp.ne.s32.totalorder %s357, %s359
      %p363 = scmp.eq.s32.totalorder %s29, 0
      %p364 = por %p362, %p363
      %p365 = scmp.ne.s32.totalorder %s357, %s359
      %p366 = scmp.eq.s32.totalorder %s34, 1
      %p367 = por %p365, %p366
      %p368 = scmp.ne.s32.totalorder %s359, %s360
      %p369 = scmp.eq.s32.totalorder %s34, 0
      %p370 = por %p368, %p369
      %p371 = scmp.ne.s32.totalorder %s359, %s360
      %p372 = scmp.eq.s32.totalorder %s35, 1
      %p373 = por %p371, %p372
      %p375 = scmp.ne.s32.totalorder %s360, %s374
      %p376 = scmp.eq.s32.totalorder %s35, 0
      %p377 = por %p375, %p376
      %s379 = sadd.s32 %s378, 1
      %p382 = scmp.eq.s32.totalorder %s29, 1
      %p383 = scmp.ne.s32.totalorder %s378, %s380
      %p384 = scmp.eq.s32.totalorder %s29, 0
      %p385 = por %p383, %p384
      %p386 = scmp.ne.s32.totalorder %s378, %s380
      %p387 = scmp.eq.s32.totalorder %s34, 1
      %p388 = por %p386, %p387
      %p389 = scmp.ne.s32.totalorder %s380, %s381
      %p390 = scmp.eq.s32.totalorder %s34, 0
      %p391 = por %p389, %p390
      %p392 = scmp.ne.s32.totalorder %s380, %s381
      %p393 = scmp.eq.s32.totalorder %s35, 1
      %p394 = por %p392, %p393
      %p396 = scmp.ne.s32.totalorder %s381, %s395
      %p397 = scmp.eq.s32.totalorder %s35, 0
      %p398 = por %p396, %p397
      %s399 = ssub.s32 %s29, %s36
      %p400 = scmp.eq.s32.totalorder %s399, 0
      %s402 = sadd.s32 %s401, 1
      %s403 = scalar_select %p400, %s401, %s402
      %p406 = pneg %p400
      %p407 = scmp.eq.s32.totalorder %s29, 1
      %p408 = por %p406, %p407
      %p409 = scmp.ne.s32.totalorder %s401, %s404
      %p410 = scmp.eq.s32.totalorder %s29, 0
      %p411 = por %p409, %p410
      %p412 = scmp.ne.s32.totalorder %s401, %s404
      %p413 = scmp.eq.s32.totalorder %s34, 1
      %p414 = por %p412, %p413
      %p415 = scmp.ne.s32.totalorder %s404, %s405
      %p416 = scmp.eq.s32.totalorder %s34, 0
      %p417 = por %p415, %p416
      %p418 = scmp.ne.s32.totalorder %s404, %s405
      %p419 = scmp.eq.s32.totalorder %s35, 1
      %p420 = por %p418, %p419
      %p422 = scmp.ne.s32.totalorder %s405, %s421
      %p423 = scmp.eq.s32.totalorder %s35, 0
      %p424 = por %p422, %p423
      %p425 = scmp.le.s32.totalorder 1, %s29
      %p426 = scmp.lt.s32.totalorder %s29, 3
      %p427 = pnand %p425, %p426
      %p428 = pneg %p427
      // Predicated region
      $region9: #{simple_cnn_forward.1} parent=5 // pred_check
        _
      $region10: #{simple_cnn_forward.1} parent=5 // pred_check_branch
        %430 = sbr.rel (%p427) target = $region12
      $region11: #{simple_cnn_forward.1} parent=5 // pred_region
        %s431 = ssub.s32 %s29, 1
        // Predicated region
        $region13: #{simple_cnn_forward.1} parent=11 // pred_check
          %p432 = pneg %p76
        $region14: #{simple_cnn_forward.1} parent=11 // pred_check_branch
          %434 = sbr.rel (%p432) target = $region16
        $region15: #{simple_cnn_forward.1} parent=11 // pred_region
          _
        $region16: #{simple_cnn_forward.1} parent=11 // pred_fallthru
          _
        // Predicated region
        $region17: #{simple_cnn_forward.1} parent=11 // pred_check
          %p435 = pneg %p97
        $region18: #{simple_cnn_forward.1} parent=11 // pred_check_branch
          %437 = sbr.rel (%p435) target = $region20
        $region19: #{simple_cnn_forward.1} parent=11 // pred_region
          _
        $region20: #{simple_cnn_forward.1} parent=11 // pred_fallthru
          _
        // Predicated region
        $region21: #{simple_cnn_forward.1} parent=11 // pred_check
          %p438 = pneg %p118
        $region22: #{simple_cnn_forward.1} parent=11 // pred_check_branch
          %440 = sbr.rel (%p438) target = $region24
        $region23: #{simple_cnn_forward.1} parent=11 // pred_region
          _
        $region24: #{simple_cnn_forward.1} parent=11 // pred_fallthru
          _
        // Predicated region
        $region25: #{simple_cnn_forward.1} parent=11 // pred_check
          %p441 = pneg %p139
        $region26: #{simple_cnn_forward.1} parent=11 // pred_check_branch
          %443 = sbr.rel (%p441) target = $region28
        $region27: #{simple_cnn_forward.1} parent=11 // pred_region
          _
        $region28: #{simple_cnn_forward.1} parent=11 // pred_fallthru
          _
        // Predicated region
        $region29: #{simple_cnn_forward.1} parent=11 // pred_check
          %p444 = pneg %p160
        $region30: #{simple_cnn_forward.1} parent=11 // pred_check_branch
          %446 = sbr.rel (%p444) target = $region32
        $region31: #{simple_cnn_forward.1} parent=11 // pred_region
          %s448 = ssub.s32 4608, 4608
          %449 = vsyncadd [#allocation17], %s448
          %s450 = sshll.u32 [#allocation16], 4
          %s451 = int_to_ptr.vmem [resolvable:$true] %s450
          %456 = dma.hbm_to_vmem [thread:$0]  %s5, 4608, %s451, [#allocation17], 128, 128, 8
        $region32: #{simple_cnn_forward.1} parent=11 // pred_fallthru
          _
        // Predicated region
        $region33: #{simple_cnn_forward.1} parent=11 // pred_check
          %p457 = pneg %p181
        $region34: #{simple_cnn_forward.1} parent=11 // pred_check_branch
          %459 = sbr.rel (%p457) target = $region36
        $region35: #{simple_cnn_forward.1} parent=11 // pred_region
          _
        $region36: #{simple_cnn_forward.1} parent=11 // pred_fallthru
          _
        // Predicated region
        $region37: #{simple_cnn_forward.1} parent=11 // pred_check
          %p460 = pneg %p202
        $region38: #{simple_cnn_forward.1} parent=11 // pred_check_branch
          %462 = sbr.rel (%p460) target = $region40
        $region39: #{simple_cnn_forward.1} parent=11 // pred_region
          %s464 = ssub.s32 9216, 9216
          %465 = vsyncadd [#allocation20], %s464
          %s466 = sshll.u32 [#allocation19], 4
          %s467 = int_to_ptr.vmem [resolvable:$true] %s466
          %472 = dma.hbm_to_vmem [thread:$0]  %s7, 9216, %s467, [#allocation20], 128, 128, 8
        $region40: #{simple_cnn_forward.1} parent=11 // pred_fallthru
          _
        // Predicated region
        $region41: #{simple_cnn_forward.1} parent=11 // pred_check
          %p473 = pneg %p223
        $region42: #{simple_cnn_forward.1} parent=11 // pred_check_branch
          %475 = sbr.rel (%p473) target = $region44
        $region43: #{simple_cnn_forward.1} parent=11 // pred_region
          _
        $region44: #{simple_cnn_forward.1} parent=11 // pred_fallthru
          _
        // Predicated region
        $region45: #{simple_cnn_forward.1} parent=11 // pred_check
          %p476 = pneg %p244
        $region46: #{simple_cnn_forward.1} parent=11 // pred_check_branch
          %478 = sbr.rel (%p476) target = $region48
        $region47: #{simple_cnn_forward.1} parent=11 // pred_region
          %s480 = ssub.s32 9216, 9216
          %481 = vsyncadd [#allocation20], %s480
          %s482 = sshll.u32 [#allocation21], 4
          %s483 = int_to_ptr.vmem [resolvable:$true] %s482
          %488 = dma.hbm_to_vmem [thread:$0]  %s9, 9216, %s483, [#allocation20], 128, 128, 8
        $region48: #{simple_cnn_forward.1} parent=11 // pred_fallthru
          _
        // Predicated region
        $region49: #{simple_cnn_forward.1} parent=11 // pred_check
          %p489 = pneg %p265
        $region50: #{simple_cnn_forward.1} parent=11 // pred_check_branch
          %491 = sbr.rel (%p489) target = $region52
        $region51: #{simple_cnn_forward.1} parent=11 // pred_region
          _
        $region52: #{simple_cnn_forward.1} parent=11 // pred_fallthru
          _
        // Predicated region
        $region53: #{simple_cnn_forward.1} parent=11 // pred_check
          %p492 = pneg %p286
        $region54: #{simple_cnn_forward.1} parent=11 // pred_check_branch
          %494 = sbr.rel (%p492) target = $region56
        $region55: #{simple_cnn_forward.1} parent=11 // pred_region
          _
        $region56: #{simple_cnn_forward.1} parent=11 // pred_fallthru
          _
        // Predicated region
        $region57: #{simple_cnn_forward.1} parent=11 // pred_check
          %p495 = pneg %p307
        $region58: #{simple_cnn_forward.1} parent=11 // pred_check_branch
          %497 = sbr.rel (%p495) target = $region60
        $region59: #{simple_cnn_forward.1} parent=11 // pred_region
          _
        $region60: #{simple_cnn_forward.1} parent=11 // pred_fallthru
          _
        // Predicated region
        $region61: #{simple_cnn_forward.1} parent=11 // pred_check
          %p498 = pneg %p328
        $region62: #{simple_cnn_forward.1} parent=11 // pred_check_branch
          %500 = sbr.rel (%p498) target = $region64
        $region63: #{simple_cnn_forward.1} parent=11 // pred_region
          %s502 = ssub.s32 18432, 18432
          %503 = vsyncadd [#allocation23], %s502
          %s504 = sshll.u32 [#allocation22], 4
          %s505 = int_to_ptr.vmem [resolvable:$true] %s504
          %510 = dma.hbm_to_vmem [thread:$0]  %s13, 18432, %s505, [#allocation23], 128, 128, 8
        $region64: #{simple_cnn_forward.1} parent=11 // pred_fallthru
          _
        // Predicated region
        $region65: #{simple_cnn_forward.1} parent=11 // pred_check
          %p511 = pneg %p349
        $region66: #{simple_cnn_forward.1} parent=11 // pred_check_branch
          %513 = sbr.rel (%p511) target = $region68
        $region67: #{simple_cnn_forward.1} parent=11 // pred_region
          _
        $region68: #{simple_cnn_forward.1} parent=11 // pred_fallthru
          _
        // Predicated region
        $region69: #{simple_cnn_forward.1} parent=11 // pred_check
          %p514 = pneg %p370
        $region70: #{simple_cnn_forward.1} parent=11 // pred_check_branch
          %516 = sbr.rel (%p514) target = $region72
        $region71: #{simple_cnn_forward.1} parent=11 // pred_region
          %s518 = ssub.s32 18432, 18432
          %519 = vsyncadd [#allocation23], %s518
          %s520 = sshll.u32 [#allocation24], 4
          %s521 = int_to_ptr.vmem [resolvable:$true] %s520
          %526 = dma.hbm_to_vmem [thread:$0]  %s15, 18432, %s521, [#allocation23], 128, 128, 8
        $region72: #{simple_cnn_forward.1} parent=11 // pred_fallthru
          _
        // Predicated region
        $region73: #{simple_cnn_forward.1} parent=11 // pred_check
          %p527 = pneg %p391
        $region74: #{simple_cnn_forward.1} parent=11 // pred_check_branch
          %529 = sbr.rel (%p527) target = $region76
        $region75: #{simple_cnn_forward.1} parent=11 // pred_region
          _
        $region76: #{simple_cnn_forward.1} parent=11 // pred_fallthru
          _
      $region12: #{simple_cnn_forward.1} parent=5 // pred_fallthru
        _
      %p530 = scmp.lt.s32.totalorder %s29, 2
      // Predicated region
      $region77: #{simple_cnn_forward.1} parent=5 // pred_check
        %p531 = pneg %p530
      $region78: #{simple_cnn_forward.1} parent=5 // pred_check_branch
        %533 = sbr.rel (%p531) target = $region80
      $region79: #{simple_cnn_forward.1} parent=5 // pred_region
        // Predicated region
        $region81: #{simple_cnn_forward.1} parent=79 // pred_check
          %p534 = pneg %p49
        $region82: #{simple_cnn_forward.1} parent=79 // pred_check_branch
          %536 = sbr.rel (%p534) target = $region84
        $region83: #{simple_cnn_forward.1} parent=79 // pred_region
          %p537 = scmp.lt.s32.totalorder %s29, 1
          %s538 = scalar_select %p537, %s29, 1
          %s539 = smul.addr %s538, 32
          %s540 = smul.addr %s539, 8
          %s541 = scalar_lea.vmem %s0, %s540
        $region84: #{simple_cnn_forward.1} parent=79 // pred_fallthru
          _
      $region80: #{simple_cnn_forward.1} parent=5 // pred_fallthru
        _
      %p542 = scmp.le.s32.totalorder 1, %s29
      %p543 = scmp.lt.s32.totalorder %s29, 3
      %p544 = pnand %p542, %p543
      %p545 = pneg %p544
      // Predicated region
      $region85: #{simple_cnn_forward.1} parent=5 // pred_check
        _
      $region86: #{simple_cnn_forward.1} parent=5 // pred_check_branch
        %547 = sbr.rel (%p544) target = $region88
      $region87: #{simple_cnn_forward.1} parent=5 // pred_region
        %s548 = ssub.s32 %s29, 1
        // Predicated region
        $region89: #{simple_cnn_forward.1} parent=87 // pred_check
          %p549 = pneg %p160
        $region90: #{simple_cnn_forward.1} parent=87 // pred_check_branch
          %551 = sbr.rel (%p549) target = $region92
        $region91: #{simple_cnn_forward.1} parent=87 // pred_region
          %552 = dma.done [#allocation17], 4608
        $region92: #{simple_cnn_forward.1} parent=87 // pred_fallthru
          _
        // Predicated region
        $region93: #{simple_cnn_forward.1} parent=87 // pred_check
          %p553 = pneg %p202
        $region94: #{simple_cnn_forward.1} parent=87 // pred_check_branch
          %555 = sbr.rel (%p553) target = $region96
        $region95: #{simple_cnn_forward.1} parent=87 // pred_region
          %556 = dma.done [#allocation20], 9216
        $region96: #{simple_cnn_forward.1} parent=87 // pred_fallthru
          _
        // Predicated region
        $region97: #{simple_cnn_forward.1} parent=87 // pred_check
          %p557 = pneg %p244
        $region98: #{simple_cnn_forward.1} parent=87 // pred_check_branch
          %559 = sbr.rel (%p557) target = $region100
        $region99: #{simple_cnn_forward.1} parent=87 // pred_region
          %560 = dma.done [#allocation20], 9216
        $region100: #{simple_cnn_forward.1} parent=87 // pred_fallthru
          _
        // Predicated region
        $region101: #{simple_cnn_forward.1} parent=87 // pred_check
          %p561 = pneg %p328
        $region102: #{simple_cnn_forward.1} parent=87 // pred_check_branch
          %563 = sbr.rel (%p561) target = $region104
        $region103: #{simple_cnn_forward.1} parent=87 // pred_region
          %564 = dma.done [#allocation23], 18432
        $region104: #{simple_cnn_forward.1} parent=87 // pred_fallthru
          _
        // Predicated region
        $region105: #{simple_cnn_forward.1} parent=87 // pred_check
          %p565 = pneg %p370
        $region106: #{simple_cnn_forward.1} parent=87 // pred_check_branch
          %567 = sbr.rel (%p565) target = $region108
        $region107: #{simple_cnn_forward.1} parent=87 // pred_region
          %568 = dma.done [#allocation23], 18432
        $region108: #{simple_cnn_forward.1} parent=87 // pred_fallthru
          _
        %p569 = scmp.lt.s32.totalorder %s34, 1
        %s570 = scalar_select %p569, %s34, 1
        %s571 = smul.addr %s570, 32
        %s572 = smul.addr %s571, 8
        %s573 = scalar_lea.vmem %s0, %s572
        %p574 = pneg %p55
        %p575 = pneg %p52
        %p576 = pneg %p76
        %p577 = pneg %p73
        %p578 = pneg %p97
        %p579 = pneg %p94
        %p580 = pneg %p118
        %p581 = pneg %p115
        %p582 = pneg %p139
        %p583 = pneg %p136
        %p584 = pneg %p160
        %p585 = pneg %p157
        %p586 = pneg %p181
        %p587 = pneg %p178
        %p588 = pneg %p202
        %p589 = pneg %p199
        %p590 = pneg %p223
        %p591 = pneg %p220
        %p592 = pneg %p244
        %p593 = pneg %p241
        %p594 = pneg %p265
        %p595 = pneg %p262
        %p596 = pneg %p286
        %p597 = pneg %p283
        %p598 = pneg %p307
        %p599 = pneg %p304
        %p600 = pneg %p328
        %p601 = pneg %p325
        %p602 = pneg %p349
        %p603 = pneg %p346
        %p604 = pneg %p370
        %p605 = pneg %p367
        %p606 = pneg %p391
        %p607 = pneg %p388
        %p608 = pneg %p417
        %p609 = pneg %p414
        %s610 = sand.u32 %s404, 1
        %s611 = scalar_lea.sflag [#allocation18], %s610
        %s612 = sand.u32 %s404, 1
        %s613 = smul.addr %s612, 4
        %s614 = scalar_lea.vmem [#allocation25], %s613
        %p615 = scmp.lt.s32.totalorder %s34, 1
        %s616 = scalar_select %p615, %s34, 1
        %s617 = smul.addr %s616, 32
        %s618 = smul.addr %s617, 8
        %s619 = scalar_lea.vmem %s0, %s618
        %v620 = vld [vmem:[%s619] sm:$0xff]
        %v621 = vld [vmem:[%s619 + $0x8] sm:$0xff]
        %v622 = vld [vmem:[%s619 + $0x10] sm:$0xff]
        %v623 = vld [vmem:[%s619 + $0x18] sm:$0xff]
        %v624 = vld [vmem:[%s619 + $0x20] sm:$0xff]
        %v625 = vld [vmem:[%s619 + $0x28] sm:$0xff]
        %v626 = vld [vmem:[%s619 + $0x30] sm:$0xff]
        %v627 = vld [vmem:[%s619 + $0x38] sm:$0xff]
        %v628 = vld [vmem:[%s619 + $0x40] sm:$0xff]
        %v629 = vld [vmem:[%s619 + $0x48] sm:$0xff]
        %v630 = vld [vmem:[%s619 + $0x50] sm:$0xff]
        %v631 = vld [vmem:[%s619 + $0x58] sm:$0xff]
        %v632 = vld [vmem:[%s619 + $0x60] sm:$0xff]
        %v633 = vld [vmem:[%s619 + $0x68] sm:$0xff]
        %v634 = vld [vmem:[%s619 + $0x70] sm:$0xff]
        %v635 = vld [vmem:[%s619 + $0x78] sm:$0xff]
        %v636 = vld [vmem:[%s619 + $0x80] sm:$0xff]
        %v637 = vld [vmem:[%s619 + $0x88] sm:$0xff]
        %v638 = vld [vmem:[%s619 + $0x90] sm:$0xff]
        %v639 = vld [vmem:[%s619 + $0x98] sm:$0xff]
        %v640 = vld [vmem:[%s619 + $0xa0] sm:$0xff]
        %v641 = vld [vmem:[%s619 + $0xa8] sm:$0xff]
        %v642 = vld [vmem:[%s619 + $0xb0] sm:$0xff]
        %v643 = vld [vmem:[%s619 + $0xb8] sm:$0xff]
        %v644 = vld [vmem:[%s619 + $0xc0] sm:$0xff]
        %v645 = vld [vmem:[%s619 + $0xc8] sm:$0xff]
        %v646 = vld [vmem:[%s619 + $0xd0] sm:$0xff]
        %v647 = vld [vmem:[%s619 + $0xd8] sm:$0xff]
        %v648 = vld [vmem:[%s619 + $0xe0] sm:$0xff]
        %v649 = vld [vmem:[%s619 + $0xe8] sm:$0xff]
        %v650 = vld [vmem:[%s619 + $0xf0] sm:$0xff]
        %v651 = vld [vmem:[%s619 + $0xf8] sm:$0xff]
        %v652 = vld [vmem:[%s1] sm:$0xff]
        %v653 = vld [vmem:[%s1 + $0x8] sm:$0x1]
        %v654 = vld [vmem:[%s2] sm:$0x1]
        %v655 = vld [vmem:[%s2 + $0x1] sm:$0x1]
        %v656 = vld [vmem:[%s2 + $0x2] sm:$0x1]
        %v657 = vlaneseq
        %v658 = vshrl.u32 %v657, 7
        %v659 = vsub.s32 0, %v658
        %v660 = vrot.slane %v654, %v659
        %vm661 = vcmask 72704
        %v663 = vsel %vm661, %v620, 0
        %v666 = vsel %vm661, %v621, 0
        %v669 = vsel %vm661, %v622, 0
        %v672 = vsel %vm661, %v623, 0
        %v675 = vsel %vm661, %v624, 0
        %v678 = vsel %vm661, %v625, 0
        %v681 = vsel %vm661, %v626, 0
        %v684 = vsel %vm661, %v627, 0
        %v687 = vsel %vm661, %v628, 0
        %v690 = vsel %vm661, %v629, 0
        %v693 = vsel %vm661, %v630, 0
        %v696 = vsel %vm661, %v631, 0
        %v699 = vsel %vm661, %v632, 0
        %v702 = vsel %vm661, %v633, 0
        %v705 = vsel %vm661, %v634, 0
        %v708 = vsel %vm661, %v635, 0
        %v711 = vsel %vm661, %v636, 0
        %v714 = vsel %vm661, %v637, 0
        %v717 = vsel %vm661, %v638, 0
        %v720 = vsel %vm661, %v639, 0
        %v723 = vsel %vm661, %v640, 0
        %v726 = vsel %vm661, %v641, 0
        %v729 = vsel %vm661, %v642, 0
        %v732 = vsel %vm661, %v643, 0
        %v735 = vsel %vm661, %v644, 0
        %v738 = vsel %vm661, %v645, 0
        %v741 = vsel %vm661, %v646, 0
        %v744 = vsel %vm661, %v647, 0
        %v747 = vsel %vm661, %v648, 0
        %v750 = vsel %vm661, %v649, 0
        %v753 = vsel %vm661, %v650, 0
        %v756 = vsel %vm661, %v651, 0
        %vm758 = vcmask 1040384
        %v760 = vsel %vm758, %v653, 0
        %762 = vmatprep.subr.mxu0 0.0
        %763 = vmatpush1.msra.mxu0 %v652
        %764 = vmatprep.subr.mxu0 0.0
        %765 = vmatpush1.msra.mxu0 %v760
        %766 = vmatprep.subr.mxu0 0.0
        %767 = vmatpush1.msra.mxu0 0.0
        %768 = vmatprep.subr.mxu0 0.0
        %769 = vmatpush1.msra.mxu0 0.0
        %770 = vmatprep.subr.mxu0 0.0
        %771 = vmatpush1.msra.mxu0 0.0
        %772 = vmatprep.subr.mxu0 0.0
        %773 = vmatpush1.msra.mxu0 0.0
        %774 = vmatprep.subr.mxu0 0.0
        %775 = vmatpush1.msra.mxu0 0.0
        %776 = vmatprep.subr.mxu0 0.0
        %777 = vmatpush1.msra.mxu0 0.0
        %778 = vmatprep.subr.mxu0 0.0
        %779 = vmatpush1.msra.mxu0 0.0
        %780 = vmatprep.subr.mxu0 0.0
        %781 = vmatpush1.msra.mxu0 0.0
        %782 = vmatprep.subr.mxu0 0.0
        %783 = vmatpush1.msra.mxu0 0.0
        %784 = vmatprep.subr.mxu0 0.0
        %785 = vmatpush1.msra.mxu0 0.0
        %786 = vmatprep.subr.mxu0 0.0
        %787 = vmatpush1.msra.mxu0 0.0
        %788 = vmatprep.subr.mxu0 0.0
        %789 = vmatpush1.msra.mxu0 0.0
        %790 = vmatprep.subr.mxu0 0.0
        %791 = vmatpush1.msra.mxu0 0.0
        %792 = vmatprep.subr.mxu0 0.0
        %793 = vmatpush1.msra.mxu0 0.0
        %794 = vmatprep.subr.mxu0 0.0
        %795 = vmatpush1.msra.mxu0 0.0
        %796 = vmatprep.subr.mxu0 0.0
        %797 = vmatpush1.msra.mxu0 0.0
        %798 = vmatprep.subr.mxu0 0.0
        %799 = vmatpush1.msra.mxu0 0.0
        %800 = vmatprep.subr.mxu0 0.0
        %801 = vmatpush1.msra.mxu0 0.0
        %802 = vmatprep.subr.mxu0 0.0
        %803 = vmatpush1.msra.mxu0 0.0
        %804 = vmatprep.subr.mxu0 0.0
        %805 = vmatpush1.msra.mxu0 0.0
        %806 = vmatprep.subr.mxu0 0.0
        %807 = vmatpush1.msra.mxu0 0.0
        %808 = vmatprep.subr.mxu0 0.0
        %809 = vmatpush1.msra.mxu0 0.0
        %810 = vmatprep.subr.mxu0 0.0
        %811 = vmatpush1.msra.mxu0 0.0
        %812 = vmatprep.subr.mxu0 0.0
        %813 = vmatpush1.msra.mxu0 0.0
        %814 = vmatprep.subr.mxu0 0.0
        %815 = vmatpush1.msra.mxu0 0.0
        %816 = vmatprep.subr.mxu0 0.0
        %817 = vmatpush1.msra.mxu0 0.0
        %818 = vmatprep.subr.mxu0 0.0
        %819 = vmatpush1.msra.mxu0 0.0
        %820 = vmatprep.subr.mxu0 0.0
        %821 = vmatpush1.msra.mxu0 0.0
        %822 = vmatprep.subr.mxu0 0.0
        %823 = vmatpush1.msra.mxu0 0.0
        %824 = vmatprep.subr.mxu0 0.0
        %825 = vmatpush1.msra.mxu0 0.0
        %826 = vmatprep.mubr.f32.mxu0 0.0
        %827 = vmatmul.mubr.f32.gmra.mrb[0].mxu0 %v663
        %v828 = vpop.f32.mrb[0].mxu0
        %v829 = vadd.f32 %v660, %v828
        %v830 = vpop.f32.mrb[0].mxu0
        %831 = vmatprep.mubr.f32.mxu0 0.0
        %832 = vmatmul.mubr.f32.gmra.mrb[0].mxu0 %v666
        %v833 = vpop.f32.mrb[0].mxu0
        %v834 = vadd.f32 %v660, %v833
        %v835 = vpop.f32.mrb[0].mxu0
        %836 = vmatprep.mubr.f32.mxu0 0.0
        %837 = vmatmul.mubr.f32.gmra.mrb[0].mxu0 %v669
        %v838 = vpop.f32.mrb[0].mxu0
        %v839 = vadd.f32 %v660, %v838
        %v840 = vpop.f32.mrb[0].mxu0
        %841 = vmatprep.mubr.f32.mxu0 0.0
        %842 = vmatmul.mubr.f32.gmra.mrb[0].mxu0 %v672
        %v843 = vpop.f32.mrb[0].mxu0
        %v844 = vadd.f32 %v660, %v843
        %v845 = vpop.f32.mrb[0].mxu0
        %846 = vmatprep.mubr.f32.mxu0 0.0
        %847 = vmatmul.mubr.f32.gmra.mrb[0].mxu0 %v675
        %v848 = vpop.f32.mrb[0].mxu0
        %v849 = vadd.f32 %v660, %v848
        %v850 = vpop.f32.mrb[0].mxu0
        %851 = vmatprep.mubr.f32.mxu0 0.0
        %852 = vmatmul.mubr.f32.gmra.mrb[0].mxu0 %v678
        %v853 = vpop.f32.mrb[0].mxu0
        %v854 = vadd.f32 %v660, %v853
        %v855 = vpop.f32.mrb[0].mxu0
        %856 = vmatprep.mubr.f32.mxu0 0.0
        %857 = vmatmul.mubr.f32.gmra.mrb[0].mxu0 %v681
        %v858 = vpop.f32.mrb[0].mxu0
        %v859 = vadd.f32 %v660, %v858
        %v860 = vpop.f32.mrb[0].mxu0
        %861 = vmatprep.mubr.f32.mxu0 0.0
        %862 = vmatmul.mubr.f32.gmra.mrb[0].mxu0 %v684
        %v863 = vpop.f32.mrb[0].mxu0
        %v864 = vadd.f32 %v660, %v863
        %v865 = vpop.f32.mrb[0].mxu0
        %866 = vmatprep.mubr.f32.mxu0 0.0
        %867 = vmatmul.mubr.f32.gmra.mrb[0].mxu0 %v687
        %v868 = vpop.f32.mrb[0].mxu0
        %v869 = vadd.f32 %v660, %v868
        %v870 = vpop.f32.mrb[0].mxu0
        %871 = vmatprep.mubr.f32.mxu0 0.0
        %872 = vmatmul.mubr.f32.gmra.mrb[0].mxu0 %v690
        %v873 = vpop.f32.mrb[0].mxu0
        %v874 = vadd.f32 %v660, %v873
        %v875 = vpop.f32.mrb[0].mxu0
        %876 = vmatprep.mubr.f32.mxu0 0.0
        %877 = vmatmul.mubr.f32.gmra.mrb[0].mxu0 %v693
        %v878 = vpop.f32.mrb[0].mxu0
        %v879 = vadd.f32 %v660, %v878
        %v880 = vpop.f32.mrb[0].mxu0
        %881 = vmatprep.mubr.f32.mxu0 0.0
        %882 = vmatmul.mubr.f32.gmra.mrb[0].mxu0 %v696
        %v883 = vpop.f32.mrb[0].mxu0
        %v884 = vadd.f32 %v660, %v883
        %v885 = vpop.f32.mrb[0].mxu0
        %886 = vmatprep.mubr.f32.mxu0 0.0
        %887 = vmatmul.mubr.f32.gmra.mrb[0].mxu0 %v699
        %v888 = vpop.f32.mrb[0].mxu0
        %v889 = vadd.f32 %v660, %v888
        %v890 = vpop.f32.mrb[0].mxu0
        %891 = vmatprep.mubr.f32.mxu0 0.0
        %892 = vmatmul.mubr.f32.gmra.mrb[0].mxu0 %v702
        %v893 = vpop.f32.mrb[0].mxu0
        %v894 = vadd.f32 %v660, %v893
        %v895 = vpop.f32.mrb[0].mxu0
        %896 = vmatprep.mubr.f32.mxu0 0.0
        %897 = vmatmul.mubr.f32.gmra.mrb[0].mxu0 %v705
        %v898 = vpop.f32.mrb[0].mxu0
        %v899 = vadd.f32 %v660, %v898
        %v900 = vpop.f32.mrb[0].mxu0
        %901 = vmatprep.mubr.f32.mxu0 0.0
        %902 = vmatmul.mubr.f32.gmra.mrb[0].mxu0 %v708
        %v903 = vpop.f32.mrb[0].mxu0
        %v904 = vadd.f32 %v660, %v903
        %v905 = vpop.f32.mrb[0].mxu0
        %906 = vmatprep.mubr.f32.mxu0 0.0
        %907 = vmatmul.mubr.f32.gmra.mrb[0].mxu0 %v711
        %v908 = vpop.f32.mrb[0].mxu0
        %v909 = vadd.f32 %v660, %v908
        %v910 = vpop.f32.mrb[0].mxu0
        %911 = vmatprep.mubr.f32.mxu0 0.0
        %912 = vmatmul.mubr.f32.gmra.mrb[0].mxu0 %v714
        %v913 = vpop.f32.mrb[0].mxu0
        %v914 = vadd.f32 %v660, %v913
        %v915 = vpop.f32.mrb[0].mxu0
        %916 = vmatprep.mubr.f32.mxu0 0.0
        %917 = vmatmul.mubr.f32.gmra.mrb[0].mxu0 %v717
        %v918 = vpop.f32.mrb[0].mxu0
        %v919 = vadd.f32 %v660, %v918
        %v920 = vpop.f32.mrb[0].mxu0
        %921 = vmatprep.mubr.f32.mxu0 0.0
        %922 = vmatmul.mubr.f32.gmra.mrb[0].mxu0 %v720
        %v923 = vpop.f32.mrb[0].mxu0
        %v924 = vadd.f32 %v660, %v923
        %v925 = vpop.f32.mrb[0].mxu0
        %926 = vmatprep.mubr.f32.mxu0 0.0
        %927 = vmatmul.mubr.f32.gmra.mrb[0].mxu0 %v723
        %v928 = vpop.f32.mrb[0].mxu0
        %v929 = vadd.f32 %v660, %v928
        %v930 = vpop.f32.mrb[0].mxu0
        %931 = vmatprep.mubr.f32.mxu0 0.0
        %932 = vmatmul.mubr.f32.gmra.mrb[0].mxu0 %v726
        %v933 = vpop.f32.mrb[0].mxu0
        %v934 = vadd.f32 %v660, %v933
        %v935 = vpop.f32.mrb[0].mxu0
        %936 = vmatprep.mubr.f32.mxu0 0.0
        %937 = vmatmul.mubr.f32.gmra.mrb[0].mxu0 %v729
        %v938 = vpop.f32.mrb[0].mxu0
        %v939 = vadd.f32 %v660, %v938
        %v940 = vpop.f32.mrb[0].mxu0
        %941 = vmatprep.mubr.f32.mxu0 0.0
        %942 = vmatmul.mubr.f32.gmra.mrb[0].mxu0 %v732
        %v943 = vpop.f32.mrb[0].mxu0
        %v944 = vadd.f32 %v660, %v943
        %v945 = vpop.f32.mrb[0].mxu0
        %946 = vmatprep.mubr.f32.mxu0 0.0
        %947 = vmatmul.mubr.f32.gmra.mrb[0].mxu0 %v735
        %v948 = vpop.f32.mrb[0].mxu0
        %v949 = vadd.f32 %v660, %v948
        %v950 = vpop.f32.mrb[0].mxu0
        %951 = vmatprep.mubr.f32.mxu0 0.0
        %952 = vmatmul.mubr.f32.gmra.mrb[0].mxu0 %v738
        %v953 = vpop.f32.mrb[0].mxu0
        %v954 = vadd.f32 %v660, %v953
        %v955 = vpop.f32.mrb[0].mxu0
        %956 = vmatprep.mubr.f32.mxu0 0.0
        %957 = vmatmul.mubr.f32.gmra.mrb[0].mxu0 %v741
        %v958 = vpop.f32.mrb[0].mxu0
        %v959 = vadd.f32 %v660, %v958
        %v960 = vpop.f32.mrb[0].mxu0
        %961 = vmatprep.mubr.f32.mxu0 0.0
        %962 = vmatmul.mubr.f32.gmra.mrb[0].mxu0 %v744
        %v963 = vpop.f32.mrb[0].mxu0
        %v964 = vadd.f32 %v660, %v963
        %v965 = vpop.f32.mrb[0].mxu0
        %966 = vmatprep.mubr.f32.mxu0 0.0
        %967 = vmatmul.mubr.f32.gmra.mrb[0].mxu0 %v747
        %v968 = vpop.f32.mrb[0].mxu0
        %v969 = vadd.f32 %v660, %v968
        %v970 = vpop.f32.mrb[0].mxu0
        %971 = vmatprep.mubr.f32.mxu0 0.0
        %972 = vmatmul.mubr.f32.gmra.mrb[0].mxu0 %v750
        %v973 = vpop.f32.mrb[0].mxu0
        %v974 = vadd.f32 %v660, %v973
        %v975 = vpop.f32.mrb[0].mxu0
        %976 = vmatprep.mubr.f32.mxu0 0.0
        %977 = vmatmul.mubr.f32.gmra.mrb[0].mxu0 %v753
        %v978 = vpop.f32.mrb[0].mxu0
        %v979 = vadd.f32 %v660, %v978
        %v980 = vpop.f32.mrb[0].mxu0
        %981 = vmatprep.mubr.f32.mxu0 0.0
        %982 = vmatmul.mubr.f32.gmra.mrb[0].mxu0 %v756
        %v983 = vpop.f32.mrb[0].mxu0
        %v984 = vadd.f32 %v660, %v983
        %v985 = vpop.f32.mrb[0].mxu0
        %986 = vdwg.mxu0
        %v987 = vmax.f32 %v829, 0.0
        %v988 = vmax.f32 %v834, 0.0
        %v989 = vmax.f32 %v839, 0.0
        %v990 = vmax.f32 %v844, 0.0
        %v991 = vmax.f32 %v849, 0.0
        %v992 = vmax.f32 %v854, 0.0
        %v993 = vmax.f32 %v859, 0.0
        %v994 = vmax.f32 %v864, 0.0
        %v995 = vmax.f32 %v869, 0.0
        %v996 = vmax.f32 %v874, 0.0
        %v997 = vmax.f32 %v879, 0.0
        %v998 = vmax.f32 %v884, 0.0
        %v999 = vmax.f32 %v889, 0.0
        %v1000 = vmax.f32 %v894, 0.0
        %v1001 = vmax.f32 %v899, 0.0
        %v1002 = vmax.f32 %v904, 0.0
        %v1003 = vmax.f32 %v909, 0.0
        %v1004 = vmax.f32 %v914, 0.0
        %v1005 = vmax.f32 %v919, 0.0
        %v1006 = vmax.f32 %v924, 0.0
        %v1007 = vmax.f32 %v929, 0.0
        %v1008 = vmax.f32 %v934, 0.0
        %v1009 = vmax.f32 %v939, 0.0
        %v1010 = vmax.f32 %v944, 0.0
        %v1011 = vmax.f32 %v949, 0.0
        %v1012 = vmax.f32 %v954, 0.0
        %v1013 = vmax.f32 %v959, 0.0
        %v1014 = vmax.f32 %v964, 0.0
        %v1015 = vmax.f32 %v969, 0.0
        %v1016 = vmax.f32 %v974, 0.0
        %v1017 = vmax.f32 %v979, 0.0
        %v1018 = vmax.f32 %v984, 0.0
        %v1019 = vlaneseq
        %v1020 = vshrl.u32 %v1019, 7
        %v1021 = vsub.s32 0, %v1020
        %v1022 = vrot.slane %v655, %v1021
        %v1023 = vmul.f32 %v987, %v1022
        %v1024 = vmul.f32 %v988, %v1022
        %v1025 = vmul.f32 %v989, %v1022
        %v1026 = vmul.f32 %v990, %v1022
        %v1027 = vmul.f32 %v991, %v1022
        %v1028 = vmul.f32 %v992, %v1022
        %v1029 = vmul.f32 %v993, %v1022
        %v1030 = vmul.f32 %v994, %v1022
        %v1031 = vmul.f32 %v995, %v1022
        %v1032 = vmul.f32 %v996, %v1022
        %v1033 = vmul.f32 %v997, %v1022
        %v1034 = vmul.f32 %v998, %v1022
        %v1035 = vmul.f32 %v999, %v1022
        %v1036 = vmul.f32 %v1000, %v1022
        %v1037 = vmul.f32 %v1001, %v1022
        %v1038 = vmul.f32 %v1002, %v1022
        %v1039 = vmul.f32 %v1003, %v1022
        %v1040 = vmul.f32 %v1004, %v1022
        %v1041 = vmul.f32 %v1005, %v1022
        %v1042 = vmul.f32 %v1006, %v1022
        %v1043 = vmul.f32 %v1007, %v1022
        %v1044 = vmul.f32 %v1008, %v1022
        %v1045 = vmul.f32 %v1009, %v1022
        %v1046 = vmul.f32 %v1010, %v1022
        %v1047 = vmul.f32 %v1011, %v1022
        %v1048 = vmul.f32 %v1012, %v1022
        %v1049 = vmul.f32 %v1013, %v1022
        %v1050 = vmul.f32 %v1014, %v1022
        %v1051 = vmul.f32 %v1015, %v1022
        %v1052 = vmul.f32 %v1016, %v1022
        %v1053 = vmul.f32 %v1017, %v1022
        %v1054 = vmul.f32 %v1018, %v1022
        %v1055 = vlaneseq
        %v1056 = vshrl.u32 %v1055, 7
        %v1057 = vsub.s32 0, %v1056
        %v1058 = vrot.slane %v656, %v1057
        %v1059 = vadd.f32 %v1023, %v1058
        %v1060 = vadd.f32 %v1024, %v1058
        %v1061 = vadd.f32 %v1025, %v1058
        %v1062 = vadd.f32 %v1026, %v1058
        %v1063 = vadd.f32 %v1027, %v1058
        %v1064 = vadd.f32 %v1028, %v1058
        %v1065 = vadd.f32 %v1029, %v1058
        %v1066 = vadd.f32 %v1030, %v1058
        %v1067 = vadd.f32 %v1031, %v1058
        %v1068 = vadd.f32 %v1032, %v1058
        %v1069 = vadd.f32 %v1033, %v1058
        %v1070 = vadd.f32 %v1034, %v1058
        %v1071 = vadd.f32 %v1035, %v1058
        %v1072 = vadd.f32 %v1036, %v1058
        %v1073 = vadd.f32 %v1037, %v1058
        %v1074 = vadd.f32 %v1038, %v1058
        %v1075 = vadd.f32 %v1039, %v1058
        %v1076 = vadd.f32 %v1040, %v1058
        %v1077 = vadd.f32 %v1041, %v1058
        %v1078 = vadd.f32 %v1042, %v1058
        %v1079 = vadd.f32 %v1043, %v1058
        %v1080 = vadd.f32 %v1044, %v1058
        %v1081 = vadd.f32 %v1045, %v1058
        %v1082 = vadd.f32 %v1046, %v1058
        %v1083 = vadd.f32 %v1047, %v1058
        %v1084 = vadd.f32 %v1048, %v1058
        %v1085 = vadd.f32 %v1049, %v1058
        %v1086 = vadd.f32 %v1050, %v1058
        %v1087 = vadd.f32 %v1051, %v1058
        %v1088 = vadd.f32 %v1052, %v1058
        %v1089 = vadd.f32 %v1053, %v1058
        %v1090 = vadd.f32 %v1054, %v1058
        %vm1091 = vcmask 261120
        %1092 = vst.msk [vmem:[#allocation2] sm:$0xff] %vm1091, 0.0
        %1093 = vst.msk [vmem:[#allocation2 + $0x8] sm:$0xff] %vm1091, 0.0
        %vm1094 = vcmask 254976
        %1095 = vst.msk [vmem:[#allocation2 + $0x10] sm:$0x3] %vm1094, 0.0
        %1096 = vst.msk [vmem:[#allocation2 + $0x18] sm:$0xff] %vm1091, 0.0
        %1097 = vst.msk [vmem:[#allocation2 + $0x20] sm:$0xff] %vm1091, 0.0
        %1098 = vst.msk [vmem:[#allocation2 + $0x28] sm:$0x3] %vm1094, 0.0
        %1099 = vst.msk [vmem:[#allocation2 + $0x30] sm:$0xff] %vm1091, 0.0
        %1100 = vst.msk [vmem:[#allocation2 + $0x38] sm:$0xff] %vm1091, 0.0
        %1101 = vst.msk [vmem:[#allocation2 + $0x40] sm:$0x3] %vm1094, 0.0
        %1102 = vst.msk [vmem:[#allocation2 + $0x48] sm:$0xff] %vm1091, 0.0
        %1103 = vst.msk [vmem:[#allocation2 + $0x50] sm:$0xff] %vm1091, 0.0
        %1104 = vst.msk [vmem:[#allocation2 + $0x58] sm:$0x3] %vm1094, 0.0
        %1105 = vst.msk [vmem:[#allocation2 + $0x60] sm:$0xff] %vm1091, 0.0
        %1106 = vst.msk [vmem:[#allocation2 + $0x68] sm:$0xff] %vm1091, 0.0
        %1107 = vst.msk [vmem:[#allocation2 + $0x70] sm:$0x3] %vm1094, 0.0
        %1108 = vst.msk [vmem:[#allocation2 + $0x78] sm:$0xff] %vm1091, 0.0
        %1109 = vst.msk [vmem:[#allocation2 + $0x80] sm:$0xff] %vm1091, 0.0
        %1110 = vst.msk [vmem:[#allocation2 + $0x88] sm:$0x3] %vm1094, 0.0
        %1111 = vst.msk [vmem:[#allocation2 + $0x90] sm:$0xff] %vm1091, 0.0
        %1112 = vst.msk [vmem:[#allocation2 + $0x98] sm:$0xff] %vm1091, 0.0
        %1113 = vst.msk [vmem:[#allocation2 + $0xa0] sm:$0x3] %vm1094, 0.0
        %1114 = vst.msk [vmem:[#allocation2 + $0xa8] sm:$0xff] %vm1091, 0.0
        %1115 = vst.msk [vmem:[#allocation2 + $0xb0] sm:$0xff] %vm1091, 0.0
        %1116 = vst.msk [vmem:[#allocation2 + $0xb8] sm:$0x3] %vm1094, 0.0
        %1117 = vst.msk [vmem:[#allocation2 + $0xc0] sm:$0xff] %vm1091, 0.0
        %1118 = vst.msk [vmem:[#allocation2 + $0xc8] sm:$0xff] %vm1091, 0.0
        %1119 = vst.msk [vmem:[#allocation2 + $0xd0] sm:$0x3] %vm1094, 0.0
        %1120 = vst.msk [vmem:[#allocation2 + $0xd8] sm:$0xff] %vm1091, 0.0
        %1121 = vst.msk [vmem:[#allocation2 + $0xe0] sm:$0xff] %vm1091, 0.0
        %1122 = vst.msk [vmem:[#allocation2 + $0xe8] sm:$0x3] %vm1094, 0.0
        %1123 = vst.msk [vmem:[#allocation2 + $0xf0] sm:$0xff] %vm1091, 0.0
        %1124 = vst.msk [vmem:[#allocation2 + $0xf8] sm:$0xff] %vm1091, 0.0
        %1125 = vst.msk [vmem:[#allocation2 + $0x100] sm:$0x3] %vm1094, 0.0
        %1126 = vst.msk [vmem:[#allocation2 + $0x108] sm:$0xff] %vm1091, 0.0
        %1127 = vst.msk [vmem:[#allocation2 + $0x110] sm:$0xff] %vm1091, 0.0
        %1128 = vst.msk [vmem:[#allocation2 + $0x118] sm:$0x3] %vm1094, 0.0
        %1129 = vst.msk [vmem:[#allocation2 + $0x120] sm:$0xff] %vm1091, 0.0
        %1130 = vst.msk [vmem:[#allocation2 + $0x128] sm:$0xff] %vm1091, 0.0
        %1131 = vst.msk [vmem:[#allocation2 + $0x130] sm:$0x3] %vm1094, 0.0
        %1132 = vst.msk [vmem:[#allocation2 + $0x138] sm:$0xff] %vm1091, 0.0
        %1133 = vst.msk [vmem:[#allocation2 + $0x140] sm:$0xff] %vm1091, 0.0
        %1134 = vst.msk [vmem:[#allocation2 + $0x148] sm:$0x3] %vm1094, 0.0
        %1135 = vst.msk [vmem:[#allocation2 + $0x150] sm:$0xff] %vm1091, 0.0
        %1136 = vst.msk [vmem:[#allocation2 + $0x158] sm:$0xff] %vm1091, 0.0
        %1137 = vst.msk [vmem:[#allocation2 + $0x160] sm:$0x3] %vm1094, 0.0
        %1138 = vst.msk [vmem:[#allocation2 + $0x168] sm:$0xff] %vm1091, 0.0
        %1139 = vst.msk [vmem:[#allocation2 + $0x170] sm:$0xff] %vm1091, 0.0
        %1140 = vst.msk [vmem:[#allocation2 + $0x178] sm:$0x3] %vm1094, 0.0
        %1141 = vst.msk [vmem:[#allocation2 + $0x180] sm:$0xff] %vm1091, 0.0
        %1142 = vst.msk [vmem:[#allocation2 + $0x188] sm:$0xff] %vm1091, 0.0
        %1143 = vst.msk [vmem:[#allocation2 + $0x190] sm:$0x3] %vm1094, 0.0
        %1144 = vst.msk [vmem:[#allocation2 + $0x198] sm:$0xff] %vm1091, 0.0
        %1145 = vst.msk [vmem:[#allocation2 + $0x1a0] sm:$0xff] %vm1091, 0.0
        %1146 = vst.msk [vmem:[#allocation2 + $0x1a8] sm:$0x3] %vm1094, 0.0
        %s1147 = scalar_lea.vmem [#allocation2], 24
        %1148 = vst.msk [vmem:[%s1147 + $0x1] sm:$0xff] %vm1091, %v1059
        %1149 = vst.msk [vmem:[%s1147 + $0x9] sm:$0xff] %vm1091, %v1060
        %1150 = vst.msk [vmem:[%s1147 + $0x19] sm:$0xff] %vm1091, %v1061
        %1151 = vst.msk [vmem:[%s1147 + $0x21] sm:$0xff] %vm1091, %v1062
        %1152 = vst.msk [vmem:[%s1147 + $0x31] sm:$0xff] %vm1091, %v1063
        %1153 = vst.msk [vmem:[%s1147 + $0x39] sm:$0xff] %vm1091, %v1064
        %1154 = vst.msk [vmem:[%s1147 + $0x49] sm:$0xff] %vm1091, %v1065
        %1155 = vst.msk [vmem:[%s1147 + $0x51] sm:$0xff] %vm1091, %v1066
        %1156 = vst.msk [vmem:[%s1147 + $0x61] sm:$0xff] %vm1091, %v1067
        %1157 = vst.msk [vmem:[%s1147 + $0x69] sm:$0xff] %vm1091, %v1068
        %1158 = vst.msk [vmem:[%s1147 + $0x79] sm:$0xff] %vm1091, %v1069
        %1159 = vst.msk [vmem:[%s1147 + $0x81] sm:$0xff] %vm1091, %v1070
        %1160 = vst.msk [vmem:[%s1147 + $0x91] sm:$0xff] %vm1091, %v1071
        %1161 = vst.msk [vmem:[%s1147 + $0x99] sm:$0xff] %vm1091, %v1072
        %1162 = vst.msk [vmem:[%s1147 + $0xa9] sm:$0xff] %vm1091, %v1073
        %1163 = vst.msk [vmem:[%s1147 + $0xb1] sm:$0xff] %vm1091, %v1074
        %1164 = vst.msk [vmem:[%s1147 + $0xc1] sm:$0xff] %vm1091, %v1075
        %1165 = vst.msk [vmem:[%s1147 + $0xc9] sm:$0xff] %vm1091, %v1076
        %1166 = vst.msk [vmem:[%s1147 + $0xd9] sm:$0xff] %vm1091, %v1077
        %1167 = vst.msk [vmem:[%s1147 + $0xe1] sm:$0xff] %vm1091, %v1078
        %1168 = vst.msk [vmem:[%s1147 + $0xf1] sm:$0xff] %vm1091, %v1079
        %1169 = vst.msk [vmem:[%s1147 + $0xf9] sm:$0xff] %vm1091, %v1080
        %1170 = vst.msk [vmem:[%s1147 + $0x109] sm:$0xff] %vm1091, %v1081
        %1171 = vst.msk [vmem:[%s1147 + $0x111] sm:$0xff] %vm1091, %v1082
        %1172 = vst.msk [vmem:[%s1147 + $0x121] sm:$0xff] %vm1091, %v1083
        %1173 = vst.msk [vmem:[%s1147 + $0x129] sm:$0xff] %vm1091, %v1084
        %1174 = vst.msk [vmem:[%s1147 + $0x139] sm:$0xff] %vm1091, %v1085
        %1175 = vst.msk [vmem:[%s1147 + $0x141] sm:$0xff] %vm1091, %v1086
        %1176 = vst.msk [vmem:[%s1147 + $0x151] sm:$0xff] %vm1091, %v1087
        %1177 = vst.msk [vmem:[%s1147 + $0x159] sm:$0xff] %vm1091, %v1088
        %1178 = vst.msk [vmem:[%s1147 + $0x169] sm:$0xff] %vm1091, %v1089
        %1179 = vst.msk [vmem:[%s1147 + $0x171] sm:$0xff] %vm1091, %v1090
        %v1180 = vld [vmem:[#allocation2] sm:$0xff]
        %v1181 = vld [vmem:[#allocation2 + $0x8] sm:$0xff]
        %v1182 = vld [vmem:[#allocation2 + $0x18] sm:$0xff]
        %v1183 = vld [vmem:[#allocation2 + $0x20] sm:$0xff]
        %v1184 = vld [vmem:[#allocation2 + $0x30] sm:$0xff]
        %v1185 = vld [vmem:[#allocation2 + $0x38] sm:$0xff]
        %v1186 = vld [vmem:[#allocation2 + $0x48] sm:$0xff]
        %v1187 = vld [vmem:[#allocation2 + $0x50] sm:$0xff]
        %v1188 = vld [vmem:[#allocation2 + $0x60] sm:$0xff]
        %v1189 = vld [vmem:[#allocation2 + $0x68] sm:$0xff]
        %v1190 = vld [vmem:[#allocation2 + $0x78] sm:$0xff]
        %v1191 = vld [vmem:[#allocation2 + $0x80] sm:$0xff]
        %v1192 = vld [vmem:[#allocation2 + $0x90] sm:$0xff]
        %v1193 = vld [vmem:[#allocation2 + $0x98] sm:$0xff]
        %v1194 = vld [vmem:[#allocation2 + $0xa8] sm:$0xff]
        %v1195 = vld [vmem:[#allocation2 + $0xb0] sm:$0xff]
        %v1196 = vld [vmem:[#allocation2 + $0xc0] sm:$0xff]
        %v1197 = vld [vmem:[#allocation2 + $0xc8] sm:$0xff]
        %v1198 = vld [vmem:[#allocation2 + $0xd8] sm:$0xff]
        %v1199 = vld [vmem:[#allocation2 + $0xe0] sm:$0xff]
        %v1200 = vld [vmem:[#allocation2 + $0xf0] sm:$0xff]
        %v1201 = vld [vmem:[#allocation2 + $0xf8] sm:$0xff]
        %v1202 = vld [vmem:[#allocation2 + $0x108] sm:$0xff]
        %v1203 = vld [vmem:[#allocation2 + $0x110] sm:$0xff]
        %v1204 = vld [vmem:[#allocation2 + $0x120] sm:$0xff]
        %v1205 = vld [vmem:[#allocation2 + $0x128] sm:$0xff]
        %v1206 = vld [vmem:[#allocation2 + $0x138] sm:$0xff]
        %v1207 = vld [vmem:[#allocation2 + $0x140] sm:$0xff]
        %v1208 = vld [vmem:[#allocation2 + $0x150] sm:$0xff]
        %v1209 = vld [vmem:[#allocation2 + $0x158] sm:$0xff]
        %v1210 = vld [vmem:[#allocation2 + $0x168] sm:$0xff]
        %v1211 = vld [vmem:[#allocation2 + $0x170] sm:$0xff]
        %1212 = vst.msk [vmem:[#allocation9] sm:$0xff] %vm1091, %v1180
        %1213 = vst.msk [vmem:[#allocation9 + $0x18] sm:$0xff] %vm1091, %v1181
        %1214 = vst.msk [vmem:[#allocation9 + $0x30] sm:$0xff] %vm1091, %v1182
        %1215 = vst.msk [vmem:[#allocation9 + $0x48] sm:$0xff] %vm1091, %v1183
        %1216 = vst.msk [vmem:[#allocation9 + $0x60] sm:$0xff] %vm1091, %v1184
        %1217 = vst.msk [vmem:[#allocation9 + $0x78] sm:$0xff] %vm1091, %v1185
        %1218 = vst.msk [vmem:[#allocation9 + $0x90] sm:$0xff] %vm1091, %v1186
        %1219 = vst.msk [vmem:[#allocation9 + $0xa8] sm:$0xff] %vm1091, %v1187
        %1220 = vst.msk [vmem:[#allocation9 + $0xc0] sm:$0xff] %vm1091, %v1188
        %1221 = vst.msk [vmem:[#allocation9 + $0xd8] sm:$0xff] %vm1091, %v1189
        %1222 = vst.msk [vmem:[#allocation9 + $0xf0] sm:$0xff] %vm1091, %v1190
        %1223 = vst.msk [vmem:[#allocation9 + $0x108] sm:$0xff] %vm1091, %v1191
        %1224 = vst.msk [vmem:[#allocation9 + $0x120] sm:$0xff] %vm1091, %v1192
        %1225 = vst.msk [vmem:[#allocation9 + $0x138] sm:$0xff] %vm1091, %v1193
        %1226 = vst.msk [vmem:[#allocation9 + $0x150] sm:$0xff] %vm1091, %v1194
        %1227 = vst.msk [vmem:[#allocation9 + $0x168] sm:$0xff] %vm1091, %v1195
        %1228 = vst.msk [vmem:[#allocation9 + $0x180] sm:$0xff] %vm1091, %v1196
        %1229 = vst.msk [vmem:[#allocation9 + $0x198] sm:$0xff] %vm1091, %v1197
        %1230 = vst.msk [vmem:[#allocation9 + $0x1b0] sm:$0xff] %vm1091, %v1198
        %1231 = vst.msk [vmem:[#allocation9 + $0x1c8] sm:$0xff] %vm1091, %v1199
        %1232 = vst.msk [vmem:[#allocation9 + $0x1e0] sm:$0xff] %vm1091, %v1200
        %1233 = vst.msk [vmem:[#allocation9 + $0x1f8] sm:$0xff] %vm1091, %v1201
        %1234 = vst.msk [vmem:[#allocation9 + $0x210] sm:$0xff] %vm1091, %v1202
        %1235 = vst.msk [vmem:[#allocation9 + $0x228] sm:$0xff] %vm1091, %v1203
        %1236 = vst.msk [vmem:[#allocation9 + $0x240] sm:$0xff] %vm1091, %v1204
        %1237 = vst.msk [vmem:[#allocation9 + $0x258] sm:$0xff] %vm1091, %v1205
        %1238 = vst.msk [vmem:[#allocation9 + $0x270] sm:$0xff] %vm1091, %v1206
        %1239 = vst.msk [vmem:[#allocation9 + $0x288] sm:$0xff] %vm1091, %v1207
        %1240 = vst.msk [vmem:[#allocation9 + $0x2a0] sm:$0xff] %vm1091, %v1208
        %1241 = vst.msk [vmem:[#allocation9 + $0x2b8] sm:$0xff] %vm1091, %v1209
        %1242 = vst.msk [vmem:[#allocation9 + $0x2d0] sm:$0xff] %vm1091, %v1210
        %1243 = vst.msk [vmem:[#allocation9 + $0x2e8] sm:$0xff] %vm1091, %v1211
        %v1244 = vld [vmem:[#allocation2 + $0x1] sm:$0xff]
        %v1245 = vld [vmem:[#allocation2 + $0x9] sm:$0xff]
        %v1246 = vld [vmem:[#allocation2 + $0x19] sm:$0xff]
        %v1247 = vld [vmem:[#allocation2 + $0x21] sm:$0xff]
        %v1248 = vld [vmem:[#allocation2 + $0x31] sm:$0xff]
        %v1249 = vld [vmem:[#allocation2 + $0x39] sm:$0xff]
        %v1250 = vld [vmem:[#allocation2 + $0x49] sm:$0xff]
        %v1251 = vld [vmem:[#allocation2 + $0x51] sm:$0xff]
        %v1252 = vld [vmem:[#allocation2 + $0x61] sm:$0xff]
        %v1253 = vld [vmem:[#allocation2 + $0x69] sm:$0xff]
        %v1254 = vld [vmem:[#allocation2 + $0x79] sm:$0xff]
        %v1255 = vld [vmem:[#allocation2 + $0x81] sm:$0xff]
        %v1256 = vld [vmem:[#allocation2 + $0x91] sm:$0xff]
        %v1257 = vld [vmem:[#allocation2 + $0x99] sm:$0xff]
        %v1258 = vld [vmem:[#allocation2 + $0xa9] sm:$0xff]
        %v1259 = vld [vmem:[#allocation2 + $0xb1] sm:$0xff]
        %v1260 = vld [vmem:[#allocation2 + $0xc1] sm:$0xff]
        %v1261 = vld [vmem:[#allocation2 + $0xc9] sm:$0xff]
        %v1262 = vld [vmem:[#allocation2 + $0xd9] sm:$0xff]
        %v1263 = vld [vmem:[#allocation2 + $0xe1] sm:$0xff]
        %v1264 = vld [vmem:[#allocation2 + $0xf1] sm:$0xff]
        %v1265 = vld [vmem:[#allocation2 + $0xf9] sm:$0xff]
        %v1266 = vld [vmem:[#allocation2 + $0x109] sm:$0xff]
        %v1267 = vld [vmem:[#allocation2 + $0x111] sm:$0xff]
        %v1268 = vld [vmem:[#allocation2 + $0x121] sm:$0xff]
        %v1269 = vld [vmem:[#allocation2 + $0x129] sm:$0xff]
        %v1270 = vld [vmem:[#allocation2 + $0x139] sm:$0xff]
        %v1271 = vld [vmem:[#allocation2 + $0x141] sm:$0xff]
        %v1272 = vld [vmem:[#allocation2 + $0x151] sm:$0xff]
        %v1273 = vld [vmem:[#allocation2 + $0x159] sm:$0xff]
        %v1274 = vld [vmem:[#allocation2 + $0x169] sm:$0xff]
        %v1275 = vld [vmem:[#allocation2 + $0x171] sm:$0xff]
        %1308 = vrot.lane.b32.xlu0 %v1244, 32
        %v1309 = vpop.permute.xlu0 %1308
        %1310 = vrot.lane.b32.xlu0 %v1245, 32
        %v1311 = vpop.permute.xlu0 %1310
        %1312 = vrot.lane.b32.xlu0 %v1246, 32
        %v1313 = vpop.permute.xlu0 %1312
        %1314 = vrot.lane.b32.xlu0 %v1247, 32
        %v1315 = vpop.permute.xlu0 %1314
        %1316 = vrot.lane.b32.xlu0 %v1248, 32
        %v1317 = vpop.permute.xlu0 %1316
        %1318 = vrot.lane.b32.xlu0 %v1249, 32
        %v1319 = vpop.permute.xlu0 %1318
        %1320 = vrot.lane.b32.xlu0 %v1250, 32
        %v1321 = vpop.permute.xlu0 %1320
        %1322 = vrot.lane.b32.xlu0 %v1251, 32
        %v1323 = vpop.permute.xlu0 %1322
        %1324 = vrot.lane.b32.xlu0 %v1252, 32
        %v1325 = vpop.permute.xlu0 %1324
        %1326 = vrot.lane.b32.xlu0 %v1253, 32
        %v1327 = vpop.permute.xlu0 %1326
        %1328 = vrot.lane.b32.xlu0 %v1254, 32
        %v1329 = vpop.permute.xlu0 %1328
        %1330 = vrot.lane.b32.xlu0 %v1255, 32
        %v1331 = vpop.permute.xlu0 %1330
        %1332 = vrot.lane.b32.xlu0 %v1256, 32
        %v1333 = vpop.permute.xlu0 %1332
        %1334 = vrot.lane.b32.xlu0 %v1257, 32
        %v1335 = vpop.permute.xlu0 %1334
        %1336 = vrot.lane.b32.xlu0 %v1258, 32
        %v1337 = vpop.permute.xlu0 %1336
        %1338 = vrot.lane.b32.xlu0 %v1259, 32
        %v1339 = vpop.permute.xlu0 %1338
        %1340 = vrot.lane.b32.xlu0 %v1260, 32
        %v1341 = vpop.permute.xlu0 %1340
        %1342 = vrot.lane.b32.xlu0 %v1261, 32
        %v1343 = vpop.permute.xlu0 %1342
        %1344 = vrot.lane.b32.xlu0 %v1262, 32
        %v1345 = vpop.permute.xlu0 %1344
        %1346 = vrot.lane.b32.xlu0 %v1263, 32
        %v1347 = vpop.permute.xlu0 %1346
        %1348 = vrot.lane.b32.xlu0 %v1264, 32
        %v1349 = vpop.permute.xlu0 %1348
        %1350 = vrot.lane.b32.xlu0 %v1265, 32
        %v1351 = vpop.permute.xlu0 %1350
        %1352 = vrot.lane.b32.xlu0 %v1266, 32
        %v1353 = vpop.permute.xlu0 %1352
        %1354 = vrot.lane.b32.xlu0 %v1267, 32
        %v1355 = vpop.permute.xlu0 %1354
        %1356 = vrot.lane.b32.xlu0 %v1268, 32
        %v1357 = vpop.permute.xlu0 %1356
        %1358 = vrot.lane.b32.xlu0 %v1269, 32
        %v1359 = vpop.permute.xlu0 %1358
        %1360 = vrot.lane.b32.xlu0 %v1270, 32
        %v1361 = vpop.permute.xlu0 %1360
        %1362 = vrot.lane.b32.xlu0 %v1271, 32
        %v1363 = vpop.permute.xlu0 %1362
        %1364 = vrot.lane.b32.xlu0 %v1272, 32
        %v1365 = vpop.permute.xlu0 %1364
        %1366 = vrot.lane.b32.xlu0 %v1273, 32
        %v1367 = vpop.permute.xlu0 %1366
        %1368 = vrot.lane.b32.xlu0 %v1274, 32
        %v1369 = vpop.permute.xlu0 %1368
        %1370 = vrot.lane.b32.xlu0 %v1275, 32
        %v1371 = vpop.permute.xlu0 %1370
        %vm1404 = vcmask 523520
        %1405 = vst.msk [vmem:[#allocation9] sm:$0xff] %vm1404, %v1309
        %1406 = vst.msk [vmem:[#allocation9 + $0x18] sm:$0xff] %vm1404, %v1311
        %1407 = vst.msk [vmem:[#allocation9 + $0x30] sm:$0xff] %vm1404, %v1313
        %1408 = vst.msk [vmem:[#allocation9 + $0x48] sm:$0xff] %vm1404, %v1315
        %1409 = vst.msk [vmem:[#allocation9 + $0x60] sm:$0xff] %vm1404, %v1317
        %1410 = vst.msk [vmem:[#allocation9 + $0x78] sm:$0xff] %vm1404, %v1319
        %1411 = vst.msk [vmem:[#allocation9 + $0x90] sm:$0xff] %vm1404, %v1321
        %1412 = vst.msk [vmem:[#allocation9 + $0xa8] sm:$0xff] %vm1404, %v1323
        %1413 = vst.msk [vmem:[#allocation9 + $0xc0] sm:$0xff] %vm1404, %v1325
        %1414 = vst.msk [vmem:[#allocation9 + $0xd8] sm:$0xff] %vm1404, %v1327
        %1415 = vst.msk [vmem:[#allocation9 + $0xf0] sm:$0xff] %vm1404, %v1329
        %1416 = vst.msk [vmem:[#allocation9 + $0x108] sm:$0xff] %vm1404, %v1331
        %1417 = vst.msk [vmem:[#allocation9 + $0x120] sm:$0xff] %vm1404, %v1333
        %1418 = vst.msk [vmem:[#allocation9 + $0x138] sm:$0xff] %vm1404, %v1335
        %1419 = vst.msk [vmem:[#allocation9 + $0x150] sm:$0xff] %vm1404, %v1337
        %1420 = vst.msk [vmem:[#allocation9 + $0x168] sm:$0xff] %vm1404, %v1339
        %1421 = vst.msk [vmem:[#allocation9 + $0x180] sm:$0xff] %vm1404, %v1341
        %1422 = vst.msk [vmem:[#allocation9 + $0x198] sm:$0xff] %vm1404, %v1343
        %1423 = vst.msk [vmem:[#allocation9 + $0x1b0] sm:$0xff] %vm1404, %v1345
        %1424 = vst.msk [vmem:[#allocation9 + $0x1c8] sm:$0xff] %vm1404, %v1347
        %1425 = vst.msk [vmem:[#allocation9 + $0x1e0] sm:$0xff] %vm1404, %v1349
        %1426 = vst.msk [vmem:[#allocation9 + $0x1f8] sm:$0xff] %vm1404, %v1351
        %1427 = vst.msk [vmem:[#allocation9 + $0x210] sm:$0xff] %vm1404, %v1353
        %1428 = vst.msk [vmem:[#allocation9 + $0x228] sm:$0xff] %vm1404, %v1355
        %1429 = vst.msk [vmem:[#allocation9 + $0x240] sm:$0xff] %vm1404, %v1357
        %1430 = vst.msk [vmem:[#allocation9 + $0x258] sm:$0xff] %vm1404, %v1359
        %1431 = vst.msk [vmem:[#allocation9 + $0x270] sm:$0xff] %vm1404, %v1361
        %1432 = vst.msk [vmem:[#allocation9 + $0x288] sm:$0xff] %vm1404, %v1363
        %1433 = vst.msk [vmem:[#allocation9 + $0x2a0] sm:$0xff] %vm1404, %v1365
        %1434 = vst.msk [vmem:[#allocation9 + $0x2b8] sm:$0xff] %vm1404, %v1367
        %1435 = vst.msk [vmem:[#allocation9 + $0x2d0] sm:$0xff] %vm1404, %v1369
        %1436 = vst.msk [vmem:[#allocation9 + $0x2e8] sm:$0xff] %vm1404, %v1371
        %v1437 = vld [vmem:[#allocation2 + $0x2] sm:$0xff]
        %v1438 = vld [vmem:[#allocation2 + $0xa] sm:$0xff]
        %v1439 = vld [vmem:[#allocation2 + $0x1a] sm:$0xff]
        %v1440 = vld [vmem:[#allocation2 + $0x22] sm:$0xff]
        %v1441 = vld [vmem:[#allocation2 + $0x32] sm:$0xff]
        %v1442 = vld [vmem:[#allocation2 + $0x3a] sm:$0xff]
        %v1443 = vld [vmem:[#allocation2 + $0x4a] sm:$0xff]
        %v1444 = vld [vmem:[#allocation2 + $0x52] sm:$0xff]
        %v1445 = vld [vmem:[#allocation2 + $0x62] sm:$0xff]
        %v1446 = vld [vmem:[#allocation2 + $0x6a] sm:$0xff]
        %v1447 = vld [vmem:[#allocation2 + $0x7a] sm:$0xff]
        %v1448 = vld [vmem:[#allocation2 + $0x82] sm:$0xff]
        %v1449 = vld [vmem:[#allocation2 + $0x92] sm:$0xff]
        %v1450 = vld [vmem:[#allocation2 + $0x9a] sm:$0xff]
        %v1451 = vld [vmem:[#allocation2 + $0xaa] sm:$0xff]
        %v1452 = vld [vmem:[#allocation2 + $0xb2] sm:$0xff]
        %v1453 = vld [vmem:[#allocation2 + $0xc2] sm:$0xff]
        %v1454 = vld [vmem:[#allocation2 + $0xca] sm:$0xff]
        %v1455 = vld [vmem:[#allocation2 + $0xda] sm:$0xff]
        %v1456 = vld [vmem:[#allocation2 + $0xe2] sm:$0xff]
        %v1457 = vld [vmem:[#allocation2 + $0xf2] sm:$0xff]
        %v1458 = vld [vmem:[#allocation2 + $0xfa] sm:$0xff]
        %v1459 = vld [vmem:[#allocation2 + $0x10a] sm:$0xff]
        %v1460 = vld [vmem:[#allocation2 + $0x112] sm:$0xff]
        %v1461 = vld [vmem:[#allocation2 + $0x122] sm:$0xff]
        %v1462 = vld [vmem:[#allocation2 + $0x12a] sm:$0xff]
        %v1463 = vld [vmem:[#allocation2 + $0x13a] sm:$0xff]
        %v1464 = vld [vmem:[#allocation2 + $0x142] sm:$0xff]
        %v1465 = vld [vmem:[#allocation2 + $0x152] sm:$0xff]
        %v1466 = vld [vmem:[#allocation2 + $0x15a] sm:$0xff]
        %v1467 = vld [vmem:[#allocation2 + $0x16a] sm:$0xff]
        %v1468 = vld [vmem:[#allocation2 + $0x172] sm:$0xff]
        %1501 = vrot.lane.b32.xlu0 %v1437, 64
        %v1502 = vpop.permute.xlu0 %1501
        %1503 = vrot.lane.b32.xlu0 %v1438, 64
        %v1504 = vpop.permute.xlu0 %1503
        %1505 = vrot.lane.b32.xlu0 %v1439, 64
        %v1506 = vpop.permute.xlu0 %1505
        %1507 = vrot.lane.b32.xlu0 %v1440, 64
        %v1508 = vpop.permute.xlu0 %1507
        %1509 = vrot.lane.b32.xlu0 %v1441, 64
        %v1510 = vpop.permute.xlu0 %1509
        %1511 = vrot.lane.b32.xlu0 %v1442, 64
        %v1512 = vpop.permute.xlu0 %1511
        %1513 = vrot.lane.b32.xlu0 %v1443, 64
        %v1514 = vpop.permute.xlu0 %1513
        %1515 = vrot.lane.b32.xlu0 %v1444, 64
        %v1516 = vpop.permute.xlu0 %1515
        %1517 = vrot.lane.b32.xlu0 %v1445, 64
        %v1518 = vpop.permute.xlu0 %1517
        %1519 = vrot.lane.b32.xlu0 %v1446, 64
        %v1520 = vpop.permute.xlu0 %1519
        %1521 = vrot.lane.b32.xlu0 %v1447, 64
        %v1522 = vpop.permute.xlu0 %1521
        %1523 = vrot.lane.b32.xlu0 %v1448, 64
        %v1524 = vpop.permute.xlu0 %1523
        %1525 = vrot.lane.b32.xlu0 %v1449, 64
        %v1526 = vpop.permute.xlu0 %1525
        %1527 = vrot.lane.b32.xlu0 %v1450, 64
        %v1528 = vpop.permute.xlu0 %1527
        %1529 = vrot.lane.b32.xlu0 %v1451, 64
        %v1530 = vpop.permute.xlu0 %1529
        %1531 = vrot.lane.b32.xlu0 %v1452, 64
        %v1532 = vpop.permute.xlu0 %1531
        %1533 = vrot.lane.b32.xlu0 %v1453, 64
        %v1534 = vpop.permute.xlu0 %1533
        %1535 = vrot.lane.b32.xlu0 %v1454, 64
        %v1536 = vpop.permute.xlu0 %1535
        %1537 = vrot.lane.b32.xlu0 %v1455, 64
        %v1538 = vpop.permute.xlu0 %1537
        %1539 = vrot.lane.b32.xlu0 %v1456, 64
        %v1540 = vpop.permute.xlu0 %1539
        %1541 = vrot.lane.b32.xlu0 %v1457, 64
        %v1542 = vpop.permute.xlu0 %1541
        %1543 = vrot.lane.b32.xlu0 %v1458, 64
        %v1544 = vpop.permute.xlu0 %1543
        %1545 = vrot.lane.b32.xlu0 %v1459, 64
        %v1546 = vpop.permute.xlu0 %1545
        %1547 = vrot.lane.b32.xlu0 %v1460, 64
        %v1548 = vpop.permute.xlu0 %1547
        %1549 = vrot.lane.b32.xlu0 %v1461, 64
        %v1550 = vpop.permute.xlu0 %1549
        %1551 = vrot.lane.b32.xlu0 %v1462, 64
        %v1552 = vpop.permute.xlu0 %1551
        %1553 = vrot.lane.b32.xlu0 %v1463, 64
        %v1554 = vpop.permute.xlu0 %1553
        %1555 = vrot.lane.b32.xlu0 %v1464, 64
        %v1556 = vpop.permute.xlu0 %1555
        %1557 = vrot.lane.b32.xlu0 %v1465, 64
        %v1558 = vpop.permute.xlu0 %1557
        %1559 = vrot.lane.b32.xlu0 %v1466, 64
        %v1560 = vpop.permute.xlu0 %1559
        %1561 = vrot.lane.b32.xlu0 %v1467, 64
        %v1562 = vpop.permute.xlu0 %1561
        %1563 = vrot.lane.b32.xlu0 %v1468, 64
        %v1564 = vpop.permute.xlu0 %1563
        %vm1597 = vcmask 785920
        %1598 = vst.msk [vmem:[#allocation9] sm:$0xff] %vm1597, %v1502
        %1599 = vst.msk [vmem:[#allocation9 + $0x18] sm:$0xff] %vm1597, %v1504
        %1600 = vst.msk [vmem:[#allocation9 + $0x30] sm:$0xff] %vm1597, %v1506
        %1601 = vst.msk [vmem:[#allocation9 + $0x48] sm:$0xff] %vm1597, %v1508
        %1602 = vst.msk [vmem:[#allocation9 + $0x60] sm:$0xff] %vm1597, %v1510
        %1603 = vst.msk [vmem:[#allocation9 + $0x78] sm:$0xff] %vm1597, %v1512
        %1604 = vst.msk [vmem:[#allocation9 + $0x90] sm:$0xff] %vm1597, %v1514
        %1605 = vst.msk [vmem:[#allocation9 + $0xa8] sm:$0xff] %vm1597, %v1516
        %1606 = vst.msk [vmem:[#allocation9 + $0xc0] sm:$0xff] %vm1597, %v1518
        %1607 = vst.msk [vmem:[#allocation9 + $0xd8] sm:$0xff] %vm1597, %v1520
        %1608 = vst.msk [vmem:[#allocation9 + $0xf0] sm:$0xff] %vm1597, %v1522
        %1609 = vst.msk [vmem:[#allocation9 + $0x108] sm:$0xff] %vm1597, %v1524
        %1610 = vst.msk [vmem:[#allocation9 + $0x120] sm:$0xff] %vm1597, %v1526
        %1611 = vst.msk [vmem:[#allocation9 + $0x138] sm:$0xff] %vm1597, %v1528
        %1612 = vst.msk [vmem:[#allocation9 + $0x150] sm:$0xff] %vm1597, %v1530
        %1613 = vst.msk [vmem:[#allocation9 + $0x168] sm:$0xff] %vm1597, %v1532
        %1614 = vst.msk [vmem:[#allocation9 + $0x180] sm:$0xff] %vm1597, %v1534
        %1615 = vst.msk [vmem:[#allocation9 + $0x198] sm:$0xff] %vm1597, %v1536
        %1616 = vst.msk [vmem:[#allocation9 + $0x1b0] sm:$0xff] %vm1597, %v1538
        %1617 = vst.msk [vmem:[#allocation9 + $0x1c8] sm:$0xff] %vm1597, %v1540
        %1618 = vst.msk [vmem:[#allocation9 + $0x1e0] sm:$0xff] %vm1597, %v1542
        %1619 = vst.msk [vmem:[#allocation9 + $0x1f8] sm:$0xff] %vm1597, %v1544
        %1620 = vst.msk [vmem:[#allocation9 + $0x210] sm:$0xff] %vm1597, %v1546
        %1621 = vst.msk [vmem:[#allocation9 + $0x228] sm:$0xff] %vm1597, %v1548
        %1622 = vst.msk [vmem:[#allocation9 + $0x240] sm:$0xff] %vm1597, %v1550
        %1623 = vst.msk [vmem:[#allocation9 + $0x258] sm:$0xff] %vm1597, %v1552
        %1624 = vst.msk [vmem:[#allocation9 + $0x270] sm:$0xff] %vm1597, %v1554
        %1625 = vst.msk [vmem:[#allocation9 + $0x288] sm:$0xff] %vm1597, %v1556
        %1626 = vst.msk [vmem:[#allocation9 + $0x2a0] sm:$0xff] %vm1597, %v1558
        %1627 = vst.msk [vmem:[#allocation9 + $0x2b8] sm:$0xff] %vm1597, %v1560
        %1628 = vst.msk [vmem:[#allocation9 + $0x2d0] sm:$0xff] %vm1597, %v1562
        %1629 = vst.msk [vmem:[#allocation9 + $0x2e8] sm:$0xff] %vm1597, %v1564
        %v1630 = vld [vmem:[%s1147] sm:$0xff]
        %v1631 = vld [vmem:[%s1147 + $0x8] sm:$0xff]
        %v1632 = vld [vmem:[%s1147 + $0x18] sm:$0xff]
        %v1633 = vld [vmem:[%s1147 + $0x20] sm:$0xff]
        %v1634 = vld [vmem:[%s1147 + $0x30] sm:$0xff]
        %v1635 = vld [vmem:[%s1147 + $0x38] sm:$0xff]
        %v1636 = vld [vmem:[%s1147 + $0x48] sm:$0xff]
        %v1637 = vld [vmem:[%s1147 + $0x50] sm:$0xff]
        %v1638 = vld [vmem:[%s1147 + $0x60] sm:$0xff]
        %v1639 = vld [vmem:[%s1147 + $0x68] sm:$0xff]
        %v1640 = vld [vmem:[%s1147 + $0x78] sm:$0xff]
        %v1641 = vld [vmem:[%s1147 + $0x80] sm:$0xff]
        %v1642 = vld [vmem:[%s1147 + $0x90] sm:$0xff]
        %v1643 = vld [vmem:[%s1147 + $0x98] sm:$0xff]
        %v1644 = vld [vmem:[%s1147 + $0xa8] sm:$0xff]
        %v1645 = vld [vmem:[%s1147 + $0xb0] sm:$0xff]
        %v1646 = vld [vmem:[%s1147 + $0xc0] sm:$0xff]
        %v1647 = vld [vmem:[%s1147 + $0xc8] sm:$0xff]
        %v1648 = vld [vmem:[%s1147 + $0xd8] sm:$0xff]
        %v1649 = vld [vmem:[%s1147 + $0xe0] sm:$0xff]
        %v1650 = vld [vmem:[%s1147 + $0xf0] sm:$0xff]
        %v1651 = vld [vmem:[%s1147 + $0xf8] sm:$0xff]
        %v1652 = vld [vmem:[%s1147 + $0x108] sm:$0xff]
        %v1653 = vld [vmem:[%s1147 + $0x110] sm:$0xff]
        %v1654 = vld [vmem:[%s1147 + $0x120] sm:$0xff]
        %v1655 = vld [vmem:[%s1147 + $0x128] sm:$0xff]
        %v1656 = vld [vmem:[%s1147 + $0x138] sm:$0xff]
        %v1657 = vld [vmem:[%s1147 + $0x140] sm:$0xff]
        %v1658 = vld [vmem:[%s1147 + $0x150] sm:$0xff]
        %v1659 = vld [vmem:[%s1147 + $0x158] sm:$0xff]
        %v1660 = vld [vmem:[%s1147 + $0x168] sm:$0xff]
        %v1661 = vld [vmem:[%s1147 + $0x170] sm:$0xff]
        %1694 = vrot.lane.b32.xlu0 %v1630, 96
        %v1695 = vpop.permute.xlu0 %1694
        %1696 = vrot.lane.b32.xlu0 %v1631, 96
        %v1697 = vpop.permute.xlu0 %1696
        %1698 = vrot.lane.b32.xlu0 %v1632, 96
        %v1699 = vpop.permute.xlu0 %1698
        %1700 = vrot.lane.b32.xlu0 %v1633, 96
        %v1701 = vpop.permute.xlu0 %1700
        %1702 = vrot.lane.b32.xlu0 %v1634, 96
        %v1703 = vpop.permute.xlu0 %1702
        %1704 = vrot.lane.b32.xlu0 %v1635, 96
        %v1705 = vpop.permute.xlu0 %1704
        %1706 = vrot.lane.b32.xlu0 %v1636, 96
        %v1707 = vpop.permute.xlu0 %1706
        %1708 = vrot.lane.b32.xlu0 %v1637, 96
        %v1709 = vpop.permute.xlu0 %1708
        %1710 = vrot.lane.b32.xlu0 %v1638, 96
        %v1711 = vpop.permute.xlu0 %1710
        %1712 = vrot.lane.b32.xlu0 %v1639, 96
        %v1713 = vpop.permute.xlu0 %1712
        %1714 = vrot.lane.b32.xlu0 %v1640, 96
        %v1715 = vpop.permute.xlu0 %1714
        %1716 = vrot.lane.b32.xlu0 %v1641, 96
        %v1717 = vpop.permute.xlu0 %1716
        %1718 = vrot.lane.b32.xlu0 %v1642, 96
        %v1719 = vpop.permute.xlu0 %1718
        %1720 = vrot.lane.b32.xlu0 %v1643, 96
        %v1721 = vpop.permute.xlu0 %1720
        %1722 = vrot.lane.b32.xlu0 %v1644, 96
        %v1723 = vpop.permute.xlu0 %1722
        %1724 = vrot.lane.b32.xlu0 %v1645, 96
        %v1725 = vpop.permute.xlu0 %1724
        %1726 = vrot.lane.b32.xlu0 %v1646, 96
        %v1727 = vpop.permute.xlu0 %1726
        %1728 = vrot.lane.b32.xlu0 %v1647, 96
        %v1729 = vpop.permute.xlu0 %1728
        %1730 = vrot.lane.b32.xlu0 %v1648, 96
        %v1731 = vpop.permute.xlu0 %1730
        %1732 = vrot.lane.b32.xlu0 %v1649, 96
        %v1733 = vpop.permute.xlu0 %1732
        %1734 = vrot.lane.b32.xlu0 %v1650, 96
        %v1735 = vpop.permute.xlu0 %1734
        %1736 = vrot.lane.b32.xlu0 %v1651, 96
        %v1737 = vpop.permute.xlu0 %1736
        %1738 = vrot.lane.b32.xlu0 %v1652, 96
        %v1739 = vpop.permute.xlu0 %1738
        %1740 = vrot.lane.b32.xlu0 %v1653, 96
        %v1741 = vpop.permute.xlu0 %1740
        %1742 = vrot.lane.b32.xlu0 %v1654, 96
        %v1743 = vpop.permute.xlu0 %1742
        %1744 = vrot.lane.b32.xlu0 %v1655, 96
        %v1745 = vpop.permute.xlu0 %1744
        %1746 = vrot.lane.b32.xlu0 %v1656, 96
        %v1747 = vpop.permute.xlu0 %1746
        %1748 = vrot.lane.b32.xlu0 %v1657, 96
        %v1749 = vpop.permute.xlu0 %1748
        %1750 = vrot.lane.b32.xlu0 %v1658, 96
        %v1751 = vpop.permute.xlu0 %1750
        %1752 = vrot.lane.b32.xlu0 %v1659, 96
        %v1753 = vpop.permute.xlu0 %1752
        %1754 = vrot.lane.b32.xlu0 %v1660, 96
        %v1755 = vpop.permute.xlu0 %1754
        %1756 = vrot.lane.b32.xlu0 %v1661, 96
        %v1757 = vpop.permute.xlu0 %1756
        %vm1790 = vcmask 1048320
        %1791 = vst.msk [vmem:[#allocation9] sm:$0xff] %vm1790, %v1695
        %1792 = vst.msk [vmem:[#allocation9 + $0x18] sm:$0xff] %vm1790, %v1697
        %1793 = vst.msk [vmem:[#allocation9 + $0x30] sm:$0xff] %vm1790, %v1699
        %1794 = vst.msk [vmem:[#allocation9 + $0x48] sm:$0xff] %vm1790, %v1701
        %1795 = vst.msk [vmem:[#allocation9 + $0x60] sm:$0xff] %vm1790, %v1703
        %1796 = vst.msk [vmem:[#allocation9 + $0x78] sm:$0xff] %vm1790, %v1705
        %1797 = vst.msk [vmem:[#allocation9 + $0x90] sm:$0xff] %vm1790, %v1707
        %1798 = vst.msk [vmem:[#allocation9 + $0xa8] sm:$0xff] %vm1790, %v1709
        %1799 = vst.msk [vmem:[#allocation9 + $0xc0] sm:$0xff] %vm1790, %v1711
        %1800 = vst.msk [vmem:[#allocation9 + $0xd8] sm:$0xff] %vm1790, %v1713
        %1801 = vst.msk [vmem:[#allocation9 + $0xf0] sm:$0xff] %vm1790, %v1715
        %1802 = vst.msk [vmem:[#allocation9 + $0x108] sm:$0xff] %vm1790, %v1717
        %1803 = vst.msk [vmem:[#allocation9 + $0x120] sm:$0xff] %vm1790, %v1719
        %1804 = vst.msk [vmem:[#allocation9 + $0x138] sm:$0xff] %vm1790, %v1721
        %1805 = vst.msk [vmem:[#allocation9 + $0x150] sm:$0xff] %vm1790, %v1723
        %1806 = vst.msk [vmem:[#allocation9 + $0x168] sm:$0xff] %vm1790, %v1725
        %1807 = vst.msk [vmem:[#allocation9 + $0x180] sm:$0xff] %vm1790, %v1727
        %1808 = vst.msk [vmem:[#allocation9 + $0x198] sm:$0xff] %vm1790, %v1729
        %1809 = vst.msk [vmem:[#allocation9 + $0x1b0] sm:$0xff] %vm1790, %v1731
        %1810 = vst.msk [vmem:[#allocation9 + $0x1c8] sm:$0xff] %vm1790, %v1733
        %1811 = vst.msk [vmem:[#allocation9 + $0x1e0] sm:$0xff] %vm1790, %v1735
        %1812 = vst.msk [vmem:[#allocation9 + $0x1f8] sm:$0xff] %vm1790, %v1737
        %1813 = vst.msk [vmem:[#allocation9 + $0x210] sm:$0xff] %vm1790, %v1739
        %1814 = vst.msk [vmem:[#allocation9 + $0x228] sm:$0xff] %vm1790, %v1741
        %1815 = vst.msk [vmem:[#allocation9 + $0x240] sm:$0xff] %vm1790, %v1743
        %1816 = vst.msk [vmem:[#allocation9 + $0x258] sm:$0xff] %vm1790, %v1745
        %1817 = vst.msk [vmem:[#allocation9 + $0x270] sm:$0xff] %vm1790, %v1747
        %1818 = vst.msk [vmem:[#allocation9 + $0x288] sm:$0xff] %vm1790, %v1749
        %1819 = vst.msk [vmem:[#allocation9 + $0x2a0] sm:$0xff] %vm1790, %v1751
        %1820 = vst.msk [vmem:[#allocation9 + $0x2b8] sm:$0xff] %vm1790, %v1753
        %1821 = vst.msk [vmem:[#allocation9 + $0x2d0] sm:$0xff] %vm1790, %v1755
        %1822 = vst.msk [vmem:[#allocation9 + $0x2e8] sm:$0xff] %vm1790, %v1757
        %v1823 = vld [vmem:[%s1147 + $0x1] sm:$0xff]
        %v1824 = vld [vmem:[%s1147 + $0x9] sm:$0xff]
        %v1825 = vld [vmem:[%s1147 + $0x19] sm:$0xff]
        %v1826 = vld [vmem:[%s1147 + $0x21] sm:$0xff]
        %v1827 = vld [vmem:[%s1147 + $0x31] sm:$0xff]
        %v1828 = vld [vmem:[%s1147 + $0x39] sm:$0xff]
        %v1829 = vld [vmem:[%s1147 + $0x49] sm:$0xff]
        %v1830 = vld [vmem:[%s1147 + $0x51] sm:$0xff]
        %v1831 = vld [vmem:[%s1147 + $0x61] sm:$0xff]
        %v1832 = vld [vmem:[%s1147 + $0x69] sm:$0xff]
        %v1833 = vld [vmem:[%s1147 + $0x79] sm:$0xff]
        %v1834 = vld [vmem:[%s1147 + $0x81] sm:$0xff]
        %v1835 = vld [vmem:[%s1147 + $0x91] sm:$0xff]
        %v1836 = vld [vmem:[%s1147 + $0x99] sm:$0xff]
        %v1837 = vld [vmem:[%s1147 + $0xa9] sm:$0xff]
        %v1838 = vld [vmem:[%s1147 + $0xb1] sm:$0xff]
        %v1839 = vld [vmem:[%s1147 + $0xc1] sm:$0xff]
        %v1840 = vld [vmem:[%s1147 + $0xc9] sm:$0xff]
        %v1841 = vld [vmem:[%s1147 + $0xd9] sm:$0xff]
        %v1842 = vld [vmem:[%s1147 + $0xe1] sm:$0xff]
        %v1843 = vld [vmem:[%s1147 + $0xf1] sm:$0xff]
        %v1844 = vld [vmem:[%s1147 + $0xf9] sm:$0xff]
        %v1845 = vld [vmem:[%s1147 + $0x109] sm:$0xff]
        %v1846 = vld [vmem:[%s1147 + $0x111] sm:$0xff]
        %v1847 = vld [vmem:[%s1147 + $0x121] sm:$0xff]
        %v1848 = vld [vmem:[%s1147 + $0x129] sm:$0xff]
        %v1849 = vld [vmem:[%s1147 + $0x139] sm:$0xff]
        %v1850 = vld [vmem:[%s1147 + $0x141] sm:$0xff]
        %v1851 = vld [vmem:[%s1147 + $0x151] sm:$0xff]
        %v1852 = vld [vmem:[%s1147 + $0x159] sm:$0xff]
        %v1853 = vld [vmem:[%s1147 + $0x169] sm:$0xff]
        %v1854 = vld [vmem:[%s1147 + $0x171] sm:$0xff]
        %1855 = vst.msk [vmem:[#allocation9 + $0x8] sm:$0xff] %vm1091, %v1823
        %1856 = vst.msk [vmem:[#allocation9 + $0x20] sm:$0xff] %vm1091, %v1824
        %1857 = vst.msk [vmem:[#allocation9 + $0x38] sm:$0xff] %vm1091, %v1825
        %1858 = vst.msk [vmem:[#allocation9 + $0x50] sm:$0xff] %vm1091, %v1826
        %1859 = vst.msk [vmem:[#allocation9 + $0x68] sm:$0xff] %vm1091, %v1827
        %1860 = vst.msk [vmem:[#allocation9 + $0x80] sm:$0xff] %vm1091, %v1828
        %1861 = vst.msk [vmem:[#allocation9 + $0x98] sm:$0xff] %vm1091, %v1829
        %1862 = vst.msk [vmem:[#allocation9 + $0xb0] sm:$0xff] %vm1091, %v1830
        %1863 = vst.msk [vmem:[#allocation9 + $0xc8] sm:$0xff] %vm1091, %v1831
        %1864 = vst.msk [vmem:[#allocation9 + $0xe0] sm:$0xff] %vm1091, %v1832
        %1865 = vst.msk [vmem:[#allocation9 + $0xf8] sm:$0xff] %vm1091, %v1833
        %1866 = vst.msk [vmem:[#allocation9 + $0x110] sm:$0xff] %vm1091, %v1834
        %1867 = vst.msk [vmem:[#allocation9 + $0x128] sm:$0xff] %vm1091, %v1835
        %1868 = vst.msk [vmem:[#allocation9 + $0x140] sm:$0xff] %vm1091, %v1836
        %1869 = vst.msk [vmem:[#allocation9 + $0x158] sm:$0xff] %vm1091, %v1837
        %1870 = vst.msk [vmem:[#allocation9 + $0x170] sm:$0xff] %vm1091, %v1838
        %1871 = vst.msk [vmem:[#allocation9 + $0x188] sm:$0xff] %vm1091, %v1839
        %1872 = vst.msk [vmem:[#allocation9 + $0x1a0] sm:$0xff] %vm1091, %v1840
        %1873 = vst.msk [vmem:[#allocation9 + $0x1b8] sm:$0xff] %vm1091, %v1841
        %1874 = vst.msk [vmem:[#allocation9 + $0x1d0] sm:$0xff] %vm1091, %v1842
        %1875 = vst.msk [vmem:[#allocation9 + $0x1e8] sm:$0xff] %vm1091, %v1843
        %1876 = vst.msk [vmem:[#allocation9 + $0x200] sm:$0xff] %vm1091, %v1844
        %1877 = vst.msk [vmem:[#allocation9 + $0x218] sm:$0xff] %vm1091, %v1845
        %1878 = vst.msk [vmem:[#allocation9 + $0x230] sm:$0xff] %vm1091, %v1846
        %1879 = vst.msk [vmem:[#allocation9 + $0x248] sm:$0xff] %vm1091, %v1847
        %1880 = vst.msk [vmem:[#allocation9 + $0x260] sm:$0xff] %vm1091, %v1848
        %1881 = vst.msk [vmem:[#allocation9 + $0x278] sm:$0xff] %vm1091, %v1849
        %1882 = vst.msk [vmem:[#allocation9 + $0x290] sm:$0xff] %vm1091, %v1850
        %1883 = vst.msk [vmem:[#allocation9 + $0x2a8] sm:$0xff] %vm1091, %v1851
        %1884 = vst.msk [vmem:[#allocation9 + $0x2c0] sm:$0xff] %vm1091, %v1852
        %1885 = vst.msk [vmem:[#allocation9 + $0x2d8] sm:$0xff] %vm1091, %v1853
        %1886 = vst.msk [vmem:[#allocation9 + $0x2f0] sm:$0xff] %vm1091, %v1854
        %v1887 = vld [vmem:[%s1147 + $0x2] sm:$0xff]
        %v1888 = vld [vmem:[%s1147 + $0xa] sm:$0xff]
        %v1889 = vld [vmem:[%s1147 + $0x1a] sm:$0xff]
        %v1890 = vld [vmem:[%s1147 + $0x22] sm:$0xff]
        %v1891 = vld [vmem:[%s1147 + $0x32] sm:$0xff]
        %v1892 = vld [vmem:[%s1147 + $0x3a] sm:$0xff]
        %v1893 = vld [vmem:[%s1147 + $0x4a] sm:$0xff]
        %v1894 = vld [vmem:[%s1147 + $0x52] sm:$0xff]
        %v1895 = vld [vmem:[%s1147 + $0x62] sm:$0xff]
        %v1896 = vld [vmem:[%s1147 + $0x6a] sm:$0xff]
        %v1897 = vld [vmem:[%s1147 + $0x7a] sm:$0xff]
        %v1898 = vld [vmem:[%s1147 + $0x82] sm:$0xff]
        %v1899 = vld [vmem:[%s1147 + $0x92] sm:$0xff]
        %v1900 = vld [vmem:[%s1147 + $0x9a] sm:$0xff]
        %v1901 = vld [vmem:[%s1147 + $0xaa] sm:$0xff]
        %v1902 = vld [vmem:[%s1147 + $0xb2] sm:$0xff]
        %v1903 = vld [vmem:[%s1147 + $0xc2] sm:$0xff]
        %v1904 = vld [vmem:[%s1147 + $0xca] sm:$0xff]
        %v1905 = vld [vmem:[%s1147 + $0xda] sm:$0xff]
        %v1906 = vld [vmem:[%s1147 + $0xe2] sm:$0xff]
        %v1907 = vld [vmem:[%s1147 + $0xf2] sm:$0xff]
        %v1908 = vld [vmem:[%s1147 + $0xfa] sm:$0xff]
        %v1909 = vld [vmem:[%s1147 + $0x10a] sm:$0xff]
        %v1910 = vld [vmem:[%s1147 + $0x112] sm:$0xff]
        %v1911 = vld [vmem:[%s1147 + $0x122] sm:$0xff]
        %v1912 = vld [vmem:[%s1147 + $0x12a] sm:$0xff]
        %v1913 = vld [vmem:[%s1147 + $0x13a] sm:$0xff]
        %v1914 = vld [vmem:[%s1147 + $0x142] sm:$0xff]
        %v1915 = vld [vmem:[%s1147 + $0x152] sm:$0xff]
        %v1916 = vld [vmem:[%s1147 + $0x15a] sm:$0xff]
        %v1917 = vld [vmem:[%s1147 + $0x16a] sm:$0xff]
        %v1918 = vld [vmem:[%s1147 + $0x172] sm:$0xff]
        %1951 = vrot.lane.b32.xlu0 %v1887, 32
        %v1952 = vpop.permute.xlu0 %1951
        %1953 = vrot.lane.b32.xlu0 %v1888, 32
        %v1954 = vpop.permute.xlu0 %1953
        %1955 = vrot.lane.b32.xlu0 %v1889, 32
        %v1956 = vpop.permute.xlu0 %1955
        %1957 = vrot.lane.b32.xlu0 %v1890, 32
        %v1958 = vpop.permute.xlu0 %1957
        %1959 = vrot.lane.b32.xlu0 %v1891, 32
        %v1960 = vpop.permute.xlu0 %1959
        %1961 = vrot.lane.b32.xlu0 %v1892, 32
        %v1962 = vpop.permute.xlu0 %1961
        %1963 = vrot.lane.b32.xlu0 %v1893, 32
        %v1964 = vpop.permute.xlu0 %1963
        %1965 = vrot.lane.b32.xlu0 %v1894, 32
        %v1966 = vpop.permute.xlu0 %1965
        %1967 = vrot.lane.b32.xlu0 %v1895, 32
        %v1968 = vpop.permute.xlu0 %1967
        %1969 = vrot.lane.b32.xlu0 %v1896, 32
        %v1970 = vpop.permute.xlu0 %1969
        %1971 = vrot.lane.b32.xlu0 %v1897, 32
        %v1972 = vpop.permute.xlu0 %1971
        %1973 = vrot.lane.b32.xlu0 %v1898, 32
        %v1974 = vpop.permute.xlu0 %1973
        %1975 = vrot.lane.b32.xlu0 %v1899, 32
        %v1976 = vpop.permute.xlu0 %1975
        %1977 = vrot.lane.b32.xlu0 %v1900, 32
        %v1978 = vpop.permute.xlu0 %1977
        %1979 = vrot.lane.b32.xlu0 %v1901, 32
        %v1980 = vpop.permute.xlu0 %1979
        %1981 = vrot.lane.b32.xlu0 %v1902, 32
        %v1982 = vpop.permute.xlu0 %1981
        %1983 = vrot.lane.b32.xlu0 %v1903, 32
        %v1984 = vpop.permute.xlu0 %1983
        %1985 = vrot.lane.b32.xlu0 %v1904, 32
        %v1986 = vpop.permute.xlu0 %1985
        %1987 = vrot.lane.b32.xlu0 %v1905, 32
        %v1988 = vpop.permute.xlu0 %1987
        %1989 = vrot.lane.b32.xlu0 %v1906, 32
        %v1990 = vpop.permute.xlu0 %1989
        %1991 = vrot.lane.b32.xlu0 %v1907, 32
        %v1992 = vpop.permute.xlu0 %1991
        %1993 = vrot.lane.b32.xlu0 %v1908, 32
        %v1994 = vpop.permute.xlu0 %1993
        %1995 = vrot.lane.b32.xlu0 %v1909, 32
        %v1996 = vpop.permute.xlu0 %1995
        %1997 = vrot.lane.b32.xlu0 %v1910, 32
        %v1998 = vpop.permute.xlu0 %1997
        %1999 = vrot.lane.b32.xlu0 %v1911, 32
        %v2000 = vpop.permute.xlu0 %1999
        %2001 = vrot.lane.b32.xlu0 %v1912, 32
        %v2002 = vpop.permute.xlu0 %2001
        %2003 = vrot.lane.b32.xlu0 %v1913, 32
        %v2004 = vpop.permute.xlu0 %2003
        %2005 = vrot.lane.b32.xlu0 %v1914, 32
        %v2006 = vpop.permute.xlu0 %2005
        %2007 = vrot.lane.b32.xlu0 %v1915, 32
        %v2008 = vpop.permute.xlu0 %2007
        %2009 = vrot.lane.b32.xlu0 %v1916, 32
        %v2010 = vpop.permute.xlu0 %2009
        %2011 = vrot.lane.b32.xlu0 %v1917, 32
        %v2012 = vpop.permute.xlu0 %2011
        %2013 = vrot.lane.b32.xlu0 %v1918, 32
        %v2014 = vpop.permute.xlu0 %2013
        %2047 = vst.msk [vmem:[#allocation9 + $0x8] sm:$0xff] %vm1404, %v1952
        %2048 = vst.msk [vmem:[#allocation9 + $0x20] sm:$0xff] %vm1404, %v1954
        %2049 = vst.msk [vmem:[#allocation9 + $0x38] sm:$0xff] %vm1404, %v1956
        %2050 = vst.msk [vmem:[#allocation9 + $0x50] sm:$0xff] %vm1404, %v1958
        %2051 = vst.msk [vmem:[#allocation9 + $0x68] sm:$0xff] %vm1404, %v1960
        %2052 = vst.msk [vmem:[#allocation9 + $0x80] sm:$0xff] %vm1404, %v1962
        %2053 = vst.msk [vmem:[#allocation9 + $0x98] sm:$0xff] %vm1404, %v1964
        %2054 = vst.msk [vmem:[#allocation9 + $0xb0] sm:$0xff] %vm1404, %v1966
        %2055 = vst.msk [vmem:[#allocation9 + $0xc8] sm:$0xff] %vm1404, %v1968
        %2056 = vst.msk [vmem:[#allocation9 + $0xe0] sm:$0xff] %vm1404, %v1970
        %2057 = vst.msk [vmem:[#allocation9 + $0xf8] sm:$0xff] %vm1404, %v1972
        %2058 = vst.msk [vmem:[#allocation9 + $0x110] sm:$0xff] %vm1404, %v1974
        %2059 = vst.msk [vmem:[#allocation9 + $0x128] sm:$0xff] %vm1404, %v1976
        %2060 = vst.msk [vmem:[#allocation9 + $0x140] sm:$0xff] %vm1404, %v1978
        %2061 = vst.msk [vmem:[#allocation9 + $0x158] sm:$0xff] %vm1404, %v1980
        %2062 = vst.msk [vmem:[#allocation9 + $0x170] sm:$0xff] %vm1404, %v1982
        %2063 = vst.msk [vmem:[#allocation9 + $0x188] sm:$0xff] %vm1404, %v1984
        %2064 = vst.msk [vmem:[#allocation9 + $0x1a0] sm:$0xff] %vm1404, %v1986
        %2065 = vst.msk [vmem:[#allocation9 + $0x1b8] sm:$0xff] %vm1404, %v1988
        %2066 = vst.msk [vmem:[#allocation9 + $0x1d0] sm:$0xff] %vm1404, %v1990
        %2067 = vst.msk [vmem:[#allocation9 + $0x1e8] sm:$0xff] %vm1404, %v1992
        %2068 = vst.msk [vmem:[#allocation9 + $0x200] sm:$0xff] %vm1404, %v1994
        %2069 = vst.msk [vmem:[#allocation9 + $0x218] sm:$0xff] %vm1404, %v1996
        %2070 = vst.msk [vmem:[#allocation9 + $0x230] sm:$0xff] %vm1404, %v1998
        %2071 = vst.msk [vmem:[#allocation9 + $0x248] sm:$0xff] %vm1404, %v2000
        %2072 = vst.msk [vmem:[#allocation9 + $0x260] sm:$0xff] %vm1404, %v2002
        %2073 = vst.msk [vmem:[#allocation9 + $0x278] sm:$0xff] %vm1404, %v2004
        %2074 = vst.msk [vmem:[#allocation9 + $0x290] sm:$0xff] %vm1404, %v2006
        %2075 = vst.msk [vmem:[#allocation9 + $0x2a8] sm:$0xff] %vm1404, %v2008
        %2076 = vst.msk [vmem:[#allocation9 + $0x2c0] sm:$0xff] %vm1404, %v2010
        %2077 = vst.msk [vmem:[#allocation9 + $0x2d8] sm:$0xff] %vm1404, %v2012
        %2078 = vst.msk [vmem:[#allocation9 + $0x2f0] sm:$0xff] %vm1404, %v2014
        %s2079 = scalar_lea.vmem [#allocation2], 48
        %v2080 = vld [vmem:[%s2079] sm:$0xff]
        %v2081 = vld [vmem:[%s2079 + $0x8] sm:$0xff]
        %v2082 = vld [vmem:[%s2079 + $0x18] sm:$0xff]
        %v2083 = vld [vmem:[%s2079 + $0x20] sm:$0xff]
        %v2084 = vld [vmem:[%s2079 + $0x30] sm:$0xff]
        %v2085 = vld [vmem:[%s2079 + $0x38] sm:$0xff]
        %v2086 = vld [vmem:[%s2079 + $0x48] sm:$0xff]
        %v2087 = vld [vmem:[%s2079 + $0x50] sm:$0xff]
        %v2088 = vld [vmem:[%s2079 + $0x60] sm:$0xff]
        %v2089 = vld [vmem:[%s2079 + $0x68] sm:$0xff]
        %v2090 = vld [vmem:[%s2079 + $0x78] sm:$0xff]
        %v2091 = vld [vmem:[%s2079 + $0x80] sm:$0xff]
        %v2092 = vld [vmem:[%s2079 + $0x90] sm:$0xff]
        %v2093 = vld [vmem:[%s2079 + $0x98] sm:$0xff]
        %v2094 = vld [vmem:[%s2079 + $0xa8] sm:$0xff]
        %v2095 = vld [vmem:[%s2079 + $0xb0] sm:$0xff]
        %v2096 = vld [vmem:[%s2079 + $0xc0] sm:$0xff]
        %v2097 = vld [vmem:[%s2079 + $0xc8] sm:$0xff]
        %v2098 = vld [vmem:[%s2079 + $0xd8] sm:$0xff]
        %v2099 = vld [vmem:[%s2079 + $0xe0] sm:$0xff]
        %v2100 = vld [vmem:[%s2079 + $0xf0] sm:$0xff]
        %v2101 = vld [vmem:[%s2079 + $0xf8] sm:$0xff]
        %v2102 = vld [vmem:[%s2079 + $0x108] sm:$0xff]
        %v2103 = vld [vmem:[%s2079 + $0x110] sm:$0xff]
        %v2104 = vld [vmem:[%s2079 + $0x120] sm:$0xff]
        %v2105 = vld [vmem:[%s2079 + $0x128] sm:$0xff]
        %v2106 = vld [vmem:[%s2079 + $0x138] sm:$0xff]
        %v2107 = vld [vmem:[%s2079 + $0x140] sm:$0xff]
        %v2108 = vld [vmem:[%s2079 + $0x150] sm:$0xff]
        %v2109 = vld [vmem:[%s2079 + $0x158] sm:$0xff]
        %v2110 = vld [vmem:[%s2079 + $0x168] sm:$0xff]
        %v2111 = vld [vmem:[%s2079 + $0x170] sm:$0xff]
        %2144 = vrot.lane.b32.xlu0 %v2080, 64
        %v2145 = vpop.permute.xlu0 %2144
        %2146 = vrot.lane.b32.xlu0 %v2081, 64
        %v2147 = vpop.permute.xlu0 %2146
        %2148 = vrot.lane.b32.xlu0 %v2082, 64
        %v2149 = vpop.permute.xlu0 %2148
        %2150 = vrot.lane.b32.xlu0 %v2083, 64
        %v2151 = vpop.permute.xlu0 %2150
        %2152 = vrot.lane.b32.xlu0 %v2084, 64
        %v2153 = vpop.permute.xlu0 %2152
        %2154 = vrot.lane.b32.xlu0 %v2085, 64
        %v2155 = vpop.permute.xlu0 %2154
        %2156 = vrot.lane.b32.xlu0 %v2086, 64
        %v2157 = vpop.permute.xlu0 %2156
        %2158 = vrot.lane.b32.xlu0 %v2087, 64
        %v2159 = vpop.permute.xlu0 %2158
        %2160 = vrot.lane.b32.xlu0 %v2088, 64
        %v2161 = vpop.permute.xlu0 %2160
        %2162 = vrot.lane.b32.xlu0 %v2089, 64
        %v2163 = vpop.permute.xlu0 %2162
        %2164 = vrot.lane.b32.xlu0 %v2090, 64
        %v2165 = vpop.permute.xlu0 %2164
        %2166 = vrot.lane.b32.xlu0 %v2091, 64
        %v2167 = vpop.permute.xlu0 %2166
        %2168 = vrot.lane.b32.xlu0 %v2092, 64
        %v2169 = vpop.permute.xlu0 %2168
        %2170 = vrot.lane.b32.xlu0 %v2093, 64
        %v2171 = vpop.permute.xlu0 %2170
        %2172 = vrot.lane.b32.xlu0 %v2094, 64
        %v2173 = vpop.permute.xlu0 %2172
        %2174 = vrot.lane.b32.xlu0 %v2095, 64
        %v2175 = vpop.permute.xlu0 %2174
        %2176 = vrot.lane.b32.xlu0 %v2096, 64
        %v2177 = vpop.permute.xlu0 %2176
        %2178 = vrot.lane.b32.xlu0 %v2097, 64
        %v2179 = vpop.permute.xlu0 %2178
        %2180 = vrot.lane.b32.xlu0 %v2098, 64
        %v2181 = vpop.permute.xlu0 %2180
        %2182 = vrot.lane.b32.xlu0 %v2099, 64
        %v2183 = vpop.permute.xlu0 %2182
        %2184 = vrot.lane.b32.xlu0 %v2100, 64
        %v2185 = vpop.permute.xlu0 %2184
        %2186 = vrot.lane.b32.xlu0 %v2101, 64
        %v2187 = vpop.permute.xlu0 %2186
        %2188 = vrot.lane.b32.xlu0 %v2102, 64
        %v2189 = vpop.permute.xlu0 %2188
        %2190 = vrot.lane.b32.xlu0 %v2103, 64
        %v2191 = vpop.permute.xlu0 %2190
        %2192 = vrot.lane.b32.xlu0 %v2104, 64
        %v2193 = vpop.permute.xlu0 %2192
        %2194 = vrot.lane.b32.xlu0 %v2105, 64
        %v2195 = vpop.permute.xlu0 %2194
        %2196 = vrot.lane.b32.xlu0 %v2106, 64
        %v2197 = vpop.permute.xlu0 %2196
        %2198 = vrot.lane.b32.xlu0 %v2107, 64
        %v2199 = vpop.permute.xlu0 %2198
        %2200 = vrot.lane.b32.xlu0 %v2108, 64
        %v2201 = vpop.permute.xlu0 %2200
        %2202 = vrot.lane.b32.xlu0 %v2109, 64
        %v2203 = vpop.permute.xlu0 %2202
        %2204 = vrot.lane.b32.xlu0 %v2110, 64
        %v2205 = vpop.permute.xlu0 %2204
        %2206 = vrot.lane.b32.xlu0 %v2111, 64
        %v2207 = vpop.permute.xlu0 %2206
        %2240 = vst.msk [vmem:[#allocation9 + $0x8] sm:$0xff] %vm1597, %v2145
        %2241 = vst.msk [vmem:[#allocation9 + $0x20] sm:$0xff] %vm1597, %v2147
        %2242 = vst.msk [vmem:[#allocation9 + $0x38] sm:$0xff] %vm1597, %v2149
        %2243 = vst.msk [vmem:[#allocation9 + $0x50] sm:$0xff] %vm1597, %v2151
        %2244 = vst.msk [vmem:[#allocation9 + $0x68] sm:$0xff] %vm1597, %v2153
        %2245 = vst.msk [vmem:[#allocation9 + $0x80] sm:$0xff] %vm1597, %v2155
        %2246 = vst.msk [vmem:[#allocation9 + $0x98] sm:$0xff] %vm1597, %v2157
        %2247 = vst.msk [vmem:[#allocation9 + $0xb0] sm:$0xff] %vm1597, %v2159
        %2248 = vst.msk [vmem:[#allocation9 + $0xc8] sm:$0xff] %vm1597, %v2161
        %2249 = vst.msk [vmem:[#allocation9 + $0xe0] sm:$0xff] %vm1597, %v2163
        %2250 = vst.msk [vmem:[#allocation9 + $0xf8] sm:$0xff] %vm1597, %v2165
        %2251 = vst.msk [vmem:[#allocation9 + $0x110] sm:$0xff] %vm1597, %v2167
        %2252 = vst.msk [vmem:[#allocation9 + $0x128] sm:$0xff] %vm1597, %v2169
        %2253 = vst.msk [vmem:[#allocation9 + $0x140] sm:$0xff] %vm1597, %v2171
        %2254 = vst.msk [vmem:[#allocation9 + $0x158] sm:$0xff] %vm1597, %v2173
        %2255 = vst.msk [vmem:[#allocation9 + $0x170] sm:$0xff] %vm1597, %v2175
        %2256 = vst.msk [vmem:[#allocation9 + $0x188] sm:$0xff] %vm1597, %v2177
        %2257 = vst.msk [vmem:[#allocation9 + $0x1a0] sm:$0xff] %vm1597, %v2179
        %2258 = vst.msk [vmem:[#allocation9 + $0x1b8] sm:$0xff] %vm1597, %v2181
        %2259 = vst.msk [vmem:[#allocation9 + $0x1d0] sm:$0xff] %vm1597, %v2183
        %2260 = vst.msk [vmem:[#allocation9 + $0x1e8] sm:$0xff] %vm1597, %v2185
        %2261 = vst.msk [vmem:[#allocation9 + $0x200] sm:$0xff] %vm1597, %v2187
        %2262 = vst.msk [vmem:[#allocation9 + $0x218] sm:$0xff] %vm1597, %v2189
        %2263 = vst.msk [vmem:[#allocation9 + $0x230] sm:$0xff] %vm1597, %v2191
        %2264 = vst.msk [vmem:[#allocation9 + $0x248] sm:$0xff] %vm1597, %v2193
        %2265 = vst.msk [vmem:[#allocation9 + $0x260] sm:$0xff] %vm1597, %v2195
        %2266 = vst.msk [vmem:[#allocation9 + $0x278] sm:$0xff] %vm1597, %v2197
        %2267 = vst.msk [vmem:[#allocation9 + $0x290] sm:$0xff] %vm1597, %v2199
        %2268 = vst.msk [vmem:[#allocation9 + $0x2a8] sm:$0xff] %vm1597, %v2201
        %2269 = vst.msk [vmem:[#allocation9 + $0x2c0] sm:$0xff] %vm1597, %v2203
        %2270 = vst.msk [vmem:[#allocation9 + $0x2d8] sm:$0xff] %vm1597, %v2205
        %2271 = vst.msk [vmem:[#allocation9 + $0x2f0] sm:$0xff] %vm1597, %v2207
        %v2272 = vld [vmem:[%s2079 + $0x1] sm:$0xff]
        %v2273 = vld [vmem:[%s2079 + $0x9] sm:$0xff]
        %v2274 = vld [vmem:[%s2079 + $0x19] sm:$0xff]
        %v2275 = vld [vmem:[%s2079 + $0x21] sm:$0xff]
        %v2276 = vld [vmem:[%s2079 + $0x31] sm:$0xff]
        %v2277 = vld [vmem:[%s2079 + $0x39] sm:$0xff]
        %v2278 = vld [vmem:[%s2079 + $0x49] sm:$0xff]
        %v2279 = vld [vmem:[%s2079 + $0x51] sm:$0xff]
        %v2280 = vld [vmem:[%s2079 + $0x61] sm:$0xff]
        %v2281 = vld [vmem:[%s2079 + $0x69] sm:$0xff]
        %v2282 = vld [vmem:[%s2079 + $0x79] sm:$0xff]
        %v2283 = vld [vmem:[%s2079 + $0x81] sm:$0xff]
        %v2284 = vld [vmem:[%s2079 + $0x91] sm:$0xff]
        %v2285 = vld [vmem:[%s2079 + $0x99] sm:$0xff]
        %v2286 = vld [vmem:[%s2079 + $0xa9] sm:$0xff]
        %v2287 = vld [vmem:[%s2079 + $0xb1] sm:$0xff]
        %v2288 = vld [vmem:[%s2079 + $0xc1] sm:$0xff]
        %v2289 = vld [vmem:[%s2079 + $0xc9] sm:$0xff]
        %v2290 = vld [vmem:[%s2079 + $0xd9] sm:$0xff]
        %v2291 = vld [vmem:[%s2079 + $0xe1] sm:$0xff]
        %v2292 = vld [vmem:[%s2079 + $0xf1] sm:$0xff]
        %v2293 = vld [vmem:[%s2079 + $0xf9] sm:$0xff]
        %v2294 = vld [vmem:[%s2079 + $0x109] sm:$0xff]
        %v2295 = vld [vmem:[%s2079 + $0x111] sm:$0xff]
        %v2296 = vld [vmem:[%s2079 + $0x121] sm:$0xff]
        %v2297 = vld [vmem:[%s2079 + $0x129] sm:$0xff]
        %v2298 = vld [vmem:[%s2079 + $0x139] sm:$0xff]
        %v2299 = vld [vmem:[%s2079 + $0x141] sm:$0xff]
        %v2300 = vld [vmem:[%s2079 + $0x151] sm:$0xff]
        %v2301 = vld [vmem:[%s2079 + $0x159] sm:$0xff]
        %v2302 = vld [vmem:[%s2079 + $0x169] sm:$0xff]
        %v2303 = vld [vmem:[%s2079 + $0x171] sm:$0xff]
        %2336 = vrot.lane.b32.xlu0 %v2272, 96
        %v2337 = vpop.permute.xlu0 %2336
        %2338 = vrot.lane.b32.xlu0 %v2273, 96
        %v2339 = vpop.permute.xlu0 %2338
        %2340 = vrot.lane.b32.xlu0 %v2274, 96
        %v2341 = vpop.permute.xlu0 %2340
        %2342 = vrot.lane.b32.xlu0 %v2275, 96
        %v2343 = vpop.permute.xlu0 %2342
        %2344 = vrot.lane.b32.xlu0 %v2276, 96
        %v2345 = vpop.permute.xlu0 %2344
        %2346 = vrot.lane.b32.xlu0 %v2277, 96
        %v2347 = vpop.permute.xlu0 %2346
        %2348 = vrot.lane.b32.xlu0 %v2278, 96
        %v2349 = vpop.permute.xlu0 %2348
        %2350 = vrot.lane.b32.xlu0 %v2279, 96
        %v2351 = vpop.permute.xlu0 %2350
        %2352 = vrot.lane.b32.xlu0 %v2280, 96
        %v2353 = vpop.permute.xlu0 %2352
        %2354 = vrot.lane.b32.xlu0 %v2281, 96
        %v2355 = vpop.permute.xlu0 %2354
        %2356 = vrot.lane.b32.xlu0 %v2282, 96
        %v2357 = vpop.permute.xlu0 %2356
        %2358 = vrot.lane.b32.xlu0 %v2283, 96
        %v2359 = vpop.permute.xlu0 %2358
        %2360 = vrot.lane.b32.xlu0 %v2284, 96
        %v2361 = vpop.permute.xlu0 %2360
        %2362 = vrot.lane.b32.xlu0 %v2285, 96
        %v2363 = vpop.permute.xlu0 %2362
        %2364 = vrot.lane.b32.xlu0 %v2286, 96
        %v2365 = vpop.permute.xlu0 %2364
        %2366 = vrot.lane.b32.xlu0 %v2287, 96
        %v2367 = vpop.permute.xlu0 %2366
        %2368 = vrot.lane.b32.xlu0 %v2288, 96
        %v2369 = vpop.permute.xlu0 %2368
        %2370 = vrot.lane.b32.xlu0 %v2289, 96
        %v2371 = vpop.permute.xlu0 %2370
        %2372 = vrot.lane.b32.xlu0 %v2290, 96
        %v2373 = vpop.permute.xlu0 %2372
        %2374 = vrot.lane.b32.xlu0 %v2291, 96
        %v2375 = vpop.permute.xlu0 %2374
        %2376 = vrot.lane.b32.xlu0 %v2292, 96
        %v2377 = vpop.permute.xlu0 %2376
        %2378 = vrot.lane.b32.xlu0 %v2293, 96
        %v2379 = vpop.permute.xlu0 %2378
        %2380 = vrot.lane.b32.xlu0 %v2294, 96
        %v2381 = vpop.permute.xlu0 %2380
        %2382 = vrot.lane.b32.xlu0 %v2295, 96
        %v2383 = vpop.permute.xlu0 %2382
        %2384 = vrot.lane.b32.xlu0 %v2296, 96
        %v2385 = vpop.permute.xlu0 %2384
        %2386 = vrot.lane.b32.xlu0 %v2297, 96
        %v2387 = vpop.permute.xlu0 %2386
        %2388 = vrot.lane.b32.xlu0 %v2298, 96
        %v2389 = vpop.permute.xlu0 %2388
        %2390 = vrot.lane.b32.xlu0 %v2299, 96
        %v2391 = vpop.permute.xlu0 %2390
        %2392 = vrot.lane.b32.xlu0 %v2300, 96
        %v2393 = vpop.permute.xlu0 %2392
        %2394 = vrot.lane.b32.xlu0 %v2301, 96
        %v2395 = vpop.permute.xlu0 %2394
        %2396 = vrot.lane.b32.xlu0 %v2302, 96
        %v2397 = vpop.permute.xlu0 %2396
        %2398 = vrot.lane.b32.xlu0 %v2303, 96
        %v2399 = vpop.permute.xlu0 %2398
        %2432 = vst.msk [vmem:[#allocation9 + $0x8] sm:$0xff] %vm1790, %v2337
        %2433 = vst.msk [vmem:[#allocation9 + $0x20] sm:$0xff] %vm1790, %v2339
        %2434 = vst.msk [vmem:[#allocation9 + $0x38] sm:$0xff] %vm1790, %v2341
        %2435 = vst.msk [vmem:[#allocation9 + $0x50] sm:$0xff] %vm1790, %v2343
        %2436 = vst.msk [vmem:[#allocation9 + $0x68] sm:$0xff] %vm1790, %v2345
        %2437 = vst.msk [vmem:[#allocation9 + $0x80] sm:$0xff] %vm1790, %v2347
        %2438 = vst.msk [vmem:[#allocation9 + $0x98] sm:$0xff] %vm1790, %v2349
        %2439 = vst.msk [vmem:[#allocation9 + $0xb0] sm:$0xff] %vm1790, %v2351
        %2440 = vst.msk [vmem:[#allocation9 + $0xc8] sm:$0xff] %vm1790, %v2353
        %2441 = vst.msk [vmem:[#allocation9 + $0xe0] sm:$0xff] %vm1790, %v2355
        %2442 = vst.msk [vmem:[#allocation9 + $0xf8] sm:$0xff] %vm1790, %v2357
        %2443 = vst.msk [vmem:[#allocation9 + $0x110] sm:$0xff] %vm1790, %v2359
        %2444 = vst.msk [vmem:[#allocation9 + $0x128] sm:$0xff] %vm1790, %v2361
        %2445 = vst.msk [vmem:[#allocation9 + $0x140] sm:$0xff] %vm1790, %v2363
        %2446 = vst.msk [vmem:[#allocation9 + $0x158] sm:$0xff] %vm1790, %v2365
        %2447 = vst.msk [vmem:[#allocation9 + $0x170] sm:$0xff] %vm1790, %v2367
        %2448 = vst.msk [vmem:[#allocation9 + $0x188] sm:$0xff] %vm1790, %v2369
        %2449 = vst.msk [vmem:[#allocation9 + $0x1a0] sm:$0xff] %vm1790, %v2371
        %2450 = vst.msk [vmem:[#allocation9 + $0x1b8] sm:$0xff] %vm1790, %v2373
        %2451 = vst.msk [vmem:[#allocation9 + $0x1d0] sm:$0xff] %vm1790, %v2375
        %2452 = vst.msk [vmem:[#allocation9 + $0x1e8] sm:$0xff] %vm1790, %v2377
        %2453 = vst.msk [vmem:[#allocation9 + $0x200] sm:$0xff] %vm1790, %v2379
        %2454 = vst.msk [vmem:[#allocation9 + $0x218] sm:$0xff] %vm1790, %v2381
        %2455 = vst.msk [vmem:[#allocation9 + $0x230] sm:$0xff] %vm1790, %v2383
        %2456 = vst.msk [vmem:[#allocation9 + $0x248] sm:$0xff] %vm1790, %v2385
        %2457 = vst.msk [vmem:[#allocation9 + $0x260] sm:$0xff] %vm1790, %v2387
        %2458 = vst.msk [vmem:[#allocation9 + $0x278] sm:$0xff] %vm1790, %v2389
        %2459 = vst.msk [vmem:[#allocation9 + $0x290] sm:$0xff] %vm1790, %v2391
        %2460 = vst.msk [vmem:[#allocation9 + $0x2a8] sm:$0xff] %vm1790, %v2393
        %2461 = vst.msk [vmem:[#allocation9 + $0x2c0] sm:$0xff] %vm1790, %v2395
        %2462 = vst.msk [vmem:[#allocation9 + $0x2d8] sm:$0xff] %vm1790, %v2397
        %2463 = vst.msk [vmem:[#allocation9 + $0x2f0] sm:$0xff] %vm1790, %v2399
        %v2464 = vld [vmem:[%s2079 + $0x2] sm:$0xff]
        %v2465 = vld [vmem:[%s2079 + $0xa] sm:$0xff]
        %v2466 = vld [vmem:[%s2079 + $0x1a] sm:$0xff]
        %v2467 = vld [vmem:[%s2079 + $0x22] sm:$0xff]
        %v2468 = vld [vmem:[%s2079 + $0x32] sm:$0xff]
        %v2469 = vld [vmem:[%s2079 + $0x3a] sm:$0xff]
        %v2470 = vld [vmem:[%s2079 + $0x4a] sm:$0xff]
        %v2471 = vld [vmem:[%s2079 + $0x52] sm:$0xff]
        %v2472 = vld [vmem:[%s2079 + $0x62] sm:$0xff]
        %v2473 = vld [vmem:[%s2079 + $0x6a] sm:$0xff]
        %v2474 = vld [vmem:[%s2079 + $0x7a] sm:$0xff]
        %v2475 = vld [vmem:[%s2079 + $0x82] sm:$0xff]
        %v2476 = vld [vmem:[%s2079 + $0x92] sm:$0xff]
        %v2477 = vld [vmem:[%s2079 + $0x9a] sm:$0xff]
        %v2478 = vld [vmem:[%s2079 + $0xaa] sm:$0xff]
        %v2479 = vld [vmem:[%s2079 + $0xb2] sm:$0xff]
        %v2480 = vld [vmem:[%s2079 + $0xc2] sm:$0xff]
        %v2481 = vld [vmem:[%s2079 + $0xca] sm:$0xff]
        %v2482 = vld [vmem:[%s2079 + $0xda] sm:$0xff]
        %v2483 = vld [vmem:[%s2079 + $0xe2] sm:$0xff]
        %v2484 = vld [vmem:[%s2079 + $0xf2] sm:$0xff]
        %v2485 = vld [vmem:[%s2079 + $0xfa] sm:$0xff]
        %v2486 = vld [vmem:[%s2079 + $0x10a] sm:$0xff]
        %v2487 = vld [vmem:[%s2079 + $0x112] sm:$0xff]
        %v2488 = vld [vmem:[%s2079 + $0x122] sm:$0xff]
        %v2489 = vld [vmem:[%s2079 + $0x12a] sm:$0xff]
        %v2490 = vld [vmem:[%s2079 + $0x13a] sm:$0xff]
        %v2491 = vld [vmem:[%s2079 + $0x142] sm:$0xff]
        %v2492 = vld [vmem:[%s2079 + $0x152] sm:$0xff]
        %v2493 = vld [vmem:[%s2079 + $0x15a] sm:$0xff]
        %v2494 = vld [vmem:[%s2079 + $0x16a] sm:$0xff]
        %v2495 = vld [vmem:[%s2079 + $0x172] sm:$0xff]
        %2496 = vst.msk [vmem:[#allocation9 + $0x10] sm:$0xff] %vm1091, %v2464
        %2497 = vst.msk [vmem:[#allocation9 + $0x28] sm:$0xff] %vm1091, %v2465
        %2498 = vst.msk [vmem:[#allocation9 + $0x40] sm:$0xff] %vm1091, %v2466
        %2499 = vst.msk [vmem:[#allocation9 + $0x58] sm:$0xff] %vm1091, %v2467
        %2500 = vst.msk [vmem:[#allocation9 + $0x70] sm:$0xff] %vm1091, %v2468
        %2501 = vst.msk [vmem:[#allocation9 + $0x88] sm:$0xff] %vm1091, %v2469
        %2502 = vst.msk [vmem:[#allocation9 + $0xa0] sm:$0xff] %vm1091, %v2470
        %2503 = vst.msk [vmem:[#allocation9 + $0xb8] sm:$0xff] %vm1091, %v2471
        %2504 = vst.msk [vmem:[#allocation9 + $0xd0] sm:$0xff] %vm1091, %v2472
        %2505 = vst.msk [vmem:[#allocation9 + $0xe8] sm:$0xff] %vm1091, %v2473
        %2506 = vst.msk [vmem:[#allocation9 + $0x100] sm:$0xff] %vm1091, %v2474
        %2507 = vst.msk [vmem:[#allocation9 + $0x118] sm:$0xff] %vm1091, %v2475
        %2508 = vst.msk [vmem:[#allocation9 + $0x130] sm:$0xff] %vm1091, %v2476
        %2509 = vst.msk [vmem:[#allocation9 + $0x148] sm:$0xff] %vm1091, %v2477
        %2510 = vst.msk [vmem:[#allocation9 + $0x160] sm:$0xff] %vm1091, %v2478
        %2511 = vst.msk [vmem:[#allocation9 + $0x178] sm:$0xff] %vm1091, %v2479
        %2512 = vst.msk [vmem:[#allocation9 + $0x190] sm:$0xff] %vm1091, %v2480
        %2513 = vst.msk [vmem:[#allocation9 + $0x1a8] sm:$0xff] %vm1091, %v2481
        %2514 = vst.msk [vmem:[#allocation9 + $0x1c0] sm:$0xff] %vm1091, %v2482
        %2515 = vst.msk [vmem:[#allocation9 + $0x1d8] sm:$0xff] %vm1091, %v2483
        %2516 = vst.msk [vmem:[#allocation9 + $0x1f0] sm:$0xff] %vm1091, %v2484
        %2517 = vst.msk [vmem:[#allocation9 + $0x208] sm:$0xff] %vm1091, %v2485
        %2518 = vst.msk [vmem:[#allocation9 + $0x220] sm:$0xff] %vm1091, %v2486
        %2519 = vst.msk [vmem:[#allocation9 + $0x238] sm:$0xff] %vm1091, %v2487
        %2520 = vst.msk [vmem:[#allocation9 + $0x250] sm:$0xff] %vm1091, %v2488
        %2521 = vst.msk [vmem:[#allocation9 + $0x268] sm:$0xff] %vm1091, %v2489
        %2522 = vst.msk [vmem:[#allocation9 + $0x280] sm:$0xff] %vm1091, %v2490
        %2523 = vst.msk [vmem:[#allocation9 + $0x298] sm:$0xff] %vm1091, %v2491
        %2524 = vst.msk [vmem:[#allocation9 + $0x2b0] sm:$0xff] %vm1091, %v2492
        %2525 = vst.msk [vmem:[#allocation9 + $0x2c8] sm:$0xff] %vm1091, %v2493
        %2526 = vst.msk [vmem:[#allocation9 + $0x2e0] sm:$0xff] %vm1091, %v2494
        %2527 = vst.msk [vmem:[#allocation9 + $0x2f8] sm:$0xff] %vm1091, %v2495
        %v2528 = vld [vmem:[#allocation9] sm:$0xff]
        %v2529 = vld [vmem:[#allocation9 + $0x8] sm:$0xff]
        %v2530 = vld [vmem:[#allocation9 + $0x10] sm:$0xff]
        %v2531 = vld [vmem:[#allocation9 + $0x18] sm:$0xff]
        %v2532 = vld [vmem:[#allocation9 + $0x20] sm:$0xff]
        %v2533 = vld [vmem:[#allocation9 + $0x28] sm:$0xff]
        %v2534 = vld [vmem:[#allocation9 + $0x30] sm:$0xff]
        %v2535 = vld [vmem:[#allocation9 + $0x38] sm:$0xff]
        %v2536 = vld [vmem:[#allocation9 + $0x40] sm:$0xff]
        %v2537 = vld [vmem:[#allocation9 + $0x48] sm:$0xff]
        %v2538 = vld [vmem:[#allocation9 + $0x50] sm:$0xff]
        %v2539 = vld [vmem:[#allocation9 + $0x58] sm:$0xff]
        %v2540 = vld [vmem:[#allocation9 + $0x60] sm:$0xff]
        %v2541 = vld [vmem:[#allocation9 + $0x68] sm:$0xff]
        %v2542 = vld [vmem:[#allocation9 + $0x70] sm:$0xff]
        %v2543 = vld [vmem:[#allocation9 + $0x78] sm:$0xff]
        %v2544 = vld [vmem:[#allocation9 + $0x80] sm:$0xff]
        %v2545 = vld [vmem:[#allocation9 + $0x88] sm:$0xff]
        %v2546 = vld [vmem:[#allocation9 + $0x90] sm:$0xff]
        %v2547 = vld [vmem:[#allocation9 + $0x98] sm:$0xff]
        %v2548 = vld [vmem:[#allocation9 + $0xa0] sm:$0xff]
        %v2549 = vld [vmem:[#allocation9 + $0xa8] sm:$0xff]
        %v2550 = vld [vmem:[#allocation9 + $0xb0] sm:$0xff]
        %v2551 = vld [vmem:[#allocation9 + $0xb8] sm:$0xff]
        %v2552 = vld [vmem:[#allocation9 + $0xc0] sm:$0xff]
        %v2553 = vld [vmem:[#allocation9 + $0xc8] sm:$0xff]
        %v2554 = vld [vmem:[#allocation9 + $0xd0] sm:$0xff]
        %v2555 = vld [vmem:[#allocation9 + $0xd8] sm:$0xff]
        %v2556 = vld [vmem:[#allocation9 + $0xe0] sm:$0xff]
        %v2557 = vld [vmem:[#allocation9 + $0xe8] sm:$0xff]
        %v2558 = vld [vmem:[#allocation9 + $0xf0] sm:$0xff]
        %v2559 = vld [vmem:[#allocation9 + $0xf8] sm:$0xff]
        %v2560 = vld [vmem:[#allocation9 + $0x100] sm:$0xff]
        %v2561 = vld [vmem:[#allocation9 + $0x108] sm:$0xff]
        %v2562 = vld [vmem:[#allocation9 + $0x110] sm:$0xff]
        %v2563 = vld [vmem:[#allocation9 + $0x118] sm:$0xff]
        %v2564 = vld [vmem:[#allocation9 + $0x120] sm:$0xff]
        %v2565 = vld [vmem:[#allocation9 + $0x128] sm:$0xff]
        %v2566 = vld [vmem:[#allocation9 + $0x130] sm:$0xff]
        %v2567 = vld [vmem:[#allocation9 + $0x138] sm:$0xff]
        %v2568 = vld [vmem:[#allocation9 + $0x140] sm:$0xff]
        %v2569 = vld [vmem:[#allocation9 + $0x148] sm:$0xff]
        %v2570 = vld [vmem:[#allocation9 + $0x150] sm:$0xff]
        %v2571 = vld [vmem:[#allocation9 + $0x158] sm:$0xff]
        %v2572 = vld [vmem:[#allocation9 + $0x160] sm:$0xff]
        %v2573 = vld [vmem:[#allocation9 + $0x168] sm:$0xff]
        %v2574 = vld [vmem:[#allocation9 + $0x170] sm:$0xff]
        %v2575 = vld [vmem:[#allocation9 + $0x178] sm:$0xff]
        %v2576 = vld [vmem:[#allocation9 + $0x180] sm:$0xff]
        %v2577 = vld [vmem:[#allocation9 + $0x188] sm:$0xff]
        %v2578 = vld [vmem:[#allocation9 + $0x190] sm:$0xff]
        %v2579 = vld [vmem:[#allocation9 + $0x198] sm:$0xff]
        %v2580 = vld [vmem:[#allocation9 + $0x1a0] sm:$0xff]
        %v2581 = vld [vmem:[#allocation9 + $0x1a8] sm:$0xff]
        %v2582 = vld [vmem:[#allocation9 + $0x1b0] sm:$0xff]
        %v2583 = vld [vmem:[#allocation9 + $0x1b8] sm:$0xff]
        %v2584 = vld [vmem:[#allocation9 + $0x1c0] sm:$0xff]
        %v2585 = vld [vmem:[#allocation9 + $0x1c8] sm:$0xff]
        %v2586 = vld [vmem:[#allocation9 + $0x1d0] sm:$0xff]
        %v2587 = vld [vmem:[#allocation9 + $0x1d8] sm:$0xff]
        %v2588 = vld [vmem:[#allocation9 + $0x1e0] sm:$0xff]
        %v2589 = vld [vmem:[#allocation9 + $0x1e8] sm:$0xff]
        %v2590 = vld [vmem:[#allocation9 + $0x1f0] sm:$0xff]
        %v2591 = vld [vmem:[#allocation9 + $0x1f8] sm:$0xff]
        %v2592 = vld [vmem:[#allocation9 + $0x200] sm:$0xff]
        %v2593 = vld [vmem:[#allocation9 + $0x208] sm:$0xff]
        %v2594 = vld [vmem:[#allocation9 + $0x210] sm:$0xff]
        %v2595 = vld [vmem:[#allocation9 + $0x218] sm:$0xff]
        %v2596 = vld [vmem:[#allocation9 + $0x220] sm:$0xff]
        %v2597 = vld [vmem:[#allocation9 + $0x228] sm:$0xff]
        %v2598 = vld [vmem:[#allocation9 + $0x230] sm:$0xff]
        %v2599 = vld [vmem:[#allocation9 + $0x238] sm:$0xff]
        %v2600 = vld [vmem:[#allocation9 + $0x240] sm:$0xff]
        %v2601 = vld [vmem:[#allocation9 + $0x248] sm:$0xff]
        %v2602 = vld [vmem:[#allocation9 + $0x250] sm:$0xff]
        %v2603 = vld [vmem:[#allocation9 + $0x258] sm:$0xff]
        %v2604 = vld [vmem:[#allocation9 + $0x260] sm:$0xff]
        %v2605 = vld [vmem:[#allocation9 + $0x268] sm:$0xff]
        %v2606 = vld [vmem:[#allocation9 + $0x270] sm:$0xff]
        %v2607 = vld [vmem:[#allocation9 + $0x278] sm:$0xff]
        %v2608 = vld [vmem:[#allocation9 + $0x280] sm:$0xff]
        %v2609 = vld [vmem:[#allocation9 + $0x288] sm:$0xff]
        %v2610 = vld [vmem:[#allocation9 + $0x290] sm:$0xff]
        %v2611 = vld [vmem:[#allocation9 + $0x298] sm:$0xff]
        %v2612 = vld [vmem:[#allocation9 + $0x2a0] sm:$0xff]
        %v2613 = vld [vmem:[#allocation9 + $0x2a8] sm:$0xff]
        %v2614 = vld [vmem:[#allocation9 + $0x2b0] sm:$0xff]
        %v2615 = vld [vmem:[#allocation9 + $0x2b8] sm:$0xff]
        %v2616 = vld [vmem:[#allocation9 + $0x2c0] sm:$0xff]
        %v2617 = vld [vmem:[#allocation9 + $0x2c8] sm:$0xff]
        %v2618 = vld [vmem:[#allocation9 + $0x2d0] sm:$0xff]
        %v2619 = vld [vmem:[#allocation9 + $0x2d8] sm:$0xff]
        %v2620 = vld [vmem:[#allocation9 + $0x2e0] sm:$0xff]
        %v2621 = vld [vmem:[#allocation9 + $0x2e8] sm:$0xff]
        %v2622 = vld [vmem:[#allocation9 + $0x2f0] sm:$0xff]
        %v2623 = vld [vmem:[#allocation9 + $0x2f8] sm:$0xff]
        %v2624 = vld [vmem:[%s3] sm:$0xff]
        %v2625 = vld [vmem:[%s3 + $0x8] sm:$0xff]
        %v2626 = vld [vmem:[%s3 + $0x10] sm:$0xff]
        %v2627 = vld [vmem:[%s3 + $0x18] sm:$0xff]
        %v2628 = vld [vmem:[%s3 + $0x20] sm:$0xff]
        %v2629 = vld [vmem:[%s3 + $0x28] sm:$0xff]
        %v2630 = vld [vmem:[%s3 + $0x30] sm:$0xff]
        %v2631 = vld [vmem:[%s3 + $0x38] sm:$0xff]
        %v2632 = vld [vmem:[%s3 + $0x40] sm:$0xff]
        %v2633 = vld [vmem:[%s3 + $0x48] sm:$0xff]
        %v2634 = vld [vmem:[%s3 + $0x50] sm:$0xff]
        %v2635 = vld [vmem:[%s3 + $0x58] sm:$0xff]
        %v2636 = vld [vmem:[%s3 + $0x60] sm:$0xff]
        %v2637 = vld [vmem:[%s3 + $0x68] sm:$0xff]
        %v2638 = vld [vmem:[%s3 + $0x70] sm:$0xff]
        %v2639 = vld [vmem:[%s3 + $0x78] sm:$0xff]
        %v2640 = vld [vmem:[%s3 + $0x80] sm:$0xff]
        %v2641 = vld [vmem:[%s3 + $0x88] sm:$0xff]
        %v2642 = vld [vmem:[%s3 + $0x90] sm:$0xff]
        %v2643 = vld [vmem:[%s3 + $0x98] sm:$0xff]
        %v2644 = vld [vmem:[%s3 + $0xa0] sm:$0xff]
        %v2645 = vld [vmem:[%s3 + $0xa8] sm:$0xff]
        %v2646 = vld [vmem:[%s3 + $0xb0] sm:$0xff]
        %v2647 = vld [vmem:[%s3 + $0xb8] sm:$0xff]
        %v2648 = vld [vmem:[%s3 + $0xc0] sm:$0xff]
        %v2649 = vld [vmem:[%s3 + $0xc8] sm:$0xff]
        %v2650 = vld [vmem:[%s3 + $0xd0] sm:$0xff]
        %v2651 = vld [vmem:[%s3 + $0xd8] sm:$0xff]
        %v2652 = vld [vmem:[%s3 + $0xe0] sm:$0xff]
        %v2653 = vld [vmem:[%s3 + $0xe8] sm:$0xff]
        %v2654 = vld [vmem:[%s3 + $0xf0] sm:$0xff]
        %v2655 = vld [vmem:[%s3 + $0xf8] sm:$0xff]
        %v2656 = vld [vmem:[%s3 + $0x100] sm:$0xff]
        %v2657 = vld [vmem:[%s3 + $0x108] sm:$0xff]
        %v2658 = vld [vmem:[%s3 + $0x110] sm:$0xff]
        %v2659 = vld [vmem:[%s3 + $0x118] sm:$0xff]
        %v2660 = vld [vmem:[%s4] sm:$0x1]
        %v2661 = vld [vmem:[%s4 + $0x1] sm:$0x1]
        %v2662 = vld [vmem:[%s4 + $0x2] sm:$0x1]
        %v2663 = vlaneseq
        %v2664 = vshrl.u32 %v2663, 7
        %v2665 = vsub.s32 0, %v2664
        %v2666 = vrot.slane %v2660, %v2665
        %v2668 = vsel %vm1091, %v2530, 0
        %v2671 = vsel %vm1091, %v2533, 0
        %v2674 = vsel %vm1091, %v2536, 0
        %v2677 = vsel %vm1091, %v2539, 0
        %v2680 = vsel %vm1091, %v2542, 0
        %v2683 = vsel %vm1091, %v2545, 0
        %v2686 = vsel %vm1091, %v2548, 0
        %v2689 = vsel %vm1091, %v2551, 0
        %v2692 = vsel %vm1091, %v2554, 0
        %v2695 = vsel %vm1091, %v2557, 0
        %v2698 = vsel %vm1091, %v2560, 0
        %v2701 = vsel %vm1091, %v2563, 0
        %v2704 = vsel %vm1091, %v2566, 0
        %v2707 = vsel %vm1091, %v2569, 0
        %v2710 = vsel %vm1091, %v2572, 0
        %v2713 = vsel %vm1091, %v2575, 0
        %v2716 = vsel %vm1091, %v2578, 0
        %v2719 = vsel %vm1091, %v2581, 0
        %v2722 = vsel %vm1091, %v2584, 0
        %v2725 = vsel %vm1091, %v2587, 0
        %v2728 = vsel %vm1091, %v2590, 0
        %v2731 = vsel %vm1091, %v2593, 0
        %v2734 = vsel %vm1091, %v2596, 0
        %v2737 = vsel %vm1091, %v2599, 0
        %v2740 = vsel %vm1091, %v2602, 0
        %v2743 = vsel %vm1091, %v2605, 0
        %v2746 = vsel %vm1091, %v2608, 0
        %v2749 = vsel %vm1091, %v2611, 0
        %v2752 = vsel %vm1091, %v2614, 0
        %v2755 = vsel %vm1091, %v2617, 0
        %v2758 = vsel %vm1091, %v2620, 0
        %v2761 = vsel %vm1091, %v2623, 0
        %2763 = vmatprep.subr.mxu0 0.0
        %2764 = vmatpush1.msra.mxu0 %v2624
        %2765 = vmatprep.subr.mxu0 0.0
        %2766 = vmatpush1.msra.mxu0 %v2625
        %2767 = vmatprep.subr.mxu0 0.0
        %2768 = vmatpush1.msra.mxu0 %v2626
        %2769 = vmatprep.subr.mxu0 0.0
        %2770 = vmatpush1.msra.mxu0 %v2627
        %2771 = vmatprep.subr.mxu0 0.0
        %2772 = vmatpush1.msra.mxu0 %v2628
        %2773 = vmatprep.subr.mxu0 0.0
        %2774 = vmatpush1.msra.mxu0 %v2629
        %2775 = vmatprep.subr.mxu0 0.0
        %2776 = vmatpush1.msra.mxu0 %v2630
        %2777 = vmatprep.subr.mxu0 0.0
        %2778 = vmatpush1.msra.mxu0 %v2631
        %2779 = vmatprep.subr.mxu0 0.0
        %2780 = vmatpush1.msra.mxu0 %v2632
        %2781 = vmatprep.subr.mxu0 0.0
        %2782 = vmatpush1.msra.mxu0 %v2633
        %2783 = vmatprep.subr.mxu0 0.0
        %2784 = vmatpush1.msra.mxu0 %v2634
        %2785 = vmatprep.subr.mxu0 0.0
        %2786 = vmatpush1.msra.mxu0 %v2635
        %2787 = vmatprep.subr.mxu0 0.0
        %2788 = vmatpush1.msra.mxu0 %v2636
        %2789 = vmatprep.subr.mxu0 0.0
        %2790 = vmatpush1.msra.mxu0 %v2637
        %2791 = vmatprep.subr.mxu0 0.0
        %2792 = vmatpush1.msra.mxu0 %v2638
        %2793 = vmatprep.subr.mxu0 0.0
        %2794 = vmatpush1.msra.mxu0 %v2639
        %2795 = vmatprep.subr.mxu0 0.0
        %2796 = vmatpush1.msra.mxu0 %v2640
        %2797 = vmatprep.subr.mxu0 0.0
        %2798 = vmatpush1.msra.mxu0 %v2641
        %2799 = vmatprep.subr.mxu0 0.0
        %2800 = vmatpush1.msra.mxu0 %v2642
        %2801 = vmatprep.subr.mxu0 0.0
        %2802 = vmatpush1.msra.mxu0 %v2643
        %2803 = vmatprep.subr.mxu0 0.0
        %2804 = vmatpush1.msra.mxu0 %v2644
        %2805 = vmatprep.subr.mxu0 0.0
        %2806 = vmatpush1.msra.mxu0 %v2645
        %2807 = vmatprep.subr.mxu0 0.0
        %2808 = vmatpush1.msra.mxu0 %v2646
        %2809 = vmatprep.subr.mxu0 0.0
        %2810 = vmatpush1.msra.mxu0 %v2647
        %2811 = vmatprep.subr.mxu0 0.0
        %2812 = vmatpush1.msra.mxu0 %v2648
        %2813 = vmatprep.subr.mxu0 0.0
        %2814 = vmatpush1.msra.mxu0 %v2649
        %2815 = vmatprep.subr.mxu0 0.0
        %2816 = vmatpush1.msra.mxu0 %v2650
        %2817 = vmatprep.subr.mxu0 0.0
        %2818 = vmatpush1.msra.mxu0 %v2651
        %2819 = vmatprep.subr.mxu0 0.0
        %2820 = vmatpush1.msra.mxu0 %v2652
        %2821 = vmatprep.subr.mxu0 0.0
        %2822 = vmatpush1.msra.mxu0 %v2653
        %2823 = vmatprep.subr.mxu0 0.0
        %2824 = vmatpush1.msra.mxu0 %v2654
        %2825 = vmatprep.subr.mxu0 0.0
        %2826 = vmatpush1.msra.mxu0 %v2655
        %2827 = vmatprep.mubr.f32.mxu0 %v2529
        %2828 = vmatmul.mubr.f32.gmra.mrb[0].mxu0 %v2528
        %v2829 = vpop.f32.mrb[0].mxu0
        %v2830 = vadd.f32 %v2666, %v2829
        %v2831 = vpop.f32.mrb[0].mxu0
        %2832 = vmatprep.mubr.f32.mxu0 %v2532
        %2833 = vmatmul.mubr.f32.gmra.mrb[0].mxu0 %v2531
        %v2834 = vpop.f32.mrb[0].mxu0
        %v2835 = vadd.f32 %v2666, %v2834
        %v2836 = vpop.f32.mrb[0].mxu0
        %2837 = vmatprep.mubr.f32.mxu0 %v2535
        %2838 = vmatmul.mubr.f32.gmra.mrb[0].mxu0 %v2534
        %v2839 = vpop.f32.mrb[0].mxu0
        %v2840 = vadd.f32 %v2666, %v2839
        %v2841 = vpop.f32.mrb[0].mxu0
        %2842 = vmatprep.mubr.f32.mxu0 %v2538
        %2843 = vmatmul.mubr.f32.gmra.mrb[0].mxu0 %v2537
        %v2844 = vpop.f32.mrb[0].mxu0
        %v2845 = vadd.f32 %v2666, %v2844
        %v2846 = vpop.f32.mrb[0].mxu0
        %2847 = vmatprep.mubr.f32.mxu0 %v2541
        %2848 = vmatmul.mubr.f32.gmra.mrb[0].mxu0 %v2540
        %v2849 = vpop.f32.mrb[0].mxu0
        %v2850 = vadd.f32 %v2666, %v2849
        %v2851 = vpop.f32.mrb[0].mxu0
        %2852 = vmatprep.mubr.f32.mxu0 %v2544
        %2853 = vmatmul.mubr.f32.gmra.mrb[0].mxu0 %v2543
        %v2854 = vpop.f32.mrb[0].mxu0
        %v2855 = vadd.f32 %v2666, %v2854
        %v2856 = vpop.f32.mrb[0].mxu0
        %2857 = vmatprep.mubr.f32.mxu0 %v2547
        %2858 = vmatmul.mubr.f32.gmra.mrb[0].mxu0 %v2546
        %v2859 = vpop.f32.mrb[0].mxu0
        %v2860 = vadd.f32 %v2666, %v2859
        %v2861 = vpop.f32.mrb[0].mxu0
        %2862 = vmatprep.mubr.f32.mxu0 %v2550
        %2863 = vmatmul.mubr.f32.gmra.mrb[0].mxu0 %v2549
        %v2864 = vpop.f32.mrb[0].mxu0
        %v2865 = vadd.f32 %v2666, %v2864
        %v2866 = vpop.f32.mrb[0].mxu0
        %2867 = vmatprep.mubr.f32.mxu0 %v2553
        %2868 = vmatmul.mubr.f32.gmra.mrb[0].mxu0 %v2552
        %v2869 = vpop.f32.mrb[0].mxu0
        %v2870 = vadd.f32 %v2666, %v2869
        %v2871 = vpop.f32.mrb[0].mxu0
        %2872 = vmatprep.mubr.f32.mxu0 %v2556
        %2873 = vmatmul.mubr.f32.gmra.mrb[0].mxu0 %v2555
        %v2874 = vpop.f32.mrb[0].mxu0
        %v2875 = vadd.f32 %v2666, %v2874
        %v2876 = vpop.f32.mrb[0].mxu0
        %2877 = vmatprep.mubr.f32.mxu0 %v2559
        %2878 = vmatmul.mubr.f32.gmra.mrb[0].mxu0 %v2558
        %v2879 = vpop.f32.mrb[0].mxu0
        %v2880 = vadd.f32 %v2666, %v2879
        %v2881 = vpop.f32.mrb[0].mxu0
        %2882 = vmatprep.mubr.f32.mxu0 %v2562
        %2883 = vmatmul.mubr.f32.gmra.mrb[0].mxu0 %v2561
        %v2884 = vpop.f32.mrb[0].mxu0
        %v2885 = vadd.f32 %v2666, %v2884
        %v2886 = vpop.f32.mrb[0].mxu0
        %2887 = vmatprep.mubr.f32.mxu0 %v2565
        %2888 = vmatmul.mubr.f32.gmra.mrb[0].mxu0 %v2564
        %v2889 = vpop.f32.mrb[0].mxu0
        %v2890 = vadd.f32 %v2666, %v2889
        %v2891 = vpop.f32.mrb[0].mxu0
        %2892 = vmatprep.mubr.f32.mxu0 %v2568
        %2893 = vmatmul.mubr.f32.gmra.mrb[0].mxu0 %v2567
        %v2894 = vpop.f32.mrb[0].mxu0
        %v2895 = vadd.f32 %v2666, %v2894
        %v2896 = vpop.f32.mrb[0].mxu0
        %2897 = vmatprep.mubr.f32.mxu0 %v2571
        %2898 = vmatmul.mubr.f32.gmra.mrb[0].mxu0 %v2570
        %v2899 = vpop.f32.mrb[0].mxu0
        %v2900 = vadd.f32 %v2666, %v2899
        %v2901 = vpop.f32.mrb[0].mxu0
        %2902 = vmatprep.mubr.f32.mxu0 %v2574
        %2903 = vmatmul.mubr.f32.gmra.mrb[0].mxu0 %v2573
        %v2904 = vpop.f32.mrb[0].mxu0
        %v2905 = vadd.f32 %v2666, %v2904
        %v2906 = vpop.f32.mrb[0].mxu0
        %2907 = vmatprep.mubr.f32.mxu0 %v2577
        %2908 = vmatmul.mubr.f32.gmra.mrb[0].mxu0 %v2576
        %v2909 = vpop.f32.mrb[0].mxu0
        %v2910 = vadd.f32 %v2666, %v2909
        %v2911 = vpop.f32.mrb[0].mxu0
        %2912 = vmatprep.mubr.f32.mxu0 %v2580
        %2913 = vmatmul.mubr.f32.gmra.mrb[0].mxu0 %v2579
        %v2914 = vpop.f32.mrb[0].mxu0
        %v2915 = vadd.f32 %v2666, %v2914
        %v2916 = vpop.f32.mrb[0].mxu0
        %2917 = vmatprep.mubr.f32.mxu0 %v2583
        %2918 = vmatmul.mubr.f32.gmra.mrb[0].mxu0 %v2582
        %v2919 = vpop.f32.mrb[0].mxu0
        %v2920 = vadd.f32 %v2666, %v2919
        %v2921 = vpop.f32.mrb[0].mxu0
        %2922 = vmatprep.mubr.f32.mxu0 %v2586
        %2923 = vmatmul.mubr.f32.gmra.mrb[0].mxu0 %v2585
        %v2924 = vpop.f32.mrb[0].mxu0
        %v2925 = vadd.f32 %v2666, %v2924
        %v2926 = vpop.f32.mrb[0].mxu0
        %2927 = vmatprep.mubr.f32.mxu0 %v2589
        %2928 = vmatmul.mubr.f32.gmra.mrb[0].mxu0 %v2588
        %v2929 = vpop.f32.mrb[0].mxu0
        %v2930 = vadd.f32 %v2666, %v2929
        %v2931 = vpop.f32.mrb[0].mxu0
        %2932 = vmatprep.mubr.f32.mxu0 %v2592
        %2933 = vmatmul.mubr.f32.gmra.mrb[0].mxu0 %v2591
        %v2934 = vpop.f32.mrb[0].mxu0
        %v2935 = vadd.f32 %v2666, %v2934
        %v2936 = vpop.f32.mrb[0].mxu0
        %2937 = vmatprep.mubr.f32.mxu0 %v2595
        %2938 = vmatmul.mubr.f32.gmra.mrb[0].mxu0 %v2594
        %v2939 = vpop.f32.mrb[0].mxu0
        %v2940 = vadd.f32 %v2666, %v2939
        %v2941 = vpop.f32.mrb[0].mxu0
        %2942 = vmatprep.mubr.f32.mxu0 %v2598
        %2943 = vmatmul.mubr.f32.gmra.mrb[0].mxu0 %v2597
        %v2944 = vpop.f32.mrb[0].mxu0
        %v2945 = vadd.f32 %v2666, %v2944
        %v2946 = vpop.f32.mrb[0].mxu0
        %2947 = vmatprep.mubr.f32.mxu0 %v2601
        %2948 = vmatmul.mubr.f32.gmra.mrb[0].mxu0 %v2600
        %v2949 = vpop.f32.mrb[0].mxu0
        %v2950 = vadd.f32 %v2666, %v2949
        %v2951 = vpop.f32.mrb[0].mxu0
        %2952 = vmatprep.mubr.f32.mxu0 %v2604
        %2953 = vmatmul.mubr.f32.gmra.mrb[0].mxu0 %v2603
        %v2954 = vpop.f32.mrb[0].mxu0
        %v2955 = vadd.f32 %v2666, %v2954
        %v2956 = vpop.f32.mrb[0].mxu0
        %2957 = vmatprep.mubr.f32.mxu0 %v2607
        %2958 = vmatmul.mubr.f32.gmra.mrb[0].mxu0 %v2606
        %v2959 = vpop.f32.mrb[0].mxu0
        %v2960 = vadd.f32 %v2666, %v2959
        %v2961 = vpop.f32.mrb[0].mxu0
        %2962 = vmatprep.mubr.f32.mxu0 %v2610
        %2963 = vmatmul.mubr.f32.gmra.mrb[0].mxu0 %v2609
        %v2964 = vpop.f32.mrb[0].mxu0
        %v2965 = vadd.f32 %v2666, %v2964
        %v2966 = vpop.f32.mrb[0].mxu0
        %2967 = vmatprep.mubr.f32.mxu0 %v2613
        %2968 = vmatmul.mubr.f32.gmra.mrb[0].mxu0 %v2612
        %v2969 = vpop.f32.mrb[0].mxu0
        %v2970 = vadd.f32 %v2666, %v2969
        %v2971 = vpop.f32.mrb[0].mxu0
        %2972 = vmatprep.mubr.f32.mxu0 %v2616
        %2973 = vmatmul.mubr.f32.gmra.mrb[0].mxu0 %v2615
        %v2974 = vpop.f32.mrb[0].mxu0
        %v2975 = vadd.f32 %v2666, %v2974
        %v2976 = vpop.f32.mrb[0].mxu0
        %2977 = vmatprep.mubr.f32.mxu0 %v2619
        %2978 = vmatmul.mubr.f32.gmra.mrb[0].mxu0 %v2618
        %v2979 = vpop.f32.mrb[0].mxu0
        %v2980 = vadd.f32 %v2666, %v2979
        %v2981 = vpop.f32.mrb[0].mxu0
        %2982 = vmatprep.mubr.f32.mxu0 %v2622
        %2983 = vmatmul.mubr.f32.gmra.mrb[0].mxu0 %v2621
        %v2984 = vpop.f32.mrb[0].mxu0
        %v2985 = vadd.f32 %v2666, %v2984
        %v2986 = vpop.f32.mrb[0].mxu0
        %2987 = vdwg.mxu0
        %2988 = vmatprep.subr.mxu0 0.0
        %2989 = vmatpush1.msra.mxu0 %v2656
        %2990 = vmatprep.subr.mxu0 0.0
        %2991 = vmatpush1.msra.mxu0 %v2657
        %2992 = vmatprep.subr.mxu0 0.0
        %2993 = vmatpush1.msra.mxu0 %v2658
        %2994 = vmatprep.subr.mxu0 0.0
        %2995 = vmatpush1.msra.mxu0 %v2659
        %2996 = vmatprep.subr.mxu0 0.0
        %2997 = vmatpush1.msra.mxu0 0.0
        %2998 = vmatprep.subr.mxu0 0.0
        %2999 = vmatpush1.msra.mxu0 0.0
        %3000 = vmatprep.subr.mxu0 0.0
        %3001 = vmatpush1.msra.mxu0 0.0
        %3002 = vmatprep.subr.mxu0 0.0
        %3003 = vmatpush1.msra.mxu0 0.0
        %3004 = vmatprep.subr.mxu0 0.0
        %3005 = vmatpush1.msra.mxu0 0.0
        %3006 = vmatprep.subr.mxu0 0.0
        %3007 = vmatpush1.msra.mxu0 0.0
        %3008 = vmatprep.subr.mxu0 0.0
        %3009 = vmatpush1.msra.mxu0 0.0
        %3010 = vmatprep.subr.mxu0 0.0
        %3011 = vmatpush1.msra.mxu0 0.0
        %3012 = vmatprep.subr.mxu0 0.0
        %3013 = vmatpush1.msra.mxu0 0.0
        %3014 = vmatprep.subr.mxu0 0.0
        %3015 = vmatpush1.msra.mxu0 0.0
        %3016 = vmatprep.subr.mxu0 0.0
        %3017 = vmatpush1.msra.mxu0 0.0
        %3018 = vmatprep.subr.mxu0 0.0
        %3019 = vmatpush1.msra.mxu0 0.0
        %3020 = vmatprep.subr.mxu0 0.0
        %3021 = vmatpush1.msra.mxu0 0.0
        %3022 = vmatprep.subr.mxu0 0.0
        %3023 = vmatpush1.msra.mxu0 0.0
        %3024 = vmatprep.subr.mxu0 0.0
        %3025 = vmatpush1.msra.mxu0 0.0
        %3026 = vmatprep.subr.mxu0 0.0
        %3027 = vmatpush1.msra.mxu0 0.0
        %3028 = vmatprep.subr.mxu0 0.0
        %3029 = vmatpush1.msra.mxu0 0.0
        %3030 = vmatprep.subr.mxu0 0.0
        %3031 = vmatpush1.msra.mxu0 0.0
        %3032 = vmatprep.subr.mxu0 0.0
        %3033 = vmatpush1.msra.mxu0 0.0
        %3034 = vmatprep.subr.mxu0 0.0
        %3035 = vmatpush1.msra.mxu0 0.0
        %3036 = vmatprep.subr.mxu0 0.0
        %3037 = vmatpush1.msra.mxu0 0.0
        %3038 = vmatprep.subr.mxu0 0.0
        %3039 = vmatpush1.msra.mxu0 0.0
        %3040 = vmatprep.subr.mxu0 0.0
        %3041 = vmatpush1.msra.mxu0 0.0
        %3042 = vmatprep.subr.mxu0 0.0
        %3043 = vmatpush1.msra.mxu0 0.0
        %3044 = vmatprep.subr.mxu0 0.0
        %3045 = vmatpush1.msra.mxu0 0.0
        %3046 = vmatprep.subr.mxu0 0.0
        %3047 = vmatpush1.msra.mxu0 0.0
        %3048 = vmatprep.subr.mxu0 0.0
        %3049 = vmatpush1.msra.mxu0 0.0
        %3050 = vmatprep.subr.mxu0 0.0
        %3051 = vmatpush1.msra.mxu0 0.0
        %3052 = vmatprep.mubr.f32.mxu0 0.0
        %3053 = vmatmul.mubr.f32.gmra.mrb[0].mxu0 %v2668
        %v3054 = vpop.f32.mrb[0].mxu0
        %v3055 = vadd.f32 %v2830, %v3054
        %v3056 = vpop.f32.mrb[0].mxu0
        %3057 = vmatprep.mubr.f32.mxu0 0.0
        %3058 = vmatmul.mubr.f32.gmra.mrb[0].mxu0 %v2671
        %v3059 = vpop.f32.mrb[0].mxu0
        %v3060 = vadd.f32 %v2835, %v3059
        %v3061 = vpop.f32.mrb[0].mxu0
        %3062 = vmatprep.mubr.f32.mxu0 0.0
        %3063 = vmatmul.mubr.f32.gmra.mrb[0].mxu0 %v2674
        %v3064 = vpop.f32.mrb[0].mxu0
        %v3065 = vadd.f32 %v2840, %v3064
        %v3066 = vpop.f32.mrb[0].mxu0
        %3067 = vmatprep.mubr.f32.mxu0 0.0
        %3068 = vmatmul.mubr.f32.gmra.mrb[0].mxu0 %v2677
        %v3069 = vpop.f32.mrb[0].mxu0
        %v3070 = vadd.f32 %v2845, %v3069
        %v3071 = vpop.f32.mrb[0].mxu0
        %3072 = vmatprep.mubr.f32.mxu0 0.0
        %3073 = vmatmul.mubr.f32.gmra.mrb[0].mxu0 %v2680
        %v3074 = vpop.f32.mrb[0].mxu0
        %v3075 = vadd.f32 %v2850, %v3074
        %v3076 = vpop.f32.mrb[0].mxu0
        %3077 = vmatprep.mubr.f32.mxu0 0.0
        %3078 = vmatmul.mubr.f32.gmra.mrb[0].mxu0 %v2683
        %v3079 = vpop.f32.mrb[0].mxu0
        %v3080 = vadd.f32 %v2855, %v3079
        %v3081 = vpop.f32.mrb[0].mxu0
        %3082 = vmatprep.mubr.f32.mxu0 0.0
        %3083 = vmatmul.mubr.f32.gmra.mrb[0].mxu0 %v2686
        %v3084 = vpop.f32.mrb[0].mxu0
        %v3085 = vadd.f32 %v2860, %v3084
        %v3086 = vpop.f32.mrb[0].mxu0
        %3087 = vmatprep.mubr.f32.mxu0 0.0
        %3088 = vmatmul.mubr.f32.gmra.mrb[0].mxu0 %v2689
        %v3089 = vpop.f32.mrb[0].mxu0
        %v3090 = vadd.f32 %v2865, %v3089
        %v3091 = vpop.f32.mrb[0].mxu0
        %3092 = vmatprep.mubr.f32.mxu0 0.0
        %3093 = vmatmul.mubr.f32.gmra.mrb[0].mxu0 %v2692
        %v3094 = vpop.f32.mrb[0].mxu0
        %v3095 = vadd.f32 %v2870, %v3094
        %v3096 = vpop.f32.mrb[0].mxu0
        %3097 = vmatprep.mubr.f32.mxu0 0.0
        %3098 = vmatmul.mubr.f32.gmra.mrb[0].mxu0 %v2695
        %v3099 = vpop.f32.mrb[0].mxu0
        %v3100 = vadd.f32 %v2875, %v3099
        %v3101 = vpop.f32.mrb[0].mxu0
        %3102 = vmatprep.mubr.f32.mxu0 0.0
        %3103 = vmatmul.mubr.f32.gmra.mrb[0].mxu0 %v2698
        %v3104 = vpop.f32.mrb[0].mxu0
        %v3105 = vadd.f32 %v2880, %v3104
        %v3106 = vpop.f32.mrb[0].mxu0
        %3107 = vmatprep.mubr.f32.mxu0 0.0
        %3108 = vmatmul.mubr.f32.gmra.mrb[0].mxu0 %v2701
        %v3109 = vpop.f32.mrb[0].mxu0
        %v3110 = vadd.f32 %v2885, %v3109
        %v3111 = vpop.f32.mrb[0].mxu0
        %3112 = vmatprep.mubr.f32.mxu0 0.0
        %3113 = vmatmul.mubr.f32.gmra.mrb[0].mxu0 %v2704
        %v3114 = vpop.f32.mrb[0].mxu0
        %v3115 = vadd.f32 %v2890, %v3114
        %v3116 = vpop.f32.mrb[0].mxu0
        %3117 = vmatprep.mubr.f32.mxu0 0.0
        %3118 = vmatmul.mubr.f32.gmra.mrb[0].mxu0 %v2707
        %v3119 = vpop.f32.mrb[0].mxu0
        %v3120 = vadd.f32 %v2895, %v3119
        %v3121 = vpop.f32.mrb[0].mxu0
        %3122 = vmatprep.mubr.f32.mxu0 0.0
        %3123 = vmatmul.mubr.f32.gmra.mrb[0].mxu0 %v2710
        %v3124 = vpop.f32.mrb[0].mxu0
        %v3125 = vadd.f32 %v2900, %v3124
        %v3126 = vpop.f32.mrb[0].mxu0
        %3127 = vmatprep.mubr.f32.mxu0 0.0
        %3128 = vmatmul.mubr.f32.gmra.mrb[0].mxu0 %v2713
        %v3129 = vpop.f32.mrb[0].mxu0
        %v3130 = vadd.f32 %v2905, %v3129
        %v3131 = vpop.f32.mrb[0].mxu0
        %3132 = vmatprep.mubr.f32.mxu0 0.0
        %3133 = vmatmul.mubr.f32.gmra.mrb[0].mxu0 %v2716
        %v3134 = vpop.f32.mrb[0].mxu0
        %v3135 = vadd.f32 %v2910, %v3134
        %v3136 = vpop.f32.mrb[0].mxu0
        %3137 = vmatprep.mubr.f32.mxu0 0.0
        %3138 = vmatmul.mubr.f32.gmra.mrb[0].mxu0 %v2719
        %v3139 = vpop.f32.mrb[0].mxu0
        %v3140 = vadd.f32 %v2915, %v3139
        %v3141 = vpop.f32.mrb[0].mxu0
        %3142 = vmatprep.mubr.f32.mxu0 0.0
        %3143 = vmatmul.mubr.f32.gmra.mrb[0].mxu0 %v2722
        %v3144 = vpop.f32.mrb[0].mxu0
        %v3145 = vadd.f32 %v2920, %v3144
        %v3146 = vpop.f32.mrb[0].mxu0
        %3147 = vmatprep.mubr.f32.mxu0 0.0
        %3148 = vmatmul.mubr.f32.gmra.mrb[0].mxu0 %v2725
        %v3149 = vpop.f32.mrb[0].mxu0
        %v3150 = vadd.f32 %v2925, %v3149
        %v3151 = vpop.f32.mrb[0].mxu0
        %3152 = vmatprep.mubr.f32.mxu0 0.0
        %3153 = vmatmul.mubr.f32.gmra.mrb[0].mxu0 %v2728
        %v3154 = vpop.f32.mrb[0].mxu0
        %v3155 = vadd.f32 %v2930, %v3154
        %v3156 = vpop.f32.mrb[0].mxu0
        %3157 = vmatprep.mubr.f32.mxu0 0.0
        %3158 = vmatmul.mubr.f32.gmra.mrb[0].mxu0 %v2731
        %v3159 = vpop.f32.mrb[0].mxu0
        %v3160 = vadd.f32 %v2935, %v3159
        %v3161 = vpop.f32.mrb[0].mxu0
        %3162 = vmatprep.mubr.f32.mxu0 0.0
        %3163 = vmatmul.mubr.f32.gmra.mrb[0].mxu0 %v2734
        %v3164 = vpop.f32.mrb[0].mxu0
        %v3165 = vadd.f32 %v2940, %v3164
        %v3166 = vpop.f32.mrb[0].mxu0
        %3167 = vmatprep.mubr.f32.mxu0 0.0
        %3168 = vmatmul.mubr.f32.gmra.mrb[0].mxu0 %v2737
        %v3169 = vpop.f32.mrb[0].mxu0
        %v3170 = vadd.f32 %v2945, %v3169
        %v3171 = vpop.f32.mrb[0].mxu0
        %3172 = vmatprep.mubr.f32.mxu0 0.0
        %3173 = vmatmul.mubr.f32.gmra.mrb[0].mxu0 %v2740
        %v3174 = vpop.f32.mrb[0].mxu0
        %v3175 = vadd.f32 %v2950, %v3174
        %v3176 = vpop.f32.mrb[0].mxu0
        %3177 = vmatprep.mubr.f32.mxu0 0.0
        %3178 = vmatmul.mubr.f32.gmra.mrb[0].mxu0 %v2743
        %v3179 = vpop.f32.mrb[0].mxu0
        %v3180 = vadd.f32 %v2955, %v3179
        %v3181 = vpop.f32.mrb[0].mxu0
        %3182 = vmatprep.mubr.f32.mxu0 0.0
        %3183 = vmatmul.mubr.f32.gmra.mrb[0].mxu0 %v2746
        %v3184 = vpop.f32.mrb[0].mxu0
        %v3185 = vadd.f32 %v2960, %v3184
        %v3186 = vpop.f32.mrb[0].mxu0
        %3187 = vmatprep.mubr.f32.mxu0 0.0
        %3188 = vmatmul.mubr.f32.gmra.mrb[0].mxu0 %v2749
        %v3189 = vpop.f32.mrb[0].mxu0
        %v3190 = vadd.f32 %v2965, %v3189
        %v3191 = vpop.f32.mrb[0].mxu0
        %3192 = vmatprep.mubr.f32.mxu0 0.0
        %3193 = vmatmul.mubr.f32.gmra.mrb[0].mxu0 %v2752
        %v3194 = vpop.f32.mrb[0].mxu0
        %v3195 = vadd.f32 %v2970, %v3194
        %v3196 = vpop.f32.mrb[0].mxu0
        %3197 = vmatprep.mubr.f32.mxu0 0.0
        %3198 = vmatmul.mubr.f32.gmra.mrb[0].mxu0 %v2755
        %v3199 = vpop.f32.mrb[0].mxu0
        %v3200 = vadd.f32 %v2975, %v3199
        %v3201 = vpop.f32.mrb[0].mxu0
        %3202 = vmatprep.mubr.f32.mxu0 0.0
        %3203 = vmatmul.mubr.f32.gmra.mrb[0].mxu0 %v2758
        %v3204 = vpop.f32.mrb[0].mxu0
        %v3205 = vadd.f32 %v2980, %v3204
        %v3206 = vpop.f32.mrb[0].mxu0
        %3207 = vmatprep.mubr.f32.mxu0 0.0
        %3208 = vmatmul.mubr.f32.gmra.mrb[0].mxu0 %v2761
        %v3209 = vpop.f32.mrb[0].mxu0
        %v3210 = vadd.f32 %v2985, %v3209
        %v3211 = vpop.f32.mrb[0].mxu0
        %3212 = vdwg.mxu0
        %v3213 = vmax.f32 %v3055, 0.0
        %v3214 = vmax.f32 %v3060, 0.0
        %v3215 = vmax.f32 %v3065, 0.0
        %v3216 = vmax.f32 %v3070, 0.0
        %v3217 = vmax.f32 %v3075, 0.0
        %v3218 = vmax.f32 %v3080, 0.0
        %v3219 = vmax.f32 %v3085, 0.0
        %v3220 = vmax.f32 %v3090, 0.0
        %v3221 = vmax.f32 %v3095, 0.0
        %v3222 = vmax.f32 %v3100, 0.0
        %v3223 = vmax.f32 %v3105, 0.0
        %v3224 = vmax.f32 %v3110, 0.0
        %v3225 = vmax.f32 %v3115, 0.0
        %v3226 = vmax.f32 %v3120, 0.0
        %v3227 = vmax.f32 %v3125, 0.0
        %v3228 = vmax.f32 %v3130, 0.0
        %v3229 = vmax.f32 %v3135, 0.0
        %v3230 = vmax.f32 %v3140, 0.0
        %v3231 = vmax.f32 %v3145, 0.0
        %v3232 = vmax.f32 %v3150, 0.0
        %v3233 = vmax.f32 %v3155, 0.0
        %v3234 = vmax.f32 %v3160, 0.0
        %v3235 = vmax.f32 %v3165, 0.0
        %v3236 = vmax.f32 %v3170, 0.0
        %v3237 = vmax.f32 %v3175, 0.0
        %v3238 = vmax.f32 %v3180, 0.0
        %v3239 = vmax.f32 %v3185, 0.0
        %v3240 = vmax.f32 %v3190, 0.0
        %v3241 = vmax.f32 %v3195, 0.0
        %v3242 = vmax.f32 %v3200, 0.0
        %v3243 = vmax.f32 %v3205, 0.0
        %v3244 = vmax.f32 %v3210, 0.0
        %v3245 = vlaneseq
        %v3246 = vshrl.u32 %v3245, 7
        %v3247 = vsub.s32 0, %v3246
        %v3248 = vrot.slane %v2661, %v3247
        %v3249 = vmul.f32 %v3213, %v3248
        %v3250 = vmul.f32 %v3214, %v3248
        %v3251 = vmul.f32 %v3215, %v3248
        %v3252 = vmul.f32 %v3216, %v3248
        %v3253 = vmul.f32 %v3217, %v3248
        %v3254 = vmul.f32 %v3218, %v3248
        %v3255 = vmul.f32 %v3219, %v3248
        %v3256 = vmul.f32 %v3220, %v3248
        %v3257 = vmul.f32 %v3221, %v3248
        %v3258 = vmul.f32 %v3222, %v3248
        %v3259 = vmul.f32 %v3223, %v3248
        %v3260 = vmul.f32 %v3224, %v3248
        %v3261 = vmul.f32 %v3225, %v3248
        %v3262 = vmul.f32 %v3226, %v3248
        %v3263 = vmul.f32 %v3227, %v3248
        %v3264 = vmul.f32 %v3228, %v3248
        %v3265 = vmul.f32 %v3229, %v3248
        %v3266 = vmul.f32 %v3230, %v3248
        %v3267 = vmul.f32 %v3231, %v3248
        %v3268 = vmul.f32 %v3232, %v3248
        %v3269 = vmul.f32 %v3233, %v3248
        %v3270 = vmul.f32 %v3234, %v3248
        %v3271 = vmul.f32 %v3235, %v3248
        %v3272 = vmul.f32 %v3236, %v3248
        %v3273 = vmul.f32 %v3237, %v3248
        %v3274 = vmul.f32 %v3238, %v3248
        %v3275 = vmul.f32 %v3239, %v3248
        %v3276 = vmul.f32 %v3240, %v3248
        %v3277 = vmul.f32 %v3241, %v3248
        %v3278 = vmul.f32 %v3242, %v3248
        %v3279 = vmul.f32 %v3243, %v3248
        %v3280 = vmul.f32 %v3244, %v3248
        %v3281 = vlaneseq
        %v3282 = vshrl.u32 %v3281, 7
        %v3283 = vsub.s32 0, %v3282
        %v3284 = vrot.slane %v2662, %v3283
        %v3285 = vadd.f32 %v3249, %v3284
        %v3286 = vadd.f32 %v3250, %v3284
        %v3287 = vadd.f32 %v3251, %v3284
        %v3288 = vadd.f32 %v3252, %v3284
        %v3289 = vadd.f32 %v3253, %v3284
        %v3290 = vadd.f32 %v3254, %v3284
        %v3291 = vadd.f32 %v3255, %v3284
        %v3292 = vadd.f32 %v3256, %v3284
        %v3293 = vadd.f32 %v3257, %v3284
        %v3294 = vadd.f32 %v3258, %v3284
        %v3295 = vadd.f32 %v3259, %v3284
        %v3296 = vadd.f32 %v3260, %v3284
        %v3297 = vadd.f32 %v3261, %v3284
        %v3298 = vadd.f32 %v3262, %v3284
        %v3299 = vadd.f32 %v3263, %v3284
        %v3300 = vadd.f32 %v3264, %v3284
        %v3301 = vadd.f32 %v3265, %v3284
        %v3302 = vadd.f32 %v3266, %v3284
        %v3303 = vadd.f32 %v3267, %v3284
        %v3304 = vadd.f32 %v3268, %v3284
        %v3305 = vadd.f32 %v3269, %v3284
        %v3306 = vadd.f32 %v3270, %v3284
        %v3307 = vadd.f32 %v3271, %v3284
        %v3308 = vadd.f32 %v3272, %v3284
        %v3309 = vadd.f32 %v3273, %v3284
        %v3310 = vadd.f32 %v3274, %v3284
        %v3311 = vadd.f32 %v3275, %v3284
        %v3312 = vadd.f32 %v3276, %v3284
        %v3313 = vadd.f32 %v3277, %v3284
        %v3314 = vadd.f32 %v3278, %v3284
        %v3315 = vadd.f32 %v3279, %v3284
        %v3316 = vadd.f32 %v3280, %v3284
        %v3349 = vcombine.high %v3285, %v3285
        %v3351 = vunpack.c.l.s4 1983009808
        %v3352 = vunpack.c.0.s8 %v3351
        %v3353 = vlaneseq
        %v3354 = vshrl.u32 %v3353, 7
        %v3355 = vsub.s32 %v3352, %v3354
        %v3356 = vrot.slane %v3285, %v3355
        %v3358 = vunpack.c.l.s4 1983009808
        %v3359 = vunpack.c.0.s8 %v3358
        %v3360 = vlaneseq
        %v3361 = vshrl.u32 %v3360, 7
        %v3362 = vsub.s32 %v3359, %v3361
        %v3363 = vrot.slane %v3349, %v3362
        %v3364 = vcombine.high %v3356, %v3356
        %v3365 = vcombine.high %v3363, %v3363
        %v3366 = vcombine.high %v3286, %v3286
        %v3368 = vunpack.c.l.s4 1983009808
        %v3369 = vunpack.c.0.s8 %v3368
        %v3370 = vlaneseq
        %v3371 = vshrl.u32 %v3370, 7
        %v3372 = vsub.s32 %v3369, %v3371
        %v3373 = vrot.slane %v3286, %v3372
        %v3375 = vunpack.c.l.s4 1983009808
        %v3376 = vunpack.c.0.s8 %v3375
        %v3377 = vlaneseq
        %v3378 = vshrl.u32 %v3377, 7
        %v3379 = vsub.s32 %v3376, %v3378
        %v3380 = vrot.slane %v3366, %v3379
        %v3381 = vcombine.high %v3373, %v3373
        %v3382 = vcombine.high %v3380, %v3380
        %v3383 = vcombine.high %v3287, %v3287
        %v3385 = vunpack.c.l.s4 1983009808
        %v3386 = vunpack.c.0.s8 %v3385
        %v3387 = vlaneseq
        %v3388 = vshrl.u32 %v3387, 7
        %v3389 = vsub.s32 %v3386, %v3388
        %v3390 = vrot.slane %v3287, %v3389
        %v3392 = vunpack.c.l.s4 1983009808
        %v3393 = vunpack.c.0.s8 %v3392
        %v3394 = vlaneseq
        %v3395 = vshrl.u32 %v3394, 7
        %v3396 = vsub.s32 %v3393, %v3395
        %v3397 = vrot.slane %v3383, %v3396
        %v3398 = vcombine.high %v3390, %v3390
        %v3399 = vcombine.high %v3397, %v3397
        %v3400 = vcombine.high %v3288, %v3288
        %v3402 = vunpack.c.l.s4 1983009808
        %v3403 = vunpack.c.0.s8 %v3402
        %v3404 = vlaneseq
        %v3405 = vshrl.u32 %v3404, 7
        %v3406 = vsub.s32 %v3403, %v3405
        %v3407 = vrot.slane %v3288, %v3406
        %v3409 = vunpack.c.l.s4 1983009808
        %v3410 = vunpack.c.0.s8 %v3409
        %v3411 = vlaneseq
        %v3412 = vshrl.u32 %v3411, 7
        %v3413 = vsub.s32 %v3410, %v3412
        %v3414 = vrot.slane %v3400, %v3413
        %v3415 = vcombine.high %v3407, %v3407
        %v3416 = vcombine.high %v3414, %v3414
        %v3417 = vcombine.high %v3289, %v3289
        %v3419 = vunpack.c.l.s4 1983009808
        %v3420 = vunpack.c.0.s8 %v3419
        %v3421 = vlaneseq
        %v3422 = vshrl.u32 %v3421, 7
        %v3423 = vsub.s32 %v3420, %v3422
        %v3424 = vrot.slane %v3289, %v3423
        %v3426 = vunpack.c.l.s4 1983009808
        %v3427 = vunpack.c.0.s8 %v3426
        %v3428 = vlaneseq
        %v3429 = vshrl.u32 %v3428, 7
        %v3430 = vsub.s32 %v3427, %v3429
        %v3431 = vrot.slane %v3417, %v3430
        %v3432 = vcombine.high %v3424, %v3424
        %v3433 = vcombine.high %v3431, %v3431
        %v3434 = vcombine.high %v3290, %v3290
        %v3436 = vunpack.c.l.s4 1983009808
        %v3437 = vunpack.c.0.s8 %v3436
        %v3438 = vlaneseq
        %v3439 = vshrl.u32 %v3438, 7
        %v3440 = vsub.s32 %v3437, %v3439
        %v3441 = vrot.slane %v3290, %v3440
        %v3443 = vunpack.c.l.s4 1983009808
        %v3444 = vunpack.c.0.s8 %v3443
        %v3445 = vlaneseq
        %v3446 = vshrl.u32 %v3445, 7
        %v3447 = vsub.s32 %v3444, %v3446
        %v3448 = vrot.slane %v3434, %v3447
        %v3449 = vcombine.high %v3441, %v3441
        %v3450 = vcombine.high %v3448, %v3448
        %v3451 = vcombine.high %v3291, %v3291
        %v3453 = vunpack.c.l.s4 1983009808
        %v3454 = vunpack.c.0.s8 %v3453
        %v3455 = vlaneseq
        %v3456 = vshrl.u32 %v3455, 7
        %v3457 = vsub.s32 %v3454, %v3456
        %v3458 = vrot.slane %v3291, %v3457
        %v3460 = vunpack.c.l.s4 1983009808
        %v3461 = vunpack.c.0.s8 %v3460
        %v3462 = vlaneseq
        %v3463 = vshrl.u32 %v3462, 7
        %v3464 = vsub.s32 %v3461, %v3463
        %v3465 = vrot.slane %v3451, %v3464
        %v3466 = vcombine.high %v3458, %v3458
        %v3467 = vcombine.high %v3465, %v3465
        %v3468 = vcombine.high %v3292, %v3292
        %v3470 = vunpack.c.l.s4 1983009808
        %v3471 = vunpack.c.0.s8 %v3470
        %v3472 = vlaneseq
        %v3473 = vshrl.u32 %v3472, 7
        %v3474 = vsub.s32 %v3471, %v3473
        %v3475 = vrot.slane %v3292, %v3474
        %v3477 = vunpack.c.l.s4 1983009808
        %v3478 = vunpack.c.0.s8 %v3477
        %v3479 = vlaneseq
        %v3480 = vshrl.u32 %v3479, 7
        %v3481 = vsub.s32 %v3478, %v3480
        %v3482 = vrot.slane %v3468, %v3481
        %v3483 = vcombine.high %v3475, %v3475
        %v3484 = vcombine.high %v3482, %v3482
        %v3485 = vcombine.high %v3293, %v3293
        %v3487 = vunpack.c.l.s4 1983009808
        %v3488 = vunpack.c.0.s8 %v3487
        %v3489 = vlaneseq
        %v3490 = vshrl.u32 %v3489, 7
        %v3491 = vsub.s32 %v3488, %v3490
        %v3492 = vrot.slane %v3293, %v3491
        %v3494 = vunpack.c.l.s4 1983009808
        %v3495 = vunpack.c.0.s8 %v3494
        %v3496 = vlaneseq
        %v3497 = vshrl.u32 %v3496, 7
        %v3498 = vsub.s32 %v3495, %v3497
        %v3499 = vrot.slane %v3485, %v3498
        %v3500 = vcombine.high %v3492, %v3492
        %v3501 = vcombine.high %v3499, %v3499
        %v3502 = vcombine.high %v3294, %v3294
        %v3504 = vunpack.c.l.s4 1983009808
        %v3505 = vunpack.c.0.s8 %v3504
        %v3506 = vlaneseq
        %v3507 = vshrl.u32 %v3506, 7
        %v3508 = vsub.s32 %v3505, %v3507
        %v3509 = vrot.slane %v3294, %v3508
        %v3511 = vunpack.c.l.s4 1983009808
        %v3512 = vunpack.c.0.s8 %v3511
        %v3513 = vlaneseq
        %v3514 = vshrl.u32 %v3513, 7
        %v3515 = vsub.s32 %v3512, %v3514
        %v3516 = vrot.slane %v3502, %v3515
        %v3517 = vcombine.high %v3509, %v3509
        %v3518 = vcombine.high %v3516, %v3516
        %v3519 = vcombine.high %v3295, %v3295
        %v3521 = vunpack.c.l.s4 1983009808
        %v3522 = vunpack.c.0.s8 %v3521
        %v3523 = vlaneseq
        %v3524 = vshrl.u32 %v3523, 7
        %v3525 = vsub.s32 %v3522, %v3524
        %v3526 = vrot.slane %v3295, %v3525
        %v3528 = vunpack.c.l.s4 1983009808
        %v3529 = vunpack.c.0.s8 %v3528
        %v3530 = vlaneseq
        %v3531 = vshrl.u32 %v3530, 7
        %v3532 = vsub.s32 %v3529, %v3531
        %v3533 = vrot.slane %v3519, %v3532
        %v3534 = vcombine.high %v3526, %v3526
        %v3535 = vcombine.high %v3533, %v3533
        %v3536 = vcombine.high %v3296, %v3296
        %v3538 = vunpack.c.l.s4 1983009808
        %v3539 = vunpack.c.0.s8 %v3538
        %v3540 = vlaneseq
        %v3541 = vshrl.u32 %v3540, 7
        %v3542 = vsub.s32 %v3539, %v3541
        %v3543 = vrot.slane %v3296, %v3542
        %v3545 = vunpack.c.l.s4 1983009808
        %v3546 = vunpack.c.0.s8 %v3545
        %v3547 = vlaneseq
        %v3548 = vshrl.u32 %v3547, 7
        %v3549 = vsub.s32 %v3546, %v3548
        %v3550 = vrot.slane %v3536, %v3549
        %v3551 = vcombine.high %v3543, %v3543
        %v3552 = vcombine.high %v3550, %v3550
        %v3553 = vcombine.high %v3297, %v3297
        %v3555 = vunpack.c.l.s4 1983009808
        %v3556 = vunpack.c.0.s8 %v3555
        %v3557 = vlaneseq
        %v3558 = vshrl.u32 %v3557, 7
        %v3559 = vsub.s32 %v3556, %v3558
        %v3560 = vrot.slane %v3297, %v3559
        %v3562 = vunpack.c.l.s4 1983009808
        %v3563 = vunpack.c.0.s8 %v3562
        %v3564 = vlaneseq
        %v3565 = vshrl.u32 %v3564, 7
        %v3566 = vsub.s32 %v3563, %v3565
        %v3567 = vrot.slane %v3553, %v3566
        %v3568 = vcombine.high %v3560, %v3560
        %v3569 = vcombine.high %v3567, %v3567
        %v3570 = vcombine.high %v3298, %v3298
        %v3572 = vunpack.c.l.s4 1983009808
        %v3573 = vunpack.c.0.s8 %v3572
        %v3574 = vlaneseq
        %v3575 = vshrl.u32 %v3574, 7
        %v3576 = vsub.s32 %v3573, %v3575
        %v3577 = vrot.slane %v3298, %v3576
        %v3579 = vunpack.c.l.s4 1983009808
        %v3580 = vunpack.c.0.s8 %v3579
        %v3581 = vlaneseq
        %v3582 = vshrl.u32 %v3581, 7
        %v3583 = vsub.s32 %v3580, %v3582
        %v3584 = vrot.slane %v3570, %v3583
        %v3585 = vcombine.high %v3577, %v3577
        %v3586 = vcombine.high %v3584, %v3584
        %v3587 = vcombine.high %v3299, %v3299
        %v3589 = vunpack.c.l.s4 1983009808
        %v3590 = vunpack.c.0.s8 %v3589
        %v3591 = vlaneseq
        %v3592 = vshrl.u32 %v3591, 7
        %v3593 = vsub.s32 %v3590, %v3592
        %v3594 = vrot.slane %v3299, %v3593
        %v3596 = vunpack.c.l.s4 1983009808
        %v3597 = vunpack.c.0.s8 %v3596
        %v3598 = vlaneseq
        %v3599 = vshrl.u32 %v3598, 7
        %v3600 = vsub.s32 %v3597, %v3599
        %v3601 = vrot.slane %v3587, %v3600
        %v3602 = vcombine.high %v3594, %v3594
        %v3603 = vcombine.high %v3601, %v3601
        %v3604 = vcombine.high %v3300, %v3300
        %v3606 = vunpack.c.l.s4 1983009808
        %v3607 = vunpack.c.0.s8 %v3606
        %v3608 = vlaneseq
        %v3609 = vshrl.u32 %v3608, 7
        %v3610 = vsub.s32 %v3607, %v3609
        %v3611 = vrot.slane %v3300, %v3610
        %v3613 = vunpack.c.l.s4 1983009808
        %v3614 = vunpack.c.0.s8 %v3613
        %v3615 = vlaneseq
        %v3616 = vshrl.u32 %v3615, 7
        %v3617 = vsub.s32 %v3614, %v3616
        %v3618 = vrot.slane %v3604, %v3617
        %v3619 = vcombine.high %v3611, %v3611
        %v3620 = vcombine.high %v3618, %v3618
        %v3621 = vcombine.high %v3301, %v3301
        %v3623 = vunpack.c.l.s4 1983009808
        %v3624 = vunpack.c.0.s8 %v3623
        %v3625 = vlaneseq
        %v3626 = vshrl.u32 %v3625, 7
        %v3627 = vsub.s32 %v3624, %v3626
        %v3628 = vrot.slane %v3301, %v3627
        %v3630 = vunpack.c.l.s4 1983009808
        %v3631 = vunpack.c.0.s8 %v3630
        %v3632 = vlaneseq
        %v3633 = vshrl.u32 %v3632, 7
        %v3634 = vsub.s32 %v3631, %v3633
        %v3635 = vrot.slane %v3621, %v3634
        %v3636 = vcombine.high %v3628, %v3628
        %v3637 = vcombine.high %v3635, %v3635
        %v3638 = vcombine.high %v3302, %v3302
        %v3640 = vunpack.c.l.s4 1983009808
        %v3641 = vunpack.c.0.s8 %v3640
        %v3642 = vlaneseq
        %v3643 = vshrl.u32 %v3642, 7
        %v3644 = vsub.s32 %v3641, %v3643
        %v3645 = vrot.slane %v3302, %v3644
        %v3647 = vunpack.c.l.s4 1983009808
        %v3648 = vunpack.c.0.s8 %v3647
        %v3649 = vlaneseq
        %v3650 = vshrl.u32 %v3649, 7
        %v3651 = vsub.s32 %v3648, %v3650
        %v3652 = vrot.slane %v3638, %v3651
        %v3653 = vcombine.high %v3645, %v3645
        %v3654 = vcombine.high %v3652, %v3652
        %v3655 = vcombine.high %v3303, %v3303
        %v3657 = vunpack.c.l.s4 1983009808
        %v3658 = vunpack.c.0.s8 %v3657
        %v3659 = vlaneseq
        %v3660 = vshrl.u32 %v3659, 7
        %v3661 = vsub.s32 %v3658, %v3660
        %v3662 = vrot.slane %v3303, %v3661
        %v3664 = vunpack.c.l.s4 1983009808
        %v3665 = vunpack.c.0.s8 %v3664
        %v3666 = vlaneseq
        %v3667 = vshrl.u32 %v3666, 7
        %v3668 = vsub.s32 %v3665, %v3667
        %v3669 = vrot.slane %v3655, %v3668
        %v3670 = vcombine.high %v3662, %v3662
        %v3671 = vcombine.high %v3669, %v3669
        %v3672 = vcombine.high %v3304, %v3304
        %v3674 = vunpack.c.l.s4 1983009808
        %v3675 = vunpack.c.0.s8 %v3674
        %v3676 = vlaneseq
        %v3677 = vshrl.u32 %v3676, 7
        %v3678 = vsub.s32 %v3675, %v3677
        %v3679 = vrot.slane %v3304, %v3678
        %v3681 = vunpack.c.l.s4 1983009808
        %v3682 = vunpack.c.0.s8 %v3681
        %v3683 = vlaneseq
        %v3684 = vshrl.u32 %v3683, 7
        %v3685 = vsub.s32 %v3682, %v3684
        %v3686 = vrot.slane %v3672, %v3685
        %v3687 = vcombine.high %v3679, %v3679
        %v3688 = vcombine.high %v3686, %v3686
        %v3689 = vcombine.high %v3305, %v3305
        %v3691 = vunpack.c.l.s4 1983009808
        %v3692 = vunpack.c.0.s8 %v3691
        %v3693 = vlaneseq
        %v3694 = vshrl.u32 %v3693, 7
        %v3695 = vsub.s32 %v3692, %v3694
        %v3696 = vrot.slane %v3305, %v3695
        %v3698 = vunpack.c.l.s4 1983009808
        %v3699 = vunpack.c.0.s8 %v3698
        %v3700 = vlaneseq
        %v3701 = vshrl.u32 %v3700, 7
        %v3702 = vsub.s32 %v3699, %v3701
        %v3703 = vrot.slane %v3689, %v3702
        %v3704 = vcombine.high %v3696, %v3696
        %v3705 = vcombine.high %v3703, %v3703
        %v3706 = vcombine.high %v3306, %v3306
        %v3708 = vunpack.c.l.s4 1983009808
        %v3709 = vunpack.c.0.s8 %v3708
        %v3710 = vlaneseq
        %v3711 = vshrl.u32 %v3710, 7
        %v3712 = vsub.s32 %v3709, %v3711
        %v3713 = vrot.slane %v3306, %v3712
        %v3715 = vunpack.c.l.s4 1983009808
        %v3716 = vunpack.c.0.s8 %v3715
        %v3717 = vlaneseq
        %v3718 = vshrl.u32 %v3717, 7
        %v3719 = vsub.s32 %v3716, %v3718
        %v3720 = vrot.slane %v3706, %v3719
        %v3721 = vcombine.high %v3713, %v3713
        %v3722 = vcombine.high %v3720, %v3720
        %v3723 = vcombine.high %v3307, %v3307
        %v3725 = vunpack.c.l.s4 1983009808
        %v3726 = vunpack.c.0.s8 %v3725
        %v3727 = vlaneseq
        %v3728 = vshrl.u32 %v3727, 7
        %v3729 = vsub.s32 %v3726, %v3728
        %v3730 = vrot.slane %v3307, %v3729
        %v3732 = vunpack.c.l.s4 1983009808
        %v3733 = vunpack.c.0.s8 %v3732
        %v3734 = vlaneseq
        %v3735 = vshrl.u32 %v3734, 7
        %v3736 = vsub.s32 %v3733, %v3735
        %v3737 = vrot.slane %v3723, %v3736
        %v3738 = vcombine.high %v3730, %v3730
        %v3739 = vcombine.high %v3737, %v3737
        %v3740 = vcombine.high %v3308, %v3308
        %v3742 = vunpack.c.l.s4 1983009808
        %v3743 = vunpack.c.0.s8 %v3742
        %v3744 = vlaneseq
        %v3745 = vshrl.u32 %v3744, 7
        %v3746 = vsub.s32 %v3743, %v3745
        %v3747 = vrot.slane %v3308, %v3746
        %v3749 = vunpack.c.l.s4 1983009808
        %v3750 = vunpack.c.0.s8 %v3749
        %v3751 = vlaneseq
        %v3752 = vshrl.u32 %v3751, 7
        %v3753 = vsub.s32 %v3750, %v3752
        %v3754 = vrot.slane %v3740, %v3753
        %v3755 = vcombine.high %v3747, %v3747
        %v3756 = vcombine.high %v3754, %v3754
        %v3757 = vcombine.high %v3309, %v3309
        %v3759 = vunpack.c.l.s4 1983009808
        %v3760 = vunpack.c.0.s8 %v3759
        %v3761 = vlaneseq
        %v3762 = vshrl.u32 %v3761, 7
        %v3763 = vsub.s32 %v3760, %v3762
        %v3764 = vrot.slane %v3309, %v3763
        %v3766 = vunpack.c.l.s4 1983009808
        %v3767 = vunpack.c.0.s8 %v3766
        %v3768 = vlaneseq
        %v3769 = vshrl.u32 %v3768, 7
        %v3770 = vsub.s32 %v3767, %v3769
        %v3771 = vrot.slane %v3757, %v3770
        %v3772 = vcombine.high %v3764, %v3764
        %v3773 = vcombine.high %v3771, %v3771
        %v3774 = vcombine.high %v3310, %v3310
        %v3776 = vunpack.c.l.s4 1983009808
        %v3777 = vunpack.c.0.s8 %v3776
        %v3778 = vlaneseq
        %v3779 = vshrl.u32 %v3778, 7
        %v3780 = vsub.s32 %v3777, %v3779
        %v3781 = vrot.slane %v3310, %v3780
        %v3783 = vunpack.c.l.s4 1983009808
        %v3784 = vunpack.c.0.s8 %v3783
        %v3785 = vlaneseq
        %v3786 = vshrl.u32 %v3785, 7
        %v3787 = vsub.s32 %v3784, %v3786
        %v3788 = vrot.slane %v3774, %v3787
        %v3789 = vcombine.high %v3781, %v3781
        %v3790 = vcombine.high %v3788, %v3788
        %v3791 = vcombine.high %v3311, %v3311
        %v3793 = vunpack.c.l.s4 1983009808
        %v3794 = vunpack.c.0.s8 %v3793
        %v3795 = vlaneseq
        %v3796 = vshrl.u32 %v3795, 7
        %v3797 = vsub.s32 %v3794, %v3796
        %v3798 = vrot.slane %v3311, %v3797
        %v3800 = vunpack.c.l.s4 1983009808
        %v3801 = vunpack.c.0.s8 %v3800
        %v3802 = vlaneseq
        %v3803 = vshrl.u32 %v3802, 7
        %v3804 = vsub.s32 %v3801, %v3803
        %v3805 = vrot.slane %v3791, %v3804
        %v3806 = vcombine.high %v3798, %v3798
        %v3807 = vcombine.high %v3805, %v3805
        %v3808 = vcombine.high %v3312, %v3312
        %v3810 = vunpack.c.l.s4 1983009808
        %v3811 = vunpack.c.0.s8 %v3810
        %v3812 = vlaneseq
        %v3813 = vshrl.u32 %v3812, 7
        %v3814 = vsub.s32 %v3811, %v3813
        %v3815 = vrot.slane %v3312, %v3814
        %v3817 = vunpack.c.l.s4 1983009808
        %v3818 = vunpack.c.0.s8 %v3817
        %v3819 = vlaneseq
        %v3820 = vshrl.u32 %v3819, 7
        %v3821 = vsub.s32 %v3818, %v3820
        %v3822 = vrot.slane %v3808, %v3821
        %v3823 = vcombine.high %v3815, %v3815
        %v3824 = vcombine.high %v3822, %v3822
        %v3825 = vcombine.high %v3313, %v3313
        %v3827 = vunpack.c.l.s4 1983009808
        %v3828 = vunpack.c.0.s8 %v3827
        %v3829 = vlaneseq
        %v3830 = vshrl.u32 %v3829, 7
        %v3831 = vsub.s32 %v3828, %v3830
        %v3832 = vrot.slane %v3313, %v3831
        %v3834 = vunpack.c.l.s4 1983009808
        %v3835 = vunpack.c.0.s8 %v3834
        %v3836 = vlaneseq
        %v3837 = vshrl.u32 %v3836, 7
        %v3838 = vsub.s32 %v3835, %v3837
        %v3839 = vrot.slane %v3825, %v3838
        %v3840 = vcombine.high %v3832, %v3832
        %v3841 = vcombine.high %v3839, %v3839
        %v3842 = vcombine.high %v3314, %v3314
        %v3844 = vunpack.c.l.s4 1983009808
        %v3845 = vunpack.c.0.s8 %v3844
        %v3846 = vlaneseq
        %v3847 = vshrl.u32 %v3846, 7
        %v3848 = vsub.s32 %v3845, %v3847
        %v3849 = vrot.slane %v3314, %v3848
        %v3851 = vunpack.c.l.s4 1983009808
        %v3852 = vunpack.c.0.s8 %v3851
        %v3853 = vlaneseq
        %v3854 = vshrl.u32 %v3853, 7
        %v3855 = vsub.s32 %v3852, %v3854
        %v3856 = vrot.slane %v3842, %v3855
        %v3857 = vcombine.high %v3849, %v3849
        %v3858 = vcombine.high %v3856, %v3856
        %v3859 = vcombine.high %v3315, %v3315
        %v3861 = vunpack.c.l.s4 1983009808
        %v3862 = vunpack.c.0.s8 %v3861
        %v3863 = vlaneseq
        %v3864 = vshrl.u32 %v3863, 7
        %v3865 = vsub.s32 %v3862, %v3864
        %v3866 = vrot.slane %v3315, %v3865
        %v3868 = vunpack.c.l.s4 1983009808
        %v3869 = vunpack.c.0.s8 %v3868
        %v3870 = vlaneseq
        %v3871 = vshrl.u32 %v3870, 7
        %v3872 = vsub.s32 %v3869, %v3871
        %v3873 = vrot.slane %v3859, %v3872
        %v3874 = vcombine.high %v3866, %v3866
        %v3875 = vcombine.high %v3873, %v3873
        %v3876 = vcombine.high %v3316, %v3316
        %v3878 = vunpack.c.l.s4 1983009808
        %v3879 = vunpack.c.0.s8 %v3878
        %v3880 = vlaneseq
        %v3881 = vshrl.u32 %v3880, 7
        %v3882 = vsub.s32 %v3879, %v3881
        %v3883 = vrot.slane %v3316, %v3882
        %v3885 = vunpack.c.l.s4 1983009808
        %v3886 = vunpack.c.0.s8 %v3885
        %v3887 = vlaneseq
        %v3888 = vshrl.u32 %v3887, 7
        %v3889 = vsub.s32 %v3886, %v3888
        %v3890 = vrot.slane %v3876, %v3889
        %v3891 = vcombine.high %v3883, %v3883
        %v3892 = vcombine.high %v3890, %v3890
        %v4021 = vsel %vm1094, %v3356, -inf
        %v4022 = vrot.slane %v4021, 4
        %v4023 = vmax.f32 %v4021, %v4022
        %v4024 = vrot.slane %v4023, 2
        %v4025 = vmax.f32 %v4023, %v4024
        %v4026 = vrot.slane %v4025, 1
        %v4027 = vmax.f32 %v4025, %v4026
        %v4028 = vsel %vm1094, %v3364, -inf
        %v4029 = vrot.slane %v4028, 4
        %v4030 = vmax.f32 %v4028, %v4029
        %v4031 = vrot.slane %v4030, 2
        %v4032 = vmax.f32 %v4030, %v4031
        %v4033 = vrot.slane %v4032, 1
        %v4034 = vmax.f32 %v4032, %v4033
        %v4035 = vsel %vm1094, %v3363, -inf
        %v4036 = vrot.slane %v4035, 4
        %v4037 = vmax.f32 %v4035, %v4036
        %v4038 = vrot.slane %v4037, 2
        %v4039 = vmax.f32 %v4037, %v4038
        %v4040 = vrot.slane %v4039, 1
        %v4041 = vmax.f32 %v4039, %v4040
        %v4042 = vsel %vm1094, %v3365, -inf
        %v4043 = vrot.slane %v4042, 4
        %v4044 = vmax.f32 %v4042, %v4043
        %v4045 = vrot.slane %v4044, 2
        %v4046 = vmax.f32 %v4044, %v4045
        %v4047 = vrot.slane %v4046, 1
        %v4048 = vmax.f32 %v4046, %v4047
        %v4049 = vsel %vm1094, %v3373, -inf
        %v4050 = vrot.slane %v4049, 4
        %v4051 = vmax.f32 %v4049, %v4050
        %v4052 = vrot.slane %v4051, 2
        %v4053 = vmax.f32 %v4051, %v4052
        %v4054 = vrot.slane %v4053, 1
        %v4055 = vmax.f32 %v4053, %v4054
        %v4056 = vsel %vm1094, %v3381, -inf
        %v4057 = vrot.slane %v4056, 4
        %v4058 = vmax.f32 %v4056, %v4057
        %v4059 = vrot.slane %v4058, 2
        %v4060 = vmax.f32 %v4058, %v4059
        %v4061 = vrot.slane %v4060, 1
        %v4062 = vmax.f32 %v4060, %v4061
        %v4063 = vsel %vm1094, %v3380, -inf
        %v4064 = vrot.slane %v4063, 4
        %v4065 = vmax.f32 %v4063, %v4064
        %v4066 = vrot.slane %v4065, 2
        %v4067 = vmax.f32 %v4065, %v4066
        %v4068 = vrot.slane %v4067, 1
        %v4069 = vmax.f32 %v4067, %v4068
        %v4070 = vsel %vm1094, %v3382, -inf
        %v4071 = vrot.slane %v4070, 4
        %v4072 = vmax.f32 %v4070, %v4071
        %v4073 = vrot.slane %v4072, 2
        %v4074 = vmax.f32 %v4072, %v4073
        %v4075 = vrot.slane %v4074, 1
        %v4076 = vmax.f32 %v4074, %v4075
        %v4077 = vsel %vm1094, %v3390, -inf
        %v4078 = vrot.slane %v4077, 4
        %v4079 = vmax.f32 %v4077, %v4078
        %v4080 = vrot.slane %v4079, 2
        %v4081 = vmax.f32 %v4079, %v4080
        %v4082 = vrot.slane %v4081, 1
        %v4083 = vmax.f32 %v4081, %v4082
        %v4084 = vsel %vm1094, %v3398, -inf
        %v4085 = vrot.slane %v4084, 4
        %v4086 = vmax.f32 %v4084, %v4085
        %v4087 = vrot.slane %v4086, 2
        %v4088 = vmax.f32 %v4086, %v4087
        %v4089 = vrot.slane %v4088, 1
        %v4090 = vmax.f32 %v4088, %v4089
        %v4091 = vsel %vm1094, %v3397, -inf
        %v4092 = vrot.slane %v4091, 4
        %v4093 = vmax.f32 %v4091, %v4092
        %v4094 = vrot.slane %v4093, 2
        %v4095 = vmax.f32 %v4093, %v4094
        %v4096 = vrot.slane %v4095, 1
        %v4097 = vmax.f32 %v4095, %v4096
        %v4098 = vsel %vm1094, %v3399, -inf
        %v4099 = vrot.slane %v4098, 4
        %v4100 = vmax.f32 %v4098, %v4099
        %v4101 = vrot.slane %v4100, 2
        %v4102 = vmax.f32 %v4100, %v4101
        %v4103 = vrot.slane %v4102, 1
        %v4104 = vmax.f32 %v4102, %v4103
        %v4105 = vsel %vm1094, %v3407, -inf
        %v4106 = vrot.slane %v4105, 4
        %v4107 = vmax.f32 %v4105, %v4106
        %v4108 = vrot.slane %v4107, 2
        %v4109 = vmax.f32 %v4107, %v4108
        %v4110 = vrot.slane %v4109, 1
        %v4111 = vmax.f32 %v4109, %v4110
        %v4112 = vsel %vm1094, %v3415, -inf
        %v4113 = vrot.slane %v4112, 4
        %v4114 = vmax.f32 %v4112, %v4113
        %v4115 = vrot.slane %v4114, 2
        %v4116 = vmax.f32 %v4114, %v4115
        %v4117 = vrot.slane %v4116, 1
        %v4118 = vmax.f32 %v4116, %v4117
        %v4119 = vsel %vm1094, %v3414, -inf
        %v4120 = vrot.slane %v4119, 4
        %v4121 = vmax.f32 %v4119, %v4120
        %v4122 = vrot.slane %v4121, 2
        %v4123 = vmax.f32 %v4121, %v4122
        %v4124 = vrot.slane %v4123, 1
        %v4125 = vmax.f32 %v4123, %v4124
        %v4126 = vsel %vm1094, %v3416, -inf
        %v4127 = vrot.slane %v4126, 4
        %v4128 = vmax.f32 %v4126, %v4127
        %v4129 = vrot.slane %v4128, 2
        %v4130 = vmax.f32 %v4128, %v4129
        %v4131 = vrot.slane %v4130, 1
        %v4132 = vmax.f32 %v4130, %v4131
        %v4133 = vsel %vm1094, %v3424, -inf
        %v4134 = vrot.slane %v4133, 4
        %v4135 = vmax.f32 %v4133, %v4134
        %v4136 = vrot.slane %v4135, 2
        %v4137 = vmax.f32 %v4135, %v4136
        %v4138 = vrot.slane %v4137, 1
        %v4139 = vmax.f32 %v4137, %v4138
        %v4140 = vsel %vm1094, %v3432, -inf
        %v4141 = vrot.slane %v4140, 4
        %v4142 = vmax.f32 %v4140, %v4141
        %v4143 = vrot.slane %v4142, 2
        %v4144 = vmax.f32 %v4142, %v4143
        %v4145 = vrot.slane %v4144, 1
        %v4146 = vmax.f32 %v4144, %v4145
        %v4147 = vsel %vm1094, %v3431, -inf
        %v4148 = vrot.slane %v4147, 4
        %v4149 = vmax.f32 %v4147, %v4148
        %v4150 = vrot.slane %v4149, 2
        %v4151 = vmax.f32 %v4149, %v4150
        %v4152 = vrot.slane %v4151, 1
        %v4153 = vmax.f32 %v4151, %v4152
        %v4154 = vsel %vm1094, %v3433, -inf
        %v4155 = vrot.slane %v4154, 4
        %v4156 = vmax.f32 %v4154, %v4155
        %v4157 = vrot.slane %v4156, 2
        %v4158 = vmax.f32 %v4156, %v4157
        %v4159 = vrot.slane %v4158, 1
        %v4160 = vmax.f32 %v4158, %v4159
        %v4161 = vsel %vm1094, %v3441, -inf
        %v4162 = vrot.slane %v4161, 4
        %v4163 = vmax.f32 %v4161, %v4162
        %v4164 = vrot.slane %v4163, 2
        %v4165 = vmax.f32 %v4163, %v4164
        %v4166 = vrot.slane %v4165, 1
        %v4167 = vmax.f32 %v4165, %v4166
        %v4168 = vsel %vm1094, %v3449, -inf
        %v4169 = vrot.slane %v4168, 4
        %v4170 = vmax.f32 %v4168, %v4169
        %v4171 = vrot.slane %v4170, 2
        %v4172 = vmax.f32 %v4170, %v4171
        %v4173 = vrot.slane %v4172, 1
        %v4174 = vmax.f32 %v4172, %v4173
        %v4175 = vsel %vm1094, %v3448, -inf
        %v4176 = vrot.slane %v4175, 4
        %v4177 = vmax.f32 %v4175, %v4176
        %v4178 = vrot.slane %v4177, 2
        %v4179 = vmax.f32 %v4177, %v4178
        %v4180 = vrot.slane %v4179, 1
        %v4181 = vmax.f32 %v4179, %v4180
        %v4182 = vsel %vm1094, %v3450, -inf
        %v4183 = vrot.slane %v4182, 4
        %v4184 = vmax.f32 %v4182, %v4183
        %v4185 = vrot.slane %v4184, 2
        %v4186 = vmax.f32 %v4184, %v4185
        %v4187 = vrot.slane %v4186, 1
        %v4188 = vmax.f32 %v4186, %v4187
        %v4189 = vsel %vm1094, %v3458, -inf
        %v4190 = vrot.slane %v4189, 4
        %v4191 = vmax.f32 %v4189, %v4190
        %v4192 = vrot.slane %v4191, 2
        %v4193 = vmax.f32 %v4191, %v4192
        %v4194 = vrot.slane %v4193, 1
        %v4195 = vmax.f32 %v4193, %v4194
        %v4196 = vsel %vm1094, %v3466, -inf
        %v4197 = vrot.slane %v4196, 4
        %v4198 = vmax.f32 %v4196, %v4197
        %v4199 = vrot.slane %v4198, 2
        %v4200 = vmax.f32 %v4198, %v4199
        %v4201 = vrot.slane %v4200, 1
        %v4202 = vmax.f32 %v4200, %v4201
        %v4203 = vsel %vm1094, %v3465, -inf
        %v4204 = vrot.slane %v4203, 4
        %v4205 = vmax.f32 %v4203, %v4204
        %v4206 = vrot.slane %v4205, 2
        %v4207 = vmax.f32 %v4205, %v4206
        %v4208 = vrot.slane %v4207, 1
        %v4209 = vmax.f32 %v4207, %v4208
        %v4210 = vsel %vm1094, %v3467, -inf
        %v4211 = vrot.slane %v4210, 4
        %v4212 = vmax.f32 %v4210, %v4211
        %v4213 = vrot.slane %v4212, 2
        %v4214 = vmax.f32 %v4212, %v4213
        %v4215 = vrot.slane %v4214, 1
        %v4216 = vmax.f32 %v4214, %v4215
        %v4217 = vsel %vm1094, %v3475, -inf
        %v4218 = vrot.slane %v4217, 4
        %v4219 = vmax.f32 %v4217, %v4218
        %v4220 = vrot.slane %v4219, 2
        %v4221 = vmax.f32 %v4219, %v4220
        %v4222 = vrot.slane %v4221, 1
        %v4223 = vmax.f32 %v4221, %v4222
        %v4224 = vsel %vm1094, %v3483, -inf
        %v4225 = vrot.slane %v4224, 4
        %v4226 = vmax.f32 %v4224, %v4225
        %v4227 = vrot.slane %v4226, 2
        %v4228 = vmax.f32 %v4226, %v4227
        %v4229 = vrot.slane %v4228, 1
        %v4230 = vmax.f32 %v4228, %v4229
        %v4231 = vsel %vm1094, %v3482, -inf
        %v4232 = vrot.slane %v4231, 4
        %v4233 = vmax.f32 %v4231, %v4232
        %v4234 = vrot.slane %v4233, 2
        %v4235 = vmax.f32 %v4233, %v4234
        %v4236 = vrot.slane %v4235, 1
        %v4237 = vmax.f32 %v4235, %v4236
        %v4238 = vsel %vm1094, %v3484, -inf
        %v4239 = vrot.slane %v4238, 4
        %v4240 = vmax.f32 %v4238, %v4239
        %v4241 = vrot.slane %v4240, 2
        %v4242 = vmax.f32 %v4240, %v4241
        %v4243 = vrot.slane %v4242, 1
        %v4244 = vmax.f32 %v4242, %v4243
        %v4245 = vsel %vm1094, %v3492, -inf
        %v4246 = vrot.slane %v4245, 4
        %v4247 = vmax.f32 %v4245, %v4246
        %v4248 = vrot.slane %v4247, 2
        %v4249 = vmax.f32 %v4247, %v4248
        %v4250 = vrot.slane %v4249, 1
        %v4251 = vmax.f32 %v4249, %v4250
        %v4252 = vsel %vm1094, %v3500, -inf
        %v4253 = vrot.slane %v4252, 4
        %v4254 = vmax.f32 %v4252, %v4253
        %v4255 = vrot.slane %v4254, 2
        %v4256 = vmax.f32 %v4254, %v4255
        %v4257 = vrot.slane %v4256, 1
        %v4258 = vmax.f32 %v4256, %v4257
        %v4259 = vsel %vm1094, %v3499, -inf
        %v4260 = vrot.slane %v4259, 4
        %v4261 = vmax.f32 %v4259, %v4260
        %v4262 = vrot.slane %v4261, 2
        %v4263 = vmax.f32 %v4261, %v4262
        %v4264 = vrot.slane %v4263, 1
        %v4265 = vmax.f32 %v4263, %v4264
        %v4266 = vsel %vm1094, %v3501, -inf
        %v4267 = vrot.slane %v4266, 4
        %v4268 = vmax.f32 %v4266, %v4267
        %v4269 = vrot.slane %v4268, 2
        %v4270 = vmax.f32 %v4268, %v4269
        %v4271 = vrot.slane %v4270, 1
        %v4272 = vmax.f32 %v4270, %v4271
        %v4273 = vsel %vm1094, %v3509, -inf
        %v4274 = vrot.slane %v4273, 4
        %v4275 = vmax.f32 %v4273, %v4274
        %v4276 = vrot.slane %v4275, 2
        %v4277 = vmax.f32 %v4275, %v4276
        %v4278 = vrot.slane %v4277, 1
        %v4279 = vmax.f32 %v4277, %v4278
        %v4280 = vsel %vm1094, %v3517, -inf
        %v4281 = vrot.slane %v4280, 4
        %v4282 = vmax.f32 %v4280, %v4281
        %v4283 = vrot.slane %v4282, 2
        %v4284 = vmax.f32 %v4282, %v4283
        %v4285 = vrot.slane %v4284, 1
        %v4286 = vmax.f32 %v4284, %v4285
        %v4287 = vsel %vm1094, %v3516, -inf
        %v4288 = vrot.slane %v4287, 4
        %v4289 = vmax.f32 %v4287, %v4288
        %v4290 = vrot.slane %v4289, 2
        %v4291 = vmax.f32 %v4289, %v4290
        %v4292 = vrot.slane %v4291, 1
        %v4293 = vmax.f32 %v4291, %v4292
        %v4294 = vsel %vm1094, %v3518, -inf
        %v4295 = vrot.slane %v4294, 4
        %v4296 = vmax.f32 %v4294, %v4295
        %v4297 = vrot.slane %v4296, 2
        %v4298 = vmax.f32 %v4296, %v4297
        %v4299 = vrot.slane %v4298, 1
        %v4300 = vmax.f32 %v4298, %v4299
        %v4301 = vsel %vm1094, %v3526, -inf
        %v4302 = vrot.slane %v4301, 4
        %v4303 = vmax.f32 %v4301, %v4302
        %v4304 = vrot.slane %v4303, 2
        %v4305 = vmax.f32 %v4303, %v4304
        %v4306 = vrot.slane %v4305, 1
        %v4307 = vmax.f32 %v4305, %v4306
        %v4308 = vsel %vm1094, %v3534, -inf
        %v4309 = vrot.slane %v4308, 4
        %v4310 = vmax.f32 %v4308, %v4309
        %v4311 = vrot.slane %v4310, 2
        %v4312 = vmax.f32 %v4310, %v4311
        %v4313 = vrot.slane %v4312, 1
        %v4314 = vmax.f32 %v4312, %v4313
        %v4315 = vsel %vm1094, %v3533, -inf
        %v4316 = vrot.slane %v4315, 4
        %v4317 = vmax.f32 %v4315, %v4316
        %v4318 = vrot.slane %v4317, 2
        %v4319 = vmax.f32 %v4317, %v4318
        %v4320 = vrot.slane %v4319, 1
        %v4321 = vmax.f32 %v4319, %v4320
        %v4322 = vsel %vm1094, %v3535, -inf
        %v4323 = vrot.slane %v4322, 4
        %v4324 = vmax.f32 %v4322, %v4323
        %v4325 = vrot.slane %v4324, 2
        %v4326 = vmax.f32 %v4324, %v4325
        %v4327 = vrot.slane %v4326, 1
        %v4328 = vmax.f32 %v4326, %v4327
        %v4329 = vsel %vm1094, %v3543, -inf
        %v4330 = vrot.slane %v4329, 4
        %v4331 = vmax.f32 %v4329, %v4330
        %v4332 = vrot.slane %v4331, 2
        %v4333 = vmax.f32 %v4331, %v4332
        %v4334 = vrot.slane %v4333, 1
        %v4335 = vmax.f32 %v4333, %v4334
        %v4336 = vsel %vm1094, %v3551, -inf
        %v4337 = vrot.slane %v4336, 4
        %v4338 = vmax.f32 %v4336, %v4337
        %v4339 = vrot.slane %v4338, 2
        %v4340 = vmax.f32 %v4338, %v4339
        %v4341 = vrot.slane %v4340, 1
        %v4342 = vmax.f32 %v4340, %v4341
        %v4343 = vsel %vm1094, %v3550, -inf
        %v4344 = vrot.slane %v4343, 4
        %v4345 = vmax.f32 %v4343, %v4344
        %v4346 = vrot.slane %v4345, 2
        %v4347 = vmax.f32 %v4345, %v4346
        %v4348 = vrot.slane %v4347, 1
        %v4349 = vmax.f32 %v4347, %v4348
        %v4350 = vsel %vm1094, %v3552, -inf
        %v4351 = vrot.slane %v4350, 4
        %v4352 = vmax.f32 %v4350, %v4351
        %v4353 = vrot.slane %v4352, 2
        %v4354 = vmax.f32 %v4352, %v4353
        %v4355 = vrot.slane %v4354, 1
        %v4356 = vmax.f32 %v4354, %v4355
        %v4357 = vsel %vm1094, %v3560, -inf
        %v4358 = vrot.slane %v4357, 4
        %v4359 = vmax.f32 %v4357, %v4358
        %v4360 = vrot.slane %v4359, 2
        %v4361 = vmax.f32 %v4359, %v4360
        %v4362 = vrot.slane %v4361, 1
        %v4363 = vmax.f32 %v4361, %v4362
        %v4364 = vsel %vm1094, %v3568, -inf
        %v4365 = vrot.slane %v4364, 4
        %v4366 = vmax.f32 %v4364, %v4365
        %v4367 = vrot.slane %v4366, 2
        %v4368 = vmax.f32 %v4366, %v4367
        %v4369 = vrot.slane %v4368, 1
        %v4370 = vmax.f32 %v4368, %v4369
        %v4371 = vsel %vm1094, %v3567, -inf
        %v4372 = vrot.slane %v4371, 4
        %v4373 = vmax.f32 %v4371, %v4372
        %v4374 = vrot.slane %v4373, 2
        %v4375 = vmax.f32 %v4373, %v4374
        %v4376 = vrot.slane %v4375, 1
        %v4377 = vmax.f32 %v4375, %v4376
        %v4378 = vsel %vm1094, %v3569, -inf
        %v4379 = vrot.slane %v4378, 4
        %v4380 = vmax.f32 %v4378, %v4379
        %v4381 = vrot.slane %v4380, 2
        %v4382 = vmax.f32 %v4380, %v4381
        %v4383 = vrot.slane %v4382, 1
        %v4384 = vmax.f32 %v4382, %v4383
        %v4385 = vsel %vm1094, %v3577, -inf
        %v4386 = vrot.slane %v4385, 4
        %v4387 = vmax.f32 %v4385, %v4386
        %v4388 = vrot.slane %v4387, 2
        %v4389 = vmax.f32 %v4387, %v4388
        %v4390 = vrot.slane %v4389, 1
        %v4391 = vmax.f32 %v4389, %v4390
        %v4392 = vsel %vm1094, %v3585, -inf
        %v4393 = vrot.slane %v4392, 4
        %v4394 = vmax.f32 %v4392, %v4393
        %v4395 = vrot.slane %v4394, 2
        %v4396 = vmax.f32 %v4394, %v4395
        %v4397 = vrot.slane %v4396, 1
        %v4398 = vmax.f32 %v4396, %v4397
        %v4399 = vsel %vm1094, %v3584, -inf
        %v4400 = vrot.slane %v4399, 4
        %v4401 = vmax.f32 %v4399, %v4400
        %v4402 = vrot.slane %v4401, 2
        %v4403 = vmax.f32 %v4401, %v4402
        %v4404 = vrot.slane %v4403, 1
        %v4405 = vmax.f32 %v4403, %v4404
        %v4406 = vsel %vm1094, %v3586, -inf
        %v4407 = vrot.slane %v4406, 4
        %v4408 = vmax.f32 %v4406, %v4407
        %v4409 = vrot.slane %v4408, 2
        %v4410 = vmax.f32 %v4408, %v4409
        %v4411 = vrot.slane %v4410, 1
        %v4412 = vmax.f32 %v4410, %v4411
        %v4413 = vsel %vm1094, %v3594, -inf
        %v4414 = vrot.slane %v4413, 4
        %v4415 = vmax.f32 %v4413, %v4414
        %v4416 = vrot.slane %v4415, 2
        %v4417 = vmax.f32 %v4415, %v4416
        %v4418 = vrot.slane %v4417, 1
        %v4419 = vmax.f32 %v4417, %v4418
        %v4420 = vsel %vm1094, %v3602, -inf
        %v4421 = vrot.slane %v4420, 4
        %v4422 = vmax.f32 %v4420, %v4421
        %v4423 = vrot.slane %v4422, 2
        %v4424 = vmax.f32 %v4422, %v4423
        %v4425 = vrot.slane %v4424, 1
        %v4426 = vmax.f32 %v4424, %v4425
        %v4427 = vsel %vm1094, %v3601, -inf
        %v4428 = vrot.slane %v4427, 4
        %v4429 = vmax.f32 %v4427, %v4428
        %v4430 = vrot.slane %v4429, 2
        %v4431 = vmax.f32 %v4429, %v4430
        %v4432 = vrot.slane %v4431, 1
        %v4433 = vmax.f32 %v4431, %v4432
        %v4434 = vsel %vm1094, %v3603, -inf
        %v4435 = vrot.slane %v4434, 4
        %v4436 = vmax.f32 %v4434, %v4435
        %v4437 = vrot.slane %v4436, 2
        %v4438 = vmax.f32 %v4436, %v4437
        %v4439 = vrot.slane %v4438, 1
        %v4440 = vmax.f32 %v4438, %v4439
        %v4441 = vsel %vm1094, %v3611, -inf
        %v4442 = vrot.slane %v4441, 4
        %v4443 = vmax.f32 %v4441, %v4442
        %v4444 = vrot.slane %v4443, 2
        %v4445 = vmax.f32 %v4443, %v4444
        %v4446 = vrot.slane %v4445, 1
        %v4447 = vmax.f32 %v4445, %v4446
        %v4448 = vsel %vm1094, %v3619, -inf
        %v4449 = vrot.slane %v4448, 4
        %v4450 = vmax.f32 %v4448, %v4449
        %v4451 = vrot.slane %v4450, 2
        %v4452 = vmax.f32 %v4450, %v4451
        %v4453 = vrot.slane %v4452, 1
        %v4454 = vmax.f32 %v4452, %v4453
        %v4455 = vsel %vm1094, %v3618, -inf
        %v4456 = vrot.slane %v4455, 4
        %v4457 = vmax.f32 %v4455, %v4456
        %v4458 = vrot.slane %v4457, 2
        %v4459 = vmax.f32 %v4457, %v4458
        %v4460 = vrot.slane %v4459, 1
        %v4461 = vmax.f32 %v4459, %v4460
        %v4462 = vsel %vm1094, %v3620, -inf
        %v4463 = vrot.slane %v4462, 4
        %v4464 = vmax.f32 %v4462, %v4463
        %v4465 = vrot.slane %v4464, 2
        %v4466 = vmax.f32 %v4464, %v4465
        %v4467 = vrot.slane %v4466, 1
        %v4468 = vmax.f32 %v4466, %v4467
        %v4469 = vsel %vm1094, %v3628, -inf
        %v4470 = vrot.slane %v4469, 4
        %v4471 = vmax.f32 %v4469, %v4470
        %v4472 = vrot.slane %v4471, 2
        %v4473 = vmax.f32 %v4471, %v4472
        %v4474 = vrot.slane %v4473, 1
        %v4475 = vmax.f32 %v4473, %v4474
        %v4476 = vsel %vm1094, %v3636, -inf
        %v4477 = vrot.slane %v4476, 4
        %v4478 = vmax.f32 %v4476, %v4477
        %v4479 = vrot.slane %v4478, 2
        %v4480 = vmax.f32 %v4478, %v4479
        %v4481 = vrot.slane %v4480, 1
        %v4482 = vmax.f32 %v4480, %v4481
        %v4483 = vsel %vm1094, %v3635, -inf
        %v4484 = vrot.slane %v4483, 4
        %v4485 = vmax.f32 %v4483, %v4484
        %v4486 = vrot.slane %v4485, 2
        %v4487 = vmax.f32 %v4485, %v4486
        %v4488 = vrot.slane %v4487, 1
        %v4489 = vmax.f32 %v4487, %v4488
        %v4490 = vsel %vm1094, %v3637, -inf
        %v4491 = vrot.slane %v4490, 4
        %v4492 = vmax.f32 %v4490, %v4491
        %v4493 = vrot.slane %v4492, 2
        %v4494 = vmax.f32 %v4492, %v4493
        %v4495 = vrot.slane %v4494, 1
        %v4496 = vmax.f32 %v4494, %v4495
        %v4497 = vsel %vm1094, %v3645, -inf
        %v4498 = vrot.slane %v4497, 4
        %v4499 = vmax.f32 %v4497, %v4498
        %v4500 = vrot.slane %v4499, 2
        %v4501 = vmax.f32 %v4499, %v4500
        %v4502 = vrot.slane %v4501, 1
        %v4503 = vmax.f32 %v4501, %v4502
        %v4504 = vsel %vm1094, %v3653, -inf
        %v4505 = vrot.slane %v4504, 4
        %v4506 = vmax.f32 %v4504, %v4505
        %v4507 = vrot.slane %v4506, 2
        %v4508 = vmax.f32 %v4506, %v4507
        %v4509 = vrot.slane %v4508, 1
        %v4510 = vmax.f32 %v4508, %v4509
        %v4511 = vsel %vm1094, %v3652, -inf
        %v4512 = vrot.slane %v4511, 4
        %v4513 = vmax.f32 %v4511, %v4512
        %v4514 = vrot.slane %v4513, 2
        %v4515 = vmax.f32 %v4513, %v4514
        %v4516 = vrot.slane %v4515, 1
        %v4517 = vmax.f32 %v4515, %v4516
        %v4518 = vsel %vm1094, %v3654, -inf
        %v4519 = vrot.slane %v4518, 4
        %v4520 = vmax.f32 %v4518, %v4519
        %v4521 = vrot.slane %v4520, 2
        %v4522 = vmax.f32 %v4520, %v4521
        %v4523 = vrot.slane %v4522, 1
        %v4524 = vmax.f32 %v4522, %v4523
        %v4525 = vsel %vm1094, %v3662, -inf
        %v4526 = vrot.slane %v4525, 4
        %v4527 = vmax.f32 %v4525, %v4526
        %v4528 = vrot.slane %v4527, 2
        %v4529 = vmax.f32 %v4527, %v4528
        %v4530 = vrot.slane %v4529, 1
        %v4531 = vmax.f32 %v4529, %v4530
        %v4532 = vsel %vm1094, %v3670, -inf
        %v4533 = vrot.slane %v4532, 4
        %v4534 = vmax.f32 %v4532, %v4533
        %v4535 = vrot.slane %v4534, 2
        %v4536 = vmax.f32 %v4534, %v4535
        %v4537 = vrot.slane %v4536, 1
        %v4538 = vmax.f32 %v4536, %v4537
        %v4539 = vsel %vm1094, %v3669, -inf
        %v4540 = vrot.slane %v4539, 4
        %v4541 = vmax.f32 %v4539, %v4540
        %v4542 = vrot.slane %v4541, 2
        %v4543 = vmax.f32 %v4541, %v4542
        %v4544 = vrot.slane %v4543, 1
        %v4545 = vmax.f32 %v4543, %v4544
        %v4546 = vsel %vm1094, %v3671, -inf
        %v4547 = vrot.slane %v4546, 4
        %v4548 = vmax.f32 %v4546, %v4547
        %v4549 = vrot.slane %v4548, 2
        %v4550 = vmax.f32 %v4548, %v4549
        %v4551 = vrot.slane %v4550, 1
        %v4552 = vmax.f32 %v4550, %v4551
        %v4553 = vsel %vm1094, %v3679, -inf
        %v4554 = vrot.slane %v4553, 4
        %v4555 = vmax.f32 %v4553, %v4554
        %v4556 = vrot.slane %v4555, 2
        %v4557 = vmax.f32 %v4555, %v4556
        %v4558 = vrot.slane %v4557, 1
        %v4559 = vmax.f32 %v4557, %v4558
        %v4560 = vsel %vm1094, %v3687, -inf
        %v4561 = vrot.slane %v4560, 4
        %v4562 = vmax.f32 %v4560, %v4561
        %v4563 = vrot.slane %v4562, 2
        %v4564 = vmax.f32 %v4562, %v4563
        %v4565 = vrot.slane %v4564, 1
        %v4566 = vmax.f32 %v4564, %v4565
        %v4567 = vsel %vm1094, %v3686, -inf
        %v4568 = vrot.slane %v4567, 4
        %v4569 = vmax.f32 %v4567, %v4568
        %v4570 = vrot.slane %v4569, 2
        %v4571 = vmax.f32 %v4569, %v4570
        %v4572 = vrot.slane %v4571, 1
        %v4573 = vmax.f32 %v4571, %v4572
        %v4574 = vsel %vm1094, %v3688, -inf
        %v4575 = vrot.slane %v4574, 4
        %v4576 = vmax.f32 %v4574, %v4575
        %v4577 = vrot.slane %v4576, 2
        %v4578 = vmax.f32 %v4576, %v4577
        %v4579 = vrot.slane %v4578, 1
        %v4580 = vmax.f32 %v4578, %v4579
        %v4581 = vsel %vm1094, %v3696, -inf
        %v4582 = vrot.slane %v4581, 4
        %v4583 = vmax.f32 %v4581, %v4582
        %v4584 = vrot.slane %v4583, 2
        %v4585 = vmax.f32 %v4583, %v4584
        %v4586 = vrot.slane %v4585, 1
        %v4587 = vmax.f32 %v4585, %v4586
        %v4588 = vsel %vm1094, %v3704, -inf
        %v4589 = vrot.slane %v4588, 4
        %v4590 = vmax.f32 %v4588, %v4589
        %v4591 = vrot.slane %v4590, 2
        %v4592 = vmax.f32 %v4590, %v4591
        %v4593 = vrot.slane %v4592, 1
        %v4594 = vmax.f32 %v4592, %v4593
        %v4595 = vsel %vm1094, %v3703, -inf
        %v4596 = vrot.slane %v4595, 4
        %v4597 = vmax.f32 %v4595, %v4596
        %v4598 = vrot.slane %v4597, 2
        %v4599 = vmax.f32 %v4597, %v4598
        %v4600 = vrot.slane %v4599, 1
        %v4601 = vmax.f32 %v4599, %v4600
        %v4602 = vsel %vm1094, %v3705, -inf
        %v4603 = vrot.slane %v4602, 4
        %v4604 = vmax.f32 %v4602, %v4603
        %v4605 = vrot.slane %v4604, 2
        %v4606 = vmax.f32 %v4604, %v4605
        %v4607 = vrot.slane %v4606, 1
        %v4608 = vmax.f32 %v4606, %v4607
        %v4609 = vsel %vm1094, %v3713, -inf
        %v4610 = vrot.slane %v4609, 4
        %v4611 = vmax.f32 %v4609, %v4610
        %v4612 = vrot.slane %v4611, 2
        %v4613 = vmax.f32 %v4611, %v4612
        %v4614 = vrot.slane %v4613, 1
        %v4615 = vmax.f32 %v4613, %v4614
        %v4616 = vsel %vm1094, %v3721, -inf
        %v4617 = vrot.slane %v4616, 4
        %v4618 = vmax.f32 %v4616, %v4617
        %v4619 = vrot.slane %v4618, 2
        %v4620 = vmax.f32 %v4618, %v4619
        %v4621 = vrot.slane %v4620, 1
        %v4622 = vmax.f32 %v4620, %v4621
        %v4623 = vsel %vm1094, %v3720, -inf
        %v4624 = vrot.slane %v4623, 4
        %v4625 = vmax.f32 %v4623, %v4624
        %v4626 = vrot.slane %v4625, 2
        %v4627 = vmax.f32 %v4625, %v4626
        %v4628 = vrot.slane %v4627, 1
        %v4629 = vmax.f32 %v4627, %v4628
        %v4630 = vsel %vm1094, %v3722, -inf
        %v4631 = vrot.slane %v4630, 4
        %v4632 = vmax.f32 %v4630, %v4631
        %v4633 = vrot.slane %v4632, 2
        %v4634 = vmax.f32 %v4632, %v4633
        %v4635 = vrot.slane %v4634, 1
        %v4636 = vmax.f32 %v4634, %v4635
        %v4637 = vsel %vm1094, %v3730, -inf
        %v4638 = vrot.slane %v4637, 4
        %v4639 = vmax.f32 %v4637, %v4638
        %v4640 = vrot.slane %v4639, 2
        %v4641 = vmax.f32 %v4639, %v4640
        %v4642 = vrot.slane %v4641, 1
        %v4643 = vmax.f32 %v4641, %v4642
        %v4644 = vsel %vm1094, %v3738, -inf
        %v4645 = vrot.slane %v4644, 4
        %v4646 = vmax.f32 %v4644, %v4645
        %v4647 = vrot.slane %v4646, 2
        %v4648 = vmax.f32 %v4646, %v4647
        %v4649 = vrot.slane %v4648, 1
        %v4650 = vmax.f32 %v4648, %v4649
        %v4651 = vsel %vm1094, %v3737, -inf
        %v4652 = vrot.slane %v4651, 4
        %v4653 = vmax.f32 %v4651, %v4652
        %v4654 = vrot.slane %v4653, 2
        %v4655 = vmax.f32 %v4653, %v4654
        %v4656 = vrot.slane %v4655, 1
        %v4657 = vmax.f32 %v4655, %v4656
        %v4658 = vsel %vm1094, %v3739, -inf
        %v4659 = vrot.slane %v4658, 4
        %v4660 = vmax.f32 %v4658, %v4659
        %v4661 = vrot.slane %v4660, 2
        %v4662 = vmax.f32 %v4660, %v4661
        %v4663 = vrot.slane %v4662, 1
        %v4664 = vmax.f32 %v4662, %v4663
        %v4665 = vsel %vm1094, %v3747, -inf
        %v4666 = vrot.slane %v4665, 4
        %v4667 = vmax.f32 %v4665, %v4666
        %v4668 = vrot.slane %v4667, 2
        %v4669 = vmax.f32 %v4667, %v4668
        %v4670 = vrot.slane %v4669, 1
        %v4671 = vmax.f32 %v4669, %v4670
        %v4672 = vsel %vm1094, %v3755, -inf
        %v4673 = vrot.slane %v4672, 4
        %v4674 = vmax.f32 %v4672, %v4673
        %v4675 = vrot.slane %v4674, 2
        %v4676 = vmax.f32 %v4674, %v4675
        %v4677 = vrot.slane %v4676, 1
        %v4678 = vmax.f32 %v4676, %v4677
        %v4679 = vsel %vm1094, %v3754, -inf
        %v4680 = vrot.slane %v4679, 4
        %v4681 = vmax.f32 %v4679, %v4680
        %v4682 = vrot.slane %v4681, 2
        %v4683 = vmax.f32 %v4681, %v4682
        %v4684 = vrot.slane %v4683, 1
        %v4685 = vmax.f32 %v4683, %v4684
        %v4686 = vsel %vm1094, %v3756, -inf
        %v4687 = vrot.slane %v4686, 4
        %v4688 = vmax.f32 %v4686, %v4687
        %v4689 = vrot.slane %v4688, 2
        %v4690 = vmax.f32 %v4688, %v4689
        %v4691 = vrot.slane %v4690, 1
        %v4692 = vmax.f32 %v4690, %v4691
        %v4693 = vsel %vm1094, %v3764, -inf
        %v4694 = vrot.slane %v4693, 4
        %v4695 = vmax.f32 %v4693, %v4694
        %v4696 = vrot.slane %v4695, 2
        %v4697 = vmax.f32 %v4695, %v4696
        %v4698 = vrot.slane %v4697, 1
        %v4699 = vmax.f32 %v4697, %v4698
        %v4700 = vsel %vm1094, %v3772, -inf
        %v4701 = vrot.slane %v4700, 4
        %v4702 = vmax.f32 %v4700, %v4701
        %v4703 = vrot.slane %v4702, 2
        %v4704 = vmax.f32 %v4702, %v4703
        %v4705 = vrot.slane %v4704, 1
        %v4706 = vmax.f32 %v4704, %v4705
        %v4707 = vsel %vm1094, %v3771, -inf
        %v4708 = vrot.slane %v4707, 4
        %v4709 = vmax.f32 %v4707, %v4708
        %v4710 = vrot.slane %v4709, 2
        %v4711 = vmax.f32 %v4709, %v4710
        %v4712 = vrot.slane %v4711, 1
        %v4713 = vmax.f32 %v4711, %v4712
        %v4714 = vsel %vm1094, %v3773, -inf
        %v4715 = vrot.slane %v4714, 4
        %v4716 = vmax.f32 %v4714, %v4715
        %v4717 = vrot.slane %v4716, 2
        %v4718 = vmax.f32 %v4716, %v4717
        %v4719 = vrot.slane %v4718, 1
        %v4720 = vmax.f32 %v4718, %v4719
        %v4721 = vsel %vm1094, %v3781, -inf
        %v4722 = vrot.slane %v4721, 4
        %v4723 = vmax.f32 %v4721, %v4722
        %v4724 = vrot.slane %v4723, 2
        %v4725 = vmax.f32 %v4723, %v4724
        %v4726 = vrot.slane %v4725, 1
        %v4727 = vmax.f32 %v4725, %v4726
        %v4728 = vsel %vm1094, %v3789, -inf
        %v4729 = vrot.slane %v4728, 4
        %v4730 = vmax.f32 %v4728, %v4729
        %v4731 = vrot.slane %v4730, 2
        %v4732 = vmax.f32 %v4730, %v4731
        %v4733 = vrot.slane %v4732, 1
        %v4734 = vmax.f32 %v4732, %v4733
        %v4735 = vsel %vm1094, %v3788, -inf
        %v4736 = vrot.slane %v4735, 4
        %v4737 = vmax.f32 %v4735, %v4736
        %v4738 = vrot.slane %v4737, 2
        %v4739 = vmax.f32 %v4737, %v4738
        %v4740 = vrot.slane %v4739, 1
        %v4741 = vmax.f32 %v4739, %v4740
        %v4742 = vsel %vm1094, %v3790, -inf
        %v4743 = vrot.slane %v4742, 4
        %v4744 = vmax.f32 %v4742, %v4743
        %v4745 = vrot.slane %v4744, 2
        %v4746 = vmax.f32 %v4744, %v4745
        %v4747 = vrot.slane %v4746, 1
        %v4748 = vmax.f32 %v4746, %v4747
        %v4749 = vsel %vm1094, %v3798, -inf
        %v4750 = vrot.slane %v4749, 4
        %v4751 = vmax.f32 %v4749, %v4750
        %v4752 = vrot.slane %v4751, 2
        %v4753 = vmax.f32 %v4751, %v4752
        %v4754 = vrot.slane %v4753, 1
        %v4755 = vmax.f32 %v4753, %v4754
        %v4756 = vsel %vm1094, %v3806, -inf
        %v4757 = vrot.slane %v4756, 4
        %v4758 = vmax.f32 %v4756, %v4757
        %v4759 = vrot.slane %v4758, 2
        %v4760 = vmax.f32 %v4758, %v4759
        %v4761 = vrot.slane %v4760, 1
        %v4762 = vmax.f32 %v4760, %v4761
        %v4763 = vsel %vm1094, %v3805, -inf
        %v4764 = vrot.slane %v4763, 4
        %v4765 = vmax.f32 %v4763, %v4764
        %v4766 = vrot.slane %v4765, 2
        %v4767 = vmax.f32 %v4765, %v4766
        %v4768 = vrot.slane %v4767, 1
        %v4769 = vmax.f32 %v4767, %v4768
        %v4770 = vsel %vm1094, %v3807, -inf
        %v4771 = vrot.slane %v4770, 4
        %v4772 = vmax.f32 %v4770, %v4771
        %v4773 = vrot.slane %v4772, 2
        %v4774 = vmax.f32 %v4772, %v4773
        %v4775 = vrot.slane %v4774, 1
        %v4776 = vmax.f32 %v4774, %v4775
        %v4777 = vsel %vm1094, %v3815, -inf
        %v4778 = vrot.slane %v4777, 4
        %v4779 = vmax.f32 %v4777, %v4778
        %v4780 = vrot.slane %v4779, 2
        %v4781 = vmax.f32 %v4779, %v4780
        %v4782 = vrot.slane %v4781, 1
        %v4783 = vmax.f32 %v4781, %v4782
        %v4784 = vsel %vm1094, %v3823, -inf
        %v4785 = vrot.slane %v4784, 4
        %v4786 = vmax.f32 %v4784, %v4785
        %v4787 = vrot.slane %v4786, 2
        %v4788 = vmax.f32 %v4786, %v4787
        %v4789 = vrot.slane %v4788, 1
        %v4790 = vmax.f32 %v4788, %v4789
        %v4791 = vsel %vm1094, %v3822, -inf
        %v4792 = vrot.slane %v4791, 4
        %v4793 = vmax.f32 %v4791, %v4792
        %v4794 = vrot.slane %v4793, 2
        %v4795 = vmax.f32 %v4793, %v4794
        %v4796 = vrot.slane %v4795, 1
        %v4797 = vmax.f32 %v4795, %v4796
        %v4798 = vsel %vm1094, %v3824, -inf
        %v4799 = vrot.slane %v4798, 4
        %v4800 = vmax.f32 %v4798, %v4799
        %v4801 = vrot.slane %v4800, 2
        %v4802 = vmax.f32 %v4800, %v4801
        %v4803 = vrot.slane %v4802, 1
        %v4804 = vmax.f32 %v4802, %v4803
        %v4805 = vsel %vm1094, %v3832, -inf
        %v4806 = vrot.slane %v4805, 4
        %v4807 = vmax.f32 %v4805, %v4806
        %v4808 = vrot.slane %v4807, 2
        %v4809 = vmax.f32 %v4807, %v4808
        %v4810 = vrot.slane %v4809, 1
        %v4811 = vmax.f32 %v4809, %v4810
        %v4812 = vsel %vm1094, %v3840, -inf
        %v4813 = vrot.slane %v4812, 4
        %v4814 = vmax.f32 %v4812, %v4813
        %v4815 = vrot.slane %v4814, 2
        %v4816 = vmax.f32 %v4814, %v4815
        %v4817 = vrot.slane %v4816, 1
        %v4818 = vmax.f32 %v4816, %v4817
        %v4819 = vsel %vm1094, %v3839, -inf
        %v4820 = vrot.slane %v4819, 4
        %v4821 = vmax.f32 %v4819, %v4820
        %v4822 = vrot.slane %v4821, 2
        %v4823 = vmax.f32 %v4821, %v4822
        %v4824 = vrot.slane %v4823, 1
        %v4825 = vmax.f32 %v4823, %v4824
        %v4826 = vsel %vm1094, %v3841, -inf
        %v4827 = vrot.slane %v4826, 4
        %v4828 = vmax.f32 %v4826, %v4827
        %v4829 = vrot.slane %v4828, 2
        %v4830 = vmax.f32 %v4828, %v4829
        %v4831 = vrot.slane %v4830, 1
        %v4832 = vmax.f32 %v4830, %v4831
        %v4833 = vsel %vm1094, %v3849, -inf
        %v4834 = vrot.slane %v4833, 4
        %v4835 = vmax.f32 %v4833, %v4834
        %v4836 = vrot.slane %v4835, 2
        %v4837 = vmax.f32 %v4835, %v4836
        %v4838 = vrot.slane %v4837, 1
        %v4839 = vmax.f32 %v4837, %v4838
        %v4840 = vsel %vm1094, %v3857, -inf
        %v4841 = vrot.slane %v4840, 4
        %v4842 = vmax.f32 %v4840, %v4841
        %v4843 = vrot.slane %v4842, 2
        %v4844 = vmax.f32 %v4842, %v4843
        %v4845 = vrot.slane %v4844, 1
        %v4846 = vmax.f32 %v4844, %v4845
        %v4847 = vsel %vm1094, %v3856, -inf
        %v4848 = vrot.slane %v4847, 4
        %v4849 = vmax.f32 %v4847, %v4848
        %v4850 = vrot.slane %v4849, 2
        %v4851 = vmax.f32 %v4849, %v4850
        %v4852 = vrot.slane %v4851, 1
        %v4853 = vmax.f32 %v4851, %v4852
        %v4854 = vsel %vm1094, %v3858, -inf
        %v4855 = vrot.slane %v4854, 4
        %v4856 = vmax.f32 %v4854, %v4855
        %v4857 = vrot.slane %v4856, 2
        %v4858 = vmax.f32 %v4856, %v4857
        %v4859 = vrot.slane %v4858, 1
        %v4860 = vmax.f32 %v4858, %v4859
        %v4861 = vsel %vm1094, %v3866, -inf
        %v4862 = vrot.slane %v4861, 4
        %v4863 = vmax.f32 %v4861, %v4862
        %v4864 = vrot.slane %v4863, 2
        %v4865 = vmax.f32 %v4863, %v4864
        %v4866 = vrot.slane %v4865, 1
        %v4867 = vmax.f32 %v4865, %v4866
        %v4868 = vsel %vm1094, %v3874, -inf
        %v4869 = vrot.slane %v4868, 4
        %v4870 = vmax.f32 %v4868, %v4869
        %v4871 = vrot.slane %v4870, 2
        %v4872 = vmax.f32 %v4870, %v4871
        %v4873 = vrot.slane %v4872, 1
        %v4874 = vmax.f32 %v4872, %v4873
        %v4875 = vsel %vm1094, %v3873, -inf
        %v4876 = vrot.slane %v4875, 4
        %v4877 = vmax.f32 %v4875, %v4876
        %v4878 = vrot.slane %v4877, 2
        %v4879 = vmax.f32 %v4877, %v4878
        %v4880 = vrot.slane %v4879, 1
        %v4881 = vmax.f32 %v4879, %v4880
        %v4882 = vsel %vm1094, %v3875, -inf
        %v4883 = vrot.slane %v4882, 4
        %v4884 = vmax.f32 %v4882, %v4883
        %v4885 = vrot.slane %v4884, 2
        %v4886 = vmax.f32 %v4884, %v4885
        %v4887 = vrot.slane %v4886, 1
        %v4888 = vmax.f32 %v4886, %v4887
        %v4889 = vsel %vm1094, %v3883, -inf
        %v4890 = vrot.slane %v4889, 4
        %v4891 = vmax.f32 %v4889, %v4890
        %v4892 = vrot.slane %v4891, 2
        %v4893 = vmax.f32 %v4891, %v4892
        %v4894 = vrot.slane %v4893, 1
        %v4895 = vmax.f32 %v4893, %v4894
        %v4896 = vsel %vm1094, %v3891, -inf
        %v4897 = vrot.slane %v4896, 4
        %v4898 = vmax.f32 %v4896, %v4897
        %v4899 = vrot.slane %v4898, 2
        %v4900 = vmax.f32 %v4898, %v4899
        %v4901 = vrot.slane %v4900, 1
        %v4902 = vmax.f32 %v4900, %v4901
        %v4903 = vsel %vm1094, %v3890, -inf
        %v4904 = vrot.slane %v4903, 4
        %v4905 = vmax.f32 %v4903, %v4904
        %v4906 = vrot.slane %v4905, 2
        %v4907 = vmax.f32 %v4905, %v4906
        %v4908 = vrot.slane %v4907, 1
        %v4909 = vmax.f32 %v4907, %v4908
        %v4910 = vsel %vm1094, %v3892, -inf
        %v4911 = vrot.slane %v4910, 4
        %v4912 = vmax.f32 %v4910, %v4911
        %v4913 = vrot.slane %v4912, 2
        %v4914 = vmax.f32 %v4912, %v4913
        %v4915 = vrot.slane %v4914, 1
        %v4916 = vmax.f32 %v4914, %v4915
        %v4917 = vmax.f32 %v4027, %v4083
        %v4918 = vmax.f32 %v4034, %v4090
        %v4919 = vmax.f32 %v4041, %v4097
        %v4920 = vmax.f32 %v4048, %v4104
        %v4921 = vmax.f32 %v4055, %v4111
        %v4922 = vmax.f32 %v4062, %v4118
        %v4923 = vmax.f32 %v4069, %v4125
        %v4924 = vmax.f32 %v4076, %v4132
        %v4925 = vmax.f32 %v4139, %v4195
        %v4926 = vmax.f32 %v4146, %v4202
        %v4927 = vmax.f32 %v4153, %v4209
        %v4928 = vmax.f32 %v4160, %v4216
        %v4929 = vmax.f32 %v4167, %v4223
        %v4930 = vmax.f32 %v4174, %v4230
        %v4931 = vmax.f32 %v4181, %v4237
        %v4932 = vmax.f32 %v4188, %v4244
        %v4933 = vmax.f32 %v4251, %v4307
        %v4934 = vmax.f32 %v4258, %v4314
        %v4935 = vmax.f32 %v4265, %v4321
        %v4936 = vmax.f32 %v4272, %v4328
        %v4937 = vmax.f32 %v4279, %v4335
        %v4938 = vmax.f32 %v4286, %v4342
        %v4939 = vmax.f32 %v4293, %v4349
        %v4940 = vmax.f32 %v4300, %v4356
        %v4941 = vmax.f32 %v4363, %v4419
        %v4942 = vmax.f32 %v4370, %v4426
        %v4943 = vmax.f32 %v4377, %v4433
        %v4944 = vmax.f32 %v4384, %v4440
        %v4945 = vmax.f32 %v4391, %v4447
        %v4946 = vmax.f32 %v4398, %v4454
        %v4947 = vmax.f32 %v4405, %v4461
        %v4948 = vmax.f32 %v4412, %v4468
        %v4949 = vmax.f32 %v4475, %v4531
        %v4950 = vmax.f32 %v4482, %v4538
        %v4951 = vmax.f32 %v4489, %v4545
        %v4952 = vmax.f32 %v4496, %v4552
        %v4953 = vmax.f32 %v4503, %v4559
        %v4954 = vmax.f32 %v4510, %v4566
        %v4955 = vmax.f32 %v4517, %v4573
        %v4956 = vmax.f32 %v4524, %v4580
        %v4957 = vmax.f32 %v4587, %v4643
        %v4958 = vmax.f32 %v4594, %v4650
        %v4959 = vmax.f32 %v4601, %v4657
        %v4960 = vmax.f32 %v4608, %v4664
        %v4961 = vmax.f32 %v4615, %v4671
        %v4962 = vmax.f32 %v4622, %v4678
        %v4963 = vmax.f32 %v4629, %v4685
        %v4964 = vmax.f32 %v4636, %v4692
        %v4965 = vmax.f32 %v4699, %v4755
        %v4966 = vmax.f32 %v4706, %v4762
        %v4967 = vmax.f32 %v4713, %v4769
        %v4968 = vmax.f32 %v4720, %v4776
        %v4969 = vmax.f32 %v4727, %v4783
        %v4970 = vmax.f32 %v4734, %v4790
        %v4971 = vmax.f32 %v4741, %v4797
        %v4972 = vmax.f32 %v4748, %v4804
        %v4973 = vmax.f32 %v4811, %v4867
        %v4974 = vmax.f32 %v4818, %v4874
        %v4975 = vmax.f32 %v4825, %v4881
        %v4976 = vmax.f32 %v4832, %v4888
        %v4977 = vmax.f32 %v4839, %v4895
        %v4978 = vmax.f32 %v4846, %v4902
        %v4979 = vmax.f32 %v4853, %v4909
        %v4980 = vmax.f32 %v4860, %v4916
        %4981 = vst.msk [vmem:[#allocation3] sm:$0xff] %vm1091, 0.0
        %4982 = vst.msk [vmem:[#allocation3 + $0x8] sm:$0x3] %vm1094, 0.0
        %4983 = vst.msk [vmem:[#allocation3 + $0x10] sm:$0xff] %vm1091, 0.0
        %4984 = vst.msk [vmem:[#allocation3 + $0x18] sm:$0x3] %vm1094, 0.0
        %4985 = vst.msk [vmem:[#allocation3 + $0x20] sm:$0xff] %vm1091, 0.0
        %4986 = vst.msk [vmem:[#allocation3 + $0x28] sm:$0x3] %vm1094, 0.0
        %4987 = vst.msk [vmem:[#allocation3 + $0x30] sm:$0xff] %vm1091, 0.0
        %4988 = vst.msk [vmem:[#allocation3 + $0x38] sm:$0x3] %vm1094, 0.0
        %4989 = vst.msk [vmem:[#allocation3 + $0x40] sm:$0xff] %vm1091, 0.0
        %4990 = vst.msk [vmem:[#allocation3 + $0x48] sm:$0x3] %vm1094, 0.0
        %4991 = vst.msk [vmem:[#allocation3 + $0x50] sm:$0xff] %vm1091, 0.0
        %4992 = vst.msk [vmem:[#allocation3 + $0x58] sm:$0x3] %vm1094, 0.0
        %4993 = vst.msk [vmem:[#allocation3 + $0x60] sm:$0xff] %vm1091, 0.0
        %4994 = vst.msk [vmem:[#allocation3 + $0x68] sm:$0x3] %vm1094, 0.0
        %4995 = vst.msk [vmem:[#allocation3 + $0x70] sm:$0xff] %vm1091, 0.0
        %4996 = vst.msk [vmem:[#allocation3 + $0x78] sm:$0x3] %vm1094, 0.0
        %4997 = vst.msk [vmem:[#allocation3 + $0x80] sm:$0xff] %vm1091, 0.0
        %4998 = vst.msk [vmem:[#allocation3 + $0x88] sm:$0x3] %vm1094, 0.0
        %4999 = vst.msk [vmem:[#allocation3 + $0x90] sm:$0xff] %vm1091, 0.0
        %5000 = vst.msk [vmem:[#allocation3 + $0x98] sm:$0x3] %vm1094, 0.0
        %vm5065 = vcmask 1041409
        %v5066 = vsel %vm5065, %v4918, %v4917
        %vm5067 = vcmask 1042434
        %v5068 = vsel %vm5067, %v4919, %v5066
        %vm5069 = vcmask 1043459
        %v5070 = vsel %vm5069, %v4920, %v5068
        %vm5071 = vcmask 1044484
        %v5072 = vsel %vm5071, %v4921, %v5070
        %vm5073 = vcmask 1045509
        %v5074 = vsel %vm5073, %v4922, %v5072
        %vm5075 = vcmask 1046534
        %v5076 = vsel %vm5075, %v4923, %v5074
        %vm5077 = vcmask 1047559
        %v5078 = vsel %vm5077, %v4924, %v5076
        %v5079 = vsel %vm5065, %v4926, %v4925
        %v5080 = vsel %vm5067, %v4927, %v5079
        %v5081 = vsel %vm5069, %v4928, %v5080
        %v5082 = vsel %vm5071, %v4929, %v5081
        %v5083 = vsel %vm5073, %v4930, %v5082
        %v5084 = vsel %vm5075, %v4931, %v5083
        %v5085 = vsel %vm5077, %v4932, %v5084
        %v5086 = vsel %vm5065, %v4934, %v4933
        %v5087 = vsel %vm5067, %v4935, %v5086
        %v5088 = vsel %vm5069, %v4936, %v5087
        %v5089 = vsel %vm5071, %v4937, %v5088
        %v5090 = vsel %vm5073, %v4938, %v5089
        %v5091 = vsel %vm5075, %v4939, %v5090
        %v5092 = vsel %vm5077, %v4940, %v5091
        %v5093 = vsel %vm5065, %v4942, %v4941
        %v5094 = vsel %vm5067, %v4943, %v5093
        %v5095 = vsel %vm5069, %v4944, %v5094
        %v5096 = vsel %vm5071, %v4945, %v5095
        %v5097 = vsel %vm5073, %v4946, %v5096
        %v5098 = vsel %vm5075, %v4947, %v5097
        %v5099 = vsel %vm5077, %v4948, %v5098
        %v5100 = vsel %vm5065, %v4950, %v4949
        %v5101 = vsel %vm5067, %v4951, %v5100
        %v5102 = vsel %vm5069, %v4952, %v5101
        %v5103 = vsel %vm5071, %v4953, %v5102
        %v5104 = vsel %vm5073, %v4954, %v5103
        %v5105 = vsel %vm5075, %v4955, %v5104
        %v5106 = vsel %vm5077, %v4956, %v5105
        %v5107 = vsel %vm5065, %v4958, %v4957
        %v5108 = vsel %vm5067, %v4959, %v5107
        %v5109 = vsel %vm5069, %v4960, %v5108
        %v5110 = vsel %vm5071, %v4961, %v5109
        %v5111 = vsel %vm5073, %v4962, %v5110
        %v5112 = vsel %vm5075, %v4963, %v5111
        %v5113 = vsel %vm5077, %v4964, %v5112
        %v5114 = vsel %vm5065, %v4966, %v4965
        %v5115 = vsel %vm5067, %v4967, %v5114
        %v5116 = vsel %vm5069, %v4968, %v5115
        %v5117 = vsel %vm5071, %v4969, %v5116
        %v5118 = vsel %vm5073, %v4970, %v5117
        %v5119 = vsel %vm5075, %v4971, %v5118
        %v5120 = vsel %vm5077, %v4972, %v5119
        %v5121 = vsel %vm5065, %v4974, %v4973
        %v5122 = vsel %vm5067, %v4975, %v5121
        %v5123 = vsel %vm5069, %v4976, %v5122
        %v5124 = vsel %vm5071, %v4977, %v5123
        %v5125 = vsel %vm5073, %v4978, %v5124
        %v5126 = vsel %vm5075, %v4979, %v5125
        %v5127 = vsel %vm5077, %v4980, %v5126
        %s5136 = scalar_lea.vmem [#allocation3], 16
        %5137 = vst.msk [vmem:[%s5136 + $0x1] sm:$0xff] %vm1091, %v5078
        %5138 = vst.msk [vmem:[%s5136 + $0x11] sm:$0xff] %vm1091, %v5085
        %5139 = vst.msk [vmem:[%s5136 + $0x21] sm:$0xff] %vm1091, %v5092
        %5140 = vst.msk [vmem:[%s5136 + $0x31] sm:$0xff] %vm1091, %v5099
        %5141 = vst.msk [vmem:[%s5136 + $0x41] sm:$0xff] %vm1091, %v5106
        %5142 = vst.msk [vmem:[%s5136 + $0x51] sm:$0xff] %vm1091, %v5113
        %5143 = vst.msk [vmem:[%s5136 + $0x61] sm:$0xff] %vm1091, %v5120
        %5144 = vst.msk [vmem:[%s5136 + $0x71] sm:$0xff] %vm1091, %v5127
        %v5145 = vld [vmem:[#allocation3] sm:$0xff]
        %v5146 = vld [vmem:[#allocation3 + $0x10] sm:$0xff]
        %v5147 = vld [vmem:[#allocation3 + $0x20] sm:$0xff]
        %v5148 = vld [vmem:[#allocation3 + $0x30] sm:$0xff]
        %v5149 = vld [vmem:[#allocation3 + $0x40] sm:$0xff]
        %v5150 = vld [vmem:[#allocation3 + $0x50] sm:$0xff]
        %v5151 = vld [vmem:[#allocation3 + $0x60] sm:$0xff]
        %v5152 = vld [vmem:[#allocation3 + $0x70] sm:$0xff]
        %5153 = vst.msk [vmem:[#allocation10] sm:$0xff] %vm1091, %v5145
        %5154 = vst.msk [vmem:[#allocation10 + $0x18] sm:$0xff] %vm1091, %v5146
        %5155 = vst.msk [vmem:[#allocation10 + $0x30] sm:$0xff] %vm1091, %v5147
        %5156 = vst.msk [vmem:[#allocation10 + $0x48] sm:$0xff] %vm1091, %v5148
        %5157 = vst.msk [vmem:[#allocation10 + $0x60] sm:$0xff] %vm1091, %v5149
        %5158 = vst.msk [vmem:[#allocation10 + $0x78] sm:$0xff] %vm1091, %v5150
        %5159 = vst.msk [vmem:[#allocation10 + $0x90] sm:$0xff] %vm1091, %v5151
        %5160 = vst.msk [vmem:[#allocation10 + $0xa8] sm:$0xff] %vm1091, %v5152
        %v5161 = vld [vmem:[#allocation3 + $0x1] sm:$0xff]
        %v5162 = vld [vmem:[#allocation3 + $0x11] sm:$0xff]
        %v5163 = vld [vmem:[#allocation3 + $0x21] sm:$0xff]
        %v5164 = vld [vmem:[#allocation3 + $0x31] sm:$0xff]
        %v5165 = vld [vmem:[#allocation3 + $0x41] sm:$0xff]
        %v5166 = vld [vmem:[#allocation3 + $0x51] sm:$0xff]
        %v5167 = vld [vmem:[#allocation3 + $0x61] sm:$0xff]
        %v5168 = vld [vmem:[#allocation3 + $0x71] sm:$0xff]
        %5177 = vrot.lane.b32.xlu0 %v5161, 32
        %v5178 = vpop.permute.xlu0 %5177
        %5179 = vrot.lane.b32.xlu0 %v5162, 32
        %v5180 = vpop.permute.xlu0 %5179
        %5181 = vrot.lane.b32.xlu0 %v5163, 32
        %v5182 = vpop.permute.xlu0 %5181
        %5183 = vrot.lane.b32.xlu0 %v5164, 32
        %v5184 = vpop.permute.xlu0 %5183
        %5185 = vrot.lane.b32.xlu0 %v5165, 32
        %v5186 = vpop.permute.xlu0 %5185
        %5187 = vrot.lane.b32.xlu0 %v5166, 32
        %v5188 = vpop.permute.xlu0 %5187
        %5189 = vrot.lane.b32.xlu0 %v5167, 32
        %v5190 = vpop.permute.xlu0 %5189
        %5191 = vrot.lane.b32.xlu0 %v5168, 32
        %v5192 = vpop.permute.xlu0 %5191
        %5201 = vst.msk [vmem:[#allocation10] sm:$0xff] %vm1404, %v5178
        %5202 = vst.msk [vmem:[#allocation10 + $0x18] sm:$0xff] %vm1404, %v5180
        %5203 = vst.msk [vmem:[#allocation10 + $0x30] sm:$0xff] %vm1404, %v5182
        %5204 = vst.msk [vmem:[#allocation10 + $0x48] sm:$0xff] %vm1404, %v5184
        %5205 = vst.msk [vmem:[#allocation10 + $0x60] sm:$0xff] %vm1404, %v5186
        %5206 = vst.msk [vmem:[#allocation10 + $0x78] sm:$0xff] %vm1404, %v5188
        %5207 = vst.msk [vmem:[#allocation10 + $0x90] sm:$0xff] %vm1404, %v5190
        %5208 = vst.msk [vmem:[#allocation10 + $0xa8] sm:$0xff] %vm1404, %v5192
        %v5209 = vld [vmem:[#allocation3 + $0x2] sm:$0xff]
        %v5210 = vld [vmem:[#allocation3 + $0x12] sm:$0xff]
        %v5211 = vld [vmem:[#allocation3 + $0x22] sm:$0xff]
        %v5212 = vld [vmem:[#allocation3 + $0x32] sm:$0xff]
        %v5213 = vld [vmem:[#allocation3 + $0x42] sm:$0xff]
        %v5214 = vld [vmem:[#allocation3 + $0x52] sm:$0xff]
        %v5215 = vld [vmem:[#allocation3 + $0x62] sm:$0xff]
        %v5216 = vld [vmem:[#allocation3 + $0x72] sm:$0xff]
        %5225 = vrot.lane.b32.xlu0 %v5209, 64
        %v5226 = vpop.permute.xlu0 %5225
        %5227 = vrot.lane.b32.xlu0 %v5210, 64
        %v5228 = vpop.permute.xlu0 %5227
        %5229 = vrot.lane.b32.xlu0 %v5211, 64
        %v5230 = vpop.permute.xlu0 %5229
        %5231 = vrot.lane.b32.xlu0 %v5212, 64
        %v5232 = vpop.permute.xlu0 %5231
        %5233 = vrot.lane.b32.xlu0 %v5213, 64
        %v5234 = vpop.permute.xlu0 %5233
        %5235 = vrot.lane.b32.xlu0 %v5214, 64
        %v5236 = vpop.permute.xlu0 %5235
        %5237 = vrot.lane.b32.xlu0 %v5215, 64
        %v5238 = vpop.permute.xlu0 %5237
        %5239 = vrot.lane.b32.xlu0 %v5216, 64
        %v5240 = vpop.permute.xlu0 %5239
        %5249 = vst.msk [vmem:[#allocation10] sm:$0xff] %vm1597, %v5226
        %5250 = vst.msk [vmem:[#allocation10 + $0x18] sm:$0xff] %vm1597, %v5228
        %5251 = vst.msk [vmem:[#allocation10 + $0x30] sm:$0xff] %vm1597, %v5230
        %5252 = vst.msk [vmem:[#allocation10 + $0x48] sm:$0xff] %vm1597, %v5232
        %5253 = vst.msk [vmem:[#allocation10 + $0x60] sm:$0xff] %vm1597, %v5234
        %5254 = vst.msk [vmem:[#allocation10 + $0x78] sm:$0xff] %vm1597, %v5236
        %5255 = vst.msk [vmem:[#allocation10 + $0x90] sm:$0xff] %vm1597, %v5238
        %5256 = vst.msk [vmem:[#allocation10 + $0xa8] sm:$0xff] %vm1597, %v5240
        %v5257 = vld [vmem:[%s5136] sm:$0xff]
        %v5258 = vld [vmem:[%s5136 + $0x10] sm:$0xff]
        %v5259 = vld [vmem:[%s5136 + $0x20] sm:$0xff]
        %v5260 = vld [vmem:[%s5136 + $0x30] sm:$0xff]
        %v5261 = vld [vmem:[%s5136 + $0x40] sm:$0xff]
        %v5262 = vld [vmem:[%s5136 + $0x50] sm:$0xff]
        %v5263 = vld [vmem:[%s5136 + $0x60] sm:$0xff]
        %v5264 = vld [vmem:[%s5136 + $0x70] sm:$0xff]
        %5273 = vrot.lane.b32.xlu0 %v5257, 96
        %v5274 = vpop.permute.xlu0 %5273
        %5275 = vrot.lane.b32.xlu0 %v5258, 96
        %v5276 = vpop.permute.xlu0 %5275
        %5277 = vrot.lane.b32.xlu0 %v5259, 96
        %v5278 = vpop.permute.xlu0 %5277
        %5279 = vrot.lane.b32.xlu0 %v5260, 96
        %v5280 = vpop.permute.xlu0 %5279
        %5281 = vrot.lane.b32.xlu0 %v5261, 96
        %v5282 = vpop.permute.xlu0 %5281
        %5283 = vrot.lane.b32.xlu0 %v5262, 96
        %v5284 = vpop.permute.xlu0 %5283
        %5285 = vrot.lane.b32.xlu0 %v5263, 96
        %v5286 = vpop.permute.xlu0 %5285
        %5287 = vrot.lane.b32.xlu0 %v5264, 96
        %v5288 = vpop.permute.xlu0 %5287
        %5297 = vst.msk [vmem:[#allocation10] sm:$0xff] %vm1790, %v5274
        %5298 = vst.msk [vmem:[#allocation10 + $0x18] sm:$0xff] %vm1790, %v5276
        %5299 = vst.msk [vmem:[#allocation10 + $0x30] sm:$0xff] %vm1790, %v5278
        %5300 = vst.msk [vmem:[#allocation10 + $0x48] sm:$0xff] %vm1790, %v5280
        %5301 = vst.msk [vmem:[#allocation10 + $0x60] sm:$0xff] %vm1790, %v5282
        %5302 = vst.msk [vmem:[#allocation10 + $0x78] sm:$0xff] %vm1790, %v5284
        %5303 = vst.msk [vmem:[#allocation10 + $0x90] sm:$0xff] %vm1790, %v5286
        %5304 = vst.msk [vmem:[#allocation10 + $0xa8] sm:$0xff] %vm1790, %v5288
        %v5305 = vld [vmem:[%s5136 + $0x1] sm:$0xff]
        %v5306 = vld [vmem:[%s5136 + $0x11] sm:$0xff]
        %v5307 = vld [vmem:[%s5136 + $0x21] sm:$0xff]
        %v5308 = vld [vmem:[%s5136 + $0x31] sm:$0xff]
        %v5309 = vld [vmem:[%s5136 + $0x41] sm:$0xff]
        %v5310 = vld [vmem:[%s5136 + $0x51] sm:$0xff]
        %v5311 = vld [vmem:[%s5136 + $0x61] sm:$0xff]
        %v5312 = vld [vmem:[%s5136 + $0x71] sm:$0xff]
        %5313 = vst.msk [vmem:[#allocation10 + $0x8] sm:$0xff] %vm1091, %v5305
        %5314 = vst.msk [vmem:[#allocation10 + $0x20] sm:$0xff] %vm1091, %v5306
        %5315 = vst.msk [vmem:[#allocation10 + $0x38] sm:$0xff] %vm1091, %v5307
        %5316 = vst.msk [vmem:[#allocation10 + $0x50] sm:$0xff] %vm1091, %v5308
        %5317 = vst.msk [vmem:[#allocation10 + $0x68] sm:$0xff] %vm1091, %v5309
        %5318 = vst.msk [vmem:[#allocation10 + $0x80] sm:$0xff] %vm1091, %v5310
        %5319 = vst.msk [vmem:[#allocation10 + $0x98] sm:$0xff] %vm1091, %v5311
        %5320 = vst.msk [vmem:[#allocation10 + $0xb0] sm:$0xff] %vm1091, %v5312
        %v5321 = vld [vmem:[%s5136 + $0x2] sm:$0xff]
        %v5322 = vld [vmem:[%s5136 + $0x12] sm:$0xff]
        %v5323 = vld [vmem:[%s5136 + $0x22] sm:$0xff]
        %v5324 = vld [vmem:[%s5136 + $0x32] sm:$0xff]
        %v5325 = vld [vmem:[%s5136 + $0x42] sm:$0xff]
        %v5326 = vld [vmem:[%s5136 + $0x52] sm:$0xff]
        %v5327 = vld [vmem:[%s5136 + $0x62] sm:$0xff]
        %v5328 = vld [vmem:[%s5136 + $0x72] sm:$0xff]
        %5337 = vrot.lane.b32.xlu0 %v5321, 32
        %v5338 = vpop.permute.xlu0 %5337
        %5339 = vrot.lane.b32.xlu0 %v5322, 32
        %v5340 = vpop.permute.xlu0 %5339
        %5341 = vrot.lane.b32.xlu0 %v5323, 32
        %v5342 = vpop.permute.xlu0 %5341
        %5343 = vrot.lane.b32.xlu0 %v5324, 32
        %v5344 = vpop.permute.xlu0 %5343
        %5345 = vrot.lane.b32.xlu0 %v5325, 32
        %v5346 = vpop.permute.xlu0 %5345
        %5347 = vrot.lane.b32.xlu0 %v5326, 32
        %v5348 = vpop.permute.xlu0 %5347
        %5349 = vrot.lane.b32.xlu0 %v5327, 32
        %v5350 = vpop.permute.xlu0 %5349
        %5351 = vrot.lane.b32.xlu0 %v5328, 32
        %v5352 = vpop.permute.xlu0 %5351
        %5361 = vst.msk [vmem:[#allocation10 + $0x8] sm:$0xff] %vm1404, %v5338
        %5362 = vst.msk [vmem:[#allocation10 + $0x20] sm:$0xff] %vm1404, %v5340
        %5363 = vst.msk [vmem:[#allocation10 + $0x38] sm:$0xff] %vm1404, %v5342
        %5364 = vst.msk [vmem:[#allocation10 + $0x50] sm:$0xff] %vm1404, %v5344
        %5365 = vst.msk [vmem:[#allocation10 + $0x68] sm:$0xff] %vm1404, %v5346
        %5366 = vst.msk [vmem:[#allocation10 + $0x80] sm:$0xff] %vm1404, %v5348
        %5367 = vst.msk [vmem:[#allocation10 + $0x98] sm:$0xff] %vm1404, %v5350
        %5368 = vst.msk [vmem:[#allocation10 + $0xb0] sm:$0xff] %vm1404, %v5352
        %s5369 = scalar_lea.vmem [#allocation3], 32
        %v5370 = vld [vmem:[%s5369] sm:$0xff]
        %v5371 = vld [vmem:[%s5369 + $0x10] sm:$0xff]
        %v5372 = vld [vmem:[%s5369 + $0x20] sm:$0xff]
        %v5373 = vld [vmem:[%s5369 + $0x30] sm:$0xff]
        %v5374 = vld [vmem:[%s5369 + $0x40] sm:$0xff]
        %v5375 = vld [vmem:[%s5369 + $0x50] sm:$0xff]
        %v5376 = vld [vmem:[%s5369 + $0x60] sm:$0xff]
        %v5377 = vld [vmem:[%s5369 + $0x70] sm:$0xff]
        %5386 = vrot.lane.b32.xlu0 %v5370, 64
        %v5387 = vpop.permute.xlu0 %5386
        %5388 = vrot.lane.b32.xlu0 %v5371, 64
        %v5389 = vpop.permute.xlu0 %5388
        %5390 = vrot.lane.b32.xlu0 %v5372, 64
        %v5391 = vpop.permute.xlu0 %5390
        %5392 = vrot.lane.b32.xlu0 %v5373, 64
        %v5393 = vpop.permute.xlu0 %5392
        %5394 = vrot.lane.b32.xlu0 %v5374, 64
        %v5395 = vpop.permute.xlu0 %5394
        %5396 = vrot.lane.b32.xlu0 %v5375, 64
        %v5397 = vpop.permute.xlu0 %5396
        %5398 = vrot.lane.b32.xlu0 %v5376, 64
        %v5399 = vpop.permute.xlu0 %5398
        %5400 = vrot.lane.b32.xlu0 %v5377, 64
        %v5401 = vpop.permute.xlu0 %5400
        %5410 = vst.msk [vmem:[#allocation10 + $0x8] sm:$0xff] %vm1597, %v5387
        %5411 = vst.msk [vmem:[#allocation10 + $0x20] sm:$0xff] %vm1597, %v5389
        %5412 = vst.msk [vmem:[#allocation10 + $0x38] sm:$0xff] %vm1597, %v5391
        %5413 = vst.msk [vmem:[#allocation10 + $0x50] sm:$0xff] %vm1597, %v5393
        %5414 = vst.msk [vmem:[#allocation10 + $0x68] sm:$0xff] %vm1597, %v5395
        %5415 = vst.msk [vmem:[#allocation10 + $0x80] sm:$0xff] %vm1597, %v5397
        %5416 = vst.msk [vmem:[#allocation10 + $0x98] sm:$0xff] %vm1597, %v5399
        %5417 = vst.msk [vmem:[#allocation10 + $0xb0] sm:$0xff] %vm1597, %v5401
        %v5418 = vld [vmem:[%s5369 + $0x1] sm:$0xff]
        %v5419 = vld [vmem:[%s5369 + $0x11] sm:$0xff]
        %v5420 = vld [vmem:[%s5369 + $0x21] sm:$0xff]
        %v5421 = vld [vmem:[%s5369 + $0x31] sm:$0xff]
        %v5422 = vld [vmem:[%s5369 + $0x41] sm:$0xff]
        %v5423 = vld [vmem:[%s5369 + $0x51] sm:$0xff]
        %v5424 = vld [vmem:[%s5369 + $0x61] sm:$0xff]
        %v5425 = vld [vmem:[%s5369 + $0x71] sm:$0xff]
        %5434 = vrot.lane.b32.xlu0 %v5418, 96
        %v5435 = vpop.permute.xlu0 %5434
        %5436 = vrot.lane.b32.xlu0 %v5419, 96
        %v5437 = vpop.permute.xlu0 %5436
        %5438 = vrot.lane.b32.xlu0 %v5420, 96
        %v5439 = vpop.permute.xlu0 %5438
        %5440 = vrot.lane.b32.xlu0 %v5421, 96
        %v5441 = vpop.permute.xlu0 %5440
        %5442 = vrot.lane.b32.xlu0 %v5422, 96
        %v5443 = vpop.permute.xlu0 %5442
        %5444 = vrot.lane.b32.xlu0 %v5423, 96
        %v5445 = vpop.permute.xlu0 %5444
        %5446 = vrot.lane.b32.xlu0 %v5424, 96
        %v5447 = vpop.permute.xlu0 %5446
        %5448 = vrot.lane.b32.xlu0 %v5425, 96
        %v5449 = vpop.permute.xlu0 %5448
        %5458 = vst.msk [vmem:[#allocation10 + $0x8] sm:$0xff] %vm1790, %v5435
        %5459 = vst.msk [vmem:[#allocation10 + $0x20] sm:$0xff] %vm1790, %v5437
        %5460 = vst.msk [vmem:[#allocation10 + $0x38] sm:$0xff] %vm1790, %v5439
        %5461 = vst.msk [vmem:[#allocation10 + $0x50] sm:$0xff] %vm1790, %v5441
        %5462 = vst.msk [vmem:[#allocation10 + $0x68] sm:$0xff] %vm1790, %v5443
        %5463 = vst.msk [vmem:[#allocation10 + $0x80] sm:$0xff] %vm1790, %v5445
        %5464 = vst.msk [vmem:[#allocation10 + $0x98] sm:$0xff] %vm1790, %v5447
        %5465 = vst.msk [vmem:[#allocation10 + $0xb0] sm:$0xff] %vm1790, %v5449
        %v5466 = vld [vmem:[%s5369 + $0x2] sm:$0xff]
        %v5467 = vld [vmem:[%s5369 + $0x12] sm:$0xff]
        %v5468 = vld [vmem:[%s5369 + $0x22] sm:$0xff]
        %v5469 = vld [vmem:[%s5369 + $0x32] sm:$0xff]
        %v5470 = vld [vmem:[%s5369 + $0x42] sm:$0xff]
        %v5471 = vld [vmem:[%s5369 + $0x52] sm:$0xff]
        %v5472 = vld [vmem:[%s5369 + $0x62] sm:$0xff]
        %v5473 = vld [vmem:[%s5369 + $0x72] sm:$0xff]
        %5474 = vst.msk [vmem:[#allocation10 + $0x10] sm:$0xff] %vm1091, %v5466
        %5475 = vst.msk [vmem:[#allocation10 + $0x28] sm:$0xff] %vm1091, %v5467
        %5476 = vst.msk [vmem:[#allocation10 + $0x40] sm:$0xff] %vm1091, %v5468
        %5477 = vst.msk [vmem:[#allocation10 + $0x58] sm:$0xff] %vm1091, %v5469
        %5478 = vst.msk [vmem:[#allocation10 + $0x70] sm:$0xff] %vm1091, %v5470
        %5479 = vst.msk [vmem:[#allocation10 + $0x88] sm:$0xff] %vm1091, %v5471
        %5480 = vst.msk [vmem:[#allocation10 + $0xa0] sm:$0xff] %vm1091, %v5472
        %5481 = vst.msk [vmem:[#allocation10 + $0xb8] sm:$0xff] %vm1091, %v5473
        %v5482 = vld [vmem:[#allocation10] sm:$0xff]
        %v5483 = vld [vmem:[#allocation10 + $0x8] sm:$0xff]
        %v5484 = vld [vmem:[#allocation10 + $0x10] sm:$0xff]
        %v5485 = vld [vmem:[#allocation10 + $0x18] sm:$0xff]
        %v5486 = vld [vmem:[#allocation10 + $0x20] sm:$0xff]
        %v5487 = vld [vmem:[#allocation10 + $0x28] sm:$0xff]
        %v5488 = vld [vmem:[#allocation10 + $0x30] sm:$0xff]
        %v5489 = vld [vmem:[#allocation10 + $0x38] sm:$0xff]
        %v5490 = vld [vmem:[#allocation10 + $0x40] sm:$0xff]
        %v5491 = vld [vmem:[#allocation10 + $0x48] sm:$0xff]
        %v5492 = vld [vmem:[#allocation10 + $0x50] sm:$0xff]
        %v5493 = vld [vmem:[#allocation10 + $0x58] sm:$0xff]
        %v5494 = vld [vmem:[#allocation10 + $0x60] sm:$0xff]
        %v5495 = vld [vmem:[#allocation10 + $0x68] sm:$0xff]
        %v5496 = vld [vmem:[#allocation10 + $0x70] sm:$0xff]
        %v5497 = vld [vmem:[#allocation10 + $0x78] sm:$0xff]
        %v5498 = vld [vmem:[#allocation10 + $0x80] sm:$0xff]
        %v5499 = vld [vmem:[#allocation10 + $0x88] sm:$0xff]
        %v5500 = vld [vmem:[#allocation10 + $0x90] sm:$0xff]
        %v5501 = vld [vmem:[#allocation10 + $0x98] sm:$0xff]
        %v5502 = vld [vmem:[#allocation10 + $0xa0] sm:$0xff]
        %v5503 = vld [vmem:[#allocation10 + $0xa8] sm:$0xff]
        %v5504 = vld [vmem:[#allocation10 + $0xb0] sm:$0xff]
        %v5505 = vld [vmem:[#allocation10 + $0xb8] sm:$0xff]
        %v5506 = vld [vmem:[#allocation16] sm:$0xff]
        %v5507 = vld [vmem:[#allocation16 + $0x8] sm:$0xff]
        %v5508 = vld [vmem:[#allocation16 + $0x10] sm:$0xff]
        %v5509 = vld [vmem:[#allocation16 + $0x18] sm:$0xff]
        %v5510 = vld [vmem:[#allocation16 + $0x20] sm:$0xff]
        %v5511 = vld [vmem:[#allocation16 + $0x28] sm:$0xff]
        %v5512 = vld [vmem:[#allocation16 + $0x30] sm:$0xff]
        %v5513 = vld [vmem:[#allocation16 + $0x38] sm:$0xff]
        %v5514 = vld [vmem:[#allocation16 + $0x40] sm:$0xff]
        %v5515 = vld [vmem:[#allocation16 + $0x48] sm:$0xff]
        %v5516 = vld [vmem:[#allocation16 + $0x50] sm:$0xff]
        %v5517 = vld [vmem:[#allocation16 + $0x58] sm:$0xff]
        %v5518 = vld [vmem:[#allocation16 + $0x60] sm:$0xff]
        %v5519 = vld [vmem:[#allocation16 + $0x68] sm:$0xff]
        %v5520 = vld [vmem:[#allocation16 + $0x70] sm:$0xff]
        %v5521 = vld [vmem:[#allocation16 + $0x78] sm:$0xff]
        %v5522 = vld [vmem:[#allocation16 + $0x80] sm:$0xff]
        %v5523 = vld [vmem:[#allocation16 + $0x88] sm:$0xff]
        %v5524 = vld [vmem:[#allocation16 + $0x90] sm:$0xff]
        %v5525 = vld [vmem:[#allocation16 + $0x98] sm:$0xff]
        %v5526 = vld [vmem:[#allocation16 + $0xa0] sm:$0xff]
        %v5527 = vld [vmem:[#allocation16 + $0xa8] sm:$0xff]
        %v5528 = vld [vmem:[#allocation16 + $0xb0] sm:$0xff]
        %v5529 = vld [vmem:[#allocation16 + $0xb8] sm:$0xff]
        %v5530 = vld [vmem:[#allocation16 + $0xc0] sm:$0xff]
        %v5531 = vld [vmem:[#allocation16 + $0xc8] sm:$0xff]
        %v5532 = vld [vmem:[#allocation16 + $0xd0] sm:$0xff]
        %v5533 = vld [vmem:[#allocation16 + $0xd8] sm:$0xff]
        %v5534 = vld [vmem:[#allocation16 + $0xe0] sm:$0xff]
        %v5535 = vld [vmem:[#allocation16 + $0xe8] sm:$0xff]
        %v5536 = vld [vmem:[#allocation16 + $0xf0] sm:$0xff]
        %v5537 = vld [vmem:[#allocation16 + $0xf8] sm:$0xff]
        %v5538 = vld [vmem:[#allocation16 + $0x100] sm:$0xff]
        %v5539 = vld [vmem:[#allocation16 + $0x108] sm:$0xff]
        %v5540 = vld [vmem:[#allocation16 + $0x110] sm:$0xff]
        %v5541 = vld [vmem:[#allocation16 + $0x118] sm:$0xff]
        %v5542 = vld [vmem:[%s6] sm:$0x1]
        %v5543 = vld [vmem:[%s6 + $0x1] sm:$0x1]
        %v5544 = vld [vmem:[%s6 + $0x2] sm:$0x1]
        %v5545 = vlaneseq
        %v5546 = vshrl.u32 %v5545, 7
        %v5547 = vsub.s32 0, %v5546
        %v5548 = vrot.slane %v5542, %v5547
        %v5550 = vsel %vm1091, %v5484, 0
        %v5553 = vsel %vm1091, %v5487, 0
        %v5556 = vsel %vm1091, %v5490, 0
        %v5559 = vsel %vm1091, %v5493, 0
        %v5562 = vsel %vm1091, %v5496, 0
        %v5565 = vsel %vm1091, %v5499, 0
        %v5568 = vsel %vm1091, %v5502, 0
        %v5571 = vsel %vm1091, %v5505, 0
        %5573 = vmatprep.subr.mxu0 0.0
        %5574 = vmatpush1.msra.mxu0 %v5506
        %5575 = vmatprep.subr.mxu0 0.0
        %5576 = vmatpush1.msra.mxu0 %v5507
        %5577 = vmatprep.subr.mxu0 0.0
        %5578 = vmatpush1.msra.mxu0 %v5508
        %5579 = vmatprep.subr.mxu0 0.0
        %5580 = vmatpush1.msra.mxu0 %v5509
        %5581 = vmatprep.subr.mxu0 0.0
        %5582 = vmatpush1.msra.mxu0 %v5510
        %5583 = vmatprep.subr.mxu0 0.0
        %5584 = vmatpush1.msra.mxu0 %v5511
        %5585 = vmatprep.subr.mxu0 0.0
        %5586 = vmatpush1.msra.mxu0 %v5512
        %5587 = vmatprep.subr.mxu0 0.0
        %5588 = vmatpush1.msra.mxu0 %v5513
        %5589 = vmatprep.subr.mxu0 0.0
        %5590 = vmatpush1.msra.mxu0 %v5514
        %5591 = vmatprep.subr.mxu0 0.0
        %5592 = vmatpush1.msra.mxu0 %v5515
        %5593 = vmatprep.subr.mxu0 0.0
        %5594 = vmatpush1.msra.mxu0 %v5516
        %5595 = vmatprep.subr.mxu0 0.0
        %5596 = vmatpush1.msra.mxu0 %v5517
        %5597 = vmatprep.subr.mxu0 0.0
        %5598 = vmatpush1.msra.mxu0 %v5518
        %5599 = vmatprep.subr.mxu0 0.0
        %5600 = vmatpush1.msra.mxu0 %v5519
        %5601 = vmatprep.subr.mxu0 0.0
        %5602 = vmatpush1.msra.mxu0 %v5520
        %5603 = vmatprep.subr.mxu0 0.0
        %5604 = vmatpush1.msra.mxu0 %v5521
        %5605 = vmatprep.subr.mxu0 0.0
        %5606 = vmatpush1.msra.mxu0 %v5522
        %5607 = vmatprep.subr.mxu0 0.0
        %5608 = vmatpush1.msra.mxu0 %v5523
        %5609 = vmatprep.subr.mxu0 0.0
        %5610 = vmatpush1.msra.mxu0 %v5524
        %5611 = vmatprep.subr.mxu0 0.0
        %5612 = vmatpush1.msra.mxu0 %v5525
        %5613 = vmatprep.subr.mxu0 0.0
        %5614 = vmatpush1.msra.mxu0 %v5526
        %5615 = vmatprep.subr.mxu0 0.0
        %5616 = vmatpush1.msra.mxu0 %v5527
        %5617 = vmatprep.subr.mxu0 0.0
        %5618 = vmatpush1.msra.mxu0 %v5528
        %5619 = vmatprep.subr.mxu0 0.0
        %5620 = vmatpush1.msra.mxu0 %v5529
        %5621 = vmatprep.subr.mxu0 0.0
        %5622 = vmatpush1.msra.mxu0 %v5530
        %5623 = vmatprep.subr.mxu0 0.0
        %5624 = vmatpush1.msra.mxu0 %v5531
        %5625 = vmatprep.subr.mxu0 0.0
        %5626 = vmatpush1.msra.mxu0 %v5532
        %5627 = vmatprep.subr.mxu0 0.0
        %5628 = vmatpush1.msra.mxu0 %v5533
        %5629 = vmatprep.subr.mxu0 0.0
        %5630 = vmatpush1.msra.mxu0 %v5534
        %5631 = vmatprep.subr.mxu0 0.0
        %5632 = vmatpush1.msra.mxu0 %v5535
        %5633 = vmatprep.subr.mxu0 0.0
        %5634 = vmatpush1.msra.mxu0 %v5536
        %5635 = vmatprep.subr.mxu0 0.0
        %5636 = vmatpush1.msra.mxu0 %v5537
        %5637 = vmatprep.mubr.f32.mxu0 %v5483
        %5638 = vmatmul.mubr.f32.gmra.mrb[0].mxu0 %v5482
        %v5639 = vpop.f32.mrb[0].mxu0
        %v5640 = vadd.f32 %v5548, %v5639
        %v5641 = vpop.f32.mrb[0].mxu0
        %5642 = vmatprep.mubr.f32.mxu0 %v5486
        %5643 = vmatmul.mubr.f32.gmra.mrb[0].mxu0 %v5485
        %v5644 = vpop.f32.mrb[0].mxu0
        %v5645 = vadd.f32 %v5548, %v5644
        %v5646 = vpop.f32.mrb[0].mxu0
        %5647 = vmatprep.mubr.f32.mxu0 %v5489
        %5648 = vmatmul.mubr.f32.gmra.mrb[0].mxu0 %v5488
        %v5649 = vpop.f32.mrb[0].mxu0
        %v5650 = vadd.f32 %v5548, %v5649
        %v5651 = vpop.f32.mrb[0].mxu0
        %5652 = vmatprep.mubr.f32.mxu0 %v5492
        %5653 = vmatmul.mubr.f32.gmra.mrb[0].mxu0 %v5491
        %v5654 = vpop.f32.mrb[0].mxu0
        %v5655 = vadd.f32 %v5548, %v5654
        %v5656 = vpop.f32.mrb[0].mxu0
        %5657 = vmatprep.mubr.f32.mxu0 %v5495
        %5658 = vmatmul.mubr.f32.gmra.mrb[0].mxu0 %v5494
        %v5659 = vpop.f32.mrb[0].mxu0
        %v5660 = vadd.f32 %v5548, %v5659
        %v5661 = vpop.f32.mrb[0].mxu0
        %5662 = vmatprep.mubr.f32.mxu0 %v5498
        %5663 = vmatmul.mubr.f32.gmra.mrb[0].mxu0 %v5497
        %v5664 = vpop.f32.mrb[0].mxu0
        %v5665 = vadd.f32 %v5548, %v5664
        %v5666 = vpop.f32.mrb[0].mxu0
        %5667 = vmatprep.mubr.f32.mxu0 %v5501
        %5668 = vmatmul.mubr.f32.gmra.mrb[0].mxu0 %v5500
        %v5669 = vpop.f32.mrb[0].mxu0
        %v5670 = vadd.f32 %v5548, %v5669
        %v5671 = vpop.f32.mrb[0].mxu0
        %5672 = vmatprep.mubr.f32.mxu0 %v5504
        %5673 = vmatmul.mubr.f32.gmra.mrb[0].mxu0 %v5503
        %v5674 = vpop.f32.mrb[0].mxu0
        %v5675 = vadd.f32 %v5548, %v5674
        %v5676 = vpop.f32.mrb[0].mxu0
        %5677 = vdwg.mxu0
        %5678 = vmatprep.subr.mxu0 0.0
        %5679 = vmatpush1.msra.mxu0 %v5538
        %5680 = vmatprep.subr.mxu0 0.0
        %5681 = vmatpush1.msra.mxu0 %v5539
        %5682 = vmatprep.subr.mxu0 0.0
        %5683 = vmatpush1.msra.mxu0 %v5540
        %5684 = vmatprep.subr.mxu0 0.0
        %5685 = vmatpush1.msra.mxu0 %v5541
        %5686 = vmatprep.subr.mxu0 0.0
        %5687 = vmatpush1.msra.mxu0 0.0
        %5688 = vmatprep.subr.mxu0 0.0
        %5689 = vmatpush1.msra.mxu0 0.0
        %5690 = vmatprep.subr.mxu0 0.0
        %5691 = vmatpush1.msra.mxu0 0.0
        %5692 = vmatprep.subr.mxu0 0.0
        %5693 = vmatpush1.msra.mxu0 0.0
        %5694 = vmatprep.subr.mxu0 0.0
        %5695 = vmatpush1.msra.mxu0 0.0
        %5696 = vmatprep.subr.mxu0 0.0
        %5697 = vmatpush1.msra.mxu0 0.0
        %5698 = vmatprep.subr.mxu0 0.0
        %5699 = vmatpush1.msra.mxu0 0.0
        %5700 = vmatprep.subr.mxu0 0.0
        %5701 = vmatpush1.msra.mxu0 0.0
        %5702 = vmatprep.subr.mxu0 0.0
        %5703 = vmatpush1.msra.mxu0 0.0
        %5704 = vmatprep.subr.mxu0 0.0
        %5705 = vmatpush1.msra.mxu0 0.0
        %5706 = vmatprep.subr.mxu0 0.0
        %5707 = vmatpush1.msra.mxu0 0.0
        %5708 = vmatprep.subr.mxu0 0.0
        %5709 = vmatpush1.msra.mxu0 0.0
        %5710 = vmatprep.subr.mxu0 0.0
        %5711 = vmatpush1.msra.mxu0 0.0
        %5712 = vmatprep.subr.mxu0 0.0
        %5713 = vmatpush1.msra.mxu0 0.0
        %5714 = vmatprep.subr.mxu0 0.0
        %5715 = vmatpush1.msra.mxu0 0.0
        %5716 = vmatprep.subr.mxu0 0.0
        %5717 = vmatpush1.msra.mxu0 0.0
        %5718 = vmatprep.subr.mxu0 0.0
        %5719 = vmatpush1.msra.mxu0 0.0
        %5720 = vmatprep.subr.mxu0 0.0
        %5721 = vmatpush1.msra.mxu0 0.0
        %5722 = vmatprep.subr.mxu0 0.0
        %5723 = vmatpush1.msra.mxu0 0.0
        %5724 = vmatprep.subr.mxu0 0.0
        %5725 = vmatpush1.msra.mxu0 0.0
        %5726 = vmatprep.subr.mxu0 0.0
        %5727 = vmatpush1.msra.mxu0 0.0
        %5728 = vmatprep.subr.mxu0 0.0
        %5729 = vmatpush1.msra.mxu0 0.0
        %5730 = vmatprep.subr.mxu0 0.0
        %5731 = vmatpush1.msra.mxu0 0.0
        %5732 = vmatprep.subr.mxu0 0.0
        %5733 = vmatpush1.msra.mxu0 0.0
        %5734 = vmatprep.subr.mxu0 0.0
        %5735 = vmatpush1.msra.mxu0 0.0
        %5736 = vmatprep.subr.mxu0 0.0
        %5737 = vmatpush1.msra.mxu0 0.0
        %5738 = vmatprep.subr.mxu0 0.0
        %5739 = vmatpush1.msra.mxu0 0.0
        %5740 = vmatprep.subr.mxu0 0.0
        %5741 = vmatpush1.msra.mxu0 0.0
        %5742 = vmatprep.mubr.f32.mxu0 0.0
        %5743 = vmatmul.mubr.f32.gmra.mrb[0].mxu0 %v5550
        %v5744 = vpop.f32.mrb[0].mxu0
        %v5745 = vadd.f32 %v5640, %v5744
        %v5746 = vpop.f32.mrb[0].mxu0
        %5747 = vmatprep.mubr.f32.mxu0 0.0
        %5748 = vmatmul.mubr.f32.gmra.mrb[0].mxu0 %v5553
        %v5749 = vpop.f32.mrb[0].mxu0
        %v5750 = vadd.f32 %v5645, %v5749
        %v5751 = vpop.f32.mrb[0].mxu0
        %5752 = vmatprep.mubr.f32.mxu0 0.0
        %5753 = vmatmul.mubr.f32.gmra.mrb[0].mxu0 %v5556
        %v5754 = vpop.f32.mrb[0].mxu0
        %v5755 = vadd.f32 %v5650, %v5754
        %v5756 = vpop.f32.mrb[0].mxu0
        %5757 = vmatprep.mubr.f32.mxu0 0.0
        %5758 = vmatmul.mubr.f32.gmra.mrb[0].mxu0 %v5559
        %v5759 = vpop.f32.mrb[0].mxu0
        %v5760 = vadd.f32 %v5655, %v5759
        %v5761 = vpop.f32.mrb[0].mxu0
        %5762 = vmatprep.mubr.f32.mxu0 0.0
        %5763 = vmatmul.mubr.f32.gmra.mrb[0].mxu0 %v5562
        %v5764 = vpop.f32.mrb[0].mxu0
        %v5765 = vadd.f32 %v5660, %v5764
        %v5766 = vpop.f32.mrb[0].mxu0
        %5767 = vmatprep.mubr.f32.mxu0 0.0
        %5768 = vmatmul.mubr.f32.gmra.mrb[0].mxu0 %v5565
        %v5769 = vpop.f32.mrb[0].mxu0
        %v5770 = vadd.f32 %v5665, %v5769
        %v5771 = vpop.f32.mrb[0].mxu0
        %5772 = vmatprep.mubr.f32.mxu0 0.0
        %5773 = vmatmul.mubr.f32.gmra.mrb[0].mxu0 %v5568
        %v5774 = vpop.f32.mrb[0].mxu0
        %v5775 = vadd.f32 %v5670, %v5774
        %v5776 = vpop.f32.mrb[0].mxu0
        %5777 = vmatprep.mubr.f32.mxu0 0.0
        %5778 = vmatmul.mubr.f32.gmra.mrb[0].mxu0 %v5571
        %v5779 = vpop.f32.mrb[0].mxu0
        %v5780 = vadd.f32 %v5675, %v5779
        %v5781 = vpop.f32.mrb[0].mxu0
        %5782 = vdwg.mxu0
        %v5783 = vmax.f32 %v5745, 0.0
        %v5784 = vmax.f32 %v5750, 0.0
        %v5785 = vmax.f32 %v5755, 0.0
        %v5786 = vmax.f32 %v5760, 0.0
        %v5787 = vmax.f32 %v5765, 0.0
        %v5788 = vmax.f32 %v5770, 0.0
        %v5789 = vmax.f32 %v5775, 0.0
        %v5790 = vmax.f32 %v5780, 0.0
        %v5791 = vlaneseq
        %v5792 = vshrl.u32 %v5791, 7
        %v5793 = vsub.s32 0, %v5792
        %v5794 = vrot.slane %v5543, %v5793
        %v5795 = vmul.f32 %v5783, %v5794
        %v5796 = vmul.f32 %v5784, %v5794
        %v5797 = vmul.f32 %v5785, %v5794
        %v5798 = vmul.f32 %v5786, %v5794
        %v5799 = vmul.f32 %v5787, %v5794
        %v5800 = vmul.f32 %v5788, %v5794
        %v5801 = vmul.f32 %v5789, %v5794
        %v5802 = vmul.f32 %v5790, %v5794
        %v5803 = vlaneseq
        %v5804 = vshrl.u32 %v5803, 7
        %v5805 = vsub.s32 0, %v5804
        %v5806 = vrot.slane %v5544, %v5805
        %v5807 = vadd.f32 %v5795, %v5806
        %v5808 = vadd.f32 %v5796, %v5806
        %v5809 = vadd.f32 %v5797, %v5806
        %v5810 = vadd.f32 %v5798, %v5806
        %v5811 = vadd.f32 %v5799, %v5806
        %v5812 = vadd.f32 %v5800, %v5806
        %v5813 = vadd.f32 %v5801, %v5806
        %v5814 = vadd.f32 %v5802, %v5806
        %vm5815 = vcmask 523264
        %5816 = vst.msk [vmem:[#allocation4] sm:$0xff] %vm5815, 0.0
        %vm5817 = vcmask 517120
        %5818 = vst.msk [vmem:[#allocation4 + $0x8] sm:$0x3] %vm5817, 0.0
        %5819 = vst.msk [vmem:[#allocation4 + $0x10] sm:$0xff] %vm5815, 0.0
        %5820 = vst.msk [vmem:[#allocation4 + $0x18] sm:$0x3] %vm5817, 0.0
        %5821 = vst.msk [vmem:[#allocation4 + $0x20] sm:$0xff] %vm5815, 0.0
        %5822 = vst.msk [vmem:[#allocation4 + $0x28] sm:$0x3] %vm5817, 0.0
        %5823 = vst.msk [vmem:[#allocation4 + $0x30] sm:$0xff] %vm5815, 0.0
        %5824 = vst.msk [vmem:[#allocation4 + $0x38] sm:$0x3] %vm5817, 0.0
        %5825 = vst.msk [vmem:[#allocation4 + $0x40] sm:$0xff] %vm5815, 0.0
        %5826 = vst.msk [vmem:[#allocation4 + $0x48] sm:$0x3] %vm5817, 0.0
        %5827 = vst.msk [vmem:[#allocation4 + $0x50] sm:$0xff] %vm5815, 0.0
        %5828 = vst.msk [vmem:[#allocation4 + $0x58] sm:$0x3] %vm5817, 0.0
        %5829 = vst.msk [vmem:[#allocation4 + $0x60] sm:$0xff] %vm5815, 0.0
        %5830 = vst.msk [vmem:[#allocation4 + $0x68] sm:$0x3] %vm5817, 0.0
        %5831 = vst.msk [vmem:[#allocation4 + $0x70] sm:$0xff] %vm5815, 0.0
        %5832 = vst.msk [vmem:[#allocation4 + $0x78] sm:$0x3] %vm5817, 0.0
        %5833 = vst.msk [vmem:[#allocation4 + $0x80] sm:$0xff] %vm5815, 0.0
        %5834 = vst.msk [vmem:[#allocation4 + $0x88] sm:$0x3] %vm5817, 0.0
        %5835 = vst.msk [vmem:[#allocation4 + $0x90] sm:$0xff] %vm5815, 0.0
        %5836 = vst.msk [vmem:[#allocation4 + $0x98] sm:$0x3] %vm5817, 0.0
        %s5837 = scalar_lea.vmem [#allocation4], 16
        %5838 = vst.msk [vmem:[%s5837 + $0x1] sm:$0xff] %vm5815, %v5807
        %5839 = vst.msk [vmem:[%s5837 + $0x11] sm:$0xff] %vm5815, %v5808
        %5840 = vst.msk [vmem:[%s5837 + $0x21] sm:$0xff] %vm5815, %v5809
        %5841 = vst.msk [vmem:[%s5837 + $0x31] sm:$0xff] %vm5815, %v5810
        %5842 = vst.msk [vmem:[%s5837 + $0x41] sm:$0xff] %vm5815, %v5811
        %5843 = vst.msk [vmem:[%s5837 + $0x51] sm:$0xff] %vm5815, %v5812
        %5844 = vst.msk [vmem:[%s5837 + $0x61] sm:$0xff] %vm5815, %v5813
        %5845 = vst.msk [vmem:[%s5837 + $0x71] sm:$0xff] %vm5815, %v5814
        %v5846 = vld [vmem:[#allocation4] sm:$0xff]
        %v5847 = vld [vmem:[#allocation4 + $0x10] sm:$0xff]
        %v5848 = vld [vmem:[#allocation4 + $0x20] sm:$0xff]
        %v5849 = vld [vmem:[#allocation4 + $0x30] sm:$0xff]
        %v5850 = vld [vmem:[#allocation4 + $0x40] sm:$0xff]
        %v5851 = vld [vmem:[#allocation4 + $0x50] sm:$0xff]
        %v5852 = vld [vmem:[#allocation4 + $0x60] sm:$0xff]
        %v5853 = vld [vmem:[#allocation4 + $0x70] sm:$0xff]
        %5854 = vst.msk [vmem:[#allocation11] sm:$0xff] %vm5815, %v5846
        %5855 = vst.msk [vmem:[#allocation11 + $0x28] sm:$0xff] %vm5815, %v5847
        %5856 = vst.msk [vmem:[#allocation11 + $0x50] sm:$0xff] %vm5815, %v5848
        %5857 = vst.msk [vmem:[#allocation11 + $0x78] sm:$0xff] %vm5815, %v5849
        %5858 = vst.msk [vmem:[#allocation11 + $0xa0] sm:$0xff] %vm5815, %v5850
        %5859 = vst.msk [vmem:[#allocation11 + $0xc8] sm:$0xff] %vm5815, %v5851
        %5860 = vst.msk [vmem:[#allocation11 + $0xf0] sm:$0xff] %vm5815, %v5852
        %5861 = vst.msk [vmem:[#allocation11 + $0x118] sm:$0xff] %vm5815, %v5853
        %v5862 = vld [vmem:[#allocation4 + $0x1] sm:$0xff]
        %v5863 = vld [vmem:[#allocation4 + $0x11] sm:$0xff]
        %v5864 = vld [vmem:[#allocation4 + $0x21] sm:$0xff]
        %v5865 = vld [vmem:[#allocation4 + $0x31] sm:$0xff]
        %v5866 = vld [vmem:[#allocation4 + $0x41] sm:$0xff]
        %v5867 = vld [vmem:[#allocation4 + $0x51] sm:$0xff]
        %v5868 = vld [vmem:[#allocation4 + $0x61] sm:$0xff]
        %v5869 = vld [vmem:[#allocation4 + $0x71] sm:$0xff]
        %5878 = vrot.lane.b32.xlu0 %v5862, 64
        %v5879 = vpop.permute.xlu0 %5878
        %5880 = vrot.lane.b32.xlu0 %v5863, 64
        %v5881 = vpop.permute.xlu0 %5880
        %5882 = vrot.lane.b32.xlu0 %v5864, 64
        %v5883 = vpop.permute.xlu0 %5882
        %5884 = vrot.lane.b32.xlu0 %v5865, 64
        %v5885 = vpop.permute.xlu0 %5884
        %5886 = vrot.lane.b32.xlu0 %v5866, 64
        %v5887 = vpop.permute.xlu0 %5886
        %5888 = vrot.lane.b32.xlu0 %v5867, 64
        %v5889 = vpop.permute.xlu0 %5888
        %5890 = vrot.lane.b32.xlu0 %v5868, 64
        %v5891 = vpop.permute.xlu0 %5890
        %5892 = vrot.lane.b32.xlu0 %v5869, 64
        %v5893 = vpop.permute.xlu0 %5892
        %vm5902 = vcmask 1048064
        %5903 = vst.msk [vmem:[#allocation11] sm:$0xff] %vm5902, %v5879
        %5904 = vst.msk [vmem:[#allocation11 + $0x28] sm:$0xff] %vm5902, %v5881
        %5905 = vst.msk [vmem:[#allocation11 + $0x50] sm:$0xff] %vm5902, %v5883
        %5906 = vst.msk [vmem:[#allocation11 + $0x78] sm:$0xff] %vm5902, %v5885
        %5907 = vst.msk [vmem:[#allocation11 + $0xa0] sm:$0xff] %vm5902, %v5887
        %5908 = vst.msk [vmem:[#allocation11 + $0xc8] sm:$0xff] %vm5902, %v5889
        %5909 = vst.msk [vmem:[#allocation11 + $0xf0] sm:$0xff] %vm5902, %v5891
        %5910 = vst.msk [vmem:[#allocation11 + $0x118] sm:$0xff] %vm5902, %v5893
        %v5911 = vld [vmem:[#allocation4 + $0x2] sm:$0xff]
        %v5912 = vld [vmem:[#allocation4 + $0x12] sm:$0xff]
        %v5913 = vld [vmem:[#allocation4 + $0x22] sm:$0xff]
        %v5914 = vld [vmem:[#allocation4 + $0x32] sm:$0xff]
        %v5915 = vld [vmem:[#allocation4 + $0x42] sm:$0xff]
        %v5916 = vld [vmem:[#allocation4 + $0x52] sm:$0xff]
        %v5917 = vld [vmem:[#allocation4 + $0x62] sm:$0xff]
        %v5918 = vld [vmem:[#allocation4 + $0x72] sm:$0xff]
        %5919 = vst.msk [vmem:[#allocation11 + $0x8] sm:$0xff] %vm5815, %v5911
        %5920 = vst.msk [vmem:[#allocation11 + $0x30] sm:$0xff] %vm5815, %v5912
        %5921 = vst.msk [vmem:[#allocation11 + $0x58] sm:$0xff] %vm5815, %v5913
        %5922 = vst.msk [vmem:[#allocation11 + $0x80] sm:$0xff] %vm5815, %v5914
        %5923 = vst.msk [vmem:[#allocation11 + $0xa8] sm:$0xff] %vm5815, %v5915
        %5924 = vst.msk [vmem:[#allocation11 + $0xd0] sm:$0xff] %vm5815, %v5916
        %5925 = vst.msk [vmem:[#allocation11 + $0xf8] sm:$0xff] %vm5815, %v5917
        %5926 = vst.msk [vmem:[#allocation11 + $0x120] sm:$0xff] %vm5815, %v5918
        %v5927 = vld [vmem:[%s5837] sm:$0xff]
        %v5928 = vld [vmem:[%s5837 + $0x10] sm:$0xff]
        %v5929 = vld [vmem:[%s5837 + $0x20] sm:$0xff]
        %v5930 = vld [vmem:[%s5837 + $0x30] sm:$0xff]
        %v5931 = vld [vmem:[%s5837 + $0x40] sm:$0xff]
        %v5932 = vld [vmem:[%s5837 + $0x50] sm:$0xff]
        %v5933 = vld [vmem:[%s5837 + $0x60] sm:$0xff]
        %v5934 = vld [vmem:[%s5837 + $0x70] sm:$0xff]
        %5943 = vrot.lane.b32.xlu0 %v5927, 64
        %v5944 = vpop.permute.xlu0 %5943
        %5945 = vrot.lane.b32.xlu0 %v5928, 64
        %v5946 = vpop.permute.xlu0 %5945
        %5947 = vrot.lane.b32.xlu0 %v5929, 64
        %v5948 = vpop.permute.xlu0 %5947
        %5949 = vrot.lane.b32.xlu0 %v5930, 64
        %v5950 = vpop.permute.xlu0 %5949
        %5951 = vrot.lane.b32.xlu0 %v5931, 64
        %v5952 = vpop.permute.xlu0 %5951
        %5953 = vrot.lane.b32.xlu0 %v5932, 64
        %v5954 = vpop.permute.xlu0 %5953
        %5955 = vrot.lane.b32.xlu0 %v5933, 64
        %v5956 = vpop.permute.xlu0 %5955
        %5957 = vrot.lane.b32.xlu0 %v5934, 64
        %v5958 = vpop.permute.xlu0 %5957
        %5967 = vst.msk [vmem:[#allocation11 + $0x8] sm:$0xff] %vm5902, %v5944
        %5968 = vst.msk [vmem:[#allocation11 + $0x30] sm:$0xff] %vm5902, %v5946
        %5969 = vst.msk [vmem:[#allocation11 + $0x58] sm:$0xff] %vm5902, %v5948
        %5970 = vst.msk [vmem:[#allocation11 + $0x80] sm:$0xff] %vm5902, %v5950
        %5971 = vst.msk [vmem:[#allocation11 + $0xa8] sm:$0xff] %vm5902, %v5952
        %5972 = vst.msk [vmem:[#allocation11 + $0xd0] sm:$0xff] %vm5902, %v5954
        %5973 = vst.msk [vmem:[#allocation11 + $0xf8] sm:$0xff] %vm5902, %v5956
        %5974 = vst.msk [vmem:[#allocation11 + $0x120] sm:$0xff] %vm5902, %v5958
        %v5975 = vld [vmem:[%s5837 + $0x1] sm:$0xff]
        %v5976 = vld [vmem:[%s5837 + $0x11] sm:$0xff]
        %v5977 = vld [vmem:[%s5837 + $0x21] sm:$0xff]
        %v5978 = vld [vmem:[%s5837 + $0x31] sm:$0xff]
        %v5979 = vld [vmem:[%s5837 + $0x41] sm:$0xff]
        %v5980 = vld [vmem:[%s5837 + $0x51] sm:$0xff]
        %v5981 = vld [vmem:[%s5837 + $0x61] sm:$0xff]
        %v5982 = vld [vmem:[%s5837 + $0x71] sm:$0xff]
        %5983 = vst.msk [vmem:[#allocation11 + $0x10] sm:$0xff] %vm5815, %v5975
        %5984 = vst.msk [vmem:[#allocation11 + $0x38] sm:$0xff] %vm5815, %v5976
        %5985 = vst.msk [vmem:[#allocation11 + $0x60] sm:$0xff] %vm5815, %v5977
        %5986 = vst.msk [vmem:[#allocation11 + $0x88] sm:$0xff] %vm5815, %v5978
        %5987 = vst.msk [vmem:[#allocation11 + $0xb0] sm:$0xff] %vm5815, %v5979
        %5988 = vst.msk [vmem:[#allocation11 + $0xd8] sm:$0xff] %vm5815, %v5980
        %5989 = vst.msk [vmem:[#allocation11 + $0x100] sm:$0xff] %vm5815, %v5981
        %5990 = vst.msk [vmem:[#allocation11 + $0x128] sm:$0xff] %vm5815, %v5982
        %v5991 = vld [vmem:[%s5837 + $0x2] sm:$0xff]
        %v5992 = vld [vmem:[%s5837 + $0x12] sm:$0xff]
        %v5993 = vld [vmem:[%s5837 + $0x22] sm:$0xff]
        %v5994 = vld [vmem:[%s5837 + $0x32] sm:$0xff]
        %v5995 = vld [vmem:[%s5837 + $0x42] sm:$0xff]
        %v5996 = vld [vmem:[%s5837 + $0x52] sm:$0xff]
        %v5997 = vld [vmem:[%s5837 + $0x62] sm:$0xff]
        %v5998 = vld [vmem:[%s5837 + $0x72] sm:$0xff]
        %6007 = vrot.lane.b32.xlu0 %v5991, 64
        %v6008 = vpop.permute.xlu0 %6007
        %6009 = vrot.lane.b32.xlu0 %v5992, 64
        %v6010 = vpop.permute.xlu0 %6009
        %6011 = vrot.lane.b32.xlu0 %v5993, 64
        %v6012 = vpop.permute.xlu0 %6011
        %6013 = vrot.lane.b32.xlu0 %v5994, 64
        %v6014 = vpop.permute.xlu0 %6013
        %6015 = vrot.lane.b32.xlu0 %v5995, 64
        %v6016 = vpop.permute.xlu0 %6015
        %6017 = vrot.lane.b32.xlu0 %v5996, 64
        %v6018 = vpop.permute.xlu0 %6017
        %6019 = vrot.lane.b32.xlu0 %v5997, 64
        %v6020 = vpop.permute.xlu0 %6019
        %6021 = vrot.lane.b32.xlu0 %v5998, 64
        %v6022 = vpop.permute.xlu0 %6021
        %6031 = vst.msk [vmem:[#allocation11 + $0x10] sm:$0xff] %vm5902, %v6008
        %6032 = vst.msk [vmem:[#allocation11 + $0x38] sm:$0xff] %vm5902, %v6010
        %6033 = vst.msk [vmem:[#allocation11 + $0x60] sm:$0xff] %vm5902, %v6012
        %6034 = vst.msk [vmem:[#allocation11 + $0x88] sm:$0xff] %vm5902, %v6014
        %6035 = vst.msk [vmem:[#allocation11 + $0xb0] sm:$0xff] %vm5902, %v6016
        %6036 = vst.msk [vmem:[#allocation11 + $0xd8] sm:$0xff] %vm5902, %v6018
        %6037 = vst.msk [vmem:[#allocation11 + $0x100] sm:$0xff] %vm5902, %v6020
        %6038 = vst.msk [vmem:[#allocation11 + $0x128] sm:$0xff] %vm5902, %v6022
        %s6039 = scalar_lea.vmem [#allocation4], 32
        %v6040 = vld [vmem:[%s6039] sm:$0xff]
        %v6041 = vld [vmem:[%s6039 + $0x10] sm:$0xff]
        %v6042 = vld [vmem:[%s6039 + $0x20] sm:$0xff]
        %v6043 = vld [vmem:[%s6039 + $0x30] sm:$0xff]
        %v6044 = vld [vmem:[%s6039 + $0x40] sm:$0xff]
        %v6045 = vld [vmem:[%s6039 + $0x50] sm:$0xff]
        %v6046 = vld [vmem:[%s6039 + $0x60] sm:$0xff]
        %v6047 = vld [vmem:[%s6039 + $0x70] sm:$0xff]
        %6048 = vst.msk [vmem:[#allocation11 + $0x18] sm:$0xff] %vm5815, %v6040
        %6049 = vst.msk [vmem:[#allocation11 + $0x40] sm:$0xff] %vm5815, %v6041
        %6050 = vst.msk [vmem:[#allocation11 + $0x68] sm:$0xff] %vm5815, %v6042
        %6051 = vst.msk [vmem:[#allocation11 + $0x90] sm:$0xff] %vm5815, %v6043
        %6052 = vst.msk [vmem:[#allocation11 + $0xb8] sm:$0xff] %vm5815, %v6044
        %6053 = vst.msk [vmem:[#allocation11 + $0xe0] sm:$0xff] %vm5815, %v6045
        %6054 = vst.msk [vmem:[#allocation11 + $0x108] sm:$0xff] %vm5815, %v6046
        %6055 = vst.msk [vmem:[#allocation11 + $0x130] sm:$0xff] %vm5815, %v6047
        %v6056 = vld [vmem:[%s6039 + $0x1] sm:$0xff]
        %v6057 = vld [vmem:[%s6039 + $0x11] sm:$0xff]
        %v6058 = vld [vmem:[%s6039 + $0x21] sm:$0xff]
        %v6059 = vld [vmem:[%s6039 + $0x31] sm:$0xff]
        %v6060 = vld [vmem:[%s6039 + $0x41] sm:$0xff]
        %v6061 = vld [vmem:[%s6039 + $0x51] sm:$0xff]
        %v6062 = vld [vmem:[%s6039 + $0x61] sm:$0xff]
        %v6063 = vld [vmem:[%s6039 + $0x71] sm:$0xff]
        %6072 = vrot.lane.b32.xlu0 %v6056, 64
        %v6073 = vpop.permute.xlu0 %6072
        %6074 = vrot.lane.b32.xlu0 %v6057, 64
        %v6075 = vpop.permute.xlu0 %6074
        %6076 = vrot.lane.b32.xlu0 %v6058, 64
        %v6077 = vpop.permute.xlu0 %6076
        %6078 = vrot.lane.b32.xlu0 %v6059, 64
        %v6079 = vpop.permute.xlu0 %6078
        %6080 = vrot.lane.b32.xlu0 %v6060, 64
        %v6081 = vpop.permute.xlu0 %6080
        %6082 = vrot.lane.b32.xlu0 %v6061, 64
        %v6083 = vpop.permute.xlu0 %6082
        %6084 = vrot.lane.b32.xlu0 %v6062, 64
        %v6085 = vpop.permute.xlu0 %6084
        %6086 = vrot.lane.b32.xlu0 %v6063, 64
        %v6087 = vpop.permute.xlu0 %6086
        %6096 = vst.msk [vmem:[#allocation11 + $0x18] sm:$0xff] %vm5902, %v6073
        %6097 = vst.msk [vmem:[#allocation11 + $0x40] sm:$0xff] %vm5902, %v6075
        %6098 = vst.msk [vmem:[#allocation11 + $0x68] sm:$0xff] %vm5902, %v6077
        %6099 = vst.msk [vmem:[#allocation11 + $0x90] sm:$0xff] %vm5902, %v6079
        %6100 = vst.msk [vmem:[#allocation11 + $0xb8] sm:$0xff] %vm5902, %v6081
        %6101 = vst.msk [vmem:[#allocation11 + $0xe0] sm:$0xff] %vm5902, %v6083
        %6102 = vst.msk [vmem:[#allocation11 + $0x108] sm:$0xff] %vm5902, %v6085
        %6103 = vst.msk [vmem:[#allocation11 + $0x130] sm:$0xff] %vm5902, %v6087
        %v6104 = vld [vmem:[%s6039 + $0x2] sm:$0xff]
        %v6105 = vld [vmem:[%s6039 + $0x12] sm:$0xff]
        %v6106 = vld [vmem:[%s6039 + $0x22] sm:$0xff]
        %v6107 = vld [vmem:[%s6039 + $0x32] sm:$0xff]
        %v6108 = vld [vmem:[%s6039 + $0x42] sm:$0xff]
        %v6109 = vld [vmem:[%s6039 + $0x52] sm:$0xff]
        %v6110 = vld [vmem:[%s6039 + $0x62] sm:$0xff]
        %v6111 = vld [vmem:[%s6039 + $0x72] sm:$0xff]
        %6112 = vst.msk [vmem:[#allocation11 + $0x20] sm:$0xff] %vm5815, %v6104
        %6113 = vst.msk [vmem:[#allocation11 + $0x48] sm:$0xff] %vm5815, %v6105
        %6114 = vst.msk [vmem:[#allocation11 + $0x70] sm:$0xff] %vm5815, %v6106
        %6115 = vst.msk [vmem:[#allocation11 + $0x98] sm:$0xff] %vm5815, %v6107
        %6116 = vst.msk [vmem:[#allocation11 + $0xc0] sm:$0xff] %vm5815, %v6108
        %6117 = vst.msk [vmem:[#allocation11 + $0xe8] sm:$0xff] %vm5815, %v6109
        %6118 = vst.msk [vmem:[#allocation11 + $0x110] sm:$0xff] %vm5815, %v6110
        %6119 = vst.msk [vmem:[#allocation11 + $0x138] sm:$0xff] %vm5815, %v6111
        %v6120 = vld [vmem:[#allocation11] sm:$0xff]
        %v6121 = vld [vmem:[#allocation11 + $0x8] sm:$0xff]
        %v6122 = vld [vmem:[#allocation11 + $0x10] sm:$0xff]
        %v6123 = vld [vmem:[#allocation11 + $0x18] sm:$0xff]
        %v6124 = vld [vmem:[#allocation11 + $0x20] sm:$0xff]
        %v6125 = vld [vmem:[#allocation11 + $0x28] sm:$0xff]
        %v6126 = vld [vmem:[#allocation11 + $0x30] sm:$0xff]
        %v6127 = vld [vmem:[#allocation11 + $0x38] sm:$0xff]
        %v6128 = vld [vmem:[#allocation11 + $0x40] sm:$0xff]
        %v6129 = vld [vmem:[#allocation11 + $0x48] sm:$0xff]
        %v6130 = vld [vmem:[#allocation11 + $0x50] sm:$0xff]
        %v6131 = vld [vmem:[#allocation11 + $0x58] sm:$0xff]
        %v6132 = vld [vmem:[#allocation11 + $0x60] sm:$0xff]
        %v6133 = vld [vmem:[#allocation11 + $0x68] sm:$0xff]
        %v6134 = vld [vmem:[#allocation11 + $0x70] sm:$0xff]
        %v6135 = vld [vmem:[#allocation11 + $0x78] sm:$0xff]
        %v6136 = vld [vmem:[#allocation11 + $0x80] sm:$0xff]
        %v6137 = vld [vmem:[#allocation11 + $0x88] sm:$0xff]
        %v6138 = vld [vmem:[#allocation11 + $0x90] sm:$0xff]
        %v6139 = vld [vmem:[#allocation11 + $0x98] sm:$0xff]
        %v6140 = vld [vmem:[#allocation11 + $0xa0] sm:$0xff]
        %v6141 = vld [vmem:[#allocation11 + $0xa8] sm:$0xff]
        %v6142 = vld [vmem:[#allocation11 + $0xb0] sm:$0xff]
        %v6143 = vld [vmem:[#allocation11 + $0xb8] sm:$0xff]
        %v6144 = vld [vmem:[#allocation11 + $0xc0] sm:$0xff]
        %v6145 = vld [vmem:[#allocation11 + $0xc8] sm:$0xff]
        %v6146 = vld [vmem:[#allocation11 + $0xd0] sm:$0xff]
        %v6147 = vld [vmem:[#allocation11 + $0xd8] sm:$0xff]
        %v6148 = vld [vmem:[#allocation11 + $0xe0] sm:$0xff]
        %v6149 = vld [vmem:[#allocation11 + $0xe8] sm:$0xff]
        %v6150 = vld [vmem:[#allocation11 + $0xf0] sm:$0xff]
        %v6151 = vld [vmem:[#allocation11 + $0xf8] sm:$0xff]
        %v6152 = vld [vmem:[#allocation11 + $0x100] sm:$0xff]
        %v6153 = vld [vmem:[#allocation11 + $0x108] sm:$0xff]
        %v6154 = vld [vmem:[#allocation11 + $0x110] sm:$0xff]
        %v6155 = vld [vmem:[#allocation11 + $0x118] sm:$0xff]
        %v6156 = vld [vmem:[#allocation11 + $0x120] sm:$0xff]
        %v6157 = vld [vmem:[#allocation11 + $0x128] sm:$0xff]
        %v6158 = vld [vmem:[#allocation11 + $0x130] sm:$0xff]
        %v6159 = vld [vmem:[#allocation11 + $0x138] sm:$0xff]
        %v6160 = vld [vmem:[#allocation19] sm:$0xff]
        %v6161 = vld [vmem:[#allocation19 + $0x8] sm:$0xff]
        %v6162 = vld [vmem:[#allocation19 + $0x10] sm:$0xff]
        %v6163 = vld [vmem:[#allocation19 + $0x18] sm:$0xff]
        %v6164 = vld [vmem:[#allocation19 + $0x20] sm:$0xff]
        %v6165 = vld [vmem:[#allocation19 + $0x28] sm:$0xff]
        %v6166 = vld [vmem:[#allocation19 + $0x30] sm:$0xff]
        %v6167 = vld [vmem:[#allocation19 + $0x38] sm:$0xff]
        %v6168 = vld [vmem:[#allocation19 + $0x40] sm:$0xff]
        %v6169 = vld [vmem:[#allocation19 + $0x48] sm:$0xff]
        %v6170 = vld [vmem:[#allocation19 + $0x50] sm:$0xff]
        %v6171 = vld [vmem:[#allocation19 + $0x58] sm:$0xff]
        %v6172 = vld [vmem:[#allocation19 + $0x60] sm:$0xff]
        %v6173 = vld [vmem:[#allocation19 + $0x68] sm:$0xff]
        %v6174 = vld [vmem:[#allocation19 + $0x70] sm:$0xff]
        %v6175 = vld [vmem:[#allocation19 + $0x78] sm:$0xff]
        %v6176 = vld [vmem:[#allocation19 + $0x80] sm:$0xff]
        %v6177 = vld [vmem:[#allocation19 + $0x88] sm:$0xff]
        %v6178 = vld [vmem:[#allocation19 + $0x90] sm:$0xff]
        %v6179 = vld [vmem:[#allocation19 + $0x98] sm:$0xff]
        %v6180 = vld [vmem:[#allocation19 + $0xa0] sm:$0xff]
        %v6181 = vld [vmem:[#allocation19 + $0xa8] sm:$0xff]
        %v6182 = vld [vmem:[#allocation19 + $0xb0] sm:$0xff]
        %v6183 = vld [vmem:[#allocation19 + $0xb8] sm:$0xff]
        %v6184 = vld [vmem:[#allocation19 + $0xc0] sm:$0xff]
        %v6185 = vld [vmem:[#allocation19 + $0xc8] sm:$0xff]
        %v6186 = vld [vmem:[#allocation19 + $0xd0] sm:$0xff]
        %v6187 = vld [vmem:[#allocation19 + $0xd8] sm:$0xff]
        %v6188 = vld [vmem:[#allocation19 + $0xe0] sm:$0xff]
        %v6189 = vld [vmem:[#allocation19 + $0xe8] sm:$0xff]
        %v6190 = vld [vmem:[#allocation19 + $0xf0] sm:$0xff]
        %v6191 = vld [vmem:[#allocation19 + $0xf8] sm:$0xff]
        %v6192 = vld [vmem:[#allocation19 + $0x100] sm:$0xff]
        %v6193 = vld [vmem:[#allocation19 + $0x108] sm:$0xff]
        %v6194 = vld [vmem:[#allocation19 + $0x110] sm:$0xff]
        %v6195 = vld [vmem:[#allocation19 + $0x118] sm:$0xff]
        %v6196 = vld [vmem:[#allocation19 + $0x120] sm:$0xff]
        %v6197 = vld [vmem:[#allocation19 + $0x128] sm:$0xff]
        %v6198 = vld [vmem:[#allocation19 + $0x130] sm:$0xff]
        %v6199 = vld [vmem:[#allocation19 + $0x138] sm:$0xff]
        %v6200 = vld [vmem:[#allocation19 + $0x140] sm:$0xff]
        %v6201 = vld [vmem:[#allocation19 + $0x148] sm:$0xff]
        %v6202 = vld [vmem:[#allocation19 + $0x150] sm:$0xff]
        %v6203 = vld [vmem:[#allocation19 + $0x158] sm:$0xff]
        %v6204 = vld [vmem:[#allocation19 + $0x160] sm:$0xff]
        %v6205 = vld [vmem:[#allocation19 + $0x168] sm:$0xff]
        %v6206 = vld [vmem:[#allocation19 + $0x170] sm:$0xff]
        %v6207 = vld [vmem:[#allocation19 + $0x178] sm:$0xff]
        %v6208 = vld [vmem:[#allocation19 + $0x180] sm:$0xff]
        %v6209 = vld [vmem:[#allocation19 + $0x188] sm:$0xff]
        %v6210 = vld [vmem:[#allocation19 + $0x190] sm:$0xff]
        %v6211 = vld [vmem:[#allocation19 + $0x198] sm:$0xff]
        %v6212 = vld [vmem:[#allocation19 + $0x1a0] sm:$0xff]
        %v6213 = vld [vmem:[#allocation19 + $0x1a8] sm:$0xff]
        %v6214 = vld [vmem:[#allocation19 + $0x1b0] sm:$0xff]
        %v6215 = vld [vmem:[#allocation19 + $0x1b8] sm:$0xff]
        %v6216 = vld [vmem:[#allocation19 + $0x1c0] sm:$0xff]
        %v6217 = vld [vmem:[#allocation19 + $0x1c8] sm:$0xff]
        %v6218 = vld [vmem:[#allocation19 + $0x1d0] sm:$0xff]
        %v6219 = vld [vmem:[#allocation19 + $0x1d8] sm:$0xff]
        %v6220 = vld [vmem:[#allocation19 + $0x1e0] sm:$0xff]
        %v6221 = vld [vmem:[#allocation19 + $0x1e8] sm:$0xff]
        %v6222 = vld [vmem:[#allocation19 + $0x1f0] sm:$0xff]
        %v6223 = vld [vmem:[#allocation19 + $0x1f8] sm:$0xff]
        %v6224 = vld [vmem:[#allocation19 + $0x200] sm:$0xff]
        %v6225 = vld [vmem:[#allocation19 + $0x208] sm:$0xff]
        %v6226 = vld [vmem:[#allocation19 + $0x210] sm:$0xff]
        %v6227 = vld [vmem:[#allocation19 + $0x218] sm:$0xff]
        %v6228 = vld [vmem:[#allocation19 + $0x220] sm:$0xff]
        %v6229 = vld [vmem:[#allocation19 + $0x228] sm:$0xff]
        %v6230 = vld [vmem:[#allocation19 + $0x230] sm:$0xff]
        %v6231 = vld [vmem:[#allocation19 + $0x238] sm:$0xff]
        %v6232 = vld [vmem:[%s8] sm:$0x1]
        %v6233 = vld [vmem:[%s8 + $0x1] sm:$0x1]
        %v6234 = vld [vmem:[%s8 + $0x2] sm:$0x1]
        %v6235 = vlaneseq
        %v6236 = vshrl.u32 %v6235, 7
        %v6237 = vsub.s32 0, %v6236
        %v6238 = vrot.slane %v6232, %v6237
        %v6240 = vsel %vm5815, %v6124, 0
        %v6243 = vsel %vm5815, %v6129, 0
        %v6246 = vsel %vm5815, %v6134, 0
        %v6249 = vsel %vm5815, %v6139, 0
        %v6252 = vsel %vm5815, %v6144, 0
        %v6255 = vsel %vm5815, %v6149, 0
        %v6258 = vsel %vm5815, %v6154, 0
        %v6261 = vsel %vm5815, %v6159, 0
        %6263 = vmatprep.subr.mxu0 0.0
        %6264 = vmatpush1.msra.mxu0 %v6160
        %6265 = vmatprep.subr.mxu0 0.0
        %6266 = vmatpush1.msra.mxu0 %v6161
        %6267 = vmatprep.subr.mxu0 0.0
        %6268 = vmatpush1.msra.mxu0 %v6162
        %6269 = vmatprep.subr.mxu0 0.0
        %6270 = vmatpush1.msra.mxu0 %v6163
        %6271 = vmatprep.subr.mxu0 0.0
        %6272 = vmatpush1.msra.mxu0 %v6164
        %6273 = vmatprep.subr.mxu0 0.0
        %6274 = vmatpush1.msra.mxu0 %v6165
        %6275 = vmatprep.subr.mxu0 0.0
        %6276 = vmatpush1.msra.mxu0 %v6166
        %6277 = vmatprep.subr.mxu0 0.0
        %6278 = vmatpush1.msra.mxu0 %v6167
        %6279 = vmatprep.subr.mxu0 0.0
        %6280 = vmatpush1.msra.mxu0 %v6168
        %6281 = vmatprep.subr.mxu0 0.0
        %6282 = vmatpush1.msra.mxu0 %v6169
        %6283 = vmatprep.subr.mxu0 0.0
        %6284 = vmatpush1.msra.mxu0 %v6170
        %6285 = vmatprep.subr.mxu0 0.0
        %6286 = vmatpush1.msra.mxu0 %v6171
        %6287 = vmatprep.subr.mxu0 0.0
        %6288 = vmatpush1.msra.mxu0 %v6172
        %6289 = vmatprep.subr.mxu0 0.0
        %6290 = vmatpush1.msra.mxu0 %v6173
        %6291 = vmatprep.subr.mxu0 0.0
        %6292 = vmatpush1.msra.mxu0 %v6174
        %6293 = vmatprep.subr.mxu0 0.0
        %6294 = vmatpush1.msra.mxu0 %v6175
        %6295 = vmatprep.subr.mxu0 0.0
        %6296 = vmatpush1.msra.mxu0 %v6176
        %6297 = vmatprep.subr.mxu0 0.0
        %6298 = vmatpush1.msra.mxu0 %v6177
        %6299 = vmatprep.subr.mxu0 0.0
        %6300 = vmatpush1.msra.mxu0 %v6178
        %6301 = vmatprep.subr.mxu0 0.0
        %6302 = vmatpush1.msra.mxu0 %v6179
        %6303 = vmatprep.subr.mxu0 0.0
        %6304 = vmatpush1.msra.mxu0 %v6180
        %6305 = vmatprep.subr.mxu0 0.0
        %6306 = vmatpush1.msra.mxu0 %v6181
        %6307 = vmatprep.subr.mxu0 0.0
        %6308 = vmatpush1.msra.mxu0 %v6182
        %6309 = vmatprep.subr.mxu0 0.0
        %6310 = vmatpush1.msra.mxu0 %v6183
        %6311 = vmatprep.subr.mxu0 0.0
        %6312 = vmatpush1.msra.mxu0 %v6184
        %6313 = vmatprep.subr.mxu0 0.0
        %6314 = vmatpush1.msra.mxu0 %v6185
        %6315 = vmatprep.subr.mxu0 0.0
        %6316 = vmatpush1.msra.mxu0 %v6186
        %6317 = vmatprep.subr.mxu0 0.0
        %6318 = vmatpush1.msra.mxu0 %v6187
        %6319 = vmatprep.subr.mxu0 0.0
        %6320 = vmatpush1.msra.mxu0 %v6188
        %6321 = vmatprep.subr.mxu0 0.0
        %6322 = vmatpush1.msra.mxu0 %v6189
        %6323 = vmatprep.subr.mxu0 0.0
        %6324 = vmatpush1.msra.mxu0 %v6190
        %6325 = vmatprep.subr.mxu0 0.0
        %6326 = vmatpush1.msra.mxu0 %v6191
        %6327 = vmatprep.mubr.f32.mxu0 %v6121
        %6328 = vmatmul.mubr.f32.gmra.mrb[0].mxu0 %v6120
        %v6329 = vpop.f32.mrb[0].mxu0
        %v6330 = vadd.f32 %v6238, %v6329
        %v6331 = vpop.f32.mrb[0].mxu0
        %6332 = vmatprep.mubr.f32.mxu0 %v6126
        %6333 = vmatmul.mubr.f32.gmra.mrb[0].mxu0 %v6125
        %v6334 = vpop.f32.mrb[0].mxu0
        %v6335 = vadd.f32 %v6238, %v6334
        %v6336 = vpop.f32.mrb[0].mxu0
        %6337 = vmatprep.mubr.f32.mxu0 %v6131
        %6338 = vmatmul.mubr.f32.gmra.mrb[0].mxu0 %v6130
        %v6339 = vpop.f32.mrb[0].mxu0
        %v6340 = vadd.f32 %v6238, %v6339
        %v6341 = vpop.f32.mrb[0].mxu0
        %6342 = vmatprep.mubr.f32.mxu0 %v6136
        %6343 = vmatmul.mubr.f32.gmra.mrb[0].mxu0 %v6135
        %v6344 = vpop.f32.mrb[0].mxu0
        %v6345 = vadd.f32 %v6238, %v6344
        %v6346 = vpop.f32.mrb[0].mxu0
        %6347 = vmatprep.mubr.f32.mxu0 %v6141
        %6348 = vmatmul.mubr.f32.gmra.mrb[0].mxu0 %v6140
        %v6349 = vpop.f32.mrb[0].mxu0
        %v6350 = vadd.f32 %v6238, %v6349
        %v6351 = vpop.f32.mrb[0].mxu0
        %6352 = vmatprep.mubr.f32.mxu0 %v6146
        %6353 = vmatmul.mubr.f32.gmra.mrb[0].mxu0 %v6145
        %v6354 = vpop.f32.mrb[0].mxu0
        %v6355 = vadd.f32 %v6238, %v6354
        %v6356 = vpop.f32.mrb[0].mxu0
        %6357 = vmatprep.mubr.f32.mxu0 %v6151
        %6358 = vmatmul.mubr.f32.gmra.mrb[0].mxu0 %v6150
        %v6359 = vpop.f32.mrb[0].mxu0
        %v6360 = vadd.f32 %v6238, %v6359
        %v6361 = vpop.f32.mrb[0].mxu0
        %6362 = vmatprep.mubr.f32.mxu0 %v6156
        %6363 = vmatmul.mubr.f32.gmra.mrb[0].mxu0 %v6155
        %v6364 = vpop.f32.mrb[0].mxu0
        %v6365 = vadd.f32 %v6238, %v6364
        %v6366 = vpop.f32.mrb[0].mxu0
        %6367 = vdwg.mxu0
        %6368 = vmatprep.subr.mxu0 0.0
        %6369 = vmatpush1.msra.mxu0 %v6192
        %6370 = vmatprep.subr.mxu0 0.0
        %6371 = vmatpush1.msra.mxu0 %v6193
        %6372 = vmatprep.subr.mxu0 0.0
        %6373 = vmatpush1.msra.mxu0 %v6194
        %6374 = vmatprep.subr.mxu0 0.0
        %6375 = vmatpush1.msra.mxu0 %v6195
        %6376 = vmatprep.subr.mxu0 0.0
        %6377 = vmatpush1.msra.mxu0 %v6196
        %6378 = vmatprep.subr.mxu0 0.0
        %6379 = vmatpush1.msra.mxu0 %v6197
        %6380 = vmatprep.subr.mxu0 0.0
        %6381 = vmatpush1.msra.mxu0 %v6198
        %6382 = vmatprep.subr.mxu0 0.0
        %6383 = vmatpush1.msra.mxu0 %v6199
        %6384 = vmatprep.subr.mxu0 0.0
        %6385 = vmatpush1.msra.mxu0 %v6200
        %6386 = vmatprep.subr.mxu0 0.0
        %6387 = vmatpush1.msra.mxu0 %v6201
        %6388 = vmatprep.subr.mxu0 0.0
        %6389 = vmatpush1.msra.mxu0 %v6202
        %6390 = vmatprep.subr.mxu0 0.0
        %6391 = vmatpush1.msra.mxu0 %v6203
        %6392 = vmatprep.subr.mxu0 0.0
        %6393 = vmatpush1.msra.mxu0 %v6204
        %6394 = vmatprep.subr.mxu0 0.0
        %6395 = vmatpush1.msra.mxu0 %v6205
        %6396 = vmatprep.subr.mxu0 0.0
        %6397 = vmatpush1.msra.mxu0 %v6206
        %6398 = vmatprep.subr.mxu0 0.0
        %6399 = vmatpush1.msra.mxu0 %v6207
        %6400 = vmatprep.subr.mxu0 0.0
        %6401 = vmatpush1.msra.mxu0 %v6208
        %6402 = vmatprep.subr.mxu0 0.0
        %6403 = vmatpush1.msra.mxu0 %v6209
        %6404 = vmatprep.subr.mxu0 0.0
        %6405 = vmatpush1.msra.mxu0 %v6210
        %6406 = vmatprep.subr.mxu0 0.0
        %6407 = vmatpush1.msra.mxu0 %v6211
        %6408 = vmatprep.subr.mxu0 0.0
        %6409 = vmatpush1.msra.mxu0 %v6212
        %6410 = vmatprep.subr.mxu0 0.0
        %6411 = vmatpush1.msra.mxu0 %v6213
        %6412 = vmatprep.subr.mxu0 0.0
        %6413 = vmatpush1.msra.mxu0 %v6214
        %6414 = vmatprep.subr.mxu0 0.0
        %6415 = vmatpush1.msra.mxu0 %v6215
        %6416 = vmatprep.subr.mxu0 0.0
        %6417 = vmatpush1.msra.mxu0 %v6216
        %6418 = vmatprep.subr.mxu0 0.0
        %6419 = vmatpush1.msra.mxu0 %v6217
        %6420 = vmatprep.subr.mxu0 0.0
        %6421 = vmatpush1.msra.mxu0 %v6218
        %6422 = vmatprep.subr.mxu0 0.0
        %6423 = vmatpush1.msra.mxu0 %v6219
        %6424 = vmatprep.subr.mxu0 0.0
        %6425 = vmatpush1.msra.mxu0 %v6220
        %6426 = vmatprep.subr.mxu0 0.0
        %6427 = vmatpush1.msra.mxu0 %v6221
        %6428 = vmatprep.subr.mxu0 0.0
        %6429 = vmatpush1.msra.mxu0 %v6222
        %6430 = vmatprep.subr.mxu0 0.0
        %6431 = vmatpush1.msra.mxu0 %v6223
        %6432 = vmatprep.mubr.f32.mxu0 %v6123
        %6433 = vmatmul.mubr.f32.gmra.mrb[0].mxu0 %v6122
        %v6434 = vpop.f32.mrb[0].mxu0
        %v6435 = vadd.f32 %v6330, %v6434
        %v6436 = vpop.f32.mrb[0].mxu0
        %6437 = vmatprep.mubr.f32.mxu0 %v6128
        %6438 = vmatmul.mubr.f32.gmra.mrb[0].mxu0 %v6127
        %v6439 = vpop.f32.mrb[0].mxu0
        %v6440 = vadd.f32 %v6335, %v6439
        %v6441 = vpop.f32.mrb[0].mxu0
        %6442 = vmatprep.mubr.f32.mxu0 %v6133
        %6443 = vmatmul.mubr.f32.gmra.mrb[0].mxu0 %v6132
        %v6444 = vpop.f32.mrb[0].mxu0
        %v6445 = vadd.f32 %v6340, %v6444
        %v6446 = vpop.f32.mrb[0].mxu0
        %6447 = vmatprep.mubr.f32.mxu0 %v6138
        %6448 = vmatmul.mubr.f32.gmra.mrb[0].mxu0 %v6137
        %v6449 = vpop.f32.mrb[0].mxu0
        %v6450 = vadd.f32 %v6345, %v6449
        %v6451 = vpop.f32.mrb[0].mxu0
        %6452 = vmatprep.mubr.f32.mxu0 %v6143
        %6453 = vmatmul.mubr.f32.gmra.mrb[0].mxu0 %v6142
        %v6454 = vpop.f32.mrb[0].mxu0
        %v6455 = vadd.f32 %v6350, %v6454
        %v6456 = vpop.f32.mrb[0].mxu0
        %6457 = vmatprep.mubr.f32.mxu0 %v6148
        %6458 = vmatmul.mubr.f32.gmra.mrb[0].mxu0 %v6147
        %v6459 = vpop.f32.mrb[0].mxu0
        %v6460 = vadd.f32 %v6355, %v6459
        %v6461 = vpop.f32.mrb[0].mxu0
        %6462 = vmatprep.mubr.f32.mxu0 %v6153
        %6463 = vmatmul.mubr.f32.gmra.mrb[0].mxu0 %v6152
        %v6464 = vpop.f32.mrb[0].mxu0
        %v6465 = vadd.f32 %v6360, %v6464
        %v6466 = vpop.f32.mrb[0].mxu0
        %6467 = vmatprep.mubr.f32.mxu0 %v6158
        %6468 = vmatmul.mubr.f32.gmra.mrb[0].mxu0 %v6157
        %v6469 = vpop.f32.mrb[0].mxu0
        %v6470 = vadd.f32 %v6365, %v6469
        %v6471 = vpop.f32.mrb[0].mxu0
        %6472 = vdwg.mxu0
        %6473 = vmatprep.subr.mxu0 0.0
        %6474 = vmatpush1.msra.mxu0 %v6224
        %6475 = vmatprep.subr.mxu0 0.0
        %6476 = vmatpush1.msra.mxu0 %v6225
        %6477 = vmatprep.subr.mxu0 0.0
        %6478 = vmatpush1.msra.mxu0 %v6226
        %6479 = vmatprep.subr.mxu0 0.0
        %6480 = vmatpush1.msra.mxu0 %v6227
        %6481 = vmatprep.subr.mxu0 0.0
        %6482 = vmatpush1.msra.mxu0 %v6228
        %6483 = vmatprep.subr.mxu0 0.0
        %6484 = vmatpush1.msra.mxu0 %v6229
        %6485 = vmatprep.subr.mxu0 0.0
        %6486 = vmatpush1.msra.mxu0 %v6230
        %6487 = vmatprep.subr.mxu0 0.0
        %6488 = vmatpush1.msra.mxu0 %v6231
        %6489 = vmatprep.subr.mxu0 0.0
        %6490 = vmatpush1.msra.mxu0 0.0
        %6491 = vmatprep.subr.mxu0 0.0
        %6492 = vmatpush1.msra.mxu0 0.0
        %6493 = vmatprep.subr.mxu0 0.0
        %6494 = vmatpush1.msra.mxu0 0.0
        %6495 = vmatprep.subr.mxu0 0.0
        %6496 = vmatpush1.msra.mxu0 0.0
        %6497 = vmatprep.subr.mxu0 0.0
        %6498 = vmatpush1.msra.mxu0 0.0
        %6499 = vmatprep.subr.mxu0 0.0
        %6500 = vmatpush1.msra.mxu0 0.0
        %6501 = vmatprep.subr.mxu0 0.0
        %6502 = vmatpush1.msra.mxu0 0.0
        %6503 = vmatprep.subr.mxu0 0.0
        %6504 = vmatpush1.msra.mxu0 0.0
        %6505 = vmatprep.subr.mxu0 0.0
        %6506 = vmatpush1.msra.mxu0 0.0
        %6507 = vmatprep.subr.mxu0 0.0
        %6508 = vmatpush1.msra.mxu0 0.0
        %6509 = vmatprep.subr.mxu0 0.0
        %6510 = vmatpush1.msra.mxu0 0.0
        %6511 = vmatprep.subr.mxu0 0.0
        %6512 = vmatpush1.msra.mxu0 0.0
        %6513 = vmatprep.subr.mxu0 0.0
        %6514 = vmatpush1.msra.mxu0 0.0
        %6515 = vmatprep.subr.mxu0 0.0
        %6516 = vmatpush1.msra.mxu0 0.0
        %6517 = vmatprep.subr.mxu0 0.0
        %6518 = vmatpush1.msra.mxu0 0.0
        %6519 = vmatprep.subr.mxu0 0.0
        %6520 = vmatpush1.msra.mxu0 0.0
        %6521 = vmatprep.subr.mxu0 0.0
        %6522 = vmatpush1.msra.mxu0 0.0
        %6523 = vmatprep.subr.mxu0 0.0
        %6524 = vmatpush1.msra.mxu0 0.0
        %6525 = vmatprep.subr.mxu0 0.0
        %6526 = vmatpush1.msra.mxu0 0.0
        %6527 = vmatprep.subr.mxu0 0.0
        %6528 = vmatpush1.msra.mxu0 0.0
        %6529 = vmatprep.subr.mxu0 0.0
        %6530 = vmatpush1.msra.mxu0 0.0
        %6531 = vmatprep.subr.mxu0 0.0
        %6532 = vmatpush1.msra.mxu0 0.0
        %6533 = vmatprep.subr.mxu0 0.0
        %6534 = vmatpush1.msra.mxu0 0.0
        %6535 = vmatprep.subr.mxu0 0.0
        %6536 = vmatpush1.msra.mxu0 0.0
        %6537 = vmatprep.mubr.f32.mxu0 0.0
        %6538 = vmatmul.mubr.f32.gmra.mrb[0].mxu0 %v6240
        %v6539 = vpop.f32.mrb[0].mxu0
        %v6540 = vadd.f32 %v6435, %v6539
        %v6541 = vpop.f32.mrb[0].mxu0
        %6542 = vmatprep.mubr.f32.mxu0 0.0
        %6543 = vmatmul.mubr.f32.gmra.mrb[0].mxu0 %v6243
        %v6544 = vpop.f32.mrb[0].mxu0
        %v6545 = vadd.f32 %v6440, %v6544
        %v6546 = vpop.f32.mrb[0].mxu0
        %6547 = vmatprep.mubr.f32.mxu0 0.0
        %6548 = vmatmul.mubr.f32.gmra.mrb[0].mxu0 %v6246
        %v6549 = vpop.f32.mrb[0].mxu0
        %v6550 = vadd.f32 %v6445, %v6549
        %v6551 = vpop.f32.mrb[0].mxu0
        %6552 = vmatprep.mubr.f32.mxu0 0.0
        %6553 = vmatmul.mubr.f32.gmra.mrb[0].mxu0 %v6249
        %v6554 = vpop.f32.mrb[0].mxu0
        %v6555 = vadd.f32 %v6450, %v6554
        %v6556 = vpop.f32.mrb[0].mxu0
        %6557 = vmatprep.mubr.f32.mxu0 0.0
        %6558 = vmatmul.mubr.f32.gmra.mrb[0].mxu0 %v6252
        %v6559 = vpop.f32.mrb[0].mxu0
        %v6560 = vadd.f32 %v6455, %v6559
        %v6561 = vpop.f32.mrb[0].mxu0
        %6562 = vmatprep.mubr.f32.mxu0 0.0
        %6563 = vmatmul.mubr.f32.gmra.mrb[0].mxu0 %v6255
        %v6564 = vpop.f32.mrb[0].mxu0
        %v6565 = vadd.f32 %v6460, %v6564
        %v6566 = vpop.f32.mrb[0].mxu0
        %6567 = vmatprep.mubr.f32.mxu0 0.0
        %6568 = vmatmul.mubr.f32.gmra.mrb[0].mxu0 %v6258
        %v6569 = vpop.f32.mrb[0].mxu0
        %v6570 = vadd.f32 %v6465, %v6569
        %v6571 = vpop.f32.mrb[0].mxu0
        %6572 = vmatprep.mubr.f32.mxu0 0.0
        %6573 = vmatmul.mubr.f32.gmra.mrb[0].mxu0 %v6261
        %v6574 = vpop.f32.mrb[0].mxu0
        %v6575 = vadd.f32 %v6470, %v6574
        %v6576 = vpop.f32.mrb[0].mxu0
        %6577 = vdwg.mxu0
        %v6578 = vmax.f32 %v6540, 0.0
        %v6579 = vmax.f32 %v6545, 0.0
        %v6580 = vmax.f32 %v6550, 0.0
        %v6581 = vmax.f32 %v6555, 0.0
        %v6582 = vmax.f32 %v6560, 0.0
        %v6583 = vmax.f32 %v6565, 0.0
        %v6584 = vmax.f32 %v6570, 0.0
        %v6585 = vmax.f32 %v6575, 0.0
        %v6586 = vlaneseq
        %v6587 = vshrl.u32 %v6586, 7
        %v6588 = vsub.s32 0, %v6587
        %v6589 = vrot.slane %v6233, %v6588
        %v6590 = vmul.f32 %v6578, %v6589
        %v6591 = vmul.f32 %v6579, %v6589
        %v6592 = vmul.f32 %v6580, %v6589
        %v6593 = vmul.f32 %v6581, %v6589
        %v6594 = vmul.f32 %v6582, %v6589
        %v6595 = vmul.f32 %v6583, %v6589
        %v6596 = vmul.f32 %v6584, %v6589
        %v6597 = vmul.f32 %v6585, %v6589
        %v6598 = vlaneseq
        %v6599 = vshrl.u32 %v6598, 7
        %v6600 = vsub.s32 0, %v6599
        %v6601 = vrot.slane %v6234, %v6600
        %v6602 = vadd.f32 %v6590, %v6601
        %v6603 = vadd.f32 %v6591, %v6601
        %v6604 = vadd.f32 %v6592, %v6601
        %v6605 = vadd.f32 %v6593, %v6601
        %v6606 = vadd.f32 %v6594, %v6601
        %v6607 = vadd.f32 %v6595, %v6601
        %v6608 = vadd.f32 %v6596, %v6601
        %v6609 = vadd.f32 %v6597, %v6601
        %v6618 = vcombine.high %v6602, %v6602
        %v6620 = vunpack.c.l.s4 1983009808
        %v6621 = vunpack.c.0.s8 %v6620
        %v6622 = vlaneseq
        %v6623 = vshrl.u32 %v6622, 7
        %v6624 = vsub.s32 %v6621, %v6623
        %v6625 = vrot.slane %v6602, %v6624
        %v6627 = vunpack.c.l.s4 1983009808
        %v6628 = vunpack.c.0.s8 %v6627
        %v6629 = vlaneseq
        %v6630 = vshrl.u32 %v6629, 7
        %v6631 = vsub.s32 %v6628, %v6630
        %v6632 = vrot.slane %v6618, %v6631
        %v6633 = vcombine.high %v6625, %v6625
        %v6634 = vcombine.high %v6632, %v6632
        %v6635 = vcombine.high %v6603, %v6603
        %v6637 = vunpack.c.l.s4 1983009808
        %v6638 = vunpack.c.0.s8 %v6637
        %v6639 = vlaneseq
        %v6640 = vshrl.u32 %v6639, 7
        %v6641 = vsub.s32 %v6638, %v6640
        %v6642 = vrot.slane %v6603, %v6641
        %v6644 = vunpack.c.l.s4 1983009808
        %v6645 = vunpack.c.0.s8 %v6644
        %v6646 = vlaneseq
        %v6647 = vshrl.u32 %v6646, 7
        %v6648 = vsub.s32 %v6645, %v6647
        %v6649 = vrot.slane %v6635, %v6648
        %v6650 = vcombine.high %v6642, %v6642
        %v6651 = vcombine.high %v6649, %v6649
        %v6652 = vcombine.high %v6604, %v6604
        %v6654 = vunpack.c.l.s4 1983009808
        %v6655 = vunpack.c.0.s8 %v6654
        %v6656 = vlaneseq
        %v6657 = vshrl.u32 %v6656, 7
        %v6658 = vsub.s32 %v6655, %v6657
        %v6659 = vrot.slane %v6604, %v6658
        %v6661 = vunpack.c.l.s4 1983009808
        %v6662 = vunpack.c.0.s8 %v6661
        %v6663 = vlaneseq
        %v6664 = vshrl.u32 %v6663, 7
        %v6665 = vsub.s32 %v6662, %v6664
        %v6666 = vrot.slane %v6652, %v6665
        %v6667 = vcombine.high %v6659, %v6659
        %v6668 = vcombine.high %v6666, %v6666
        %v6669 = vcombine.high %v6605, %v6605
        %v6671 = vunpack.c.l.s4 1983009808
        %v6672 = vunpack.c.0.s8 %v6671
        %v6673 = vlaneseq
        %v6674 = vshrl.u32 %v6673, 7
        %v6675 = vsub.s32 %v6672, %v6674
        %v6676 = vrot.slane %v6605, %v6675
        %v6678 = vunpack.c.l.s4 1983009808
        %v6679 = vunpack.c.0.s8 %v6678
        %v6680 = vlaneseq
        %v6681 = vshrl.u32 %v6680, 7
        %v6682 = vsub.s32 %v6679, %v6681
        %v6683 = vrot.slane %v6669, %v6682
        %v6684 = vcombine.high %v6676, %v6676
        %v6685 = vcombine.high %v6683, %v6683
        %v6686 = vcombine.high %v6606, %v6606
        %v6688 = vunpack.c.l.s4 1983009808
        %v6689 = vunpack.c.0.s8 %v6688
        %v6690 = vlaneseq
        %v6691 = vshrl.u32 %v6690, 7
        %v6692 = vsub.s32 %v6689, %v6691
        %v6693 = vrot.slane %v6606, %v6692
        %v6695 = vunpack.c.l.s4 1983009808
        %v6696 = vunpack.c.0.s8 %v6695
        %v6697 = vlaneseq
        %v6698 = vshrl.u32 %v6697, 7
        %v6699 = vsub.s32 %v6696, %v6698
        %v6700 = vrot.slane %v6686, %v6699
        %v6701 = vcombine.high %v6693, %v6693
        %v6702 = vcombine.high %v6700, %v6700
        %v6703 = vcombine.high %v6607, %v6607
        %v6705 = vunpack.c.l.s4 1983009808
        %v6706 = vunpack.c.0.s8 %v6705
        %v6707 = vlaneseq
        %v6708 = vshrl.u32 %v6707, 7
        %v6709 = vsub.s32 %v6706, %v6708
        %v6710 = vrot.slane %v6607, %v6709
        %v6712 = vunpack.c.l.s4 1983009808
        %v6713 = vunpack.c.0.s8 %v6712
        %v6714 = vlaneseq
        %v6715 = vshrl.u32 %v6714, 7
        %v6716 = vsub.s32 %v6713, %v6715
        %v6717 = vrot.slane %v6703, %v6716
        %v6718 = vcombine.high %v6710, %v6710
        %v6719 = vcombine.high %v6717, %v6717
        %v6720 = vcombine.high %v6608, %v6608
        %v6722 = vunpack.c.l.s4 1983009808
        %v6723 = vunpack.c.0.s8 %v6722
        %v6724 = vlaneseq
        %v6725 = vshrl.u32 %v6724, 7
        %v6726 = vsub.s32 %v6723, %v6725
        %v6727 = vrot.slane %v6608, %v6726
        %v6729 = vunpack.c.l.s4 1983009808
        %v6730 = vunpack.c.0.s8 %v6729
        %v6731 = vlaneseq
        %v6732 = vshrl.u32 %v6731, 7
        %v6733 = vsub.s32 %v6730, %v6732
        %v6734 = vrot.slane %v6720, %v6733
        %v6735 = vcombine.high %v6727, %v6727
        %v6736 = vcombine.high %v6734, %v6734
        %v6737 = vcombine.high %v6609, %v6609
        %v6739 = vunpack.c.l.s4 1983009808
        %v6740 = vunpack.c.0.s8 %v6739
        %v6741 = vlaneseq
        %v6742 = vshrl.u32 %v6741, 7
        %v6743 = vsub.s32 %v6740, %v6742
        %v6744 = vrot.slane %v6609, %v6743
        %v6746 = vunpack.c.l.s4 1983009808
        %v6747 = vunpack.c.0.s8 %v6746
        %v6748 = vlaneseq
        %v6749 = vshrl.u32 %v6748, 7
        %v6750 = vsub.s32 %v6747, %v6749
        %v6751 = vrot.slane %v6737, %v6750
        %v6752 = vcombine.high %v6744, %v6744
        %v6753 = vcombine.high %v6751, %v6751
        %v6786 = vsel %vm5817, %v6625, -inf
        %v6787 = vrot.slane %v6786, 4
        %v6788 = vmax.f32 %v6786, %v6787
        %v6789 = vrot.slane %v6788, 2
        %v6790 = vmax.f32 %v6788, %v6789
        %v6791 = vrot.slane %v6790, 1
        %v6792 = vmax.f32 %v6790, %v6791
        %v6793 = vsel %vm5817, %v6633, -inf
        %v6794 = vrot.slane %v6793, 4
        %v6795 = vmax.f32 %v6793, %v6794
        %v6796 = vrot.slane %v6795, 2
        %v6797 = vmax.f32 %v6795, %v6796
        %v6798 = vrot.slane %v6797, 1
        %v6799 = vmax.f32 %v6797, %v6798
        %v6800 = vsel %vm5817, %v6632, -inf
        %v6801 = vrot.slane %v6800, 4
        %v6802 = vmax.f32 %v6800, %v6801
        %v6803 = vrot.slane %v6802, 2
        %v6804 = vmax.f32 %v6802, %v6803
        %v6805 = vrot.slane %v6804, 1
        %v6806 = vmax.f32 %v6804, %v6805
        %v6807 = vsel %vm5817, %v6634, -inf
        %v6808 = vrot.slane %v6807, 4
        %v6809 = vmax.f32 %v6807, %v6808
        %v6810 = vrot.slane %v6809, 2
        %v6811 = vmax.f32 %v6809, %v6810
        %v6812 = vrot.slane %v6811, 1
        %v6813 = vmax.f32 %v6811, %v6812
        %v6814 = vsel %vm5817, %v6642, -inf
        %v6815 = vrot.slane %v6814, 4
        %v6816 = vmax.f32 %v6814, %v6815
        %v6817 = vrot.slane %v6816, 2
        %v6818 = vmax.f32 %v6816, %v6817
        %v6819 = vrot.slane %v6818, 1
        %v6820 = vmax.f32 %v6818, %v6819
        %v6821 = vsel %vm5817, %v6650, -inf
        %v6822 = vrot.slane %v6821, 4
        %v6823 = vmax.f32 %v6821, %v6822
        %v6824 = vrot.slane %v6823, 2
        %v6825 = vmax.f32 %v6823, %v6824
        %v6826 = vrot.slane %v6825, 1
        %v6827 = vmax.f32 %v6825, %v6826
        %v6828 = vsel %vm5817, %v6649, -inf
        %v6829 = vrot.slane %v6828, 4
        %v6830 = vmax.f32 %v6828, %v6829
        %v6831 = vrot.slane %v6830, 2
        %v6832 = vmax.f32 %v6830, %v6831
        %v6833 = vrot.slane %v6832, 1
        %v6834 = vmax.f32 %v6832, %v6833
        %v6835 = vsel %vm5817, %v6651, -inf
        %v6836 = vrot.slane %v6835, 4
        %v6837 = vmax.f32 %v6835, %v6836
        %v6838 = vrot.slane %v6837, 2
        %v6839 = vmax.f32 %v6837, %v6838
        %v6840 = vrot.slane %v6839, 1
        %v6841 = vmax.f32 %v6839, %v6840
        %v6842 = vsel %vm5817, %v6659, -inf
        %v6843 = vrot.slane %v6842, 4
        %v6844 = vmax.f32 %v6842, %v6843
        %v6845 = vrot.slane %v6844, 2
        %v6846 = vmax.f32 %v6844, %v6845
        %v6847 = vrot.slane %v6846, 1
        %v6848 = vmax.f32 %v6846, %v6847
        %v6849 = vsel %vm5817, %v6667, -inf
        %v6850 = vrot.slane %v6849, 4
        %v6851 = vmax.f32 %v6849, %v6850
        %v6852 = vrot.slane %v6851, 2
        %v6853 = vmax.f32 %v6851, %v6852
        %v6854 = vrot.slane %v6853, 1
        %v6855 = vmax.f32 %v6853, %v6854
        %v6856 = vsel %vm5817, %v6666, -inf
        %v6857 = vrot.slane %v6856, 4
        %v6858 = vmax.f32 %v6856, %v6857
        %v6859 = vrot.slane %v6858, 2
        %v6860 = vmax.f32 %v6858, %v6859
        %v6861 = vrot.slane %v6860, 1
        %v6862 = vmax.f32 %v6860, %v6861
        %v6863 = vsel %vm5817, %v6668, -inf
        %v6864 = vrot.slane %v6863, 4
        %v6865 = vmax.f32 %v6863, %v6864
        %v6866 = vrot.slane %v6865, 2
        %v6867 = vmax.f32 %v6865, %v6866
        %v6868 = vrot.slane %v6867, 1
        %v6869 = vmax.f32 %v6867, %v6868
        %v6870 = vsel %vm5817, %v6676, -inf
        %v6871 = vrot.slane %v6870, 4
        %v6872 = vmax.f32 %v6870, %v6871
        %v6873 = vrot.slane %v6872, 2
        %v6874 = vmax.f32 %v6872, %v6873
        %v6875 = vrot.slane %v6874, 1
        %v6876 = vmax.f32 %v6874, %v6875
        %v6877 = vsel %vm5817, %v6684, -inf
        %v6878 = vrot.slane %v6877, 4
        %v6879 = vmax.f32 %v6877, %v6878
        %v6880 = vrot.slane %v6879, 2
        %v6881 = vmax.f32 %v6879, %v6880
        %v6882 = vrot.slane %v6881, 1
        %v6883 = vmax.f32 %v6881, %v6882
        %v6884 = vsel %vm5817, %v6683, -inf
        %v6885 = vrot.slane %v6884, 4
        %v6886 = vmax.f32 %v6884, %v6885
        %v6887 = vrot.slane %v6886, 2
        %v6888 = vmax.f32 %v6886, %v6887
        %v6889 = vrot.slane %v6888, 1
        %v6890 = vmax.f32 %v6888, %v6889
        %v6891 = vsel %vm5817, %v6685, -inf
        %v6892 = vrot.slane %v6891, 4
        %v6893 = vmax.f32 %v6891, %v6892
        %v6894 = vrot.slane %v6893, 2
        %v6895 = vmax.f32 %v6893, %v6894
        %v6896 = vrot.slane %v6895, 1
        %v6897 = vmax.f32 %v6895, %v6896
        %v6898 = vsel %vm5817, %v6693, -inf
        %v6899 = vrot.slane %v6898, 4
        %v6900 = vmax.f32 %v6898, %v6899
        %v6901 = vrot.slane %v6900, 2
        %v6902 = vmax.f32 %v6900, %v6901
        %v6903 = vrot.slane %v6902, 1
        %v6904 = vmax.f32 %v6902, %v6903
        %v6905 = vsel %vm5817, %v6701, -inf
        %v6906 = vrot.slane %v6905, 4
        %v6907 = vmax.f32 %v6905, %v6906
        %v6908 = vrot.slane %v6907, 2
        %v6909 = vmax.f32 %v6907, %v6908
        %v6910 = vrot.slane %v6909, 1
        %v6911 = vmax.f32 %v6909, %v6910
        %v6912 = vsel %vm5817, %v6700, -inf
        %v6913 = vrot.slane %v6912, 4
        %v6914 = vmax.f32 %v6912, %v6913
        %v6915 = vrot.slane %v6914, 2
        %v6916 = vmax.f32 %v6914, %v6915
        %v6917 = vrot.slane %v6916, 1
        %v6918 = vmax.f32 %v6916, %v6917
        %v6919 = vsel %vm5817, %v6702, -inf
        %v6920 = vrot.slane %v6919, 4
        %v6921 = vmax.f32 %v6919, %v6920
        %v6922 = vrot.slane %v6921, 2
        %v6923 = vmax.f32 %v6921, %v6922
        %v6924 = vrot.slane %v6923, 1
        %v6925 = vmax.f32 %v6923, %v6924
        %v6926 = vsel %vm5817, %v6710, -inf
        %v6927 = vrot.slane %v6926, 4
        %v6928 = vmax.f32 %v6926, %v6927
        %v6929 = vrot.slane %v6928, 2
        %v6930 = vmax.f32 %v6928, %v6929
        %v6931 = vrot.slane %v6930, 1
        %v6932 = vmax.f32 %v6930, %v6931
        %v6933 = vsel %vm5817, %v6718, -inf
        %v6934 = vrot.slane %v6933, 4
        %v6935 = vmax.f32 %v6933, %v6934
        %v6936 = vrot.slane %v6935, 2
        %v6937 = vmax.f32 %v6935, %v6936
        %v6938 = vrot.slane %v6937, 1
        %v6939 = vmax.f32 %v6937, %v6938
        %v6940 = vsel %vm5817, %v6717, -inf
        %v6941 = vrot.slane %v6940, 4
        %v6942 = vmax.f32 %v6940, %v6941
        %v6943 = vrot.slane %v6942, 2
        %v6944 = vmax.f32 %v6942, %v6943
        %v6945 = vrot.slane %v6944, 1
        %v6946 = vmax.f32 %v6944, %v6945
        %v6947 = vsel %vm5817, %v6719, -inf
        %v6948 = vrot.slane %v6947, 4
        %v6949 = vmax.f32 %v6947, %v6948
        %v6950 = vrot.slane %v6949, 2
        %v6951 = vmax.f32 %v6949, %v6950
        %v6952 = vrot.slane %v6951, 1
        %v6953 = vmax.f32 %v6951, %v6952
        %v6954 = vsel %vm5817, %v6727, -inf
        %v6955 = vrot.slane %v6954, 4
        %v6956 = vmax.f32 %v6954, %v6955
        %v6957 = vrot.slane %v6956, 2
        %v6958 = vmax.f32 %v6956, %v6957
        %v6959 = vrot.slane %v6958, 1
        %v6960 = vmax.f32 %v6958, %v6959
        %v6961 = vsel %vm5817, %v6735, -inf
        %v6962 = vrot.slane %v6961, 4
        %v6963 = vmax.f32 %v6961, %v6962
        %v6964 = vrot.slane %v6963, 2
        %v6965 = vmax.f32 %v6963, %v6964
        %v6966 = vrot.slane %v6965, 1
        %v6967 = vmax.f32 %v6965, %v6966
        %v6968 = vsel %vm5817, %v6734, -inf
        %v6969 = vrot.slane %v6968, 4
        %v6970 = vmax.f32 %v6968, %v6969
        %v6971 = vrot.slane %v6970, 2
        %v6972 = vmax.f32 %v6970, %v6971
        %v6973 = vrot.slane %v6972, 1
        %v6974 = vmax.f32 %v6972, %v6973
        %v6975 = vsel %vm5817, %v6736, -inf
        %v6976 = vrot.slane %v6975, 4
        %v6977 = vmax.f32 %v6975, %v6976
        %v6978 = vrot.slane %v6977, 2
        %v6979 = vmax.f32 %v6977, %v6978
        %v6980 = vrot.slane %v6979, 1
        %v6981 = vmax.f32 %v6979, %v6980
        %v6982 = vsel %vm5817, %v6744, -inf
        %v6983 = vrot.slane %v6982, 4
        %v6984 = vmax.f32 %v6982, %v6983
        %v6985 = vrot.slane %v6984, 2
        %v6986 = vmax.f32 %v6984, %v6985
        %v6987 = vrot.slane %v6986, 1
        %v6988 = vmax.f32 %v6986, %v6987
        %v6989 = vsel %vm5817, %v6752, -inf
        %v6990 = vrot.slane %v6989, 4
        %v6991 = vmax.f32 %v6989, %v6990
        %v6992 = vrot.slane %v6991, 2
        %v6993 = vmax.f32 %v6991, %v6992
        %v6994 = vrot.slane %v6993, 1
        %v6995 = vmax.f32 %v6993, %v6994
        %v6996 = vsel %vm5817, %v6751, -inf
        %v6997 = vrot.slane %v6996, 4
        %v6998 = vmax.f32 %v6996, %v6997
        %v6999 = vrot.slane %v6998, 2
        %v7000 = vmax.f32 %v6998, %v6999
        %v7001 = vrot.slane %v7000, 1
        %v7002 = vmax.f32 %v7000, %v7001
        %v7003 = vsel %vm5817, %v6753, -inf
        %v7004 = vrot.slane %v7003, 4
        %v7005 = vmax.f32 %v7003, %v7004
        %v7006 = vrot.slane %v7005, 2
        %v7007 = vmax.f32 %v7005, %v7006
        %v7008 = vrot.slane %v7007, 1
        %v7009 = vmax.f32 %v7007, %v7008
        %v7010 = vmax.f32 %v6792, %v6820
        %v7011 = vmax.f32 %v6799, %v6827
        %v7012 = vmax.f32 %v6806, %v6834
        %v7013 = vmax.f32 %v6813, %v6841
        %v7014 = vmax.f32 %v6848, %v6876
        %v7015 = vmax.f32 %v6855, %v6883
        %v7016 = vmax.f32 %v6862, %v6890
        %v7017 = vmax.f32 %v6869, %v6897
        %v7018 = vmax.f32 %v6904, %v6932
        %v7019 = vmax.f32 %v6911, %v6939
        %v7020 = vmax.f32 %v6918, %v6946
        %v7021 = vmax.f32 %v6925, %v6953
        %v7022 = vmax.f32 %v6960, %v6988
        %v7023 = vmax.f32 %v6967, %v6995
        %v7024 = vmax.f32 %v6974, %v7002
        %v7025 = vmax.f32 %v6981, %v7009
        %vm7026 = vcmask 521216
        %7027 = vst.msk [vmem:[#allocation5] sm:$0x3f] %vm7026, 0.0
        %7028 = vst.msk [vmem:[#allocation5 + $0x8] sm:$0x3f] %vm7026, 0.0
        %7029 = vst.msk [vmem:[#allocation5 + $0x10] sm:$0x3f] %vm7026, 0.0
        %7030 = vst.msk [vmem:[#allocation5 + $0x18] sm:$0x3f] %vm7026, 0.0
        %7031 = vst.msk [vmem:[#allocation5 + $0x20] sm:$0x3f] %vm7026, 0.0
        %7032 = vst.msk [vmem:[#allocation5 + $0x28] sm:$0x3f] %vm7026, 0.0
        %v7049 = vsel %vm5065, %v7011, %v7010
        %v7050 = vsel %vm5067, %v7012, %v7049
        %v7051 = vsel %vm5069, %v7013, %v7050
        %v7052 = vsel %vm5065, %v7015, %v7014
        %v7053 = vsel %vm5067, %v7016, %v7052
        %v7054 = vsel %vm5069, %v7017, %v7053
        %v7055 = vsel %vm5065, %v7019, %v7018
        %v7056 = vsel %vm5067, %v7020, %v7055
        %v7057 = vsel %vm5069, %v7021, %v7056
        %v7058 = vsel %vm5065, %v7023, %v7022
        %v7059 = vsel %vm5067, %v7024, %v7058
        %v7060 = vsel %vm5069, %v7025, %v7059
        %s7065 = scalar_lea.vmem [#allocation5], 8
        %vm7066 = vcmask 519168
        %7067 = vst.msk [vmem:[%s7065 + $0x1] sm:$0xf] %vm7066, %v7051
        %7068 = vst.msk [vmem:[%s7065 + $0x9] sm:$0xf] %vm7066, %v7054
        %7069 = vst.msk [vmem:[%s7065 + $0x11] sm:$0xf] %vm7066, %v7057
        %7070 = vst.msk [vmem:[%s7065 + $0x19] sm:$0xf] %vm7066, %v7060
        %v7071 = vld [vmem:[#allocation5] sm:$0xf]
        %v7072 = vld [vmem:[#allocation5 + $0x8] sm:$0xf]
        %v7073 = vld [vmem:[#allocation5 + $0x10] sm:$0xf]
        %v7074 = vld [vmem:[#allocation5 + $0x18] sm:$0xf]
        %v7079 = vcombine.low %v7071, %v7072
        %v7080 = vcombine.low %v7073, %v7074
        %7083 = vst.msk [vmem:[#allocation12] sm:$0xff] %vm5815, %v7079
        %7084 = vst.msk [vmem:[#allocation12 + $0x28] sm:$0xff] %vm5815, %v7080
        %v7085 = vld [vmem:[#allocation5 + $0x1] sm:$0xf]
        %v7086 = vld [vmem:[#allocation5 + $0x9] sm:$0xf]
        %v7087 = vld [vmem:[#allocation5 + $0x11] sm:$0xf]
        %v7088 = vld [vmem:[#allocation5 + $0x19] sm:$0xf]
        %v7093 = vcombine.low %v7085, %v7086
        %v7094 = vcombine.low %v7087, %v7088
        %7095 = vrot.lane.b32.xlu0 %v7093, 64
        %v7096 = vpop.permute.xlu0 %7095
        %7097 = vrot.lane.b32.xlu0 %v7094, 64
        %v7098 = vpop.permute.xlu0 %7097
        %7101 = vst.msk [vmem:[#allocation12] sm:$0xff] %vm5902, %v7096
        %7102 = vst.msk [vmem:[#allocation12 + $0x28] sm:$0xff] %vm5902, %v7098
        %v7103 = vld [vmem:[#allocation5 + $0x2] sm:$0xf]
        %v7104 = vld [vmem:[#allocation5 + $0xa] sm:$0xf]
        %v7105 = vld [vmem:[#allocation5 + $0x12] sm:$0xf]
        %v7106 = vld [vmem:[#allocation5 + $0x1a] sm:$0xf]
        %v7111 = vcombine.low %v7103, %v7104
        %v7112 = vcombine.low %v7105, %v7106
        %7115 = vst.msk [vmem:[#allocation12 + $0x8] sm:$0xff] %vm5815, %v7111
        %7116 = vst.msk [vmem:[#allocation12 + $0x30] sm:$0xff] %vm5815, %v7112
        %v7117 = vld [vmem:[%s7065] sm:$0xf]
        %v7118 = vld [vmem:[%s7065 + $0x8] sm:$0xf]
        %v7119 = vld [vmem:[%s7065 + $0x10] sm:$0xf]
        %v7120 = vld [vmem:[%s7065 + $0x18] sm:$0xf]
        %v7125 = vcombine.low %v7117, %v7118
        %v7126 = vcombine.low %v7119, %v7120
        %7127 = vrot.lane.b32.xlu0 %v7125, 64
        %v7128 = vpop.permute.xlu0 %7127
        %7129 = vrot.lane.b32.xlu0 %v7126, 64
        %v7130 = vpop.permute.xlu0 %7129
        %7133 = vst.msk [vmem:[#allocation12 + $0x8] sm:$0xff] %vm5902, %v7128
        %7134 = vst.msk [vmem:[#allocation12 + $0x30] sm:$0xff] %vm5902, %v7130
        %v7135 = vld [vmem:[%s7065 + $0x1] sm:$0xf]
        %v7136 = vld [vmem:[%s7065 + $0x9] sm:$0xf]
        %v7137 = vld [vmem:[%s7065 + $0x11] sm:$0xf]
        %v7138 = vld [vmem:[%s7065 + $0x19] sm:$0xf]
        %v7143 = vcombine.low %v7135, %v7136
        %v7144 = vcombine.low %v7137, %v7138
        %7147 = vst.msk [vmem:[#allocation12 + $0x10] sm:$0xff] %vm5815, %v7143
        %7148 = vst.msk [vmem:[#allocation12 + $0x38] sm:$0xff] %vm5815, %v7144
        %v7149 = vld [vmem:[%s7065 + $0x2] sm:$0xf]
        %v7150 = vld [vmem:[%s7065 + $0xa] sm:$0xf]
        %v7151 = vld [vmem:[%s7065 + $0x12] sm:$0xf]
        %v7152 = vld [vmem:[%s7065 + $0x1a] sm:$0xf]
        %v7157 = vcombine.low %v7149, %v7150
        %v7158 = vcombine.low %v7151, %v7152
        %7159 = vrot.lane.b32.xlu0 %v7157, 64
        %v7160 = vpop.permute.xlu0 %7159
        %7161 = vrot.lane.b32.xlu0 %v7158, 64
        %v7162 = vpop.permute.xlu0 %7161
        %7165 = vst.msk [vmem:[#allocation12 + $0x10] sm:$0xff] %vm5902, %v7160
        %7166 = vst.msk [vmem:[#allocation12 + $0x38] sm:$0xff] %vm5902, %v7162
        %s7167 = scalar_lea.vmem [#allocation5], 16
        %v7168 = vld [vmem:[%s7167] sm:$0xf]
        %v7169 = vld [vmem:[%s7167 + $0x8] sm:$0xf]
        %v7170 = vld [vmem:[%s7167 + $0x10] sm:$0xf]
        %v7171 = vld [vmem:[%s7167 + $0x18] sm:$0xf]
        %v7176 = vcombine.low %v7168, %v7169
        %v7177 = vcombine.low %v7170, %v7171
        %7180 = vst.msk [vmem:[#allocation12 + $0x18] sm:$0xff] %vm5815, %v7176
        %7181 = vst.msk [vmem:[#allocation12 + $0x40] sm:$0xff] %vm5815, %v7177
        %v7182 = vld [vmem:[%s7167 + $0x1] sm:$0xf]
        %v7183 = vld [vmem:[%s7167 + $0x9] sm:$0xf]
        %v7184 = vld [vmem:[%s7167 + $0x11] sm:$0xf]
        %v7185 = vld [vmem:[%s7167 + $0x19] sm:$0xf]
        %v7190 = vcombine.low %v7182, %v7183
        %v7191 = vcombine.low %v7184, %v7185
        %7192 = vrot.lane.b32.xlu0 %v7190, 64
        %v7193 = vpop.permute.xlu0 %7192
        %7194 = vrot.lane.b32.xlu0 %v7191, 64
        %v7195 = vpop.permute.xlu0 %7194
        %7198 = vst.msk [vmem:[#allocation12 + $0x18] sm:$0xff] %vm5902, %v7193
        %7199 = vst.msk [vmem:[#allocation12 + $0x40] sm:$0xff] %vm5902, %v7195
        %v7200 = vld [vmem:[%s7167 + $0x2] sm:$0xf]
        %v7201 = vld [vmem:[%s7167 + $0xa] sm:$0xf]
        %v7202 = vld [vmem:[%s7167 + $0x12] sm:$0xf]
        %v7203 = vld [vmem:[%s7167 + $0x1a] sm:$0xf]
        %v7208 = vcombine.low %v7200, %v7201
        %v7209 = vcombine.low %v7202, %v7203
        %7212 = vst.msk [vmem:[#allocation12 + $0x20] sm:$0xff] %vm5815, %v7208
        %7213 = vst.msk [vmem:[#allocation12 + $0x48] sm:$0xff] %vm5815, %v7209
        %v7214 = vld [vmem:[#allocation12] sm:$0xff]
        %v7215 = vld [vmem:[#allocation12 + $0x8] sm:$0xff]
        %v7216 = vld [vmem:[#allocation12 + $0x10] sm:$0xff]
        %v7217 = vld [vmem:[#allocation12 + $0x18] sm:$0xff]
        %v7218 = vld [vmem:[#allocation12 + $0x20] sm:$0xff]
        %v7219 = vld [vmem:[#allocation12 + $0x28] sm:$0xff]
        %v7220 = vld [vmem:[#allocation12 + $0x30] sm:$0xff]
        %v7221 = vld [vmem:[#allocation12 + $0x38] sm:$0xff]
        %v7222 = vld [vmem:[#allocation12 + $0x40] sm:$0xff]
        %v7223 = vld [vmem:[#allocation12 + $0x48] sm:$0xff]
        %v7224 = vld [vmem:[#allocation21] sm:$0xff]
        %v7225 = vld [vmem:[#allocation21 + $0x8] sm:$0xff]
        %v7226 = vld [vmem:[#allocation21 + $0x10] sm:$0xff]
        %v7227 = vld [vmem:[#allocation21 + $0x18] sm:$0xff]
        %v7228 = vld [vmem:[#allocation21 + $0x20] sm:$0xff]
        %v7229 = vld [vmem:[#allocation21 + $0x28] sm:$0xff]
        %v7230 = vld [vmem:[#allocation21 + $0x30] sm:$0xff]
        %v7231 = vld [vmem:[#allocation21 + $0x38] sm:$0xff]
        %v7232 = vld [vmem:[#allocation21 + $0x40] sm:$0xff]
        %v7233 = vld [vmem:[#allocation21 + $0x48] sm:$0xff]
        %v7234 = vld [vmem:[#allocation21 + $0x50] sm:$0xff]
        %v7235 = vld [vmem:[#allocation21 + $0x58] sm:$0xff]
        %v7236 = vld [vmem:[#allocation21 + $0x60] sm:$0xff]
        %v7237 = vld [vmem:[#allocation21 + $0x68] sm:$0xff]
        %v7238 = vld [vmem:[#allocation21 + $0x70] sm:$0xff]
        %v7239 = vld [vmem:[#allocation21 + $0x78] sm:$0xff]
        %v7240 = vld [vmem:[#allocation21 + $0x80] sm:$0xff]
        %v7241 = vld [vmem:[#allocation21 + $0x88] sm:$0xff]
        %v7242 = vld [vmem:[#allocation21 + $0x90] sm:$0xff]
        %v7243 = vld [vmem:[#allocation21 + $0x98] sm:$0xff]
        %v7244 = vld [vmem:[#allocation21 + $0xa0] sm:$0xff]
        %v7245 = vld [vmem:[#allocation21 + $0xa8] sm:$0xff]
        %v7246 = vld [vmem:[#allocation21 + $0xb0] sm:$0xff]
        %v7247 = vld [vmem:[#allocation21 + $0xb8] sm:$0xff]
        %v7248 = vld [vmem:[#allocation21 + $0xc0] sm:$0xff]
        %v7249 = vld [vmem:[#allocation21 + $0xc8] sm:$0xff]
        %v7250 = vld [vmem:[#allocation21 + $0xd0] sm:$0xff]
        %v7251 = vld [vmem:[#allocation21 + $0xd8] sm:$0xff]
        %v7252 = vld [vmem:[#allocation21 + $0xe0] sm:$0xff]
        %v7253 = vld [vmem:[#allocation21 + $0xe8] sm:$0xff]
        %v7254 = vld [vmem:[#allocation21 + $0xf0] sm:$0xff]
        %v7255 = vld [vmem:[#allocation21 + $0xf8] sm:$0xff]
        %v7256 = vld [vmem:[#allocation21 + $0x100] sm:$0xff]
        %v7257 = vld [vmem:[#allocation21 + $0x108] sm:$0xff]
        %v7258 = vld [vmem:[#allocation21 + $0x110] sm:$0xff]
        %v7259 = vld [vmem:[#allocation21 + $0x118] sm:$0xff]
        %v7260 = vld [vmem:[#allocation21 + $0x120] sm:$0xff]
        %v7261 = vld [vmem:[#allocation21 + $0x128] sm:$0xff]
        %v7262 = vld [vmem:[#allocation21 + $0x130] sm:$0xff]
        %v7263 = vld [vmem:[#allocation21 + $0x138] sm:$0xff]
        %v7264 = vld [vmem:[#allocation21 + $0x140] sm:$0xff]
        %v7265 = vld [vmem:[#allocation21 + $0x148] sm:$0xff]
        %v7266 = vld [vmem:[#allocation21 + $0x150] sm:$0xff]
        %v7267 = vld [vmem:[#allocation21 + $0x158] sm:$0xff]
        %v7268 = vld [vmem:[#allocation21 + $0x160] sm:$0xff]
        %v7269 = vld [vmem:[#allocation21 + $0x168] sm:$0xff]
        %v7270 = vld [vmem:[#allocation21 + $0x170] sm:$0xff]
        %v7271 = vld [vmem:[#allocation21 + $0x178] sm:$0xff]
        %v7272 = vld [vmem:[#allocation21 + $0x180] sm:$0xff]
        %v7273 = vld [vmem:[#allocation21 + $0x188] sm:$0xff]
        %v7274 = vld [vmem:[#allocation21 + $0x190] sm:$0xff]
        %v7275 = vld [vmem:[#allocation21 + $0x198] sm:$0xff]
        %v7276 = vld [vmem:[#allocation21 + $0x1a0] sm:$0xff]
        %v7277 = vld [vmem:[#allocation21 + $0x1a8] sm:$0xff]
        %v7278 = vld [vmem:[#allocation21 + $0x1b0] sm:$0xff]
        %v7279 = vld [vmem:[#allocation21 + $0x1b8] sm:$0xff]
        %v7280 = vld [vmem:[#allocation21 + $0x1c0] sm:$0xff]
        %v7281 = vld [vmem:[#allocation21 + $0x1c8] sm:$0xff]
        %v7282 = vld [vmem:[#allocation21 + $0x1d0] sm:$0xff]
        %v7283 = vld [vmem:[#allocation21 + $0x1d8] sm:$0xff]
        %v7284 = vld [vmem:[#allocation21 + $0x1e0] sm:$0xff]
        %v7285 = vld [vmem:[#allocation21 + $0x1e8] sm:$0xff]
        %v7286 = vld [vmem:[#allocation21 + $0x1f0] sm:$0xff]
        %v7287 = vld [vmem:[#allocation21 + $0x1f8] sm:$0xff]
        %v7288 = vld [vmem:[#allocation21 + $0x200] sm:$0xff]
        %v7289 = vld [vmem:[#allocation21 + $0x208] sm:$0xff]
        %v7290 = vld [vmem:[#allocation21 + $0x210] sm:$0xff]
        %v7291 = vld [vmem:[#allocation21 + $0x218] sm:$0xff]
        %v7292 = vld [vmem:[#allocation21 + $0x220] sm:$0xff]
        %v7293 = vld [vmem:[#allocation21 + $0x228] sm:$0xff]
        %v7294 = vld [vmem:[#allocation21 + $0x230] sm:$0xff]
        %v7295 = vld [vmem:[#allocation21 + $0x238] sm:$0xff]
        %v7296 = vld [vmem:[%s10] sm:$0x1]
        %v7297 = vld [vmem:[%s10 + $0x1] sm:$0x1]
        %v7298 = vld [vmem:[%s10 + $0x2] sm:$0x1]
        %v7299 = vlaneseq
        %v7300 = vshrl.u32 %v7299, 7
        %v7301 = vsub.s32 0, %v7300
        %v7302 = vrot.slane %v7296, %v7301
        %v7304 = vsel %vm5815, %v7218, 0
        %v7307 = vsel %vm5815, %v7223, 0
        %7309 = vmatprep.subr.mxu0 0.0
        %7310 = vmatpush1.msra.mxu0 %v7224
        %7311 = vmatprep.subr.mxu0 0.0
        %7312 = vmatpush1.msra.mxu0 %v7225
        %7313 = vmatprep.subr.mxu0 0.0
        %7314 = vmatpush1.msra.mxu0 %v7226
        %7315 = vmatprep.subr.mxu0 0.0
        %7316 = vmatpush1.msra.mxu0 %v7227
        %7317 = vmatprep.subr.mxu0 0.0
        %7318 = vmatpush1.msra.mxu0 %v7228
        %7319 = vmatprep.subr.mxu0 0.0
        %7320 = vmatpush1.msra.mxu0 %v7229
        %7321 = vmatprep.subr.mxu0 0.0
        %7322 = vmatpush1.msra.mxu0 %v7230
        %7323 = vmatprep.subr.mxu0 0.0
        %7324 = vmatpush1.msra.mxu0 %v7231
        %7325 = vmatprep.subr.mxu0 0.0
        %7326 = vmatpush1.msra.mxu0 %v7232
        %7327 = vmatprep.subr.mxu0 0.0
        %7328 = vmatpush1.msra.mxu0 %v7233
        %7329 = vmatprep.subr.mxu0 0.0
        %7330 = vmatpush1.msra.mxu0 %v7234
        %7331 = vmatprep.subr.mxu0 0.0
        %7332 = vmatpush1.msra.mxu0 %v7235
        %7333 = vmatprep.subr.mxu0 0.0
        %7334 = vmatpush1.msra.mxu0 %v7236
        %7335 = vmatprep.subr.mxu0 0.0
        %7336 = vmatpush1.msra.mxu0 %v7237
        %7337 = vmatprep.subr.mxu0 0.0
        %7338 = vmatpush1.msra.mxu0 %v7238
        %7339 = vmatprep.subr.mxu0 0.0
        %7340 = vmatpush1.msra.mxu0 %v7239
        %7341 = vmatprep.subr.mxu0 0.0
        %7342 = vmatpush1.msra.mxu0 %v7240
        %7343 = vmatprep.subr.mxu0 0.0
        %7344 = vmatpush1.msra.mxu0 %v7241
        %7345 = vmatprep.subr.mxu0 0.0
        %7346 = vmatpush1.msra.mxu0 %v7242
        %7347 = vmatprep.subr.mxu0 0.0
        %7348 = vmatpush1.msra.mxu0 %v7243
        %7349 = vmatprep.subr.mxu0 0.0
        %7350 = vmatpush1.msra.mxu0 %v7244
        %7351 = vmatprep.subr.mxu0 0.0
        %7352 = vmatpush1.msra.mxu0 %v7245
        %7353 = vmatprep.subr.mxu0 0.0
        %7354 = vmatpush1.msra.mxu0 %v7246
        %7355 = vmatprep.subr.mxu0 0.0
        %7356 = vmatpush1.msra.mxu0 %v7247
        %7357 = vmatprep.subr.mxu0 0.0
        %7358 = vmatpush1.msra.mxu0 %v7248
        %7359 = vmatprep.subr.mxu0 0.0
        %7360 = vmatpush1.msra.mxu0 %v7249
        %7361 = vmatprep.subr.mxu0 0.0
        %7362 = vmatpush1.msra.mxu0 %v7250
        %7363 = vmatprep.subr.mxu0 0.0
        %7364 = vmatpush1.msra.mxu0 %v7251
        %7365 = vmatprep.subr.mxu0 0.0
        %7366 = vmatpush1.msra.mxu0 %v7252
        %7367 = vmatprep.subr.mxu0 0.0
        %7368 = vmatpush1.msra.mxu0 %v7253
        %7369 = vmatprep.subr.mxu0 0.0
        %7370 = vmatpush1.msra.mxu0 %v7254
        %7371 = vmatprep.subr.mxu0 0.0
        %7372 = vmatpush1.msra.mxu0 %v7255
        %7373 = vmatprep.mubr.f32.mxu0 %v7215
        %7374 = vmatmul.mubr.f32.gmra.mrb[0].mxu0 %v7214
        %v7375 = vpop.f32.mrb[0].mxu0
        %v7376 = vadd.f32 %v7302, %v7375
        %v7377 = vpop.f32.mrb[0].mxu0
        %7378 = vmatprep.mubr.f32.mxu0 %v7220
        %7379 = vmatmul.mubr.f32.gmra.mrb[0].mxu0 %v7219
        %v7380 = vpop.f32.mrb[0].mxu0
        %v7381 = vadd.f32 %v7302, %v7380
        %v7382 = vpop.f32.mrb[0].mxu0
        %7383 = vdwg.mxu0
        %7384 = vmatprep.subr.mxu0 0.0
        %7385 = vmatpush1.msra.mxu0 %v7256
        %7386 = vmatprep.subr.mxu0 0.0
        %7387 = vmatpush1.msra.mxu0 %v7257
        %7388 = vmatprep.subr.mxu0 0.0
        %7389 = vmatpush1.msra.mxu0 %v7258
        %7390 = vmatprep.subr.mxu0 0.0
        %7391 = vmatpush1.msra.mxu0 %v7259
        %7392 = vmatprep.subr.mxu0 0.0
        %7393 = vmatpush1.msra.mxu0 %v7260
        %7394 = vmatprep.subr.mxu0 0.0
        %7395 = vmatpush1.msra.mxu0 %v7261
        %7396 = vmatprep.subr.mxu0 0.0
        %7397 = vmatpush1.msra.mxu0 %v7262
        %7398 = vmatprep.subr.mxu0 0.0
        %7399 = vmatpush1.msra.mxu0 %v7263
        %7400 = vmatprep.subr.mxu0 0.0
        %7401 = vmatpush1.msra.mxu0 %v7264
        %7402 = vmatprep.subr.mxu0 0.0
        %7403 = vmatpush1.msra.mxu0 %v7265
        %7404 = vmatprep.subr.mxu0 0.0
        %7405 = vmatpush1.msra.mxu0 %v7266
        %7406 = vmatprep.subr.mxu0 0.0
        %7407 = vmatpush1.msra.mxu0 %v7267
        %7408 = vmatprep.subr.mxu0 0.0
        %7409 = vmatpush1.msra.mxu0 %v7268
        %7410 = vmatprep.subr.mxu0 0.0
        %7411 = vmatpush1.msra.mxu0 %v7269
        %7412 = vmatprep.subr.mxu0 0.0
        %7413 = vmatpush1.msra.mxu0 %v7270
        %7414 = vmatprep.subr.mxu0 0.0
        %7415 = vmatpush1.msra.mxu0 %v7271
        %7416 = vmatprep.subr.mxu0 0.0
        %7417 = vmatpush1.msra.mxu0 %v7272
        %7418 = vmatprep.subr.mxu0 0.0
        %7419 = vmatpush1.msra.mxu0 %v7273
        %7420 = vmatprep.subr.mxu0 0.0
        %7421 = vmatpush1.msra.mxu0 %v7274
        %7422 = vmatprep.subr.mxu0 0.0
        %7423 = vmatpush1.msra.mxu0 %v7275
        %7424 = vmatprep.subr.mxu0 0.0
        %7425 = vmatpush1.msra.mxu0 %v7276
        %7426 = vmatprep.subr.mxu0 0.0
        %7427 = vmatpush1.msra.mxu0 %v7277
        %7428 = vmatprep.subr.mxu0 0.0
        %7429 = vmatpush1.msra.mxu0 %v7278
        %7430 = vmatprep.subr.mxu0 0.0
        %7431 = vmatpush1.msra.mxu0 %v7279
        %7432 = vmatprep.subr.mxu0 0.0
        %7433 = vmatpush1.msra.mxu0 %v7280
        %7434 = vmatprep.subr.mxu0 0.0
        %7435 = vmatpush1.msra.mxu0 %v7281
        %7436 = vmatprep.subr.mxu0 0.0
        %7437 = vmatpush1.msra.mxu0 %v7282
        %7438 = vmatprep.subr.mxu0 0.0
        %7439 = vmatpush1.msra.mxu0 %v7283
        %7440 = vmatprep.subr.mxu0 0.0
        %7441 = vmatpush1.msra.mxu0 %v7284
        %7442 = vmatprep.subr.mxu0 0.0
        %7443 = vmatpush1.msra.mxu0 %v7285
        %7444 = vmatprep.subr.mxu0 0.0
        %7445 = vmatpush1.msra.mxu0 %v7286
        %7446 = vmatprep.subr.mxu0 0.0
        %7447 = vmatpush1.msra.mxu0 %v7287
        %7448 = vmatprep.mubr.f32.mxu0 %v7217
        %7449 = vmatmul.mubr.f32.gmra.mrb[0].mxu0 %v7216
        %v7450 = vpop.f32.mrb[0].mxu0
        %v7451 = vadd.f32 %v7376, %v7450
        %v7452 = vpop.f32.mrb[0].mxu0
        %7453 = vmatprep.mubr.f32.mxu0 %v7222
        %7454 = vmatmul.mubr.f32.gmra.mrb[0].mxu0 %v7221
        %v7455 = vpop.f32.mrb[0].mxu0
        %v7456 = vadd.f32 %v7381, %v7455
        %v7457 = vpop.f32.mrb[0].mxu0
        %7458 = vdwg.mxu0
        %7459 = vmatprep.subr.mxu0 0.0
        %7460 = vmatpush1.msra.mxu0 %v7288
        %7461 = vmatprep.subr.mxu0 0.0
        %7462 = vmatpush1.msra.mxu0 %v7289
        %7463 = vmatprep.subr.mxu0 0.0
        %7464 = vmatpush1.msra.mxu0 %v7290
        %7465 = vmatprep.subr.mxu0 0.0
        %7466 = vmatpush1.msra.mxu0 %v7291
        %7467 = vmatprep.subr.mxu0 0.0
        %7468 = vmatpush1.msra.mxu0 %v7292
        %7469 = vmatprep.subr.mxu0 0.0
        %7470 = vmatpush1.msra.mxu0 %v7293
        %7471 = vmatprep.subr.mxu0 0.0
        %7472 = vmatpush1.msra.mxu0 %v7294
        %7473 = vmatprep.subr.mxu0 0.0
        %7474 = vmatpush1.msra.mxu0 %v7295
        %7475 = vmatprep.subr.mxu0 0.0
        %7476 = vmatpush1.msra.mxu0 0.0
        %7477 = vmatprep.subr.mxu0 0.0
        %7478 = vmatpush1.msra.mxu0 0.0
        %7479 = vmatprep.subr.mxu0 0.0
        %7480 = vmatpush1.msra.mxu0 0.0
        %7481 = vmatprep.subr.mxu0 0.0
        %7482 = vmatpush1.msra.mxu0 0.0
        %7483 = vmatprep.subr.mxu0 0.0
        %7484 = vmatpush1.msra.mxu0 0.0
        %7485 = vmatprep.subr.mxu0 0.0
        %7486 = vmatpush1.msra.mxu0 0.0
        %7487 = vmatprep.subr.mxu0 0.0
        %7488 = vmatpush1.msra.mxu0 0.0
        %7489 = vmatprep.subr.mxu0 0.0
        %7490 = vmatpush1.msra.mxu0 0.0
        %7491 = vmatprep.subr.mxu0 0.0
        %7492 = vmatpush1.msra.mxu0 0.0
        %7493 = vmatprep.subr.mxu0 0.0
        %7494 = vmatpush1.msra.mxu0 0.0
        %7495 = vmatprep.subr.mxu0 0.0
        %7496 = vmatpush1.msra.mxu0 0.0
        %7497 = vmatprep.subr.mxu0 0.0
        %7498 = vmatpush1.msra.mxu0 0.0
        %7499 = vmatprep.subr.mxu0 0.0
        %7500 = vmatpush1.msra.mxu0 0.0
        %7501 = vmatprep.subr.mxu0 0.0
        %7502 = vmatpush1.msra.mxu0 0.0
        %7503 = vmatprep.subr.mxu0 0.0
        %7504 = vmatpush1.msra.mxu0 0.0
        %7505 = vmatprep.subr.mxu0 0.0
        %7506 = vmatpush1.msra.mxu0 0.0
        %7507 = vmatprep.subr.mxu0 0.0
        %7508 = vmatpush1.msra.mxu0 0.0
        %7509 = vmatprep.subr.mxu0 0.0
        %7510 = vmatpush1.msra.mxu0 0.0
        %7511 = vmatprep.subr.mxu0 0.0
        %7512 = vmatpush1.msra.mxu0 0.0
        %7513 = vmatprep.subr.mxu0 0.0
        %7514 = vmatpush1.msra.mxu0 0.0
        %7515 = vmatprep.subr.mxu0 0.0
        %7516 = vmatpush1.msra.mxu0 0.0
        %7517 = vmatprep.subr.mxu0 0.0
        %7518 = vmatpush1.msra.mxu0 0.0
        %7519 = vmatprep.subr.mxu0 0.0
        %7520 = vmatpush1.msra.mxu0 0.0
        %7521 = vmatprep.subr.mxu0 0.0
        %7522 = vmatpush1.msra.mxu0 0.0
        %7523 = vmatprep.mubr.f32.mxu0 0.0
        %7524 = vmatmul.mubr.f32.gmra.mrb[0].mxu0 %v7304
        %v7525 = vpop.f32.mrb[0].mxu0
        %v7526 = vadd.f32 %v7451, %v7525
        %v7527 = vpop.f32.mrb[0].mxu0
        %7528 = vmatprep.mubr.f32.mxu0 0.0
        %7529 = vmatmul.mubr.f32.gmra.mrb[0].mxu0 %v7307
        %v7530 = vpop.f32.mrb[0].mxu0
        %v7531 = vadd.f32 %v7456, %v7530
        %v7532 = vpop.f32.mrb[0].mxu0
        %7533 = vdwg.mxu0
        %v7534 = vmax.f32 %v7526, 0.0
        %v7535 = vmax.f32 %v7531, 0.0
        %v7536 = vlaneseq
        %v7537 = vshrl.u32 %v7536, 7
        %v7538 = vsub.s32 0, %v7537
        %v7539 = vrot.slane %v7297, %v7538
        %v7540 = vmul.f32 %v7534, %v7539
        %v7541 = vmul.f32 %v7535, %v7539
        %v7542 = vlaneseq
        %v7543 = vshrl.u32 %v7542, 7
        %v7544 = vsub.s32 0, %v7543
        %v7545 = vrot.slane %v7298, %v7544
        %v7546 = vadd.f32 %v7540, %v7545
        %v7547 = vadd.f32 %v7541, %v7545
        %v7550 = vcombine.high %v7546, %v7546
        %v7551 = vcombine.high %v7547, %v7547
        %7554 = vst [vmem:[#allocation6] sm:$0x3f] 0.0
        %7555 = vst [vmem:[#allocation6 + $0x8] sm:$0x3f] 0.0
        %7556 = vst [vmem:[#allocation6 + $0x10] sm:$0x3f] 0.0
        %7557 = vst [vmem:[#allocation6 + $0x18] sm:$0x3f] 0.0
        %7558 = vst [vmem:[#allocation6 + $0x20] sm:$0x3f] 0.0
        %7559 = vst [vmem:[#allocation6 + $0x28] sm:$0x3f] 0.0
        %s7560 = scalar_lea.vmem [#allocation6], 8
        %7561 = vst [vmem:[%s7560 + $0x1] sm:$0xf] %v7546
        %7562 = vst [vmem:[%s7560 + $0x9] sm:$0xf] %v7550
        %7563 = vst [vmem:[%s7560 + $0x11] sm:$0xf] %v7547
        %7564 = vst [vmem:[%s7560 + $0x19] sm:$0xf] %v7551
        %v7565 = vld [vmem:[#allocation6] sm:$0xf]
        %v7566 = vld [vmem:[#allocation6 + $0x8] sm:$0xf]
        %v7567 = vld [vmem:[#allocation6 + $0x10] sm:$0xf]
        %v7568 = vld [vmem:[#allocation6 + $0x18] sm:$0xf]
        %v7573 = vcombine.low %v7565, %v7566
        %v7574 = vcombine.low %v7567, %v7568
        %7577 = vst [vmem:[#allocation13] sm:$0xff] %v7573
        %7578 = vst [vmem:[#allocation13 + $0x48] sm:$0xff] %v7574
        %v7579 = vld [vmem:[#allocation6 + $0x1] sm:$0xf]
        %v7580 = vld [vmem:[#allocation6 + $0x9] sm:$0xf]
        %v7581 = vld [vmem:[#allocation6 + $0x11] sm:$0xf]
        %v7582 = vld [vmem:[#allocation6 + $0x19] sm:$0xf]
        %v7587 = vcombine.low %v7579, %v7580
        %v7588 = vcombine.low %v7581, %v7582
        %7591 = vst [vmem:[#allocation13 + $0x8] sm:$0xff] %v7587
        %7592 = vst [vmem:[#allocation13 + $0x50] sm:$0xff] %v7588
        %v7593 = vld [vmem:[#allocation6 + $0x2] sm:$0xf]
        %v7594 = vld [vmem:[#allocation6 + $0xa] sm:$0xf]
        %v7595 = vld [vmem:[#allocation6 + $0x12] sm:$0xf]
        %v7596 = vld [vmem:[#allocation6 + $0x1a] sm:$0xf]
        %v7601 = vcombine.low %v7593, %v7594
        %v7602 = vcombine.low %v7595, %v7596
        %7605 = vst [vmem:[#allocation13 + $0x10] sm:$0xff] %v7601
        %7606 = vst [vmem:[#allocation13 + $0x58] sm:$0xff] %v7602
        %v7607 = vld [vmem:[%s7560] sm:$0xf]
        %v7608 = vld [vmem:[%s7560 + $0x8] sm:$0xf]
        %v7609 = vld [vmem:[%s7560 + $0x10] sm:$0xf]
        %v7610 = vld [vmem:[%s7560 + $0x18] sm:$0xf]
        %v7615 = vcombine.low %v7607, %v7608
        %v7616 = vcombine.low %v7609, %v7610
        %7619 = vst [vmem:[#allocation13 + $0x18] sm:$0xff] %v7615
        %7620 = vst [vmem:[#allocation13 + $0x60] sm:$0xff] %v7616
        %v7621 = vld [vmem:[%s7560 + $0x1] sm:$0xf]
        %v7622 = vld [vmem:[%s7560 + $0x9] sm:$0xf]
        %v7623 = vld [vmem:[%s7560 + $0x11] sm:$0xf]
        %v7624 = vld [vmem:[%s7560 + $0x19] sm:$0xf]
        %v7629 = vcombine.low %v7621, %v7622
        %v7630 = vcombine.low %v7623, %v7624
        %7633 = vst [vmem:[#allocation13 + $0x20] sm:$0xff] %v7629
        %7634 = vst [vmem:[#allocation13 + $0x68] sm:$0xff] %v7630
        %v7635 = vld [vmem:[%s7560 + $0x2] sm:$0xf]
        %v7636 = vld [vmem:[%s7560 + $0xa] sm:$0xf]
        %v7637 = vld [vmem:[%s7560 + $0x12] sm:$0xf]
        %v7638 = vld [vmem:[%s7560 + $0x1a] sm:$0xf]
        %v7643 = vcombine.low %v7635, %v7636
        %v7644 = vcombine.low %v7637, %v7638
        %7647 = vst [vmem:[#allocation13 + $0x28] sm:$0xff] %v7643
        %7648 = vst [vmem:[#allocation13 + $0x70] sm:$0xff] %v7644
        %s7649 = scalar_lea.vmem [#allocation6], 16
        %v7650 = vld [vmem:[%s7649] sm:$0xf]
        %v7651 = vld [vmem:[%s7649 + $0x8] sm:$0xf]
        %v7652 = vld [vmem:[%s7649 + $0x10] sm:$0xf]
        %v7653 = vld [vmem:[%s7649 + $0x18] sm:$0xf]
        %v7658 = vcombine.low %v7650, %v7651
        %v7659 = vcombine.low %v7652, %v7653
        %7662 = vst [vmem:[#allocation13 + $0x30] sm:$0xff] %v7658
        %7663 = vst [vmem:[#allocation13 + $0x78] sm:$0xff] %v7659
        %v7664 = vld [vmem:[%s7649 + $0x1] sm:$0xf]
        %v7665 = vld [vmem:[%s7649 + $0x9] sm:$0xf]
        %v7666 = vld [vmem:[%s7649 + $0x11] sm:$0xf]
        %v7667 = vld [vmem:[%s7649 + $0x19] sm:$0xf]
        %v7672 = vcombine.low %v7664, %v7665
        %v7673 = vcombine.low %v7666, %v7667
        %7676 = vst [vmem:[#allocation13 + $0x38] sm:$0xff] %v7672
        %7677 = vst [vmem:[#allocation13 + $0x80] sm:$0xff] %v7673
        %v7678 = vld [vmem:[%s7649 + $0x2] sm:$0xf]
        %v7679 = vld [vmem:[%s7649 + $0xa] sm:$0xf]
        %v7680 = vld [vmem:[%s7649 + $0x12] sm:$0xf]
        %v7681 = vld [vmem:[%s7649 + $0x1a] sm:$0xf]
        %v7686 = vcombine.low %v7678, %v7679
        %v7687 = vcombine.low %v7680, %v7681
        %7690 = vst [vmem:[#allocation13 + $0x40] sm:$0xff] %v7686
        %7691 = vst [vmem:[#allocation13 + $0x88] sm:$0xff] %v7687
        %v7692 = vld [vmem:[#allocation13] sm:$0xff]
        %v7693 = vld [vmem:[#allocation13 + $0x8] sm:$0xff]
        %v7694 = vld [vmem:[#allocation13 + $0x10] sm:$0xff]
        %v7695 = vld [vmem:[#allocation13 + $0x18] sm:$0xff]
        %v7696 = vld [vmem:[#allocation13 + $0x20] sm:$0xff]
        %v7697 = vld [vmem:[#allocation13 + $0x28] sm:$0xff]
        %v7698 = vld [vmem:[#allocation13 + $0x30] sm:$0xff]
        %v7699 = vld [vmem:[#allocation13 + $0x38] sm:$0xff]
        %v7700 = vld [vmem:[#allocation13 + $0x40] sm:$0xff]
        %v7701 = vld [vmem:[#allocation13 + $0x48] sm:$0xff]
        %v7702 = vld [vmem:[#allocation13 + $0x50] sm:$0xff]
        %v7703 = vld [vmem:[#allocation13 + $0x58] sm:$0xff]
        %v7704 = vld [vmem:[#allocation13 + $0x60] sm:$0xff]
        %v7705 = vld [vmem:[#allocation13 + $0x68] sm:$0xff]
        %v7706 = vld [vmem:[#allocation13 + $0x70] sm:$0xff]
        %v7707 = vld [vmem:[#allocation13 + $0x78] sm:$0xff]
        %v7708 = vld [vmem:[#allocation13 + $0x80] sm:$0xff]
        %v7709 = vld [vmem:[#allocation13 + $0x88] sm:$0xff]
        %v7710 = vld [vmem:[%s11] sm:$0xff]
        %v7711 = vld [vmem:[%s11 + $0x8] sm:$0xff]
        %v7712 = vld [vmem:[%s11 + $0x10] sm:$0xff]
        %v7713 = vld [vmem:[%s11 + $0x18] sm:$0xff]
        %v7714 = vld [vmem:[%s11 + $0x20] sm:$0xff]
        %v7715 = vld [vmem:[%s11 + $0x28] sm:$0xff]
        %v7716 = vld [vmem:[%s11 + $0x30] sm:$0xff]
        %v7717 = vld [vmem:[%s11 + $0x38] sm:$0xff]
        %v7718 = vld [vmem:[%s11 + $0x40] sm:$0xff]
        %v7719 = vld [vmem:[%s11 + $0x48] sm:$0xff]
        %v7720 = vld [vmem:[%s11 + $0x50] sm:$0xff]
        %v7721 = vld [vmem:[%s11 + $0x58] sm:$0xff]
        %v7722 = vld [vmem:[%s11 + $0x60] sm:$0xff]
        %v7723 = vld [vmem:[%s11 + $0x68] sm:$0xff]
        %v7724 = vld [vmem:[%s11 + $0x70] sm:$0xff]
        %v7725 = vld [vmem:[%s11 + $0x78] sm:$0xff]
        %v7726 = vld [vmem:[%s11 + $0x80] sm:$0xff]
        %v7727 = vld [vmem:[%s11 + $0x88] sm:$0xff]
        %v7728 = vld [vmem:[%s11 + $0x90] sm:$0xff]
        %v7729 = vld [vmem:[%s11 + $0x98] sm:$0xff]
        %v7730 = vld [vmem:[%s11 + $0xa0] sm:$0xff]
        %v7731 = vld [vmem:[%s11 + $0xa8] sm:$0xff]
        %v7732 = vld [vmem:[%s11 + $0xb0] sm:$0xff]
        %v7733 = vld [vmem:[%s11 + $0xb8] sm:$0xff]
        %v7734 = vld [vmem:[%s11 + $0xc0] sm:$0xff]
        %v7735 = vld [vmem:[%s11 + $0xc8] sm:$0xff]
        %v7736 = vld [vmem:[%s11 + $0xd0] sm:$0xff]
        %v7737 = vld [vmem:[%s11 + $0xd8] sm:$0xff]
        %v7738 = vld [vmem:[%s11 + $0xe0] sm:$0xff]
        %v7739 = vld [vmem:[%s11 + $0xe8] sm:$0xff]
        %v7740 = vld [vmem:[%s11 + $0xf0] sm:$0xff]
        %v7741 = vld [vmem:[%s11 + $0xf8] sm:$0xff]
        %v7742 = vld [vmem:[%s11 + $0x100] sm:$0xff]
        %v7743 = vld [vmem:[%s11 + $0x108] sm:$0xff]
        %v7744 = vld [vmem:[%s11 + $0x110] sm:$0xff]
        %v7745 = vld [vmem:[%s11 + $0x118] sm:$0xff]
        %v7746 = vld [vmem:[%s11 + $0x120] sm:$0xff]
        %v7747 = vld [vmem:[%s11 + $0x128] sm:$0xff]
        %v7748 = vld [vmem:[%s11 + $0x130] sm:$0xff]
        %v7749 = vld [vmem:[%s11 + $0x138] sm:$0xff]
        %v7750 = vld [vmem:[%s11 + $0x140] sm:$0xff]
        %v7751 = vld [vmem:[%s11 + $0x148] sm:$0xff]
        %v7752 = vld [vmem:[%s11 + $0x150] sm:$0xff]
        %v7753 = vld [vmem:[%s11 + $0x158] sm:$0xff]
        %v7754 = vld [vmem:[%s11 + $0x160] sm:$0xff]
        %v7755 = vld [vmem:[%s11 + $0x168] sm:$0xff]
        %v7756 = vld [vmem:[%s11 + $0x170] sm:$0xff]
        %v7757 = vld [vmem:[%s11 + $0x178] sm:$0xff]
        %v7758 = vld [vmem:[%s11 + $0x180] sm:$0xff]
        %v7759 = vld [vmem:[%s11 + $0x188] sm:$0xff]
        %v7760 = vld [vmem:[%s11 + $0x190] sm:$0xff]
        %v7761 = vld [vmem:[%s11 + $0x198] sm:$0xff]
        %v7762 = vld [vmem:[%s11 + $0x1a0] sm:$0xff]
        %v7763 = vld [vmem:[%s11 + $0x1a8] sm:$0xff]
        %v7764 = vld [vmem:[%s11 + $0x1b0] sm:$0xff]
        %v7765 = vld [vmem:[%s11 + $0x1b8] sm:$0xff]
        %v7766 = vld [vmem:[%s11 + $0x1c0] sm:$0xff]
        %v7767 = vld [vmem:[%s11 + $0x1c8] sm:$0xff]
        %v7768 = vld [vmem:[%s11 + $0x1d0] sm:$0xff]
        %v7769 = vld [vmem:[%s11 + $0x1d8] sm:$0xff]
        %v7770 = vld [vmem:[%s11 + $0x1e0] sm:$0xff]
        %v7771 = vld [vmem:[%s11 + $0x1e8] sm:$0xff]
        %v7772 = vld [vmem:[%s11 + $0x1f0] sm:$0xff]
        %v7773 = vld [vmem:[%s11 + $0x1f8] sm:$0xff]
        %v7774 = vld [vmem:[%s11 + $0x200] sm:$0xff]
        %v7775 = vld [vmem:[%s11 + $0x208] sm:$0xff]
        %v7776 = vld [vmem:[%s11 + $0x210] sm:$0xff]
        %v7777 = vld [vmem:[%s11 + $0x218] sm:$0xff]
        %v7778 = vld [vmem:[%s11 + $0x220] sm:$0xff]
        %v7779 = vld [vmem:[%s11 + $0x228] sm:$0xff]
        %v7780 = vld [vmem:[%s11 + $0x230] sm:$0xff]
        %v7781 = vld [vmem:[%s11 + $0x238] sm:$0xff]
        %v7782 = vld [vmem:[%s11 + $0x240] sm:$0xff]
        %v7783 = vld [vmem:[%s11 + $0x248] sm:$0xff]
        %v7784 = vld [vmem:[%s11 + $0x250] sm:$0xff]
        %v7785 = vld [vmem:[%s11 + $0x258] sm:$0xff]
        %v7786 = vld [vmem:[%s11 + $0x260] sm:$0xff]
        %v7787 = vld [vmem:[%s11 + $0x268] sm:$0xff]
        %v7788 = vld [vmem:[%s11 + $0x270] sm:$0xff]
        %v7789 = vld [vmem:[%s11 + $0x278] sm:$0xff]
        %v7790 = vld [vmem:[%s11 + $0x280] sm:$0xff]
        %v7791 = vld [vmem:[%s11 + $0x288] sm:$0xff]
        %v7792 = vld [vmem:[%s11 + $0x290] sm:$0xff]
        %v7793 = vld [vmem:[%s11 + $0x298] sm:$0xff]
        %v7794 = vld [vmem:[%s11 + $0x2a0] sm:$0xff]
        %v7795 = vld [vmem:[%s11 + $0x2a8] sm:$0xff]
        %v7796 = vld [vmem:[%s11 + $0x2b0] sm:$0xff]
        %v7797 = vld [vmem:[%s11 + $0x2b8] sm:$0xff]
        %v7798 = vld [vmem:[%s11 + $0x2c0] sm:$0xff]
        %v7799 = vld [vmem:[%s11 + $0x2c8] sm:$0xff]
        %v7800 = vld [vmem:[%s11 + $0x2d0] sm:$0xff]
        %v7801 = vld [vmem:[%s11 + $0x2d8] sm:$0xff]
        %v7802 = vld [vmem:[%s11 + $0x2e0] sm:$0xff]
        %v7803 = vld [vmem:[%s11 + $0x2e8] sm:$0xff]
        %v7804 = vld [vmem:[%s11 + $0x2f0] sm:$0xff]
        %v7805 = vld [vmem:[%s11 + $0x2f8] sm:$0xff]
        %v7806 = vld [vmem:[%s11 + $0x300] sm:$0xff]
        %v7807 = vld [vmem:[%s11 + $0x308] sm:$0xff]
        %v7808 = vld [vmem:[%s11 + $0x310] sm:$0xff]
        %v7809 = vld [vmem:[%s11 + $0x318] sm:$0xff]
        %v7810 = vld [vmem:[%s11 + $0x320] sm:$0xff]
        %v7811 = vld [vmem:[%s11 + $0x328] sm:$0xff]
        %v7812 = vld [vmem:[%s11 + $0x330] sm:$0xff]
        %v7813 = vld [vmem:[%s11 + $0x338] sm:$0xff]
        %v7814 = vld [vmem:[%s11 + $0x340] sm:$0xff]
        %v7815 = vld [vmem:[%s11 + $0x348] sm:$0xff]
        %v7816 = vld [vmem:[%s11 + $0x350] sm:$0xff]
        %v7817 = vld [vmem:[%s11 + $0x358] sm:$0xff]
        %v7818 = vld [vmem:[%s11 + $0x360] sm:$0xff]
        %v7819 = vld [vmem:[%s11 + $0x368] sm:$0xff]
        %v7820 = vld [vmem:[%s11 + $0x370] sm:$0xff]
        %v7821 = vld [vmem:[%s11 + $0x378] sm:$0xff]
        %v7822 = vld [vmem:[%s11 + $0x380] sm:$0xff]
        %v7823 = vld [vmem:[%s11 + $0x388] sm:$0xff]
        %v7824 = vld [vmem:[%s11 + $0x390] sm:$0xff]
        %v7825 = vld [vmem:[%s11 + $0x398] sm:$0xff]
        %v7826 = vld [vmem:[%s11 + $0x3a0] sm:$0xff]
        %v7827 = vld [vmem:[%s11 + $0x3a8] sm:$0xff]
        %v7828 = vld [vmem:[%s11 + $0x3b0] sm:$0xff]
        %v7829 = vld [vmem:[%s11 + $0x3b8] sm:$0xff]
        %v7830 = vld [vmem:[%s11 + $0x3c0] sm:$0xff]
        %v7831 = vld [vmem:[%s11 + $0x3c8] sm:$0xff]
        %v7832 = vld [vmem:[%s11 + $0x3d0] sm:$0xff]
        %v7833 = vld [vmem:[%s11 + $0x3d8] sm:$0xff]
        %v7834 = vld [vmem:[%s11 + $0x3e0] sm:$0xff]
        %v7835 = vld [vmem:[%s11 + $0x3e8] sm:$0xff]
        %v7836 = vld [vmem:[%s11 + $0x3f0] sm:$0xff]
        %v7837 = vld [vmem:[%s11 + $0x3f8] sm:$0xff]
        %v7838 = vld [vmem:[%s11 + $0x400] sm:$0xff]
        %v7839 = vld [vmem:[%s11 + $0x408] sm:$0xff]
        %v7840 = vld [vmem:[%s11 + $0x410] sm:$0xff]
        %v7841 = vld [vmem:[%s11 + $0x418] sm:$0xff]
        %v7842 = vld [vmem:[%s11 + $0x420] sm:$0xff]
        %v7843 = vld [vmem:[%s11 + $0x428] sm:$0xff]
        %v7844 = vld [vmem:[%s11 + $0x430] sm:$0xff]
        %v7845 = vld [vmem:[%s11 + $0x438] sm:$0xff]
        %v7846 = vld [vmem:[%s11 + $0x440] sm:$0xff]
        %v7847 = vld [vmem:[%s11 + $0x448] sm:$0xff]
        %v7848 = vld [vmem:[%s11 + $0x450] sm:$0xff]
        %v7849 = vld [vmem:[%s11 + $0x458] sm:$0xff]
        %v7850 = vld [vmem:[%s11 + $0x460] sm:$0xff]
        %v7851 = vld [vmem:[%s11 + $0x468] sm:$0xff]
        %v7852 = vld [vmem:[%s11 + $0x470] sm:$0xff]
        %v7853 = vld [vmem:[%s11 + $0x478] sm:$0xff]
        %v7854 = vld [vmem:[%s12] sm:$0x1]
        %v7855 = vld [vmem:[%s12 + $0x1] sm:$0x1]
        %v7856 = vld [vmem:[%s12 + $0x2] sm:$0x1]
        %v7857 = vlaneseq
        %v7858 = vshrl.u32 %v7857, 7
        %v7859 = vsub.s32 0, %v7858
        %v7860 = vrot.slane %v7854, %v7859
        %7861 = vmatprep.subr.mxu0 0.0
        %7862 = vmatpush1.msra.mxu0 %v7710
        %7863 = vmatprep.subr.mxu0 0.0
        %7864 = vmatpush1.msra.mxu0 %v7711
        %7865 = vmatprep.subr.mxu0 0.0
        %7866 = vmatpush1.msra.mxu0 %v7712
        %7867 = vmatprep.subr.mxu0 0.0
        %7868 = vmatpush1.msra.mxu0 %v7713
        %7869 = vmatprep.subr.mxu0 0.0
        %7870 = vmatpush1.msra.mxu0 %v7714
        %7871 = vmatprep.subr.mxu0 0.0
        %7872 = vmatpush1.msra.mxu0 %v7715
        %7873 = vmatprep.subr.mxu0 0.0
        %7874 = vmatpush1.msra.mxu0 %v7716
        %7875 = vmatprep.subr.mxu0 0.0
        %7876 = vmatpush1.msra.mxu0 %v7717
        %7877 = vmatprep.subr.mxu0 0.0
        %7878 = vmatpush1.msra.mxu0 %v7718
        %7879 = vmatprep.subr.mxu0 0.0
        %7880 = vmatpush1.msra.mxu0 %v7719
        %7881 = vmatprep.subr.mxu0 0.0
        %7882 = vmatpush1.msra.mxu0 %v7720
        %7883 = vmatprep.subr.mxu0 0.0
        %7884 = vmatpush1.msra.mxu0 %v7721
        %7885 = vmatprep.subr.mxu0 0.0
        %7886 = vmatpush1.msra.mxu0 %v7722
        %7887 = vmatprep.subr.mxu0 0.0
        %7888 = vmatpush1.msra.mxu0 %v7723
        %7889 = vmatprep.subr.mxu0 0.0
        %7890 = vmatpush1.msra.mxu0 %v7724
        %7891 = vmatprep.subr.mxu0 0.0
        %7892 = vmatpush1.msra.mxu0 %v7725
        %7893 = vmatprep.subr.mxu0 0.0
        %7894 = vmatpush1.msra.mxu0 %v7726
        %7895 = vmatprep.subr.mxu0 0.0
        %7896 = vmatpush1.msra.mxu0 %v7727
        %7897 = vmatprep.subr.mxu0 0.0
        %7898 = vmatpush1.msra.mxu0 %v7728
        %7899 = vmatprep.subr.mxu0 0.0
        %7900 = vmatpush1.msra.mxu0 %v7729
        %7901 = vmatprep.subr.mxu0 0.0
        %7902 = vmatpush1.msra.mxu0 %v7730
        %7903 = vmatprep.subr.mxu0 0.0
        %7904 = vmatpush1.msra.mxu0 %v7731
        %7905 = vmatprep.subr.mxu0 0.0
        %7906 = vmatpush1.msra.mxu0 %v7732
        %7907 = vmatprep.subr.mxu0 0.0
        %7908 = vmatpush1.msra.mxu0 %v7733
        %7909 = vmatprep.subr.mxu0 0.0
        %7910 = vmatpush1.msra.mxu0 %v7734
        %7911 = vmatprep.subr.mxu0 0.0
        %7912 = vmatpush1.msra.mxu0 %v7735
        %7913 = vmatprep.subr.mxu0 0.0
        %7914 = vmatpush1.msra.mxu0 %v7736
        %7915 = vmatprep.subr.mxu0 0.0
        %7916 = vmatpush1.msra.mxu0 %v7737
        %7917 = vmatprep.subr.mxu0 0.0
        %7918 = vmatpush1.msra.mxu0 %v7738
        %7919 = vmatprep.subr.mxu0 0.0
        %7920 = vmatpush1.msra.mxu0 %v7739
        %7921 = vmatprep.subr.mxu0 0.0
        %7922 = vmatpush1.msra.mxu0 %v7740
        %7923 = vmatprep.subr.mxu0 0.0
        %7924 = vmatpush1.msra.mxu0 %v7741
        %7925 = vmatprep.mubr.f32.mxu0 %v7693
        %7926 = vmatmul.mubr.f32.gmra.mrb[0].mxu0 %v7692
        %v7927 = vpop.f32.mrb[0].mxu0
        %v7928 = vadd.f32 %v7860, %v7927
        %v7929 = vpop.f32.mrb[0].mxu0
        %7930 = vmatprep.mubr.f32.mxu0 %v7702
        %7931 = vmatmul.mubr.f32.gmra.mrb[0].mxu0 %v7701
        %v7932 = vpop.f32.mrb[0].mxu0
        %v7933 = vadd.f32 %v7860, %v7932
        %v7934 = vpop.f32.mrb[0].mxu0
        %7935 = vdwg.mxu0
        %7936 = vmatprep.subr.mxu0 0.0
        %7937 = vmatpush1.msra.mxu0 %v7742
        %7938 = vmatprep.subr.mxu0 0.0
        %7939 = vmatpush1.msra.mxu0 %v7743
        %7940 = vmatprep.subr.mxu0 0.0
        %7941 = vmatpush1.msra.mxu0 %v7744
        %7942 = vmatprep.subr.mxu0 0.0
        %7943 = vmatpush1.msra.mxu0 %v7745
        %7944 = vmatprep.subr.mxu0 0.0
        %7945 = vmatpush1.msra.mxu0 %v7746
        %7946 = vmatprep.subr.mxu0 0.0
        %7947 = vmatpush1.msra.mxu0 %v7747
        %7948 = vmatprep.subr.mxu0 0.0
        %7949 = vmatpush1.msra.mxu0 %v7748
        %7950 = vmatprep.subr.mxu0 0.0
        %7951 = vmatpush1.msra.mxu0 %v7749
        %7952 = vmatprep.subr.mxu0 0.0
        %7953 = vmatpush1.msra.mxu0 %v7750
        %7954 = vmatprep.subr.mxu0 0.0
        %7955 = vmatpush1.msra.mxu0 %v7751
        %7956 = vmatprep.subr.mxu0 0.0
        %7957 = vmatpush1.msra.mxu0 %v7752
        %7958 = vmatprep.subr.mxu0 0.0
        %7959 = vmatpush1.msra.mxu0 %v7753
        %7960 = vmatprep.subr.mxu0 0.0
        %7961 = vmatpush1.msra.mxu0 %v7754
        %7962 = vmatprep.subr.mxu0 0.0
        %7963 = vmatpush1.msra.mxu0 %v7755
        %7964 = vmatprep.subr.mxu0 0.0
        %7965 = vmatpush1.msra.mxu0 %v7756
        %7966 = vmatprep.subr.mxu0 0.0
        %7967 = vmatpush1.msra.mxu0 %v7757
        %7968 = vmatprep.subr.mxu0 0.0
        %7969 = vmatpush1.msra.mxu0 %v7758
        %7970 = vmatprep.subr.mxu0 0.0
        %7971 = vmatpush1.msra.mxu0 %v7759
        %7972 = vmatprep.subr.mxu0 0.0
        %7973 = vmatpush1.msra.mxu0 %v7760
        %7974 = vmatprep.subr.mxu0 0.0
        %7975 = vmatpush1.msra.mxu0 %v7761
        %7976 = vmatprep.subr.mxu0 0.0
        %7977 = vmatpush1.msra.mxu0 %v7762
        %7978 = vmatprep.subr.mxu0 0.0
        %7979 = vmatpush1.msra.mxu0 %v7763
        %7980 = vmatprep.subr.mxu0 0.0
        %7981 = vmatpush1.msra.mxu0 %v7764
        %7982 = vmatprep.subr.mxu0 0.0
        %7983 = vmatpush1.msra.mxu0 %v7765
        %7984 = vmatprep.subr.mxu0 0.0
        %7985 = vmatpush1.msra.mxu0 %v7766
        %7986 = vmatprep.subr.mxu0 0.0
        %7987 = vmatpush1.msra.mxu0 %v7767
        %7988 = vmatprep.subr.mxu0 0.0
        %7989 = vmatpush1.msra.mxu0 %v7768
        %7990 = vmatprep.subr.mxu0 0.0
        %7991 = vmatpush1.msra.mxu0 %v7769
        %7992 = vmatprep.subr.mxu0 0.0
        %7993 = vmatpush1.msra.mxu0 %v7770
        %7994 = vmatprep.subr.mxu0 0.0
        %7995 = vmatpush1.msra.mxu0 %v7771
        %7996 = vmatprep.subr.mxu0 0.0
        %7997 = vmatpush1.msra.mxu0 %v7772
        %7998 = vmatprep.subr.mxu0 0.0
        %7999 = vmatpush1.msra.mxu0 %v7773
        %8000 = vmatprep.mubr.f32.mxu0 %v7695
        %8001 = vmatmul.mubr.f32.gmra.mrb[0].mxu0 %v7694
        %v8002 = vpop.f32.mrb[0].mxu0
        %v8003 = vadd.f32 %v7928, %v8002
        %v8004 = vpop.f32.mrb[0].mxu0
        %8005 = vmatprep.mubr.f32.mxu0 %v7704
        %8006 = vmatmul.mubr.f32.gmra.mrb[0].mxu0 %v7703
        %v8007 = vpop.f32.mrb[0].mxu0
        %v8008 = vadd.f32 %v7933, %v8007
        %v8009 = vpop.f32.mrb[0].mxu0
        %8010 = vdwg.mxu0
        %8011 = vmatprep.subr.mxu0 0.0
        %8012 = vmatpush1.msra.mxu0 %v7774
        %8013 = vmatprep.subr.mxu0 0.0
        %8014 = vmatpush1.msra.mxu0 %v7775
        %8015 = vmatprep.subr.mxu0 0.0
        %8016 = vmatpush1.msra.mxu0 %v7776
        %8017 = vmatprep.subr.mxu0 0.0
        %8018 = vmatpush1.msra.mxu0 %v7777
        %8019 = vmatprep.subr.mxu0 0.0
        %8020 = vmatpush1.msra.mxu0 %v7778
        %8021 = vmatprep.subr.mxu0 0.0
        %8022 = vmatpush1.msra.mxu0 %v7779
        %8023 = vmatprep.subr.mxu0 0.0
        %8024 = vmatpush1.msra.mxu0 %v7780
        %8025 = vmatprep.subr.mxu0 0.0
        %8026 = vmatpush1.msra.mxu0 %v7781
        %8027 = vmatprep.subr.mxu0 0.0
        %8028 = vmatpush1.msra.mxu0 %v7782
        %8029 = vmatprep.subr.mxu0 0.0
        %8030 = vmatpush1.msra.mxu0 %v7783
        %8031 = vmatprep.subr.mxu0 0.0
        %8032 = vmatpush1.msra.mxu0 %v7784
        %8033 = vmatprep.subr.mxu0 0.0
        %8034 = vmatpush1.msra.mxu0 %v7785
        %8035 = vmatprep.subr.mxu0 0.0
        %8036 = vmatpush1.msra.mxu0 %v7786
        %8037 = vmatprep.subr.mxu0 0.0
        %8038 = vmatpush1.msra.mxu0 %v7787
        %8039 = vmatprep.subr.mxu0 0.0
        %8040 = vmatpush1.msra.mxu0 %v7788
        %8041 = vmatprep.subr.mxu0 0.0
        %8042 = vmatpush1.msra.mxu0 %v7789
        %8043 = vmatprep.subr.mxu0 0.0
        %8044 = vmatpush1.msra.mxu0 %v7790
        %8045 = vmatprep.subr.mxu0 0.0
        %8046 = vmatpush1.msra.mxu0 %v7791
        %8047 = vmatprep.subr.mxu0 0.0
        %8048 = vmatpush1.msra.mxu0 %v7792
        %8049 = vmatprep.subr.mxu0 0.0
        %8050 = vmatpush1.msra.mxu0 %v7793
        %8051 = vmatprep.subr.mxu0 0.0
        %8052 = vmatpush1.msra.mxu0 %v7794
        %8053 = vmatprep.subr.mxu0 0.0
        %8054 = vmatpush1.msra.mxu0 %v7795
        %8055 = vmatprep.subr.mxu0 0.0
        %8056 = vmatpush1.msra.mxu0 %v7796
        %8057 = vmatprep.subr.mxu0 0.0
        %8058 = vmatpush1.msra.mxu0 %v7797
        %8059 = vmatprep.subr.mxu0 0.0
        %8060 = vmatpush1.msra.mxu0 %v7798
        %8061 = vmatprep.subr.mxu0 0.0
        %8062 = vmatpush1.msra.mxu0 %v7799
        %8063 = vmatprep.subr.mxu0 0.0
        %8064 = vmatpush1.msra.mxu0 %v7800
        %8065 = vmatprep.subr.mxu0 0.0
        %8066 = vmatpush1.msra.mxu0 %v7801
        %8067 = vmatprep.subr.mxu0 0.0
        %8068 = vmatpush1.msra.mxu0 %v7802
        %8069 = vmatprep.subr.mxu0 0.0
        %8070 = vmatpush1.msra.mxu0 %v7803
        %8071 = vmatprep.subr.mxu0 0.0
        %8072 = vmatpush1.msra.mxu0 %v7804
        %8073 = vmatprep.subr.mxu0 0.0
        %8074 = vmatpush1.msra.mxu0 %v7805
        %8075 = vmatprep.mubr.f32.mxu0 %v7697
        %8076 = vmatmul.mubr.f32.gmra.mrb[0].mxu0 %v7696
        %v8077 = vpop.f32.mrb[0].mxu0
        %v8078 = vadd.f32 %v8003, %v8077
        %v8079 = vpop.f32.mrb[0].mxu0
        %8080 = vmatprep.mubr.f32.mxu0 %v7706
        %8081 = vmatmul.mubr.f32.gmra.mrb[0].mxu0 %v7705
        %v8082 = vpop.f32.mrb[0].mxu0
        %v8083 = vadd.f32 %v8008, %v8082
        %v8084 = vpop.f32.mrb[0].mxu0
        %8085 = vdwg.mxu0
        %8086 = vmatprep.subr.mxu0 0.0
        %8087 = vmatpush1.msra.mxu0 %v7806
        %8088 = vmatprep.subr.mxu0 0.0
        %8089 = vmatpush1.msra.mxu0 %v7807
        %8090 = vmatprep.subr.mxu0 0.0
        %8091 = vmatpush1.msra.mxu0 %v7808
        %8092 = vmatprep.subr.mxu0 0.0
        %8093 = vmatpush1.msra.mxu0 %v7809
        %8094 = vmatprep.subr.mxu0 0.0
        %8095 = vmatpush1.msra.mxu0 %v7810
        %8096 = vmatprep.subr.mxu0 0.0
        %8097 = vmatpush1.msra.mxu0 %v7811
        %8098 = vmatprep.subr.mxu0 0.0
        %8099 = vmatpush1.msra.mxu0 %v7812
        %8100 = vmatprep.subr.mxu0 0.0
        %8101 = vmatpush1.msra.mxu0 %v7813
        %8102 = vmatprep.subr.mxu0 0.0
        %8103 = vmatpush1.msra.mxu0 %v7814
        %8104 = vmatprep.subr.mxu0 0.0
        %8105 = vmatpush1.msra.mxu0 %v7815
        %8106 = vmatprep.subr.mxu0 0.0
        %8107 = vmatpush1.msra.mxu0 %v7816
        %8108 = vmatprep.subr.mxu0 0.0
        %8109 = vmatpush1.msra.mxu0 %v7817
        %8110 = vmatprep.subr.mxu0 0.0
        %8111 = vmatpush1.msra.mxu0 %v7818
        %8112 = vmatprep.subr.mxu0 0.0
        %8113 = vmatpush1.msra.mxu0 %v7819
        %8114 = vmatprep.subr.mxu0 0.0
        %8115 = vmatpush1.msra.mxu0 %v7820
        %8116 = vmatprep.subr.mxu0 0.0
        %8117 = vmatpush1.msra.mxu0 %v7821
        %8118 = vmatprep.subr.mxu0 0.0
        %8119 = vmatpush1.msra.mxu0 %v7822
        %8120 = vmatprep.subr.mxu0 0.0
        %8121 = vmatpush1.msra.mxu0 %v7823
        %8122 = vmatprep.subr.mxu0 0.0
        %8123 = vmatpush1.msra.mxu0 %v7824
        %8124 = vmatprep.subr.mxu0 0.0
        %8125 = vmatpush1.msra.mxu0 %v7825
        %8126 = vmatprep.subr.mxu0 0.0
        %8127 = vmatpush1.msra.mxu0 %v7826
        %8128 = vmatprep.subr.mxu0 0.0
        %8129 = vmatpush1.msra.mxu0 %v7827
        %8130 = vmatprep.subr.mxu0 0.0
        %8131 = vmatpush1.msra.mxu0 %v7828
        %8132 = vmatprep.subr.mxu0 0.0
        %8133 = vmatpush1.msra.mxu0 %v7829
        %8134 = vmatprep.subr.mxu0 0.0
        %8135 = vmatpush1.msra.mxu0 %v7830
        %8136 = vmatprep.subr.mxu0 0.0
        %8137 = vmatpush1.msra.mxu0 %v7831
        %8138 = vmatprep.subr.mxu0 0.0
        %8139 = vmatpush1.msra.mxu0 %v7832
        %8140 = vmatprep.subr.mxu0 0.0
        %8141 = vmatpush1.msra.mxu0 %v7833
        %8142 = vmatprep.subr.mxu0 0.0
        %8143 = vmatpush1.msra.mxu0 %v7834
        %8144 = vmatprep.subr.mxu0 0.0
        %8145 = vmatpush1.msra.mxu0 %v7835
        %8146 = vmatprep.subr.mxu0 0.0
        %8147 = vmatpush1.msra.mxu0 %v7836
        %8148 = vmatprep.subr.mxu0 0.0
        %8149 = vmatpush1.msra.mxu0 %v7837
        %8150 = vmatprep.mubr.f32.mxu0 %v7699
        %8151 = vmatmul.mubr.f32.gmra.mrb[0].mxu0 %v7698
        %v8152 = vpop.f32.mrb[0].mxu0
        %v8153 = vadd.f32 %v8078, %v8152
        %v8154 = vpop.f32.mrb[0].mxu0
        %8155 = vmatprep.mubr.f32.mxu0 %v7708
        %8156 = vmatmul.mubr.f32.gmra.mrb[0].mxu0 %v7707
        %v8157 = vpop.f32.mrb[0].mxu0
        %v8158 = vadd.f32 %v8083, %v8157
        %v8159 = vpop.f32.mrb[0].mxu0
        %8160 = vdwg.mxu0
        %8161 = vmatprep.subr.mxu0 0.0
        %8162 = vmatpush1.msra.mxu0 %v7838
        %8163 = vmatprep.subr.mxu0 0.0
        %8164 = vmatpush1.msra.mxu0 %v7839
        %8165 = vmatprep.subr.mxu0 0.0
        %8166 = vmatpush1.msra.mxu0 %v7840
        %8167 = vmatprep.subr.mxu0 0.0
        %8168 = vmatpush1.msra.mxu0 %v7841
        %8169 = vmatprep.subr.mxu0 0.0
        %8170 = vmatpush1.msra.mxu0 %v7842
        %8171 = vmatprep.subr.mxu0 0.0
        %8172 = vmatpush1.msra.mxu0 %v7843
        %8173 = vmatprep.subr.mxu0 0.0
        %8174 = vmatpush1.msra.mxu0 %v7844
        %8175 = vmatprep.subr.mxu0 0.0
        %8176 = vmatpush1.msra.mxu0 %v7845
        %8177 = vmatprep.subr.mxu0 0.0
        %8178 = vmatpush1.msra.mxu0 %v7846
        %8179 = vmatprep.subr.mxu0 0.0
        %8180 = vmatpush1.msra.mxu0 %v7847
        %8181 = vmatprep.subr.mxu0 0.0
        %8182 = vmatpush1.msra.mxu0 %v7848
        %8183 = vmatprep.subr.mxu0 0.0
        %8184 = vmatpush1.msra.mxu0 %v7849
        %8185 = vmatprep.subr.mxu0 0.0
        %8186 = vmatpush1.msra.mxu0 %v7850
        %8187 = vmatprep.subr.mxu0 0.0
        %8188 = vmatpush1.msra.mxu0 %v7851
        %8189 = vmatprep.subr.mxu0 0.0
        %8190 = vmatpush1.msra.mxu0 %v7852
        %8191 = vmatprep.subr.mxu0 0.0
        %8192 = vmatpush1.msra.mxu0 %v7853
        %8193 = vmatprep.subr.mxu0 0.0
        %8194 = vmatpush1.msra.mxu0 0.0
        %8195 = vmatprep.subr.mxu0 0.0
        %8196 = vmatpush1.msra.mxu0 0.0
        %8197 = vmatprep.subr.mxu0 0.0
        %8198 = vmatpush1.msra.mxu0 0.0
        %8199 = vmatprep.subr.mxu0 0.0
        %8200 = vmatpush1.msra.mxu0 0.0
        %8201 = vmatprep.subr.mxu0 0.0
        %8202 = vmatpush1.msra.mxu0 0.0
        %8203 = vmatprep.subr.mxu0 0.0
        %8204 = vmatpush1.msra.mxu0 0.0
        %8205 = vmatprep.subr.mxu0 0.0
        %8206 = vmatpush1.msra.mxu0 0.0
        %8207 = vmatprep.subr.mxu0 0.0
        %8208 = vmatpush1.msra.mxu0 0.0
        %8209 = vmatprep.subr.mxu0 0.0
        %8210 = vmatpush1.msra.mxu0 0.0
        %8211 = vmatprep.subr.mxu0 0.0
        %8212 = vmatpush1.msra.mxu0 0.0
        %8213 = vmatprep.subr.mxu0 0.0
        %8214 = vmatpush1.msra.mxu0 0.0
        %8215 = vmatprep.subr.mxu0 0.0
        %8216 = vmatpush1.msra.mxu0 0.0
        %8217 = vmatprep.subr.mxu0 0.0
        %8218 = vmatpush1.msra.mxu0 0.0
        %8219 = vmatprep.subr.mxu0 0.0
        %8220 = vmatpush1.msra.mxu0 0.0
        %8221 = vmatprep.subr.mxu0 0.0
        %8222 = vmatpush1.msra.mxu0 0.0
        %8223 = vmatprep.subr.mxu0 0.0
        %8224 = vmatpush1.msra.mxu0 0.0
        %8225 = vmatprep.mubr.f32.mxu0 0.0
        %8226 = vmatmul.mubr.f32.gmra.mrb[0].mxu0 %v7700
        %v8227 = vpop.f32.mrb[0].mxu0
        %v8228 = vadd.f32 %v8153, %v8227
        %v8229 = vpop.f32.mrb[0].mxu0
        %8230 = vmatprep.mubr.f32.mxu0 0.0
        %8231 = vmatmul.mubr.f32.gmra.mrb[0].mxu0 %v7709
        %v8232 = vpop.f32.mrb[0].mxu0
        %v8233 = vadd.f32 %v8158, %v8232
        %v8234 = vpop.f32.mrb[0].mxu0
        %8235 = vdwg.mxu0
        %v8236 = vmax.f32 %v8228, 0.0
        %v8237 = vmax.f32 %v8233, 0.0
        %v8238 = vlaneseq
        %v8239 = vshrl.u32 %v8238, 7
        %v8240 = vsub.s32 0, %v8239
        %v8241 = vrot.slane %v7855, %v8240
        %v8242 = vmul.f32 %v8236, %v8241
        %v8243 = vmul.f32 %v8237, %v8241
        %v8244 = vlaneseq
        %v8245 = vshrl.u32 %v8244, 7
        %v8246 = vsub.s32 0, %v8245
        %v8247 = vrot.slane %v7856, %v8246
        %v8248 = vadd.f32 %v8242, %v8247
        %v8249 = vadd.f32 %v8243, %v8247
        %v8252 = vcombine.high %v8248, %v8248
        %v8254 = vunpack.c.l.s4 1983009808
        %v8255 = vunpack.c.0.s8 %v8254
        %v8256 = vlaneseq
        %v8257 = vshrl.u32 %v8256, 7
        %v8258 = vsub.s32 %v8255, %v8257
        %v8259 = vrot.slane %v8248, %v8258
        %v8261 = vunpack.c.l.s4 1983009808
        %v8262 = vunpack.c.0.s8 %v8261
        %v8263 = vlaneseq
        %v8264 = vshrl.u32 %v8263, 7
        %v8265 = vsub.s32 %v8262, %v8264
        %v8266 = vrot.slane %v8252, %v8265
        %v8267 = vcombine.high %v8259, %v8259
        %v8268 = vcombine.high %v8266, %v8266
        %v8269 = vcombine.high %v8249, %v8249
        %v8271 = vunpack.c.l.s4 1983009808
        %v8272 = vunpack.c.0.s8 %v8271
        %v8273 = vlaneseq
        %v8274 = vshrl.u32 %v8273, 7
        %v8275 = vsub.s32 %v8272, %v8274
        %v8276 = vrot.slane %v8249, %v8275
        %v8278 = vunpack.c.l.s4 1983009808
        %v8279 = vunpack.c.0.s8 %v8278
        %v8280 = vlaneseq
        %v8281 = vshrl.u32 %v8280, 7
        %v8282 = vsub.s32 %v8279, %v8281
        %v8283 = vrot.slane %v8269, %v8282
        %v8284 = vcombine.high %v8276, %v8276
        %v8285 = vcombine.high %v8283, %v8283
        %vm8294 = vcmask 1041408
        %v8295 = vsel %vm8294, %v8259, -inf
        %v8296 = vrot.slane %v8295, 4
        %v8297 = vmax.f32 %v8295, %v8296
        %v8298 = vrot.slane %v8297, 2
        %v8299 = vmax.f32 %v8297, %v8298
        %v8300 = vrot.slane %v8299, 1
        %v8301 = vmax.f32 %v8299, %v8300
        %v8302 = vsel %vm8294, %v8267, -inf
        %v8303 = vrot.slane %v8302, 4
        %v8304 = vmax.f32 %v8302, %v8303
        %v8305 = vrot.slane %v8304, 2
        %v8306 = vmax.f32 %v8304, %v8305
        %v8307 = vrot.slane %v8306, 1
        %v8308 = vmax.f32 %v8306, %v8307
        %v8309 = vsel %vm8294, %v8266, -inf
        %v8310 = vrot.slane %v8309, 4
        %v8311 = vmax.f32 %v8309, %v8310
        %v8312 = vrot.slane %v8311, 2
        %v8313 = vmax.f32 %v8311, %v8312
        %v8314 = vrot.slane %v8313, 1
        %v8315 = vmax.f32 %v8313, %v8314
        %v8316 = vsel %vm8294, %v8268, -inf
        %v8317 = vrot.slane %v8316, 4
        %v8318 = vmax.f32 %v8316, %v8317
        %v8319 = vrot.slane %v8318, 2
        %v8320 = vmax.f32 %v8318, %v8319
        %v8321 = vrot.slane %v8320, 1
        %v8322 = vmax.f32 %v8320, %v8321
        %v8323 = vsel %vm8294, %v8276, -inf
        %v8324 = vrot.slane %v8323, 4
        %v8325 = vmax.f32 %v8323, %v8324
        %v8326 = vrot.slane %v8325, 2
        %v8327 = vmax.f32 %v8325, %v8326
        %v8328 = vrot.slane %v8327, 1
        %v8329 = vmax.f32 %v8327, %v8328
        %v8330 = vsel %vm8294, %v8284, -inf
        %v8331 = vrot.slane %v8330, 4
        %v8332 = vmax.f32 %v8330, %v8331
        %v8333 = vrot.slane %v8332, 2
        %v8334 = vmax.f32 %v8332, %v8333
        %v8335 = vrot.slane %v8334, 1
        %v8336 = vmax.f32 %v8334, %v8335
        %v8337 = vsel %vm8294, %v8283, -inf
        %v8338 = vrot.slane %v8337, 4
        %v8339 = vmax.f32 %v8337, %v8338
        %v8340 = vrot.slane %v8339, 2
        %v8341 = vmax.f32 %v8339, %v8340
        %v8342 = vrot.slane %v8341, 1
        %v8343 = vmax.f32 %v8341, %v8342
        %v8344 = vsel %vm8294, %v8285, -inf
        %v8345 = vrot.slane %v8344, 4
        %v8346 = vmax.f32 %v8344, %v8345
        %v8347 = vrot.slane %v8346, 2
        %v8348 = vmax.f32 %v8346, %v8347
        %v8349 = vrot.slane %v8348, 1
        %v8350 = vmax.f32 %v8348, %v8349
        %v8351 = vmax.f32 %v8301, %v8315
        %v8352 = vmax.f32 %v8308, %v8322
        %v8353 = vmax.f32 %v8329, %v8343
        %v8354 = vmax.f32 %v8336, %v8350
        %8355 = vst [vmem:[#allocation7] sm:$0xf] 0.0
        %8356 = vst [vmem:[#allocation7 + $0x4] sm:$0xf] 0.0
        %8357 = vst [vmem:[#allocation7 + $0x8] sm:$0xf] 0.0
        %8358 = vst [vmem:[#allocation7 + $0xc] sm:$0xf] 0.0
        %v8363 = vsel %vm5065, %v8352, %v8351
        %v8364 = vsel %vm5065, %v8354, %v8353
        %s8367 = scalar_lea.vmem [#allocation7], 4
        %8368 = vst [vmem:[%s8367 + $0x1] sm:$0x3] %v8363
        %8369 = vst [vmem:[%s8367 + $0x5] sm:$0x3] %v8364
        %v8370 = vld [vmem:[#allocation7] sm:$0x3]
        %v8371 = vld [vmem:[#allocation7 + $0x4] sm:$0x3]
        %v8374 = vcombine.low %v8370, %v8371
        %v8376 = vunpack.c.l.s4 1983009808
        %v8377 = vunpack.c.0.s8 %v8376
        %v8378 = vlaneseq
        %v8379 = vshrl.u32 %v8378, 7
        %v8380 = vsub.s32 %v8377, %v8379
        %v8381 = vrot.slane %v8374, %v8380
        %8383 = vst [vmem:[#allocation14] sm:$0xf] %v8381
        %v8384 = vld [vmem:[#allocation7 + $0x1] sm:$0x3]
        %v8385 = vld [vmem:[#allocation7 + $0x5] sm:$0x3]
        %v8388 = vcombine.low %v8384, %v8385
        %v8390 = vunpack.c.l.s4 1983009808
        %v8391 = vunpack.c.0.s8 %v8390
        %v8392 = vlaneseq
        %v8393 = vshrl.u32 %v8392, 7
        %v8394 = vsub.s32 %v8391, %v8393
        %v8395 = vrot.slane %v8388, %v8394
        %8397 = vst [vmem:[#allocation14 + $0x4] sm:$0xf] %v8395
        %v8398 = vld [vmem:[#allocation7 + $0x2] sm:$0x3]
        %v8399 = vld [vmem:[#allocation7 + $0x6] sm:$0x3]
        %v8402 = vcombine.low %v8398, %v8399
        %v8404 = vunpack.c.l.s4 1983009808
        %v8405 = vunpack.c.0.s8 %v8404
        %v8406 = vlaneseq
        %v8407 = vshrl.u32 %v8406, 7
        %v8408 = vsub.s32 %v8405, %v8407
        %v8409 = vrot.slane %v8402, %v8408
        %8411 = vst [vmem:[#allocation14 + $0x8] sm:$0xf] %v8409
        %v8412 = vld [vmem:[%s8367] sm:$0x3]
        %v8413 = vld [vmem:[%s8367 + $0x4] sm:$0x3]
        %v8416 = vcombine.low %v8412, %v8413
        %v8418 = vunpack.c.l.s4 1983009808
        %v8419 = vunpack.c.0.s8 %v8418
        %v8420 = vlaneseq
        %v8421 = vshrl.u32 %v8420, 7
        %v8422 = vsub.s32 %v8419, %v8421
        %v8423 = vrot.slane %v8416, %v8422
        %8425 = vst [vmem:[#allocation14 + $0xc] sm:$0xf] %v8423
        %v8426 = vld [vmem:[%s8367 + $0x1] sm:$0x3]
        %v8427 = vld [vmem:[%s8367 + $0x5] sm:$0x3]
        %v8430 = vcombine.low %v8426, %v8427
        %v8432 = vunpack.c.l.s4 1983009808
        %v8433 = vunpack.c.0.s8 %v8432
        %v8434 = vlaneseq
        %v8435 = vshrl.u32 %v8434, 7
        %v8436 = vsub.s32 %v8433, %v8435
        %v8437 = vrot.slane %v8430, %v8436
        %8439 = vst [vmem:[#allocation14 + $0x10] sm:$0xf] %v8437
        %v8440 = vld [vmem:[%s8367 + $0x2] sm:$0x3]
        %v8441 = vld [vmem:[%s8367 + $0x6] sm:$0x3]
        %v8444 = vcombine.low %v8440, %v8441
        %v8446 = vunpack.c.l.s4 1983009808
        %v8447 = vunpack.c.0.s8 %v8446
        %v8448 = vlaneseq
        %v8449 = vshrl.u32 %v8448, 7
        %v8450 = vsub.s32 %v8447, %v8449
        %v8451 = vrot.slane %v8444, %v8450
        %8453 = vst [vmem:[#allocation14 + $0x14] sm:$0xf] %v8451
        %s8454 = scalar_lea.vmem [#allocation7], 8
        %v8455 = vld [vmem:[%s8454] sm:$0x3]
        %v8456 = vld [vmem:[%s8454 + $0x4] sm:$0x3]
        %v8459 = vcombine.low %v8455, %v8456
        %v8461 = vunpack.c.l.s4 1983009808
        %v8462 = vunpack.c.0.s8 %v8461
        %v8463 = vlaneseq
        %v8464 = vshrl.u32 %v8463, 7
        %v8465 = vsub.s32 %v8462, %v8464
        %v8466 = vrot.slane %v8459, %v8465
        %8468 = vst [vmem:[#allocation14 + $0x18] sm:$0xf] %v8466
        %v8469 = vld [vmem:[%s8454 + $0x1] sm:$0x3]
        %v8470 = vld [vmem:[%s8454 + $0x5] sm:$0x3]
        %v8473 = vcombine.low %v8469, %v8470
        %v8475 = vunpack.c.l.s4 1983009808
        %v8476 = vunpack.c.0.s8 %v8475
        %v8477 = vlaneseq
        %v8478 = vshrl.u32 %v8477, 7
        %v8479 = vsub.s32 %v8476, %v8478
        %v8480 = vrot.slane %v8473, %v8479
        %8482 = vst [vmem:[#allocation14 + $0x1c] sm:$0xf] %v8480
        %v8483 = vld [vmem:[%s8454 + $0x2] sm:$0x3]
        %v8484 = vld [vmem:[%s8454 + $0x6] sm:$0x3]
        %v8487 = vcombine.low %v8483, %v8484
        %v8489 = vunpack.c.l.s4 1983009808
        %v8490 = vunpack.c.0.s8 %v8489
        %v8491 = vlaneseq
        %v8492 = vshrl.u32 %v8491, 7
        %v8493 = vsub.s32 %v8490, %v8492
        %v8494 = vrot.slane %v8487, %v8493
        %8496 = vst [vmem:[#allocation14 + $0x20] sm:$0xf] %v8494
        %v8497 = vld [vmem:[#allocation14] sm:$0xff]
        %v8498 = vld [vmem:[#allocation14 + $0x8] sm:$0xff]
        %v8499 = vld [vmem:[#allocation14 + $0x10] sm:$0xff]
        %v8500 = vld [vmem:[#allocation14 + $0x18] sm:$0xff]
        %v8501 = vld [vmem:[#allocation14 + $0x20] sm:$0xf]
        %v8502 = vld [vmem:[#allocation22] sm:$0xff]
        %v8503 = vld [vmem:[#allocation22 + $0x8] sm:$0xff]
        %v8504 = vld [vmem:[#allocation22 + $0x10] sm:$0xff]
        %v8505 = vld [vmem:[#allocation22 + $0x18] sm:$0xff]
        %v8506 = vld [vmem:[#allocation22 + $0x20] sm:$0xff]
        %v8507 = vld [vmem:[#allocation22 + $0x28] sm:$0xff]
        %v8508 = vld [vmem:[#allocation22 + $0x30] sm:$0xff]
        %v8509 = vld [vmem:[#allocation22 + $0x38] sm:$0xff]
        %v8510 = vld [vmem:[#allocation22 + $0x40] sm:$0xff]
        %v8511 = vld [vmem:[#allocation22 + $0x48] sm:$0xff]
        %v8512 = vld [vmem:[#allocation22 + $0x50] sm:$0xff]
        %v8513 = vld [vmem:[#allocation22 + $0x58] sm:$0xff]
        %v8514 = vld [vmem:[#allocation22 + $0x60] sm:$0xff]
        %v8515 = vld [vmem:[#allocation22 + $0x68] sm:$0xff]
        %v8516 = vld [vmem:[#allocation22 + $0x70] sm:$0xff]
        %v8517 = vld [vmem:[#allocation22 + $0x78] sm:$0xff]
        %v8518 = vld [vmem:[#allocation22 + $0x80] sm:$0xff]
        %v8519 = vld [vmem:[#allocation22 + $0x88] sm:$0xff]
        %v8520 = vld [vmem:[#allocation22 + $0x90] sm:$0xff]
        %v8521 = vld [vmem:[#allocation22 + $0x98] sm:$0xff]
        %v8522 = vld [vmem:[#allocation22 + $0xa0] sm:$0xff]
        %v8523 = vld [vmem:[#allocation22 + $0xa8] sm:$0xff]
        %v8524 = vld [vmem:[#allocation22 + $0xb0] sm:$0xff]
        %v8525 = vld [vmem:[#allocation22 + $0xb8] sm:$0xff]
        %v8526 = vld [vmem:[#allocation22 + $0xc0] sm:$0xff]
        %v8527 = vld [vmem:[#allocation22 + $0xc8] sm:$0xff]
        %v8528 = vld [vmem:[#allocation22 + $0xd0] sm:$0xff]
        %v8529 = vld [vmem:[#allocation22 + $0xd8] sm:$0xff]
        %v8530 = vld [vmem:[#allocation22 + $0xe0] sm:$0xff]
        %v8531 = vld [vmem:[#allocation22 + $0xe8] sm:$0xff]
        %v8532 = vld [vmem:[#allocation22 + $0xf0] sm:$0xff]
        %v8533 = vld [vmem:[#allocation22 + $0xf8] sm:$0xff]
        %v8534 = vld [vmem:[#allocation22 + $0x100] sm:$0xff]
        %v8535 = vld [vmem:[#allocation22 + $0x108] sm:$0xff]
        %v8536 = vld [vmem:[#allocation22 + $0x110] sm:$0xff]
        %v8537 = vld [vmem:[#allocation22 + $0x118] sm:$0xff]
        %v8538 = vld [vmem:[#allocation22 + $0x120] sm:$0xff]
        %v8539 = vld [vmem:[#allocation22 + $0x128] sm:$0xff]
        %v8540 = vld [vmem:[#allocation22 + $0x130] sm:$0xff]
        %v8541 = vld [vmem:[#allocation22 + $0x138] sm:$0xff]
        %v8542 = vld [vmem:[#allocation22 + $0x140] sm:$0xff]
        %v8543 = vld [vmem:[#allocation22 + $0x148] sm:$0xff]
        %v8544 = vld [vmem:[#allocation22 + $0x150] sm:$0xff]
        %v8545 = vld [vmem:[#allocation22 + $0x158] sm:$0xff]
        %v8546 = vld [vmem:[#allocation22 + $0x160] sm:$0xff]
        %v8547 = vld [vmem:[#allocation22 + $0x168] sm:$0xff]
        %v8548 = vld [vmem:[#allocation22 + $0x170] sm:$0xff]
        %v8549 = vld [vmem:[#allocation22 + $0x178] sm:$0xff]
        %v8550 = vld [vmem:[#allocation22 + $0x180] sm:$0xff]
        %v8551 = vld [vmem:[#allocation22 + $0x188] sm:$0xff]
        %v8552 = vld [vmem:[#allocation22 + $0x190] sm:$0xff]
        %v8553 = vld [vmem:[#allocation22 + $0x198] sm:$0xff]
        %v8554 = vld [vmem:[#allocation22 + $0x1a0] sm:$0xff]
        %v8555 = vld [vmem:[#allocation22 + $0x1a8] sm:$0xff]
        %v8556 = vld [vmem:[#allocation22 + $0x1b0] sm:$0xff]
        %v8557 = vld [vmem:[#allocation22 + $0x1b8] sm:$0xff]
        %v8558 = vld [vmem:[#allocation22 + $0x1c0] sm:$0xff]
        %v8559 = vld [vmem:[#allocation22 + $0x1c8] sm:$0xff]
        %v8560 = vld [vmem:[#allocation22 + $0x1d0] sm:$0xff]
        %v8561 = vld [vmem:[#allocation22 + $0x1d8] sm:$0xff]
        %v8562 = vld [vmem:[#allocation22 + $0x1e0] sm:$0xff]
        %v8563 = vld [vmem:[#allocation22 + $0x1e8] sm:$0xff]
        %v8564 = vld [vmem:[#allocation22 + $0x1f0] sm:$0xff]
        %v8565 = vld [vmem:[#allocation22 + $0x1f8] sm:$0xff]
        %v8566 = vld [vmem:[#allocation22 + $0x200] sm:$0xff]
        %v8567 = vld [vmem:[#allocation22 + $0x208] sm:$0xff]
        %v8568 = vld [vmem:[#allocation22 + $0x210] sm:$0xff]
        %v8569 = vld [vmem:[#allocation22 + $0x218] sm:$0xff]
        %v8570 = vld [vmem:[#allocation22 + $0x220] sm:$0xff]
        %v8571 = vld [vmem:[#allocation22 + $0x228] sm:$0xff]
        %v8572 = vld [vmem:[#allocation22 + $0x230] sm:$0xff]
        %v8573 = vld [vmem:[#allocation22 + $0x238] sm:$0xff]
        %v8574 = vld [vmem:[#allocation22 + $0x240] sm:$0xff]
        %v8575 = vld [vmem:[#allocation22 + $0x248] sm:$0xff]
        %v8576 = vld [vmem:[#allocation22 + $0x250] sm:$0xff]
        %v8577 = vld [vmem:[#allocation22 + $0x258] sm:$0xff]
        %v8578 = vld [vmem:[#allocation22 + $0x260] sm:$0xff]
        %v8579 = vld [vmem:[#allocation22 + $0x268] sm:$0xff]
        %v8580 = vld [vmem:[#allocation22 + $0x270] sm:$0xff]
        %v8581 = vld [vmem:[#allocation22 + $0x278] sm:$0xff]
        %v8582 = vld [vmem:[#allocation22 + $0x280] sm:$0xff]
        %v8583 = vld [vmem:[#allocation22 + $0x288] sm:$0xff]
        %v8584 = vld [vmem:[#allocation22 + $0x290] sm:$0xff]
        %v8585 = vld [vmem:[#allocation22 + $0x298] sm:$0xff]
        %v8586 = vld [vmem:[#allocation22 + $0x2a0] sm:$0xff]
        %v8587 = vld [vmem:[#allocation22 + $0x2a8] sm:$0xff]
        %v8588 = vld [vmem:[#allocation22 + $0x2b0] sm:$0xff]
        %v8589 = vld [vmem:[#allocation22 + $0x2b8] sm:$0xff]
        %v8590 = vld [vmem:[#allocation22 + $0x2c0] sm:$0xff]
        %v8591 = vld [vmem:[#allocation22 + $0x2c8] sm:$0xff]
        %v8592 = vld [vmem:[#allocation22 + $0x2d0] sm:$0xff]
        %v8593 = vld [vmem:[#allocation22 + $0x2d8] sm:$0xff]
        %v8594 = vld [vmem:[#allocation22 + $0x2e0] sm:$0xff]
        %v8595 = vld [vmem:[#allocation22 + $0x2e8] sm:$0xff]
        %v8596 = vld [vmem:[#allocation22 + $0x2f0] sm:$0xff]
        %v8597 = vld [vmem:[#allocation22 + $0x2f8] sm:$0xff]
        %v8598 = vld [vmem:[#allocation22 + $0x300] sm:$0xff]
        %v8599 = vld [vmem:[#allocation22 + $0x308] sm:$0xff]
        %v8600 = vld [vmem:[#allocation22 + $0x310] sm:$0xff]
        %v8601 = vld [vmem:[#allocation22 + $0x318] sm:$0xff]
        %v8602 = vld [vmem:[#allocation22 + $0x320] sm:$0xff]
        %v8603 = vld [vmem:[#allocation22 + $0x328] sm:$0xff]
        %v8604 = vld [vmem:[#allocation22 + $0x330] sm:$0xff]
        %v8605 = vld [vmem:[#allocation22 + $0x338] sm:$0xff]
        %v8606 = vld [vmem:[#allocation22 + $0x340] sm:$0xff]
        %v8607 = vld [vmem:[#allocation22 + $0x348] sm:$0xff]
        %v8608 = vld [vmem:[#allocation22 + $0x350] sm:$0xff]
        %v8609 = vld [vmem:[#allocation22 + $0x358] sm:$0xff]
        %v8610 = vld [vmem:[#allocation22 + $0x360] sm:$0xff]
        %v8611 = vld [vmem:[#allocation22 + $0x368] sm:$0xff]
        %v8612 = vld [vmem:[#allocation22 + $0x370] sm:$0xff]
        %v8613 = vld [vmem:[#allocation22 + $0x378] sm:$0xff]
        %v8614 = vld [vmem:[#allocation22 + $0x380] sm:$0xff]
        %v8615 = vld [vmem:[#allocation22 + $0x388] sm:$0xff]
        %v8616 = vld [vmem:[#allocation22 + $0x390] sm:$0xff]
        %v8617 = vld [vmem:[#allocation22 + $0x398] sm:$0xff]
        %v8618 = vld [vmem:[#allocation22 + $0x3a0] sm:$0xff]
        %v8619 = vld [vmem:[#allocation22 + $0x3a8] sm:$0xff]
        %v8620 = vld [vmem:[#allocation22 + $0x3b0] sm:$0xff]
        %v8621 = vld [vmem:[#allocation22 + $0x3b8] sm:$0xff]
        %v8622 = vld [vmem:[#allocation22 + $0x3c0] sm:$0xff]
        %v8623 = vld [vmem:[#allocation22 + $0x3c8] sm:$0xff]
        %v8624 = vld [vmem:[#allocation22 + $0x3d0] sm:$0xff]
        %v8625 = vld [vmem:[#allocation22 + $0x3d8] sm:$0xff]
        %v8626 = vld [vmem:[#allocation22 + $0x3e0] sm:$0xff]
        %v8627 = vld [vmem:[#allocation22 + $0x3e8] sm:$0xff]
        %v8628 = vld [vmem:[#allocation22 + $0x3f0] sm:$0xff]
        %v8629 = vld [vmem:[#allocation22 + $0x3f8] sm:$0xff]
        %v8630 = vld [vmem:[#allocation22 + $0x400] sm:$0xff]
        %v8631 = vld [vmem:[#allocation22 + $0x408] sm:$0xff]
        %v8632 = vld [vmem:[#allocation22 + $0x410] sm:$0xff]
        %v8633 = vld [vmem:[#allocation22 + $0x418] sm:$0xff]
        %v8634 = vld [vmem:[#allocation22 + $0x420] sm:$0xff]
        %v8635 = vld [vmem:[#allocation22 + $0x428] sm:$0xff]
        %v8636 = vld [vmem:[#allocation22 + $0x430] sm:$0xff]
        %v8637 = vld [vmem:[#allocation22 + $0x438] sm:$0xff]
        %v8638 = vld [vmem:[#allocation22 + $0x440] sm:$0xff]
        %v8639 = vld [vmem:[#allocation22 + $0x448] sm:$0xff]
        %v8640 = vld [vmem:[#allocation22 + $0x450] sm:$0xff]
        %v8641 = vld [vmem:[#allocation22 + $0x458] sm:$0xff]
        %v8642 = vld [vmem:[#allocation22 + $0x460] sm:$0xff]
        %v8643 = vld [vmem:[#allocation22 + $0x468] sm:$0xff]
        %v8644 = vld [vmem:[#allocation22 + $0x470] sm:$0xff]
        %v8645 = vld [vmem:[#allocation22 + $0x478] sm:$0xff]
        %v8646 = vld [vmem:[%s14] sm:$0x1]
        %v8647 = vld [vmem:[%s14 + $0x1] sm:$0x1]
        %v8648 = vld [vmem:[%s14 + $0x2] sm:$0x1]
        %v8649 = vlaneseq
        %v8650 = vshrl.u32 %v8649, 7
        %v8651 = vsub.s32 0, %v8650
        %v8652 = vrot.slane %v8646, %v8651
        %v8657 = vcombine.high %v8497, %v8497
        %v8658 = vcombine.high %v8498, %v8498
        %v8659 = vcombine.high %v8499, %v8499
        %v8660 = vcombine.high %v8500, %v8500
        %8665 = vmatprep.subr.mxu0 0.0
        %8666 = vmatpush1.msra.mxu0 %v8502
        %8667 = vmatprep.subr.mxu0 0.0
        %8668 = vmatpush1.msra.mxu0 %v8503
        %8669 = vmatprep.subr.mxu0 0.0
        %8670 = vmatpush1.msra.mxu0 %v8504
        %8671 = vmatprep.subr.mxu0 0.0
        %8672 = vmatpush1.msra.mxu0 %v8505
        %8673 = vmatprep.subr.mxu0 0.0
        %8674 = vmatpush1.msra.mxu0 %v8506
        %8675 = vmatprep.subr.mxu0 0.0
        %8676 = vmatpush1.msra.mxu0 %v8507
        %8677 = vmatprep.subr.mxu0 0.0
        %8678 = vmatpush1.msra.mxu0 %v8508
        %8679 = vmatprep.subr.mxu0 0.0
        %8680 = vmatpush1.msra.mxu0 %v8509
        %8681 = vmatprep.subr.mxu0 0.0
        %8682 = vmatpush1.msra.mxu0 %v8510
        %8683 = vmatprep.subr.mxu0 0.0
        %8684 = vmatpush1.msra.mxu0 %v8511
        %8685 = vmatprep.subr.mxu0 0.0
        %8686 = vmatpush1.msra.mxu0 %v8512
        %8687 = vmatprep.subr.mxu0 0.0
        %8688 = vmatpush1.msra.mxu0 %v8513
        %8689 = vmatprep.subr.mxu0 0.0
        %8690 = vmatpush1.msra.mxu0 %v8514
        %8691 = vmatprep.subr.mxu0 0.0
        %8692 = vmatpush1.msra.mxu0 %v8515
        %8693 = vmatprep.subr.mxu0 0.0
        %8694 = vmatpush1.msra.mxu0 %v8516
        %8695 = vmatprep.subr.mxu0 0.0
        %8696 = vmatpush1.msra.mxu0 %v8517
        %8697 = vmatprep.subr.mxu0 0.0
        %8698 = vmatpush1.msra.mxu0 %v8518
        %8699 = vmatprep.subr.mxu0 0.0
        %8700 = vmatpush1.msra.mxu0 %v8519
        %8701 = vmatprep.subr.mxu0 0.0
        %8702 = vmatpush1.msra.mxu0 %v8520
        %8703 = vmatprep.subr.mxu0 0.0
        %8704 = vmatpush1.msra.mxu0 %v8521
        %8705 = vmatprep.subr.mxu0 0.0
        %8706 = vmatpush1.msra.mxu0 %v8522
        %8707 = vmatprep.subr.mxu0 0.0
        %8708 = vmatpush1.msra.mxu0 %v8523
        %8709 = vmatprep.subr.mxu0 0.0
        %8710 = vmatpush1.msra.mxu0 %v8524
        %8711 = vmatprep.subr.mxu0 0.0
        %8712 = vmatpush1.msra.mxu0 %v8525
        %8713 = vmatprep.subr.mxu0 0.0
        %8714 = vmatpush1.msra.mxu0 %v8526
        %8715 = vmatprep.subr.mxu0 0.0
        %8716 = vmatpush1.msra.mxu0 %v8527
        %8717 = vmatprep.subr.mxu0 0.0
        %8718 = vmatpush1.msra.mxu0 %v8528
        %8719 = vmatprep.subr.mxu0 0.0
        %8720 = vmatpush1.msra.mxu0 %v8529
        %8721 = vmatprep.subr.mxu0 0.0
        %8722 = vmatpush1.msra.mxu0 %v8530
        %8723 = vmatprep.subr.mxu0 0.0
        %8724 = vmatpush1.msra.mxu0 %v8531
        %8725 = vmatprep.subr.mxu0 0.0
        %8726 = vmatpush1.msra.mxu0 %v8532
        %8727 = vmatprep.subr.mxu0 0.0
        %8728 = vmatpush1.msra.mxu0 %v8533
        %8729 = vmatprep.mubr.f32.mxu0 %v8657
        %8730 = vmatmul.mubr.f32.gmra.mrb[0].mxu0 %v8497
        %v8731 = vpop.f32.mrb[0].mxu0
        %v8732 = vadd.f32 %v8652, %v8731
        %v8733 = vpop.f32.mrb[0].mxu0
        %8734 = vdwg.mxu0
        %8735 = vmatprep.subr.mxu0 0.0
        %8736 = vmatpush1.msra.mxu0 %v8534
        %8737 = vmatprep.subr.mxu0 0.0
        %8738 = vmatpush1.msra.mxu0 %v8535
        %8739 = vmatprep.subr.mxu0 0.0
        %8740 = vmatpush1.msra.mxu0 %v8536
        %8741 = vmatprep.subr.mxu0 0.0
        %8742 = vmatpush1.msra.mxu0 %v8537
        %8743 = vmatprep.subr.mxu0 0.0
        %8744 = vmatpush1.msra.mxu0 %v8538
        %8745 = vmatprep.subr.mxu0 0.0
        %8746 = vmatpush1.msra.mxu0 %v8539
        %8747 = vmatprep.subr.mxu0 0.0
        %8748 = vmatpush1.msra.mxu0 %v8540
        %8749 = vmatprep.subr.mxu0 0.0
        %8750 = vmatpush1.msra.mxu0 %v8541
        %8751 = vmatprep.subr.mxu0 0.0
        %8752 = vmatpush1.msra.mxu0 %v8542
        %8753 = vmatprep.subr.mxu0 0.0
        %8754 = vmatpush1.msra.mxu0 %v8543
        %8755 = vmatprep.subr.mxu0 0.0
        %8756 = vmatpush1.msra.mxu0 %v8544
        %8757 = vmatprep.subr.mxu0 0.0
        %8758 = vmatpush1.msra.mxu0 %v8545
        %8759 = vmatprep.subr.mxu0 0.0
        %8760 = vmatpush1.msra.mxu0 %v8546
        %8761 = vmatprep.subr.mxu0 0.0
        %8762 = vmatpush1.msra.mxu0 %v8547
        %8763 = vmatprep.subr.mxu0 0.0
        %8764 = vmatpush1.msra.mxu0 %v8548
        %8765 = vmatprep.subr.mxu0 0.0
        %8766 = vmatpush1.msra.mxu0 %v8549
        %8767 = vmatprep.subr.mxu0 0.0
        %8768 = vmatpush1.msra.mxu0 %v8550
        %8769 = vmatprep.subr.mxu0 0.0
        %8770 = vmatpush1.msra.mxu0 %v8551
        %8771 = vmatprep.subr.mxu0 0.0
        %8772 = vmatpush1.msra.mxu0 %v8552
        %8773 = vmatprep.subr.mxu0 0.0
        %8774 = vmatpush1.msra.mxu0 %v8553
        %8775 = vmatprep.subr.mxu0 0.0
        %8776 = vmatpush1.msra.mxu0 %v8554
        %8777 = vmatprep.subr.mxu0 0.0
        %8778 = vmatpush1.msra.mxu0 %v8555
        %8779 = vmatprep.subr.mxu0 0.0
        %8780 = vmatpush1.msra.mxu0 %v8556
        %8781 = vmatprep.subr.mxu0 0.0
        %8782 = vmatpush1.msra.mxu0 %v8557
        %8783 = vmatprep.subr.mxu0 0.0
        %8784 = vmatpush1.msra.mxu0 %v8558
        %8785 = vmatprep.subr.mxu0 0.0
        %8786 = vmatpush1.msra.mxu0 %v8559
        %8787 = vmatprep.subr.mxu0 0.0
        %8788 = vmatpush1.msra.mxu0 %v8560
        %8789 = vmatprep.subr.mxu0 0.0
        %8790 = vmatpush1.msra.mxu0 %v8561
        %8791 = vmatprep.subr.mxu0 0.0
        %8792 = vmatpush1.msra.mxu0 %v8562
        %8793 = vmatprep.subr.mxu0 0.0
        %8794 = vmatpush1.msra.mxu0 %v8563
        %8795 = vmatprep.subr.mxu0 0.0
        %8796 = vmatpush1.msra.mxu0 %v8564
        %8797 = vmatprep.subr.mxu0 0.0
        %8798 = vmatpush1.msra.mxu0 %v8565
        %8799 = vmatprep.mubr.f32.mxu0 %v8658
        %8800 = vmatmul.mubr.f32.gmra.mrb[0].mxu0 %v8498
        %v8801 = vpop.f32.mrb[0].mxu0
        %v8802 = vadd.f32 %v8732, %v8801
        %v8803 = vpop.f32.mrb[0].mxu0
        %8804 = vdwg.mxu0
        %8805 = vmatprep.subr.mxu0 0.0
        %8806 = vmatpush1.msra.mxu0 %v8566
        %8807 = vmatprep.subr.mxu0 0.0
        %8808 = vmatpush1.msra.mxu0 %v8567
        %8809 = vmatprep.subr.mxu0 0.0
        %8810 = vmatpush1.msra.mxu0 %v8568
        %8811 = vmatprep.subr.mxu0 0.0
        %8812 = vmatpush1.msra.mxu0 %v8569
        %8813 = vmatprep.subr.mxu0 0.0
        %8814 = vmatpush1.msra.mxu0 %v8570
        %8815 = vmatprep.subr.mxu0 0.0
        %8816 = vmatpush1.msra.mxu0 %v8571
        %8817 = vmatprep.subr.mxu0 0.0
        %8818 = vmatpush1.msra.mxu0 %v8572
        %8819 = vmatprep.subr.mxu0 0.0
        %8820 = vmatpush1.msra.mxu0 %v8573
        %8821 = vmatprep.subr.mxu0 0.0
        %8822 = vmatpush1.msra.mxu0 %v8574
        %8823 = vmatprep.subr.mxu0 0.0
        %8824 = vmatpush1.msra.mxu0 %v8575
        %8825 = vmatprep.subr.mxu0 0.0
        %8826 = vmatpush1.msra.mxu0 %v8576
        %8827 = vmatprep.subr.mxu0 0.0
        %8828 = vmatpush1.msra.mxu0 %v8577
        %8829 = vmatprep.subr.mxu0 0.0
        %8830 = vmatpush1.msra.mxu0 %v8578
        %8831 = vmatprep.subr.mxu0 0.0
        %8832 = vmatpush1.msra.mxu0 %v8579
        %8833 = vmatprep.subr.mxu0 0.0
        %8834 = vmatpush1.msra.mxu0 %v8580
        %8835 = vmatprep.subr.mxu0 0.0
        %8836 = vmatpush1.msra.mxu0 %v8581
        %8837 = vmatprep.subr.mxu0 0.0
        %8838 = vmatpush1.msra.mxu0 %v8582
        %8839 = vmatprep.subr.mxu0 0.0
        %8840 = vmatpush1.msra.mxu0 %v8583
        %8841 = vmatprep.subr.mxu0 0.0
        %8842 = vmatpush1.msra.mxu0 %v8584
        %8843 = vmatprep.subr.mxu0 0.0
        %8844 = vmatpush1.msra.mxu0 %v8585
        %8845 = vmatprep.subr.mxu0 0.0
        %8846 = vmatpush1.msra.mxu0 %v8586
        %8847 = vmatprep.subr.mxu0 0.0
        %8848 = vmatpush1.msra.mxu0 %v8587
        %8849 = vmatprep.subr.mxu0 0.0
        %8850 = vmatpush1.msra.mxu0 %v8588
        %8851 = vmatprep.subr.mxu0 0.0
        %8852 = vmatpush1.msra.mxu0 %v8589
        %8853 = vmatprep.subr.mxu0 0.0
        %8854 = vmatpush1.msra.mxu0 %v8590
        %8855 = vmatprep.subr.mxu0 0.0
        %8856 = vmatpush1.msra.mxu0 %v8591
        %8857 = vmatprep.subr.mxu0 0.0
        %8858 = vmatpush1.msra.mxu0 %v8592
        %8859 = vmatprep.subr.mxu0 0.0
        %8860 = vmatpush1.msra.mxu0 %v8593
        %8861 = vmatprep.subr.mxu0 0.0
        %8862 = vmatpush1.msra.mxu0 %v8594
        %8863 = vmatprep.subr.mxu0 0.0
        %8864 = vmatpush1.msra.mxu0 %v8595
        %8865 = vmatprep.subr.mxu0 0.0
        %8866 = vmatpush1.msra.mxu0 %v8596
        %8867 = vmatprep.subr.mxu0 0.0
        %8868 = vmatpush1.msra.mxu0 %v8597
        %8869 = vmatprep.mubr.f32.mxu0 %v8659
        %8870 = vmatmul.mubr.f32.gmra.mrb[0].mxu0 %v8499
        %v8871 = vpop.f32.mrb[0].mxu0
        %v8872 = vadd.f32 %v8802, %v8871
        %v8873 = vpop.f32.mrb[0].mxu0
        %8874 = vdwg.mxu0
        %8875 = vmatprep.subr.mxu0 0.0
        %8876 = vmatpush1.msra.mxu0 %v8598
        %8877 = vmatprep.subr.mxu0 0.0
        %8878 = vmatpush1.msra.mxu0 %v8599
        %8879 = vmatprep.subr.mxu0 0.0
        %8880 = vmatpush1.msra.mxu0 %v8600
        %8881 = vmatprep.subr.mxu0 0.0
        %8882 = vmatpush1.msra.mxu0 %v8601
        %8883 = vmatprep.subr.mxu0 0.0
        %8884 = vmatpush1.msra.mxu0 %v8602
        %8885 = vmatprep.subr.mxu0 0.0
        %8886 = vmatpush1.msra.mxu0 %v8603
        %8887 = vmatprep.subr.mxu0 0.0
        %8888 = vmatpush1.msra.mxu0 %v8604
        %8889 = vmatprep.subr.mxu0 0.0
        %8890 = vmatpush1.msra.mxu0 %v8605
        %8891 = vmatprep.subr.mxu0 0.0
        %8892 = vmatpush1.msra.mxu0 %v8606
        %8893 = vmatprep.subr.mxu0 0.0
        %8894 = vmatpush1.msra.mxu0 %v8607
        %8895 = vmatprep.subr.mxu0 0.0
        %8896 = vmatpush1.msra.mxu0 %v8608
        %8897 = vmatprep.subr.mxu0 0.0
        %8898 = vmatpush1.msra.mxu0 %v8609
        %8899 = vmatprep.subr.mxu0 0.0
        %8900 = vmatpush1.msra.mxu0 %v8610
        %8901 = vmatprep.subr.mxu0 0.0
        %8902 = vmatpush1.msra.mxu0 %v8611
        %8903 = vmatprep.subr.mxu0 0.0
        %8904 = vmatpush1.msra.mxu0 %v8612
        %8905 = vmatprep.subr.mxu0 0.0
        %8906 = vmatpush1.msra.mxu0 %v8613
        %8907 = vmatprep.subr.mxu0 0.0
        %8908 = vmatpush1.msra.mxu0 %v8614
        %8909 = vmatprep.subr.mxu0 0.0
        %8910 = vmatpush1.msra.mxu0 %v8615
        %8911 = vmatprep.subr.mxu0 0.0
        %8912 = vmatpush1.msra.mxu0 %v8616
        %8913 = vmatprep.subr.mxu0 0.0
        %8914 = vmatpush1.msra.mxu0 %v8617
        %8915 = vmatprep.subr.mxu0 0.0
        %8916 = vmatpush1.msra.mxu0 %v8618
        %8917 = vmatprep.subr.mxu0 0.0
        %8918 = vmatpush1.msra.mxu0 %v8619
        %8919 = vmatprep.subr.mxu0 0.0
        %8920 = vmatpush1.msra.mxu0 %v8620
        %8921 = vmatprep.subr.mxu0 0.0
        %8922 = vmatpush1.msra.mxu0 %v8621
        %8923 = vmatprep.subr.mxu0 0.0
        %8924 = vmatpush1.msra.mxu0 %v8622
        %8925 = vmatprep.subr.mxu0 0.0
        %8926 = vmatpush1.msra.mxu0 %v8623
        %8927 = vmatprep.subr.mxu0 0.0
        %8928 = vmatpush1.msra.mxu0 %v8624
        %8929 = vmatprep.subr.mxu0 0.0
        %8930 = vmatpush1.msra.mxu0 %v8625
        %8931 = vmatprep.subr.mxu0 0.0
        %8932 = vmatpush1.msra.mxu0 %v8626
        %8933 = vmatprep.subr.mxu0 0.0
        %8934 = vmatpush1.msra.mxu0 %v8627
        %8935 = vmatprep.subr.mxu0 0.0
        %8936 = vmatpush1.msra.mxu0 %v8628
        %8937 = vmatprep.subr.mxu0 0.0
        %8938 = vmatpush1.msra.mxu0 %v8629
        %8939 = vmatprep.mubr.f32.mxu0 %v8660
        %8940 = vmatmul.mubr.f32.gmra.mrb[0].mxu0 %v8500
        %v8941 = vpop.f32.mrb[0].mxu0
        %v8942 = vadd.f32 %v8872, %v8941
        %v8943 = vpop.f32.mrb[0].mxu0
        %8944 = vdwg.mxu0
        %8945 = vmatprep.subr.mxu0 0.0
        %8946 = vmatpush1.msra.mxu0 %v8630
        %8947 = vmatprep.subr.mxu0 0.0
        %8948 = vmatpush1.msra.mxu0 %v8631
        %8949 = vmatprep.subr.mxu0 0.0
        %8950 = vmatpush1.msra.mxu0 %v8632
        %8951 = vmatprep.subr.mxu0 0.0
        %8952 = vmatpush1.msra.mxu0 %v8633
        %8953 = vmatprep.subr.mxu0 0.0
        %8954 = vmatpush1.msra.mxu0 %v8634
        %8955 = vmatprep.subr.mxu0 0.0
        %8956 = vmatpush1.msra.mxu0 %v8635
        %8957 = vmatprep.subr.mxu0 0.0
        %8958 = vmatpush1.msra.mxu0 %v8636
        %8959 = vmatprep.subr.mxu0 0.0
        %8960 = vmatpush1.msra.mxu0 %v8637
        %8961 = vmatprep.subr.mxu0 0.0
        %8962 = vmatpush1.msra.mxu0 %v8638
        %8963 = vmatprep.subr.mxu0 0.0
        %8964 = vmatpush1.msra.mxu0 %v8639
        %8965 = vmatprep.subr.mxu0 0.0
        %8966 = vmatpush1.msra.mxu0 %v8640
        %8967 = vmatprep.subr.mxu0 0.0
        %8968 = vmatpush1.msra.mxu0 %v8641
        %8969 = vmatprep.subr.mxu0 0.0
        %8970 = vmatpush1.msra.mxu0 %v8642
        %8971 = vmatprep.subr.mxu0 0.0
        %8972 = vmatpush1.msra.mxu0 %v8643
        %8973 = vmatprep.subr.mxu0 0.0
        %8974 = vmatpush1.msra.mxu0 %v8644
        %8975 = vmatprep.subr.mxu0 0.0
        %8976 = vmatpush1.msra.mxu0 %v8645
        %8977 = vmatprep.subr.mxu0 0.0
        %8978 = vmatpush1.msra.mxu0 0.0
        %8979 = vmatprep.subr.mxu0 0.0
        %8980 = vmatpush1.msra.mxu0 0.0
        %8981 = vmatprep.subr.mxu0 0.0
        %8982 = vmatpush1.msra.mxu0 0.0
        %8983 = vmatprep.subr.mxu0 0.0
        %8984 = vmatpush1.msra.mxu0 0.0
        %8985 = vmatprep.subr.mxu0 0.0
        %8986 = vmatpush1.msra.mxu0 0.0
        %8987 = vmatprep.subr.mxu0 0.0
        %8988 = vmatpush1.msra.mxu0 0.0
        %8989 = vmatprep.subr.mxu0 0.0
        %8990 = vmatpush1.msra.mxu0 0.0
        %8991 = vmatprep.subr.mxu0 0.0
        %8992 = vmatpush1.msra.mxu0 0.0
        %8993 = vmatprep.subr.mxu0 0.0
        %8994 = vmatpush1.msra.mxu0 0.0
        %8995 = vmatprep.subr.mxu0 0.0
        %8996 = vmatpush1.msra.mxu0 0.0
        %8997 = vmatprep.subr.mxu0 0.0
        %8998 = vmatpush1.msra.mxu0 0.0
        %8999 = vmatprep.subr.mxu0 0.0
        %9000 = vmatpush1.msra.mxu0 0.0
        %9001 = vmatprep.subr.mxu0 0.0
        %9002 = vmatpush1.msra.mxu0 0.0
        %9003 = vmatprep.subr.mxu0 0.0
        %9004 = vmatpush1.msra.mxu0 0.0
        %9005 = vmatprep.subr.mxu0 0.0
        %9006 = vmatpush1.msra.mxu0 0.0
        %9007 = vmatprep.subr.mxu0 0.0
        %9008 = vmatpush1.msra.mxu0 0.0
        %9009 = vmatprep.mubr.f32.mxu0 0.0
        %9010 = vmatmul.mubr.f32.gmra.mrb[0].mxu0 %v8501
        %v9011 = vpop.f32.mrb[0].mxu0
        %v9012 = vadd.f32 %v8942, %v9011
        %v9013 = vpop.f32.mrb[0].mxu0
        %9014 = vdwg.mxu0
        %v9015 = vmax.f32 %v9012, 0.0
        %v9016 = vlaneseq
        %v9017 = vshrl.u32 %v9016, 7
        %v9018 = vsub.s32 0, %v9017
        %v9019 = vrot.slane %v8647, %v9018
        %v9020 = vmul.f32 %v9015, %v9019
        %v9021 = vlaneseq
        %v9022 = vshrl.u32 %v9021, 7
        %v9023 = vsub.s32 0, %v9022
        %v9024 = vrot.slane %v8648, %v9023
        %v9025 = vadd.f32 %v9020, %v9024
        %v9028 = vunpack.c.l.s4 1983009808
        %v9029 = vunpack.c.0.s8 %v9028
        %v9030 = vlaneseq
        %v9031 = vshrl.u32 %v9030, 7
        %v9032 = vsub.s32 %v9029, %v9031
        %v9033 = vrot.slane %v9025, %v9032
        %v9034 = vcombine.high %v9033, %v9033
        %9037 = vst [vmem:[#allocation8] sm:$0xf] 0.0
        %9038 = vst [vmem:[#allocation8 + $0x4] sm:$0xf] 0.0
        %9039 = vst [vmem:[#allocation8 + $0x8] sm:$0xf] 0.0
        %9040 = vst [vmem:[#allocation8 + $0xc] sm:$0xf] 0.0
        %s9041 = scalar_lea.vmem [#allocation8], 4
        %9042 = vst [vmem:[%s9041 + $0x1] sm:$0x3] %v9033
        %9043 = vst [vmem:[%s9041 + $0x5] sm:$0x3] %v9034
        %v9044 = vld [vmem:[#allocation8] sm:$0x3]
        %v9045 = vld [vmem:[#allocation8 + $0x4] sm:$0x3]
        %v9048 = vcombine.low %v9044, %v9045
        %v9050 = vunpack.c.l.s4 1983009808
        %v9051 = vunpack.c.0.s8 %v9050
        %v9052 = vlaneseq
        %v9053 = vshrl.u32 %v9052, 7
        %v9054 = vsub.s32 %v9051, %v9053
        %v9055 = vrot.slane %v9048, %v9054
        %9057 = vst [vmem:[#allocation15] sm:$0xf] %v9055
        %v9058 = vld [vmem:[#allocation8 + $0x1] sm:$0x3]
        %v9059 = vld [vmem:[#allocation8 + $0x5] sm:$0x3]
        %v9062 = vcombine.low %v9058, %v9059
        %v9064 = vunpack.c.l.s4 1983009808
        %v9065 = vunpack.c.0.s8 %v9064
        %v9066 = vlaneseq
        %v9067 = vshrl.u32 %v9066, 7
        %v9068 = vsub.s32 %v9065, %v9067
        %v9069 = vrot.slane %v9062, %v9068
        %9071 = vst [vmem:[#allocation15 + $0x4] sm:$0xf] %v9069
        %v9072 = vld [vmem:[#allocation8 + $0x2] sm:$0x3]
        %v9073 = vld [vmem:[#allocation8 + $0x6] sm:$0x3]
        %v9076 = vcombine.low %v9072, %v9073
        %v9078 = vunpack.c.l.s4 1983009808
        %v9079 = vunpack.c.0.s8 %v9078
        %v9080 = vlaneseq
        %v9081 = vshrl.u32 %v9080, 7
        %v9082 = vsub.s32 %v9079, %v9081
        %v9083 = vrot.slane %v9076, %v9082
        %9085 = vst [vmem:[#allocation15 + $0x8] sm:$0xf] %v9083
        %v9086 = vld [vmem:[%s9041] sm:$0x3]
        %v9087 = vld [vmem:[%s9041 + $0x4] sm:$0x3]
        %v9090 = vcombine.low %v9086, %v9087
        %v9092 = vunpack.c.l.s4 1983009808
        %v9093 = vunpack.c.0.s8 %v9092
        %v9094 = vlaneseq
        %v9095 = vshrl.u32 %v9094, 7
        %v9096 = vsub.s32 %v9093, %v9095
        %v9097 = vrot.slane %v9090, %v9096
        %9099 = vst [vmem:[#allocation15 + $0xc] sm:$0xf] %v9097
        %v9100 = vld [vmem:[%s9041 + $0x1] sm:$0x3]
        %v9101 = vld [vmem:[%s9041 + $0x5] sm:$0x3]
        %v9104 = vcombine.low %v9100, %v9101
        %v9106 = vunpack.c.l.s4 1983009808
        %v9107 = vunpack.c.0.s8 %v9106
        %v9108 = vlaneseq
        %v9109 = vshrl.u32 %v9108, 7
        %v9110 = vsub.s32 %v9107, %v9109
        %v9111 = vrot.slane %v9104, %v9110
        %9113 = vst [vmem:[#allocation15 + $0x10] sm:$0xf] %v9111
        %v9114 = vld [vmem:[%s9041 + $0x2] sm:$0x3]
        %v9115 = vld [vmem:[%s9041 + $0x6] sm:$0x3]
        %v9118 = vcombine.low %v9114, %v9115
        %v9120 = vunpack.c.l.s4 1983009808
        %v9121 = vunpack.c.0.s8 %v9120
        %v9122 = vlaneseq
        %v9123 = vshrl.u32 %v9122, 7
        %v9124 = vsub.s32 %v9121, %v9123
        %v9125 = vrot.slane %v9118, %v9124
        %9127 = vst [vmem:[#allocation15 + $0x14] sm:$0xf] %v9125
        %s9128 = scalar_lea.vmem [#allocation8], 8
        %v9129 = vld [vmem:[%s9128] sm:$0x3]
        %v9130 = vld [vmem:[%s9128 + $0x4] sm:$0x3]
        %v9133 = vcombine.low %v9129, %v9130
        %v9135 = vunpack.c.l.s4 1983009808
        %v9136 = vunpack.c.0.s8 %v9135
        %v9137 = vlaneseq
        %v9138 = vshrl.u32 %v9137, 7
        %v9139 = vsub.s32 %v9136, %v9138
        %v9140 = vrot.slane %v9133, %v9139
        %9142 = vst [vmem:[#allocation15 + $0x18] sm:$0xf] %v9140
        %v9143 = vld [vmem:[%s9128 + $0x1] sm:$0x3]
        %v9144 = vld [vmem:[%s9128 + $0x5] sm:$0x3]
        %v9147 = vcombine.low %v9143, %v9144
        %v9149 = vunpack.c.l.s4 1983009808
        %v9150 = vunpack.c.0.s8 %v9149
        %v9151 = vlaneseq
        %v9152 = vshrl.u32 %v9151, 7
        %v9153 = vsub.s32 %v9150, %v9152
        %v9154 = vrot.slane %v9147, %v9153
        %9156 = vst [vmem:[#allocation15 + $0x1c] sm:$0xf] %v9154
        %v9157 = vld [vmem:[%s9128 + $0x2] sm:$0x3]
        %v9158 = vld [vmem:[%s9128 + $0x6] sm:$0x3]
        %v9161 = vcombine.low %v9157, %v9158
        %v9163 = vunpack.c.l.s4 1983009808
        %v9164 = vunpack.c.0.s8 %v9163
        %v9165 = vlaneseq
        %v9166 = vshrl.u32 %v9165, 7
        %v9167 = vsub.s32 %v9164, %v9166
        %v9168 = vrot.slane %v9161, %v9167
        %9170 = vst [vmem:[#allocation15 + $0x20] sm:$0xf] %v9168
        %v9171 = vld [vmem:[#allocation15] sm:$0xff]
        %v9172 = vld [vmem:[#allocation15 + $0x8] sm:$0xff]
        %v9173 = vld [vmem:[#allocation15 + $0x10] sm:$0xff]
        %v9174 = vld [vmem:[#allocation15 + $0x18] sm:$0xff]
        %v9175 = vld [vmem:[#allocation15 + $0x20] sm:$0xf]
        %v9176 = vld [vmem:[#allocation24] sm:$0xff]
        %v9177 = vld [vmem:[#allocation24 + $0x8] sm:$0xff]
        %v9178 = vld [vmem:[#allocation24 + $0x10] sm:$0xff]
        %v9179 = vld [vmem:[#allocation24 + $0x18] sm:$0xff]
        %v9180 = vld [vmem:[#allocation24 + $0x20] sm:$0xff]
        %v9181 = vld [vmem:[#allocation24 + $0x28] sm:$0xff]
        %v9182 = vld [vmem:[#allocation24 + $0x30] sm:$0xff]
        %v9183 = vld [vmem:[#allocation24 + $0x38] sm:$0xff]
        %v9184 = vld [vmem:[#allocation24 + $0x40] sm:$0xff]
        %v9185 = vld [vmem:[#allocation24 + $0x48] sm:$0xff]
        %v9186 = vld [vmem:[#allocation24 + $0x50] sm:$0xff]
        %v9187 = vld [vmem:[#allocation24 + $0x58] sm:$0xff]
        %v9188 = vld [vmem:[#allocation24 + $0x60] sm:$0xff]
        %v9189 = vld [vmem:[#allocation24 + $0x68] sm:$0xff]
        %v9190 = vld [vmem:[#allocation24 + $0x70] sm:$0xff]
        %v9191 = vld [vmem:[#allocation24 + $0x78] sm:$0xff]
        %v9192 = vld [vmem:[#allocation24 + $0x80] sm:$0xff]
        %v9193 = vld [vmem:[#allocation24 + $0x88] sm:$0xff]
        %v9194 = vld [vmem:[#allocation24 + $0x90] sm:$0xff]
        %v9195 = vld [vmem:[#allocation24 + $0x98] sm:$0xff]
        %v9196 = vld [vmem:[#allocation24 + $0xa0] sm:$0xff]
        %v9197 = vld [vmem:[#allocation24 + $0xa8] sm:$0xff]
        %v9198 = vld [vmem:[#allocation24 + $0xb0] sm:$0xff]
        %v9199 = vld [vmem:[#allocation24 + $0xb8] sm:$0xff]
        %v9200 = vld [vmem:[#allocation24 + $0xc0] sm:$0xff]
        %v9201 = vld [vmem:[#allocation24 + $0xc8] sm:$0xff]
        %v9202 = vld [vmem:[#allocation24 + $0xd0] sm:$0xff]
        %v9203 = vld [vmem:[#allocation24 + $0xd8] sm:$0xff]
        %v9204 = vld [vmem:[#allocation24 + $0xe0] sm:$0xff]
        %v9205 = vld [vmem:[#allocation24 + $0xe8] sm:$0xff]
        %v9206 = vld [vmem:[#allocation24 + $0xf0] sm:$0xff]
        %v9207 = vld [vmem:[#allocation24 + $0xf8] sm:$0xff]
        %v9208 = vld [vmem:[#allocation24 + $0x100] sm:$0xff]
        %v9209 = vld [vmem:[#allocation24 + $0x108] sm:$0xff]
        %v9210 = vld [vmem:[#allocation24 + $0x110] sm:$0xff]
        %v9211 = vld [vmem:[#allocation24 + $0x118] sm:$0xff]
        %v9212 = vld [vmem:[#allocation24 + $0x120] sm:$0xff]
        %v9213 = vld [vmem:[#allocation24 + $0x128] sm:$0xff]
        %v9214 = vld [vmem:[#allocation24 + $0x130] sm:$0xff]
        %v9215 = vld [vmem:[#allocation24 + $0x138] sm:$0xff]
        %v9216 = vld [vmem:[#allocation24 + $0x140] sm:$0xff]
        %v9217 = vld [vmem:[#allocation24 + $0x148] sm:$0xff]
        %v9218 = vld [vmem:[#allocation24 + $0x150] sm:$0xff]
        %v9219 = vld [vmem:[#allocation24 + $0x158] sm:$0xff]
        %v9220 = vld [vmem:[#allocation24 + $0x160] sm:$0xff]
        %v9221 = vld [vmem:[#allocation24 + $0x168] sm:$0xff]
        %v9222 = vld [vmem:[#allocation24 + $0x170] sm:$0xff]
        %v9223 = vld [vmem:[#allocation24 + $0x178] sm:$0xff]
        %v9224 = vld [vmem:[#allocation24 + $0x180] sm:$0xff]
        %v9225 = vld [vmem:[#allocation24 + $0x188] sm:$0xff]
        %v9226 = vld [vmem:[#allocation24 + $0x190] sm:$0xff]
        %v9227 = vld [vmem:[#allocation24 + $0x198] sm:$0xff]
        %v9228 = vld [vmem:[#allocation24 + $0x1a0] sm:$0xff]
        %v9229 = vld [vmem:[#allocation24 + $0x1a8] sm:$0xff]
        %v9230 = vld [vmem:[#allocation24 + $0x1b0] sm:$0xff]
        %v9231 = vld [vmem:[#allocation24 + $0x1b8] sm:$0xff]
        %v9232 = vld [vmem:[#allocation24 + $0x1c0] sm:$0xff]
        %v9233 = vld [vmem:[#allocation24 + $0x1c8] sm:$0xff]
        %v9234 = vld [vmem:[#allocation24 + $0x1d0] sm:$0xff]
        %v9235 = vld [vmem:[#allocation24 + $0x1d8] sm:$0xff]
        %v9236 = vld [vmem:[#allocation24 + $0x1e0] sm:$0xff]
        %v9237 = vld [vmem:[#allocation24 + $0x1e8] sm:$0xff]
        %v9238 = vld [vmem:[#allocation24 + $0x1f0] sm:$0xff]
        %v9239 = vld [vmem:[#allocation24 + $0x1f8] sm:$0xff]
        %v9240 = vld [vmem:[#allocation24 + $0x200] sm:$0xff]
        %v9241 = vld [vmem:[#allocation24 + $0x208] sm:$0xff]
        %v9242 = vld [vmem:[#allocation24 + $0x210] sm:$0xff]
        %v9243 = vld [vmem:[#allocation24 + $0x218] sm:$0xff]
        %v9244 = vld [vmem:[#allocation24 + $0x220] sm:$0xff]
        %v9245 = vld [vmem:[#allocation24 + $0x228] sm:$0xff]
        %v9246 = vld [vmem:[#allocation24 + $0x230] sm:$0xff]
        %v9247 = vld [vmem:[#allocation24 + $0x238] sm:$0xff]
        %v9248 = vld [vmem:[#allocation24 + $0x240] sm:$0xff]
        %v9249 = vld [vmem:[#allocation24 + $0x248] sm:$0xff]
        %v9250 = vld [vmem:[#allocation24 + $0x250] sm:$0xff]
        %v9251 = vld [vmem:[#allocation24 + $0x258] sm:$0xff]
        %v9252 = vld [vmem:[#allocation24 + $0x260] sm:$0xff]
        %v9253 = vld [vmem:[#allocation24 + $0x268] sm:$0xff]
        %v9254 = vld [vmem:[#allocation24 + $0x270] sm:$0xff]
        %v9255 = vld [vmem:[#allocation24 + $0x278] sm:$0xff]
        %v9256 = vld [vmem:[#allocation24 + $0x280] sm:$0xff]
        %v9257 = vld [vmem:[#allocation24 + $0x288] sm:$0xff]
        %v9258 = vld [vmem:[#allocation24 + $0x290] sm:$0xff]
        %v9259 = vld [vmem:[#allocation24 + $0x298] sm:$0xff]
        %v9260 = vld [vmem:[#allocation24 + $0x2a0] sm:$0xff]
        %v9261 = vld [vmem:[#allocation24 + $0x2a8] sm:$0xff]
        %v9262 = vld [vmem:[#allocation24 + $0x2b0] sm:$0xff]
        %v9263 = vld [vmem:[#allocation24 + $0x2b8] sm:$0xff]
        %v9264 = vld [vmem:[#allocation24 + $0x2c0] sm:$0xff]
        %v9265 = vld [vmem:[#allocation24 + $0x2c8] sm:$0xff]
        %v9266 = vld [vmem:[#allocation24 + $0x2d0] sm:$0xff]
        %v9267 = vld [vmem:[#allocation24 + $0x2d8] sm:$0xff]
        %v9268 = vld [vmem:[#allocation24 + $0x2e0] sm:$0xff]
        %v9269 = vld [vmem:[#allocation24 + $0x2e8] sm:$0xff]
        %v9270 = vld [vmem:[#allocation24 + $0x2f0] sm:$0xff]
        %v9271 = vld [vmem:[#allocation24 + $0x2f8] sm:$0xff]
        %v9272 = vld [vmem:[#allocation24 + $0x300] sm:$0xff]
        %v9273 = vld [vmem:[#allocation24 + $0x308] sm:$0xff]
        %v9274 = vld [vmem:[#allocation24 + $0x310] sm:$0xff]
        %v9275 = vld [vmem:[#allocation24 + $0x318] sm:$0xff]
        %v9276 = vld [vmem:[#allocation24 + $0x320] sm:$0xff]
        %v9277 = vld [vmem:[#allocation24 + $0x328] sm:$0xff]
        %v9278 = vld [vmem:[#allocation24 + $0x330] sm:$0xff]
        %v9279 = vld [vmem:[#allocation24 + $0x338] sm:$0xff]
        %v9280 = vld [vmem:[#allocation24 + $0x340] sm:$0xff]
        %v9281 = vld [vmem:[#allocation24 + $0x348] sm:$0xff]
        %v9282 = vld [vmem:[#allocation24 + $0x350] sm:$0xff]
        %v9283 = vld [vmem:[#allocation24 + $0x358] sm:$0xff]
        %v9284 = vld [vmem:[#allocation24 + $0x360] sm:$0xff]
        %v9285 = vld [vmem:[#allocation24 + $0x368] sm:$0xff]
        %v9286 = vld [vmem:[#allocation24 + $0x370] sm:$0xff]
        %v9287 = vld [vmem:[#allocation24 + $0x378] sm:$0xff]
        %v9288 = vld [vmem:[#allocation24 + $0x380] sm:$0xff]
        %v9289 = vld [vmem:[#allocation24 + $0x388] sm:$0xff]
        %v9290 = vld [vmem:[#allocation24 + $0x390] sm:$0xff]
        %v9291 = vld [vmem:[#allocation24 + $0x398] sm:$0xff]
        %v9292 = vld [vmem:[#allocation24 + $0x3a0] sm:$0xff]
        %v9293 = vld [vmem:[#allocation24 + $0x3a8] sm:$0xff]
        %v9294 = vld [vmem:[#allocation24 + $0x3b0] sm:$0xff]
        %v9295 = vld [vmem:[#allocation24 + $0x3b8] sm:$0xff]
        %v9296 = vld [vmem:[#allocation24 + $0x3c0] sm:$0xff]
        %v9297 = vld [vmem:[#allocation24 + $0x3c8] sm:$0xff]
        %v9298 = vld [vmem:[#allocation24 + $0x3d0] sm:$0xff]
        %v9299 = vld [vmem:[#allocation24 + $0x3d8] sm:$0xff]
        %v9300 = vld [vmem:[#allocation24 + $0x3e0] sm:$0xff]
        %v9301 = vld [vmem:[#allocation24 + $0x3e8] sm:$0xff]
        %v9302 = vld [vmem:[#allocation24 + $0x3f0] sm:$0xff]
        %v9303 = vld [vmem:[#allocation24 + $0x3f8] sm:$0xff]
        %v9304 = vld [vmem:[#allocation24 + $0x400] sm:$0xff]
        %v9305 = vld [vmem:[#allocation24 + $0x408] sm:$0xff]
        %v9306 = vld [vmem:[#allocation24 + $0x410] sm:$0xff]
        %v9307 = vld [vmem:[#allocation24 + $0x418] sm:$0xff]
        %v9308 = vld [vmem:[#allocation24 + $0x420] sm:$0xff]
        %v9309 = vld [vmem:[#allocation24 + $0x428] sm:$0xff]
        %v9310 = vld [vmem:[#allocation24 + $0x430] sm:$0xff]
        %v9311 = vld [vmem:[#allocation24 + $0x438] sm:$0xff]
        %v9312 = vld [vmem:[#allocation24 + $0x440] sm:$0xff]
        %v9313 = vld [vmem:[#allocation24 + $0x448] sm:$0xff]
        %v9314 = vld [vmem:[#allocation24 + $0x450] sm:$0xff]
        %v9315 = vld [vmem:[#allocation24 + $0x458] sm:$0xff]
        %v9316 = vld [vmem:[#allocation24 + $0x460] sm:$0xff]
        %v9317 = vld [vmem:[#allocation24 + $0x468] sm:$0xff]
        %v9318 = vld [vmem:[#allocation24 + $0x470] sm:$0xff]
        %v9319 = vld [vmem:[#allocation24 + $0x478] sm:$0xff]
        %v9320 = vld [vmem:[%s16] sm:$0x1]
        %v9321 = vld [vmem:[%s16 + $0x1] sm:$0x1]
        %v9322 = vld [vmem:[%s16 + $0x2] sm:$0x1]
        %v9323 = vlaneseq
        %v9324 = vshrl.u32 %v9323, 7
        %v9325 = vsub.s32 0, %v9324
        %v9326 = vrot.slane %v9320, %v9325
        %v9331 = vcombine.high %v9171, %v9171
        %v9332 = vcombine.high %v9172, %v9172
        %v9333 = vcombine.high %v9173, %v9173
        %v9334 = vcombine.high %v9174, %v9174
        %9339 = vmatprep.subr.mxu0 0.0
        %9340 = vmatpush1.msra.mxu0 %v9176
        %9341 = vmatprep.subr.mxu0 0.0
        %9342 = vmatpush1.msra.mxu0 %v9177
        %9343 = vmatprep.subr.mxu0 0.0
        %9344 = vmatpush1.msra.mxu0 %v9178
        %9345 = vmatprep.subr.mxu0 0.0
        %9346 = vmatpush1.msra.mxu0 %v9179
        %9347 = vmatprep.subr.mxu0 0.0
        %9348 = vmatpush1.msra.mxu0 %v9180
        %9349 = vmatprep.subr.mxu0 0.0
        %9350 = vmatpush1.msra.mxu0 %v9181
        %9351 = vmatprep.subr.mxu0 0.0
        %9352 = vmatpush1.msra.mxu0 %v9182
        %9353 = vmatprep.subr.mxu0 0.0
        %9354 = vmatpush1.msra.mxu0 %v9183
        %9355 = vmatprep.subr.mxu0 0.0
        %9356 = vmatpush1.msra.mxu0 %v9184
        %9357 = vmatprep.subr.mxu0 0.0
        %9358 = vmatpush1.msra.mxu0 %v9185
        %9359 = vmatprep.subr.mxu0 0.0
        %9360 = vmatpush1.msra.mxu0 %v9186
        %9361 = vmatprep.subr.mxu0 0.0
        %9362 = vmatpush1.msra.mxu0 %v9187
        %9363 = vmatprep.subr.mxu0 0.0
        %9364 = vmatpush1.msra.mxu0 %v9188
        %9365 = vmatprep.subr.mxu0 0.0
        %9366 = vmatpush1.msra.mxu0 %v9189
        %9367 = vmatprep.subr.mxu0 0.0
        %9368 = vmatpush1.msra.mxu0 %v9190
        %9369 = vmatprep.subr.mxu0 0.0
        %9370 = vmatpush1.msra.mxu0 %v9191
        %9371 = vmatprep.subr.mxu0 0.0
        %9372 = vmatpush1.msra.mxu0 %v9192
        %9373 = vmatprep.subr.mxu0 0.0
        %9374 = vmatpush1.msra.mxu0 %v9193
        %9375 = vmatprep.subr.mxu0 0.0
        %9376 = vmatpush1.msra.mxu0 %v9194
        %9377 = vmatprep.subr.mxu0 0.0
        %9378 = vmatpush1.msra.mxu0 %v9195
        %9379 = vmatprep.subr.mxu0 0.0
        %9380 = vmatpush1.msra.mxu0 %v9196
        %9381 = vmatprep.subr.mxu0 0.0
        %9382 = vmatpush1.msra.mxu0 %v9197
        %9383 = vmatprep.subr.mxu0 0.0
        %9384 = vmatpush1.msra.mxu0 %v9198
        %9385 = vmatprep.subr.mxu0 0.0
        %9386 = vmatpush1.msra.mxu0 %v9199
        %9387 = vmatprep.subr.mxu0 0.0
        %9388 = vmatpush1.msra.mxu0 %v9200
        %9389 = vmatprep.subr.mxu0 0.0
        %9390 = vmatpush1.msra.mxu0 %v9201
        %9391 = vmatprep.subr.mxu0 0.0
        %9392 = vmatpush1.msra.mxu0 %v9202
        %9393 = vmatprep.subr.mxu0 0.0
        %9394 = vmatpush1.msra.mxu0 %v9203
        %9395 = vmatprep.subr.mxu0 0.0
        %9396 = vmatpush1.msra.mxu0 %v9204
        %9397 = vmatprep.subr.mxu0 0.0
        %9398 = vmatpush1.msra.mxu0 %v9205
        %9399 = vmatprep.subr.mxu0 0.0
        %9400 = vmatpush1.msra.mxu0 %v9206
        %9401 = vmatprep.subr.mxu0 0.0
        %9402 = vmatpush1.msra.mxu0 %v9207
        %9403 = vmatprep.mubr.f32.mxu0 %v9331
        %9404 = vmatmul.mubr.f32.gmra.mrb[0].mxu0 %v9171
        %v9405 = vpop.f32.mrb[0].mxu0
        %v9406 = vadd.f32 %v9326, %v9405
        %v9407 = vpop.f32.mrb[0].mxu0
        %9408 = vdwg.mxu0
        %9409 = vmatprep.subr.mxu0 0.0
        %9410 = vmatpush1.msra.mxu0 %v9208
        %9411 = vmatprep.subr.mxu0 0.0
        %9412 = vmatpush1.msra.mxu0 %v9209
        %9413 = vmatprep.subr.mxu0 0.0
        %9414 = vmatpush1.msra.mxu0 %v9210
        %9415 = vmatprep.subr.mxu0 0.0
        %9416 = vmatpush1.msra.mxu0 %v9211
        %9417 = vmatprep.subr.mxu0 0.0
        %9418 = vmatpush1.msra.mxu0 %v9212
        %9419 = vmatprep.subr.mxu0 0.0
        %9420 = vmatpush1.msra.mxu0 %v9213
        %9421 = vmatprep.subr.mxu0 0.0
        %9422 = vmatpush1.msra.mxu0 %v9214
        %9423 = vmatprep.subr.mxu0 0.0
        %9424 = vmatpush1.msra.mxu0 %v9215
        %9425 = vmatprep.subr.mxu0 0.0
        %9426 = vmatpush1.msra.mxu0 %v9216
        %9427 = vmatprep.subr.mxu0 0.0
        %9428 = vmatpush1.msra.mxu0 %v9217
        %9429 = vmatprep.subr.mxu0 0.0
        %9430 = vmatpush1.msra.mxu0 %v9218
        %9431 = vmatprep.subr.mxu0 0.0
        %9432 = vmatpush1.msra.mxu0 %v9219
        %9433 = vmatprep.subr.mxu0 0.0
        %9434 = vmatpush1.msra.mxu0 %v9220
        %9435 = vmatprep.subr.mxu0 0.0
        %9436 = vmatpush1.msra.mxu0 %v9221
        %9437 = vmatprep.subr.mxu0 0.0
        %9438 = vmatpush1.msra.mxu0 %v9222
        %9439 = vmatprep.subr.mxu0 0.0
        %9440 = vmatpush1.msra.mxu0 %v9223
        %9441 = vmatprep.subr.mxu0 0.0
        %9442 = vmatpush1.msra.mxu0 %v9224
        %9443 = vmatprep.subr.mxu0 0.0
        %9444 = vmatpush1.msra.mxu0 %v9225
        %9445 = vmatprep.subr.mxu0 0.0
        %9446 = vmatpush1.msra.mxu0 %v9226
        %9447 = vmatprep.subr.mxu0 0.0
        %9448 = vmatpush1.msra.mxu0 %v9227
        %9449 = vmatprep.subr.mxu0 0.0
        %9450 = vmatpush1.msra.mxu0 %v9228
        %9451 = vmatprep.subr.mxu0 0.0
        %9452 = vmatpush1.msra.mxu0 %v9229
        %9453 = vmatprep.subr.mxu0 0.0
        %9454 = vmatpush1.msra.mxu0 %v9230
        %9455 = vmatprep.subr.mxu0 0.0
        %9456 = vmatpush1.msra.mxu0 %v9231
        %9457 = vmatprep.subr.mxu0 0.0
        %9458 = vmatpush1.msra.mxu0 %v9232
        %9459 = vmatprep.subr.mxu0 0.0
        %9460 = vmatpush1.msra.mxu0 %v9233
        %9461 = vmatprep.subr.mxu0 0.0
        %9462 = vmatpush1.msra.mxu0 %v9234
        %9463 = vmatprep.subr.mxu0 0.0
        %9464 = vmatpush1.msra.mxu0 %v9235
        %9465 = vmatprep.subr.mxu0 0.0
        %9466 = vmatpush1.msra.mxu0 %v9236
        %9467 = vmatprep.subr.mxu0 0.0
        %9468 = vmatpush1.msra.mxu0 %v9237
        %9469 = vmatprep.subr.mxu0 0.0
        %9470 = vmatpush1.msra.mxu0 %v9238
        %9471 = vmatprep.subr.mxu0 0.0
        %9472 = vmatpush1.msra.mxu0 %v9239
        %9473 = vmatprep.mubr.f32.mxu0 %v9332
        %9474 = vmatmul.mubr.f32.gmra.mrb[0].mxu0 %v9172
        %v9475 = vpop.f32.mrb[0].mxu0
        %v9476 = vadd.f32 %v9406, %v9475
        %v9477 = vpop.f32.mrb[0].mxu0
        %9478 = vdwg.mxu0
        %9479 = vmatprep.subr.mxu0 0.0
        %9480 = vmatpush1.msra.mxu0 %v9240
        %9481 = vmatprep.subr.mxu0 0.0
        %9482 = vmatpush1.msra.mxu0 %v9241
        %9483 = vmatprep.subr.mxu0 0.0
        %9484 = vmatpush1.msra.mxu0 %v9242
        %9485 = vmatprep.subr.mxu0 0.0
        %9486 = vmatpush1.msra.mxu0 %v9243
        %9487 = vmatprep.subr.mxu0 0.0
        %9488 = vmatpush1.msra.mxu0 %v9244
        %9489 = vmatprep.subr.mxu0 0.0
        %9490 = vmatpush1.msra.mxu0 %v9245
        %9491 = vmatprep.subr.mxu0 0.0
        %9492 = vmatpush1.msra.mxu0 %v9246
        %9493 = vmatprep.subr.mxu0 0.0
        %9494 = vmatpush1.msra.mxu0 %v9247
        %9495 = vmatprep.subr.mxu0 0.0
        %9496 = vmatpush1.msra.mxu0 %v9248
        %9497 = vmatprep.subr.mxu0 0.0
        %9498 = vmatpush1.msra.mxu0 %v9249
        %9499 = vmatprep.subr.mxu0 0.0
        %9500 = vmatpush1.msra.mxu0 %v9250
        %9501 = vmatprep.subr.mxu0 0.0
        %9502 = vmatpush1.msra.mxu0 %v9251
        %9503 = vmatprep.subr.mxu0 0.0
        %9504 = vmatpush1.msra.mxu0 %v9252
        %9505 = vmatprep.subr.mxu0 0.0
        %9506 = vmatpush1.msra.mxu0 %v9253
        %9507 = vmatprep.subr.mxu0 0.0
        %9508 = vmatpush1.msra.mxu0 %v9254
        %9509 = vmatprep.subr.mxu0 0.0
        %9510 = vmatpush1.msra.mxu0 %v9255
        %9511 = vmatprep.subr.mxu0 0.0
        %9512 = vmatpush1.msra.mxu0 %v9256
        %9513 = vmatprep.subr.mxu0 0.0
        %9514 = vmatpush1.msra.mxu0 %v9257
        %9515 = vmatprep.subr.mxu0 0.0
        %9516 = vmatpush1.msra.mxu0 %v9258
        %9517 = vmatprep.subr.mxu0 0.0
        %9518 = vmatpush1.msra.mxu0 %v9259
        %9519 = vmatprep.subr.mxu0 0.0
        %9520 = vmatpush1.msra.mxu0 %v9260
        %9521 = vmatprep.subr.mxu0 0.0
        %9522 = vmatpush1.msra.mxu0 %v9261
        %9523 = vmatprep.subr.mxu0 0.0
        %9524 = vmatpush1.msra.mxu0 %v9262
        %9525 = vmatprep.subr.mxu0 0.0
        %9526 = vmatpush1.msra.mxu0 %v9263
        %9527 = vmatprep.subr.mxu0 0.0
        %9528 = vmatpush1.msra.mxu0 %v9264
        %9529 = vmatprep.subr.mxu0 0.0
        %9530 = vmatpush1.msra.mxu0 %v9265
        %9531 = vmatprep.subr.mxu0 0.0
        %9532 = vmatpush1.msra.mxu0 %v9266
        %9533 = vmatprep.subr.mxu0 0.0
        %9534 = vmatpush1.msra.mxu0 %v9267
        %9535 = vmatprep.subr.mxu0 0.0
        %9536 = vmatpush1.msra.mxu0 %v9268
        %9537 = vmatprep.subr.mxu0 0.0
        %9538 = vmatpush1.msra.mxu0 %v9269
        %9539 = vmatprep.subr.mxu0 0.0
        %9540 = vmatpush1.msra.mxu0 %v9270
        %9541 = vmatprep.subr.mxu0 0.0
        %9542 = vmatpush1.msra.mxu0 %v9271
        %9543 = vmatprep.mubr.f32.mxu0 %v9333
        %9544 = vmatmul.mubr.f32.gmra.mrb[0].mxu0 %v9173
        %v9545 = vpop.f32.mrb[0].mxu0
        %v9546 = vadd.f32 %v9476, %v9545
        %v9547 = vpop.f32.mrb[0].mxu0
        %9548 = vdwg.mxu0
        %9549 = vmatprep.subr.mxu0 0.0
        %9550 = vmatpush1.msra.mxu0 %v9272
        %9551 = vmatprep.subr.mxu0 0.0
        %9552 = vmatpush1.msra.mxu0 %v9273
        %9553 = vmatprep.subr.mxu0 0.0
        %9554 = vmatpush1.msra.mxu0 %v9274
        %9555 = vmatprep.subr.mxu0 0.0
        %9556 = vmatpush1.msra.mxu0 %v9275
        %9557 = vmatprep.subr.mxu0 0.0
        %9558 = vmatpush1.msra.mxu0 %v9276
        %9559 = vmatprep.subr.mxu0 0.0
        %9560 = vmatpush1.msra.mxu0 %v9277
        %9561 = vmatprep.subr.mxu0 0.0
        %9562 = vmatpush1.msra.mxu0 %v9278
        %9563 = vmatprep.subr.mxu0 0.0
        %9564 = vmatpush1.msra.mxu0 %v9279
        %9565 = vmatprep.subr.mxu0 0.0
        %9566 = vmatpush1.msra.mxu0 %v9280
        %9567 = vmatprep.subr.mxu0 0.0
        %9568 = vmatpush1.msra.mxu0 %v9281
        %9569 = vmatprep.subr.mxu0 0.0
        %9570 = vmatpush1.msra.mxu0 %v9282
        %9571 = vmatprep.subr.mxu0 0.0
        %9572 = vmatpush1.msra.mxu0 %v9283
        %9573 = vmatprep.subr.mxu0 0.0
        %9574 = vmatpush1.msra.mxu0 %v9284
        %9575 = vmatprep.subr.mxu0 0.0
        %9576 = vmatpush1.msra.mxu0 %v9285
        %9577 = vmatprep.subr.mxu0 0.0
        %9578 = vmatpush1.msra.mxu0 %v9286
        %9579 = vmatprep.subr.mxu0 0.0
        %9580 = vmatpush1.msra.mxu0 %v9287
        %9581 = vmatprep.subr.mxu0 0.0
        %9582 = vmatpush1.msra.mxu0 %v9288
        %9583 = vmatprep.subr.mxu0 0.0
        %9584 = vmatpush1.msra.mxu0 %v9289
        %9585 = vmatprep.subr.mxu0 0.0
        %9586 = vmatpush1.msra.mxu0 %v9290
        %9587 = vmatprep.subr.mxu0 0.0
        %9588 = vmatpush1.msra.mxu0 %v9291
        %9589 = vmatprep.subr.mxu0 0.0
        %9590 = vmatpush1.msra.mxu0 %v9292
        %9591 = vmatprep.subr.mxu0 0.0
        %9592 = vmatpush1.msra.mxu0 %v9293
        %9593 = vmatprep.subr.mxu0 0.0
        %9594 = vmatpush1.msra.mxu0 %v9294
        %9595 = vmatprep.subr.mxu0 0.0
        %9596 = vmatpush1.msra.mxu0 %v9295
        %9597 = vmatprep.subr.mxu0 0.0
        %9598 = vmatpush1.msra.mxu0 %v9296
        %9599 = vmatprep.subr.mxu0 0.0
        %9600 = vmatpush1.msra.mxu0 %v9297
        %9601 = vmatprep.subr.mxu0 0.0
        %9602 = vmatpush1.msra.mxu0 %v9298
        %9603 = vmatprep.subr.mxu0 0.0
        %9604 = vmatpush1.msra.mxu0 %v9299
        %9605 = vmatprep.subr.mxu0 0.0
        %9606 = vmatpush1.msra.mxu0 %v9300
        %9607 = vmatprep.subr.mxu0 0.0
        %9608 = vmatpush1.msra.mxu0 %v9301
        %9609 = vmatprep.subr.mxu0 0.0
        %9610 = vmatpush1.msra.mxu0 %v9302
        %9611 = vmatprep.subr.mxu0 0.0
        %9612 = vmatpush1.msra.mxu0 %v9303
        %9613 = vmatprep.mubr.f32.mxu0 %v9334
        %9614 = vmatmul.mubr.f32.gmra.mrb[0].mxu0 %v9174
        %v9615 = vpop.f32.mrb[0].mxu0
        %v9616 = vadd.f32 %v9546, %v9615
        %v9617 = vpop.f32.mrb[0].mxu0
        %9618 = vdwg.mxu0
        %9619 = vmatprep.subr.mxu0 0.0
        %9620 = vmatpush1.msra.mxu0 %v9304
        %9621 = vmatprep.subr.mxu0 0.0
        %9622 = vmatpush1.msra.mxu0 %v9305
        %9623 = vmatprep.subr.mxu0 0.0
        %9624 = vmatpush1.msra.mxu0 %v9306
        %9625 = vmatprep.subr.mxu0 0.0
        %9626 = vmatpush1.msra.mxu0 %v9307
        %9627 = vmatprep.subr.mxu0 0.0
        %9628 = vmatpush1.msra.mxu0 %v9308
        %9629 = vmatprep.subr.mxu0 0.0
        %9630 = vmatpush1.msra.mxu0 %v9309
        %9631 = vmatprep.subr.mxu0 0.0
        %9632 = vmatpush1.msra.mxu0 %v9310
        %9633 = vmatprep.subr.mxu0 0.0
        %9634 = vmatpush1.msra.mxu0 %v9311
        %9635 = vmatprep.subr.mxu0 0.0
        %9636 = vmatpush1.msra.mxu0 %v9312
        %9637 = vmatprep.subr.mxu0 0.0
        %9638 = vmatpush1.msra.mxu0 %v9313
        %9639 = vmatprep.subr.mxu0 0.0
        %9640 = vmatpush1.msra.mxu0 %v9314
        %9641 = vmatprep.subr.mxu0 0.0
        %9642 = vmatpush1.msra.mxu0 %v9315
        %9643 = vmatprep.subr.mxu0 0.0
        %9644 = vmatpush1.msra.mxu0 %v9316
        %9645 = vmatprep.subr.mxu0 0.0
        %9646 = vmatpush1.msra.mxu0 %v9317
        %9647 = vmatprep.subr.mxu0 0.0
        %9648 = vmatpush1.msra.mxu0 %v9318
        %9649 = vmatprep.subr.mxu0 0.0
        %9650 = vmatpush1.msra.mxu0 %v9319
        %9651 = vmatprep.subr.mxu0 0.0
        %9652 = vmatpush1.msra.mxu0 0.0
        %9653 = vmatprep.subr.mxu0 0.0
        %9654 = vmatpush1.msra.mxu0 0.0
        %9655 = vmatprep.subr.mxu0 0.0
        %9656 = vmatpush1.msra.mxu0 0.0
        %9657 = vmatprep.subr.mxu0 0.0
        %9658 = vmatpush1.msra.mxu0 0.0
        %9659 = vmatprep.subr.mxu0 0.0
        %9660 = vmatpush1.msra.mxu0 0.0
        %9661 = vmatprep.subr.mxu0 0.0
        %9662 = vmatpush1.msra.mxu0 0.0
        %9663 = vmatprep.subr.mxu0 0.0
        %9664 = vmatpush1.msra.mxu0 0.0
        %9665 = vmatprep.subr.mxu0 0.0
        %9666 = vmatpush1.msra.mxu0 0.0
        %9667 = vmatprep.subr.mxu0 0.0
        %9668 = vmatpush1.msra.mxu0 0.0
        %9669 = vmatprep.subr.mxu0 0.0
        %9670 = vmatpush1.msra.mxu0 0.0
        %9671 = vmatprep.subr.mxu0 0.0
        %9672 = vmatpush1.msra.mxu0 0.0
        %9673 = vmatprep.subr.mxu0 0.0
        %9674 = vmatpush1.msra.mxu0 0.0
        %9675 = vmatprep.subr.mxu0 0.0
        %9676 = vmatpush1.msra.mxu0 0.0
        %9677 = vmatprep.subr.mxu0 0.0
        %9678 = vmatpush1.msra.mxu0 0.0
        %9679 = vmatprep.subr.mxu0 0.0
        %9680 = vmatpush1.msra.mxu0 0.0
        %9681 = vmatprep.subr.mxu0 0.0
        %9682 = vmatpush1.msra.mxu0 0.0
        %9683 = vmatprep.mubr.f32.mxu0 0.0
        %9684 = vmatmul.mubr.f32.gmra.mrb[0].mxu0 %v9175
        %v9685 = vpop.f32.mrb[0].mxu0
        %v9686 = vadd.f32 %v9616, %v9685
        %v9687 = vpop.f32.mrb[0].mxu0
        %9688 = vdwg.mxu0
        %v9689 = vmax.f32 %v9686, 0.0
        %v9690 = vlaneseq
        %v9691 = vshrl.u32 %v9690, 7
        %v9692 = vsub.s32 0, %v9691
        %v9693 = vrot.slane %v9321, %v9692
        %v9694 = vmul.f32 %v9689, %v9693
        %v9695 = vlaneseq
        %v9696 = vshrl.u32 %v9695, 7
        %v9697 = vsub.s32 0, %v9696
        %v9698 = vrot.slane %v9322, %v9697
        %v9699 = vadd.f32 %v9694, %v9698
        %9700 = vst [vmem:[%s614] sm:$0xf] %v9699
        %s9701 = sand.u32 %s404, 1
        %s9702 = scalar_lea.sflag [#allocation18], %s9701
        %s9703 = sand.u32 %s404, 1
        %s9704 = smul.addr %s9703, 4
        %s9705 = scalar_lea.vmem [#allocation25], %s9704
        // Predicated region
        $region109: #{simple_cnn_forward.1} parent=87 // pred_check
          %p9706 = pneg %p414
        $region110: #{simple_cnn_forward.1} parent=87 // pred_check_branch
          %9708 = sbr.rel (%p9706) target = $region112
        $region111: #{simple_cnn_forward.1} parent=87 // pred_region
          %s9710 = ssub.s32 64, 64
          %9711 = vsyncadd %s9702, %s9710
          %s9712 = smul.addr %s34, 64
          %s9713 = scalar_lea.hbm %s17, %s9712
          %s9715 = sshll.u32 %s9705, 4
          %s9716 = int_to_ptr.vmem [resolvable:$true] %s9715
          %9718 = dma.vmem_to_hbm [thread:$0]  %s9716, 64, %s9713, %s9702
        $region112: #{simple_cnn_forward.1} parent=87 // pred_fallthru
          _
      $region88: #{simple_cnn_forward.1} parent=5 // pred_fallthru
        _
      %p9719 = scmp.le.s32.totalorder 2, %s29
      // Predicated region
      $region113: #{simple_cnn_forward.1} parent=5 // pred_check
        %p9720 = pneg %p9719
      $region114: #{simple_cnn_forward.1} parent=5 // pred_check_branch
        %9722 = sbr.rel (%p9720) target = $region116
      $region115: #{simple_cnn_forward.1} parent=5 // pred_region
        %s9723 = ssub.s32 %s29, 2
        // Predicated region
        $region117: #{simple_cnn_forward.1} parent=115 // pred_check
          %p9724 = pneg %p420
        $region118: #{simple_cnn_forward.1} parent=115 // pred_check_branch
          %9726 = sbr.rel (%p9724) target = $region120
        $region119: #{simple_cnn_forward.1} parent=115 // pred_region
          %s9727 = sand.u32 %s405, 1
          %s9728 = scalar_lea.sflag [#allocation18], %s9727
          %s9729 = sand.u32 %s405, 1
          %s9730 = smul.addr %s9729, 4
          %s9731 = scalar_lea.vmem [#allocation25], %s9730
          %9732 = dma.done %s9728, 64
        $region120: #{simple_cnn_forward.1} parent=115 // pred_fallthru
          _
      $region116: #{simple_cnn_forward.1} parent=5 // pred_fallthru
        _
    $region6: #{simple_cnn_forward.1} parent=1 // loop_footer
      %s33 = sadd.s32 1, %s29
    $region7: #{simple_cnn_forward.1} parent=1 // loop_footer_branch
      %28 = sbr.rel target = $region3
    $region8: #{simple_cnn_forward.1} parent=1 // loop_exit
      _
    %9733 = vsyncpa [#allocation17], 1
    %s9734 = scalar_lea.sflag [#allocation17], 1
    %9735 = vsyncpa %s9734, 1
    %9736 = vsyncpa [#allocation20], 1
    %9737 = vsyncpa [#allocation23], 1
    %9738 = vsyncpa [#allocation18], 1
    %s9739 = scalar_lea.sflag [#allocation18], 1
    %9740 = vsyncpa %s9739, 1

</llo_original>
